<compile_context>
chip_gen: v7x
topology: tpu7x:2x2x1
jax: 0.10.0
libtpu: 0.0.40
codegen_flags: <defaults>
</compile_context>

<pallas_src>
import numpy as np
import jax
import jax.numpy as jnp
from jax import lax
from jax.experimental import pallas as pl
from jax.experimental.pallas import tpu as pltpu

CH = 16     # channel padding quantum: a bf16 vreg packs 16 sublanes


def _pad_to(n, q=CH):
    return ((max(n, 1) + q - 1) // q) * q


# --------------------------------------------------------------------------- #
# host-side parameter / selection-matrix preparation
# --------------------------------------------------------------------------- #

def _prep_conv3(w, b, cin_pad, cout_pad):
    """torch (Cout,Cin,3,3) -> fused-tap (Cout_pad, 9*Cin_pad) bf16; bias (Cout_pad,1) f32."""
    cout, cin = w.shape[:2]
    w = jnp.pad(w, ((0, cout_pad - cout), (0, cin_pad - cin), (0, 0), (0, 0)))
    w9 = jnp.transpose(w, (0, 2, 3, 1)).reshape(cout_pad, 9 * cin_pad).astype(jnp.bfloat16)
    bb = jnp.pad(b, (0, cout_pad - cout)).reshape(cout_pad, 1).astype(jnp.float32)
    return w9, bb


def _prep_cat_conv3(w, b, f_skip, f_up, cout_pad):
    """Conv over concat([skip, up]): per-tap K blocks ordered [skip_pad | up_pad]."""
    cout = w.shape[0]
    sp, up = _pad_to(f_skip), _pad_to(f_up)
    ws = jnp.pad(w[:, :f_skip], ((0, cout_pad - cout), (0, sp - f_skip), (0, 0), (0, 0)))
    wu = jnp.pad(w[:, f_skip:], ((0, cout_pad - cout), (0, up - f_up), (0, 0), (0, 0)))
    wc = jnp.concatenate([ws, wu], axis=1)                     # (Cout_p, sp+up, 3, 3)
    w9 = jnp.transpose(wc, (0, 2, 3, 1)).reshape(cout_pad, 9 * (sp + up)).astype(jnp.bfloat16)
    bb = jnp.pad(b, (0, cout_pad - cout)).reshape(cout_pad, 1).astype(jnp.float32)
    return w9, bb


def _prep_convT(w, b, cin_pad, cout_pad):
    """torch (Cin,Cout,2,2) -> (Cout_pad, 4*Cin_pad) bf16, tap-major K; bias f32."""
    cin, cout = w.shape[:2]
    w = jnp.pad(w, ((0, cin_pad - cin), (0, cout_pad - cout), (0, 0), (0, 0)))
    wt = jnp.transpose(w, (1, 2, 3, 0)).reshape(cout_pad, 4 * cin_pad).astype(jnp.bfloat16)
    bb = jnp.pad(b, (0, cout_pad - cout)).reshape(cout_pad, 1).astype(jnp.float32)
    return wt, bb


def _pool_sel(Wf, Hs, Ws):
    """0/1 matrix compacting the even-(row,col) lattice of the pair-max slab."""
    Hp, Wp = Hs // 2, Ws // 2
    L2 = (Hs - 1) * Wf + Ws
    Lh = L2 - Wf - 1
    sel = np.zeros((Lh, Hp * Wp), np.float32)
    for yp in range(Hp):
        for xp in range(Wp):
            sel[2 * yp * Wf + 2 * xp, yp * Wp + xp] = 1.0
    return jnp.asarray(sel, jnp.bfloat16)


def _upsample_scatter(Wfx, Hvx, Wvx, Wft):
    """0/1 scatter matrices for ConvTranspose(k=2,s=2): tap t=dy*2+dx, x-frame -> Wft-frame."""
    Lx = (Hvx - 1) * Wfx + Wvx
    Hu, Wu = 2 * Hvx, 2 * Wvx
    Lu = (Hu - 1) * Wft + Wu
    s = np.zeros((4, Lx, Lu), np.float32)
    for dy in range(2):
        for dx in range(2):
            for y in range(Hvx):
                for x in range(Wvx):
                    s[dy * 2 + dx, y * Wfx + x, (2 * y + dy) * Wft + 2 * x + dx] = 1.0
    return jnp.asarray(s, jnp.bfloat16)


def _compact_sel(Wf, Hv, Wv):
    """0/1 matrix compacting a frame's valid (Hv, Wv) region to Hv*Wv dense lanes."""
    L = (Hv - 1) * Wf + Wv
    sel = np.zeros((L, Hv * Wv), np.float32)
    for y in range(Hv):
        for x in range(Wv):
            sel[y * Wf + x, y * Wv + x] = 1.0
    return jnp.asarray(sel, jnp.bfloat16)


# --------------------------------------------------------------------------- #
# in-kernel building blocks (trace-level; operate on values + weight refs)
# --------------------------------------------------------------------------- #

def _conv3x3(x, w9_ref, b_ref, Wf):
    """Valid 3x3 conv in frame layout as ONE K=9*C MXU matmul. Returns f32 post-ReLU."""
    C, L = x.shape
    Lo = L - 2 * Wf - 2
    taps = [x[:, dy * Wf + dx: dy * Wf + dx + Lo] for dy in range(3) for dx in range(3)]
    x9 = jnp.concatenate(taps, axis=0)                         # (9C, Lo) sublane stack
    acc = jnp.dot(w9_ref[...], x9, preferred_element_type=jnp.float32) + b_ref[...]
    return jnp.maximum(acc, 0.0)


def _conv3x3_cat(skip, s_off, u, w9_ref, b_ref, Wf, Lo):
    """Valid 3x3 conv over implicit concat([cropped skip, up]); crop folded into tap offsets."""
    taps = []
    for dy in range(3):
        for dx in range(3):
            o = dy * Wf + dx
            taps.append(skip[:, s_off + o: s_off + o + Lo])
            taps.append(u[:, o: o + Lo])
    x9 = jnp.concatenate(taps, axis=0)
    acc = jnp.dot(w9_ref[...], x9, preferred_element_type=jnp.float32) + b_ref[...]
    return jnp.maximum(acc, 0.0)


def _maxpool2x2(h2, sel_ref, Wf):
    """2x2/2 maxpool: two whole-slab pair maxima (f32, VPU) + one compaction matmul."""
    Lv = h2.shape[1] - Wf
    v = jnp.maximum(h2[:, :Lv], h2[:, Wf:Wf + Lv])             # vertical pair max
    h = jnp.maximum(v[:, :Lv - 1], v[:, 1:Lv])                 # horizontal pair max
    return jnp.dot(h.astype(jnp.bfloat16), sel_ref[...],
                   preferred_element_type=jnp.float32).astype(jnp.bfloat16)


def _conv_transpose2x2(x, s_ref, wt_ref, bt_ref):
    """ConvTranspose2d(k=2,s=2): 4 precomputed 0/1 phase scatters of x + one K=4*Cin matmul."""
    xs = [jnp.dot(x, s_ref[t], preferred_element_type=jnp.float32).astype(jnp.bfloat16)
          for t in range(4)]
    x4 = jnp.concatenate(xs, axis=0)                           # (4*Cin, Lu)
    u = jnp.dot(wt_ref[...], x4, preferred_element_type=jnp.float32) + bt_ref[...]
    return u.astype(jnp.bfloat16)


def _take(it, k):
    return [next(it) for _ in range(k)]


# --------------------------------------------------------------------------- #
# fused forward builder (one pallas_call for the whole network)
# --------------------------------------------------------------------------- #

def build_unet_forward(torch_params, *, in_channels, out_channels, height, width, features):
    n_down = len(features)
    cin_pad = _pad_to(in_channels)
    consts, flops = [], 0

    # ------------------------------- encoder ------------------------------ #
    down_geo = []
    Wf, Hv, Wv = width, height, width
    cprev = cin_pad
    for i, f in enumerate(features):
        fp = _pad_to(f)
        assert Hv > 4 and Wv > 4, "spatial size too small for a valid double conv"
        Hs, Ws = Hv - 4, Wv - 4
        assert Hs % 2 == 0 and Ws % 2 == 0, "2x2/2 maxpool needs an even pre-pool size"
        L = (Hv - 1) * Wf + Wv
        L1, L2 = L - 2 * Wf - 2, L - 4 * Wf - 4
        (w1, b1), (w2, b2) = torch_params["downs"][i]
        consts += list(_prep_conv3(w1, b1, cprev, fp))
        consts += list(_prep_conv3(w2, b2, fp, fp))
        consts.append(_pool_sel(Wf, Hs, Ws))
        flops += 2 * fp * 9 * cprev * L1 + 2 * fp * 9 * fp * L2
        flops += 2 * fp * (L2 - Wf - 1) * (Hs // 2) * (Ws // 2)
        down_geo.append(dict(Wf=Wf, Hs=Hs, Ws=Ws, F=fp))
        Wf, Hv, Wv, cprev = Ws // 2, Hs // 2, Ws // 2, fp

    # ----------------------------- bottleneck ----------------------------- #
    assert Hv > 4 and Wv > 4, "spatial size too small for the bottleneck"
    fbp = _pad_to(2 * features[-1])
    Lb = (Hv - 1) * Wf + Wv
    (w1, b1), (w2, b2) = torch_params["bottleneck"]
    consts += list(_prep_conv3(w1, b1, cprev, fbp))
    consts += list(_prep_conv3(w2, b2, fbp, fbp))
    flops += 2 * fbp * 9 * cprev * (Lb - 2 * Wf - 2) + 2 * fbp * 9 * fbp * (Lb - 4 * Wf - 4)
    bott_Wf = Wf
    xg = dict(Wf=Wf, Hv=Hv - 4, Wv=Wv - 4, C=fbp)        # running decoder-input geometry

    # ------------------------------- decoder ------------------------------ #
    up_geo = []
    for j, f in enumerate(reversed(features)):
        fp = _pad_to(f)
        sk = down_geo[n_down - 1 - j]
        Hu, Wu = 2 * xg["Hv"], 2 * xg["Wv"]
        assert sk["Hs"] >= Hu and sk["Ws"] >= Wu, "skip smaller than the upsampled map"
        Wft = sk["Wf"]                                    # decoder works in the skip's frame
        Lx = (xg["Hv"] - 1) * xg["Wf"] + xg["Wv"]
        Lu = (Hu - 1) * Wft + Wu
        L1 = Lu - 2 * Wft - 2
        L2d = L1 - 2 * Wft - 2
        (wt, bt), (w1, b1), (w2, b2) = torch_params["ups"][j]
        consts.append(_upsample_scatter(xg["Wf"], xg["Hv"], xg["Wv"], Wft))
        consts += list(_prep_convT(wt, bt, xg["C"], fp))
        consts += list(_prep_cat_conv3(w1, b1, f, f, fp))
        consts += list(_prep_conv3(w2, b2, fp, fp))
        # TODO(synk): crop_img uses the H-dim delta for both dims; per-dim offsets here are
        # identical for square inputs (which is all this toy config exercises).
        s_off = ((sk["Hs"] - Hu) // 2) * Wft + (sk["Ws"] - Wu) // 2
        up_geo.append(dict(Wft=Wft, L1=L1, s_off=s_off, skip_idx=n_down - 1 - j))
        flops += 8 * xg["C"] * Lx * Lu + 2 * fp * 4 * xg["C"] * Lu
        flops += 2 * fp * 9 * (sk["F"] + fp) * L1 + 2 * fp * 9 * fp * L2d
        xg = dict(Wf=Wft, Hv=Hu - 4, Wv=Wu - 4, C=fp)

    # ---------------------------- final 1x1 conv --------------------------- #
    coutp = ((max(out_channels, 8) + 7) // 8) * 8          # f32 sublane quantum
    Hout, Wout, Cl = xg["Hv"], xg["Wv"], xg["C"]
    Lf = (Hout - 1) * xg["Wf"] + Wout
    fw, fbias = torch_params["final"]
    fwk = jnp.pad(fw.reshape(out_channels, -1),
                  ((0, coutp - out_channels), (0, Cl - fw.shape[1]))).astype(jnp.bfloat16)
    fbk = jnp.pad(fbias, (0, coutp - out_channels)).reshape(coutp, 1).astype(jnp.float32)
    consts += [fwk, fbk, _compact_sel(xg["Wf"], Hout, Wout)]
    flops += 2 * Cl * Lf * Hout * Wout + 2 * coutp * Cl * Hout * Wout

    Lin = height * width
    const_bytes = int(sum(int(c.size) * c.dtype.itemsize for c in consts))

    # -------------------------------- kernel ------------------------------- #
    def kernel(x_ref, *rest):
        o_ref = rest[-1]
        it = iter(rest[:-1])
        x = x_ref[0]                                       # (Cin_pad, H*W) bf16

        skips = []
        for g in down_geo:                                 # encoder stages
            w1r, b1r, w2r, b2r, pselr = _take(it, 5)
            h1 = _conv3x3(x, w1r, b1r, g["Wf"]).astype(jnp.bfloat16)
            h2 = _conv3x3(h1, w2r, b2r, g["Wf"])           # f32 for the pooling epilogue
            skips.append(h2.astype(jnp.bfloat16))
            x = _maxpool2x2(h2, pselr, g["Wf"])

        w1r, b1r, w2r, b2r = _take(it, 4)                  # bottleneck
        h1 = _conv3x3(x, w1r, b1r, bott_Wf).astype(jnp.bfloat16)
        x = _conv3x3(h1, w2r, b2r, bott_Wf).astype(jnp.bfloat16)

        for g in up_geo:                                   # decoder stages
            supr, wtr, btr, w1r, b1r, w2r, b2r = _take(it, 7)
            u = _conv_transpose2x2(x, supr, wtr, btr)
            h1 = _conv3x3_cat(skips[g["skip_idx"]], g["s_off"], u, w1r, b1r,
                              g["Wft"], g["L1"]).astype(jnp.bfloat16)
            x = _conv3x3(h1, w2r, b2r, g["Wft"]).astype(jnp.bfloat16)

        fwr, fbr, fselr = _take(it, 3)                     # final 1x1 conv (f32 output)
        xc = jnp.dot(x, fselr[...], preferred_element_type=jnp.float32).astype(jnp.bfloat16)
        o_ref[0] = jnp.dot(fwr[...], xc, preferred_element_type=jnp.float32) + fbr[...]

    in_specs = [pl.BlockSpec((1, cin_pad, Lin), lambda n: (n, 0, 0))]
    for c in consts:
        in_specs.append(pl.BlockSpec(c.shape, lambda n, nd=c.ndim: (0,) * nd))
    out_spec = pl.BlockSpec((1, coutp, Hout * Wout), lambda n: (n, 0, 0))

    def forward(x_nchw):
        N = x_nchw.shape[0]
        xx = x_nchw.astype(jnp.bfloat16).reshape(N, in_channels, Lin)
        if cin_pad > in_channels:
            xx = jnp.pad(xx, ((0, 0), (0, cin_pad - in_channels), (0, 0)))
        cost = pl.CostEstimate(
            flops=int(N * flops), transcendentals=0,
            bytes_accessed=int(N * (cin_pad * Lin * 2 + coutp * Hout * Wout * 4) + const_bytes))
        y = pl.pallas_call(
            kernel,
            out_shape=jax.ShapeDtypeStruct((N, coutp, Hout * Wout), jnp.float32),
            grid=(N,),
            in_specs=in_specs,
            out_specs=out_spec,
            compiler_params=pltpu.CompilerParams(
                dimension_semantics=("parallel",),          # batch axis feeds both v7x TCs
                vmem_limit_bytes=32 * 1024 * 1024),
            cost_estimate=cost,
        )(xx, *consts)
        return y[:, :out_channels, :].reshape(N, out_channels, Hout, Wout)

    return jax.jit(forward)


# --------------------------------------------------------------------------- #
# parameter init (PyTorch layouts) + pure-JAX reference (mirrors nn.Module)
# --------------------------------------------------------------------------- #

def init_unet_params(key, in_channels=3, out_channels=1, features=(8, 16)):
    keys = iter(jax.random.split(key, 64))

    def conv_p(cin, cout, k):
        w = jax.random.normal(next(keys), (cout, cin, k, k), jnp.float32) / np.sqrt(cin * k * k)
        b = jax.random.normal(next(keys), (cout,), jnp.float32) * 0.01
        return w, b

    downs, cin = [], in_channels
    for f in features:
        downs.append((conv_p(cin, f, 3), conv_p(f, f, 3)))
        cin = f
    bott = (conv_p(features[-1], 2 * features[-1], 3),
            conv_p(2 * features[-1], 2 * features[-1], 3))
    ups = []
    for f in reversed(features):
        wt = jax.random.normal(next(keys), (2 * f, f, 2, 2), jnp.float32) / np.sqrt(2 * f * 4)
        bt = jax.random.normal(next(keys), (f,), jnp.float32) * 0.01
        ups.append(((wt, bt), conv_p(2 * f, f, 3), conv_p(f, f, 3)))
    final = conv_p(features[0], out_channels, 1)
    return dict(downs=downs, bottleneck=bott, ups=ups, final=final)


def unet_reference(tp, x):
    bf = jnp.bfloat16

    def conv(xx, w, b, relu):
        y = lax.conv_general_dilated(xx.astype(bf), w.astype(bf), (1, 1), "VALID",
                                     dimension_numbers=("NCHW", "OIHW", "NCHW"),
                                     preferred_element_type=jnp.float32)
        y = y + b.reshape(1, -1, 1, 1)
        if relu:
            y = jnp.maximum(y, 0.0)
        return y.astype(bf)

    def dconv(xx, c1, c2):
        (w1, b1), (w2, b2) = c1, c2
        return conv(conv(xx, w1, b1, True), w2, b2, True)

    def pool(xx):
        n, c, h, w = xx.shape
        return xx.reshape(n, c, h // 2, 2, w // 2, 2).max(axis=(3, 5))

    def convT(xx, w, b):
        t = jnp.einsum("nchw,coij->nohiwj", xx.astype(bf), w.astype(bf),
                       preferred_element_type=jnp.float32)
        n, o, h, _, wd, _ = t.shape
        return (t.reshape(n, o, 2 * h, 2 * wd) + b.reshape(1, -1, 1, 1)).astype(bf)

    def crop(t, target):
        ts, tg = t.shape[2], target.shape[2]
        d = ts - tg
        if d % 2 == 0:
            d //= 2
            return t[:, :, d:ts - d, d:ts - d]
        d //= 2
        return t[:, :, d:ts - d - 1, d:ts - d - 1]

    skips, xx = [], x
    for c1, c2 in tp["downs"]:
        xx = dconv(xx, c1, c2)
        skips.append(xx)
        xx = pool(xx)
    xx = dconv(xx, *tp["bottleneck"])
    for ((wt, bt), c1, c2), sk in zip(tp["ups"], skips[::-1]):
        xx = convT(xx, wt, bt)
        if sk.shape != xx.shape:
            sk = crop(sk, xx)
        xx = dconv(jnp.concatenate([sk, xx], axis=1), c1, c2)
    fw, fb = tp["final"]
    y = lax.conv_general_dilated(xx.astype(bf), fw.astype(bf), (1, 1), "VALID",
                                 dimension_numbers=("NCHW", "OIHW", "NCHW"),
                                 preferred_element_type=jnp.float32)
    return y + fb.reshape(1, -1, 1, 1)


# --------------------------------------------------------------------------- #

if __name__ == "__main__":
    key = jax.random.PRNGKey(0)
    k_in, k_par = jax.random.split(key)
    # small UNet: features=(8,16); spatial 44 keeps every valid conv / pool / up-conv
    # positive-sized (final output spatial = 4).
    H = W = 44
    x = jax.random.normal(k_in, (2, 3, H, W), jnp.float32)          # NCHW like PyTorch
    torch_params = init_unet_params(k_par, in_channels=3, out_channels=1, features=(8, 16))

    fwd = build_unet_forward(torch_params, in_channels=3, out_channels=1,
                             height=H, width=W, features=(8, 16))
    y = jax.block_until_ready(fwd(x))
    assert y.shape == (2, 1, 4, 4), y.shape
    assert bool(jnp.all(jnp.isfinite(y)))

    # loose correctness check against a pure-JAX reference (bf16 MXU noise tolerated)
    y_ref = jax.block_until_ready(jax.jit(unet_reference)(torch_params, x))
    err = float(jnp.max(jnp.abs(y - y_ref)))
    scale = float(jnp.max(jnp.abs(y_ref)))
    assert err <= 0.05 * (scale + 1.0), (err, scale)

    print("KERNEL_OK")
</pallas_src>

<mosaic_0001>
module attributes {stable_mosaic.version = 11 : i64} {
  func.func @kernel(%arg0: i32, %arg1: memref<1x16x1936xbf16, #tpu.memory_space<vmem>>, %arg2: memref<16x144xbf16, #tpu.memory_space<vmem>>, %arg3: memref<16x1xf32, #tpu.memory_space<vmem>>, %arg4: memref<16x144xbf16, #tpu.memory_space<vmem>>, %arg5: memref<16x1xf32, #tpu.memory_space<vmem>>, %arg6: memref<1711x400xbf16, #tpu.memory_space<vmem>>, %arg7: memref<16x144xbf16, #tpu.memory_space<vmem>>, %arg8: memref<16x1xf32, #tpu.memory_space<vmem>>, %arg9: memref<16x144xbf16, #tpu.memory_space<vmem>>, %arg10: memref<16x1xf32, #tpu.memory_space<vmem>>, %arg11: memref<295x64xbf16, #tpu.memory_space<vmem>>, %arg12: memref<32x144xbf16, #tpu.memory_space<vmem>>, %arg13: memref<32x1xf32, #tpu.memory_space<vmem>>, %arg14: memref<32x288xbf16, #tpu.memory_space<vmem>>, %arg15: memref<32x1xf32, #tpu.memory_space<vmem>>, %arg16: memref<4x28x148xbf16, #tpu.memory_space<vmem>>, %arg17: memref<16x128xbf16, #tpu.memory_space<vmem>>, %arg18: memref<16x1xf32, #tpu.memory_space<vmem>>, %arg19: memref<16x288xbf16, #tpu.memory_space<vmem>>, %arg20: memref<16x1xf32, #tpu.memory_space<vmem>>, %arg21: memref<16x144xbf16, #tpu.memory_space<vmem>>, %arg22: memref<16x1xf32, #tpu.memory_space<vmem>>, %arg23: memref<4x64x316xbf16, #tpu.memory_space<vmem>>, %arg24: memref<16x64xbf16, #tpu.memory_space<vmem>>, %arg25: memref<16x1xf32, #tpu.memory_space<vmem>>, %arg26: memref<16x288xbf16, #tpu.memory_space<vmem>>, %arg27: memref<16x1xf32, #tpu.memory_space<vmem>>, %arg28: memref<16x144xbf16, #tpu.memory_space<vmem>>, %arg29: memref<16x1xf32, #tpu.memory_space<vmem>>, %arg30: memref<8x16xbf16, #tpu.memory_space<vmem>>, %arg31: memref<8x1xf32, #tpu.memory_space<vmem>>, %arg32: memref<136x16xbf16, #tpu.memory_space<vmem>>, %arg33: memref<1x8x16xf32, #tpu.memory_space<vmem>>) attributes {dimension_semantics = [#tpu.dimension_semantics<parallel>], iteration_bounds = array<i64: 2>, scalar_prefetch = 0 : i64, scratch_operands = 0 : i64, tpu.core_type = #tpu.core_type<tc>, window_params = [{transform_indices = @transform_0, window_bounds = array<i64: 1, 16, 1936>}, {pipeline_mode = #tpu.pipeline_mode<synchronous>, transform_indices = @transform_1, window_bounds = array<i64: 16, 144>}, {pipeline_mode = #tpu.pipeline_mode<synchronous>, transform_indices = @transform_2, window_bounds = array<i64: 16, 1>}, {pipeline_mode = #tpu.pipeline_mode<synchronous>, transform_indices = @transform_3, window_bounds = array<i64: 16, 144>}, {pipeline_mode = #tpu.pipeline_mode<synchronous>, transform_indices = @transform_4, window_bounds = array<i64: 16, 1>}, {pipeline_mode = #tpu.pipeline_mode<synchronous>, transform_indices = @transform_5, window_bounds = array<i64: 1711, 400>}, {pipeline_mode = #tpu.pipeline_mode<synchronous>, transform_indices = @transform_6, window_bounds = array<i64: 16, 144>}, {pipeline_mode = #tpu.pipeline_mode<synchronous>, transform_indices = @transform_7, window_bounds = array<i64: 16, 1>}, {pipeline_mode = #tpu.pipeline_mode<synchronous>, transform_indices = @transform_8, window_bounds = array<i64: 16, 144>}, {pipeline_mode = #tpu.pipeline_mode<synchronous>, transform_indices = @transform_9, window_bounds = array<i64: 16, 1>}, {pipeline_mode = #tpu.pipeline_mode<synchronous>, transform_indices = @transform_10, window_bounds = array<i64: 295, 64>}, {pipeline_mode = #tpu.pipeline_mode<synchronous>, transform_indices = @transform_11, window_bounds = array<i64: 32, 144>}, {pipeline_mode = #tpu.pipeline_mode<synchronous>, transform_indices = @transform_12, window_bounds = array<i64: 32, 1>}, {pipeline_mode = #tpu.pipeline_mode<synchronous>, transform_indices = @transform_13, window_bounds = array<i64: 32, 288>}, {pipeline_mode = #tpu.pipeline_mode<synchronous>, transform_indices = @transform_14, window_bounds = array<i64: 32, 1>}, {pipeline_mode = #tpu.pipeline_mode<synchronous>, transform_indices = @transform_15, window_bounds = array<i64: 4, 28, 148>}, {pipeline_mode = #tpu.pipeline_mode<synchronous>, transform_indices = @transform_16, window_bounds = array<i64: 16, 128>}, {pipeline_mode = #tpu.pipeline_mode<synchronous>, transform_indices = @transform_17, window_bounds = array<i64: 16, 1>}, {pipeline_mode = #tpu.pipeline_mode<synchronous>, transform_indices = @transform_18, window_bounds = array<i64: 16, 288>}, {pipeline_mode = #tpu.pipeline_mode<synchronous>, transform_indices = @transform_19, window_bounds = array<i64: 16, 1>}, {pipeline_mode = #tpu.pipeline_mode<synchronous>, transform_indices = @transform_20, window_bounds = array<i64: 16, 144>}, {pipeline_mode = #tpu.pipeline_mode<synchronous>, transform_indices = @transform_21, window_bounds = array<i64: 16, 1>}, {pipeline_mode = #tpu.pipeline_mode<synchronous>, transform_indices = @transform_22, window_bounds = array<i64: 4, 64, 316>}, {pipeline_mode = #tpu.pipeline_mode<synchronous>, transform_indices = @transform_23, window_bounds = array<i64: 16, 64>}, {pipeline_mode = #tpu.pipeline_mode<synchronous>, transform_indices = @transform_24, window_bounds = array<i64: 16, 1>}, {pipeline_mode = #tpu.pipeline_mode<synchronous>, transform_indices = @transform_25, window_bounds = array<i64: 16, 288>}, {pipeline_mode = #tpu.pipeline_mode<synchronous>, transform_indices = @transform_26, window_bounds = array<i64: 16, 1>}, {pipeline_mode = #tpu.pipeline_mode<synchronous>, transform_indices = @transform_27, window_bounds = array<i64: 16, 144>}, {pipeline_mode = #tpu.pipeline_mode<synchronous>, transform_indices = @transform_28, window_bounds = array<i64: 16, 1>}, {pipeline_mode = #tpu.pipeline_mode<synchronous>, transform_indices = @transform_29, window_bounds = array<i64: 8, 16>}, {pipeline_mode = #tpu.pipeline_mode<synchronous>, transform_indices = @transform_30, window_bounds = array<i64: 8, 1>}, {pipeline_mode = #tpu.pipeline_mode<synchronous>, transform_indices = @transform_31, window_bounds = array<i64: 136, 16>}, {transform_indices = @transform_32, window_bounds = array<i64: 1, 8, 16>}]} {
    %c0 = arith.constant 0 : index
    %c0_0 = arith.constant 0 : index
    %c0_1 = arith.constant 0 : index
    %0 = vector.load %arg1[%c0, %c0_0, %c0_1] : memref<1x16x1936xbf16, #tpu.memory_space<vmem>>, vector<1x16x1936xbf16>
    %1 = vector.shape_cast %0 : vector<1x16x1936xbf16> to vector<16x1936xbf16>
    %2 = vector.extract_strided_slice %1 {offsets = [0, 0], sizes = [16, 1846], strides = [1, 1]} : vector<16x1936xbf16> to vector<16x1846xbf16>
    %3 = vector.extract_strided_slice %1 {offsets = [0, 1], sizes = [16, 1846], strides = [1, 1]} : vector<16x1936xbf16> to vector<16x1846xbf16>
    %4 = vector.extract_strided_slice %1 {offsets = [0, 2], sizes = [16, 1846], strides = [1, 1]} : vector<16x1936xbf16> to vector<16x1846xbf16>
    %5 = vector.extract_strided_slice %1 {offsets = [0, 44], sizes = [16, 1846], strides = [1, 1]} : vector<16x1936xbf16> to vector<16x1846xbf16>
    %6 = vector.extract_strided_slice %1 {offsets = [0, 45], sizes = [16, 1846], strides = [1, 1]} : vector<16x1936xbf16> to vector<16x1846xbf16>
    %7 = vector.extract_strided_slice %1 {offsets = [0, 46], sizes = [16, 1846], strides = [1, 1]} : vector<16x1936xbf16> to vector<16x1846xbf16>
    %8 = vector.extract_strided_slice %1 {offsets = [0, 88], sizes = [16, 1846], strides = [1, 1]} : vector<16x1936xbf16> to vector<16x1846xbf16>
    %9 = vector.extract_strided_slice %1 {offsets = [0, 89], sizes = [16, 1846], strides = [1, 1]} : vector<16x1936xbf16> to vector<16x1846xbf16>
    %10 = vector.extract_strided_slice %1 {offsets = [0, 90], sizes = [16, 1846], strides = [1, 1]} : vector<16x1936xbf16> to vector<16x1846xbf16>
    %11 = tpu.concatenate %2, %3, %4, %5, %6, %7, %8, %9, %10 in 0 : vector<16x1846xbf16>, vector<16x1846xbf16>, vector<16x1846xbf16>, vector<16x1846xbf16>, vector<16x1846xbf16>, vector<16x1846xbf16>, vector<16x1846xbf16>, vector<16x1846xbf16>, vector<16x1846xbf16> -> vector<144x1846xbf16>
    %c0_2 = arith.constant 0 : index
    %c0_3 = arith.constant 0 : index
    %12 = vector.load %arg2[%c0_2, %c0_3] : memref<16x144xbf16, #tpu.memory_space<vmem>>, vector<16x144xbf16>
    %cst = arith.constant dense<0.000000e+00> : vector<16x1846xf32>
    %13 = tpu.matmul %12, %11, %cst {dimension_numbers = #tpu.dot_dimension_numbers<[1], [0], [0], [1], [0, 0, 1, 1], [], []>} : vector<16x144xbf16>, vector<144x1846xbf16>, vector<16x1846xf32> -> vector<16x1846xf32>
    %c0_4 = arith.constant 0 : index
    %c0_5 = arith.constant 0 : index
    %14 = vector.load %arg3[%c0_4, %c0_5] : memref<16x1xf32, #tpu.memory_space<vmem>>, vector<16x1xf32>
    %15 = vector.broadcast %14 : vector<16x1xf32> to vector<16x1846xf32>
    %16 = arith.addf %13, %15 : vector<16x1846xf32>
    %cst_6 = arith.constant 0.000000e+00 : f32
    %17 = vector.broadcast %cst_6 : f32 to vector<16x1846xf32>
    %18 = arith.maximumf %16, %17 : vector<16x1846xf32>
    %19 = arith.truncf %18 : vector<16x1846xf32> to vector<16x1846xbf16>
    %20 = vector.extract_strided_slice %19 {offsets = [0, 0], sizes = [16, 1756], strides = [1, 1]} : vector<16x1846xbf16> to vector<16x1756xbf16>
    %21 = vector.extract_strided_slice %19 {offsets = [0, 1], sizes = [16, 1756], strides = [1, 1]} : vector<16x1846xbf16> to vector<16x1756xbf16>
    %22 = vector.extract_strided_slice %19 {offsets = [0, 2], sizes = [16, 1756], strides = [1, 1]} : vector<16x1846xbf16> to vector<16x1756xbf16>
    %23 = vector.extract_strided_slice %19 {offsets = [0, 44], sizes = [16, 1756], strides = [1, 1]} : vector<16x1846xbf16> to vector<16x1756xbf16>
    %24 = vector.extract_strided_slice %19 {offsets = [0, 45], sizes = [16, 1756], strides = [1, 1]} : vector<16x1846xbf16> to vector<16x1756xbf16>
    %25 = vector.extract_strided_slice %19 {offsets = [0, 46], sizes = [16, 1756], strides = [1, 1]} : vector<16x1846xbf16> to vector<16x1756xbf16>
    %26 = vector.extract_strided_slice %19 {offsets = [0, 88], sizes = [16, 1756], strides = [1, 1]} : vector<16x1846xbf16> to vector<16x1756xbf16>
    %27 = vector.extract_strided_slice %19 {offsets = [0, 89], sizes = [16, 1756], strides = [1, 1]} : vector<16x1846xbf16> to vector<16x1756xbf16>
    %28 = vector.extract_strided_slice %19 {offsets = [0, 90], sizes = [16, 1756], strides = [1, 1]} : vector<16x1846xbf16> to vector<16x1756xbf16>
    %29 = tpu.concatenate %20, %21, %22, %23, %24, %25, %26, %27, %28 in 0 : vector<16x1756xbf16>, vector<16x1756xbf16>, vector<16x1756xbf16>, vector<16x1756xbf16>, vector<16x1756xbf16>, vector<16x1756xbf16>, vector<16x1756xbf16>, vector<16x1756xbf16>, vector<16x1756xbf16> -> vector<144x1756xbf16>
    %c0_7 = arith.constant 0 : index
    %c0_8 = arith.constant 0 : index
    %30 = vector.load %arg4[%c0_7, %c0_8] : memref<16x144xbf16, #tpu.memory_space<vmem>>, vector<16x144xbf16>
    %cst_9 = arith.constant dense<0.000000e+00> : vector<16x1756xf32>
    %31 = tpu.matmul %30, %29, %cst_9 {dimension_numbers = #tpu.dot_dimension_numbers<[1], [0], [0], [1], [0, 0, 1, 1], [], []>} : vector<16x144xbf16>, vector<144x1756xbf16>, vector<16x1756xf32> -> vector<16x1756xf32>
    %c0_10 = arith.constant 0 : index
    %c0_11 = arith.constant 0 : index
    %32 = vector.load %arg5[%c0_10, %c0_11] : memref<16x1xf32, #tpu.memory_space<vmem>>, vector<16x1xf32>
    %33 = vector.broadcast %32 : vector<16x1xf32> to vector<16x1756xf32>
    %34 = arith.addf %31, %33 : vector<16x1756xf32>
    %cst_12 = arith.constant 0.000000e+00 : f32
    %35 = vector.broadcast %cst_12 : f32 to vector<16x1756xf32>
    %36 = arith.maximumf %34, %35 : vector<16x1756xf32>
    %37 = arith.truncf %36 : vector<16x1756xf32> to vector<16x1756xbf16>
    %38 = vector.extract_strided_slice %36 {offsets = [0, 0], sizes = [16, 1712], strides = [1, 1]} : vector<16x1756xf32> to vector<16x1712xf32>
    %39 = vector.extract_strided_slice %36 {offsets = [0, 44], sizes = [16, 1712], strides = [1, 1]} : vector<16x1756xf32> to vector<16x1712xf32>
    %40 = arith.maximumf %38, %39 : vector<16x1712xf32>
    %41 = vector.extract_strided_slice %40 {offsets = [0, 0], sizes = [16, 1711], strides = [1, 1]} : vector<16x1712xf32> to vector<16x1711xf32>
    %42 = vector.extract_strided_slice %40 {offsets = [0, 1], sizes = [16, 1711], strides = [1, 1]} : vector<16x1712xf32> to vector<16x1711xf32>
    %43 = arith.maximumf %41, %42 : vector<16x1711xf32>
    %44 = arith.truncf %43 : vector<16x1711xf32> to vector<16x1711xbf16>
    %c0_13 = arith.constant 0 : index
    %c0_14 = arith.constant 0 : index
    %45 = vector.load %arg6[%c0_13, %c0_14] : memref<1711x400xbf16, #tpu.memory_space<vmem>>, vector<1711x400xbf16>
    %cst_15 = arith.constant dense<0.000000e+00> : vector<16x400xf32>
    %46 = tpu.matmul %44, %45, %cst_15 {dimension_numbers = #tpu.dot_dimension_numbers<[1], [0], [0], [1], [0, 0, 1, 1], [], []>} : vector<16x1711xbf16>, vector<1711x400xbf16>, vector<16x400xf32> -> vector<16x400xf32>
    %47 = arith.truncf %46 : vector<16x400xf32> to vector<16x400xbf16>
    %48 = vector.extract_strided_slice %47 {offsets = [0, 0], sizes = [16, 358], strides = [1, 1]} : vector<16x400xbf16> to vector<16x358xbf16>
    %49 = vector.extract_strided_slice %47 {offsets = [0, 1], sizes = [16, 358], strides = [1, 1]} : vector<16x400xbf16> to vector<16x358xbf16>
    %50 = vector.extract_strided_slice %47 {offsets = [0, 2], sizes = [16, 358], strides = [1, 1]} : vector<16x400xbf16> to vector<16x358xbf16>
    %51 = vector.extract_strided_slice %47 {offsets = [0, 20], sizes = [16, 358], strides = [1, 1]} : vector<16x400xbf16> to vector<16x358xbf16>
    %52 = vector.extract_strided_slice %47 {offsets = [0, 21], sizes = [16, 358], strides = [1, 1]} : vector<16x400xbf16> to vector<16x358xbf16>
    %53 = vector.extract_strided_slice %47 {offsets = [0, 22], sizes = [16, 358], strides = [1, 1]} : vector<16x400xbf16> to vector<16x358xbf16>
    %54 = vector.extract_strided_slice %47 {offsets = [0, 40], sizes = [16, 358], strides = [1, 1]} : vector<16x400xbf16> to vector<16x358xbf16>
    %55 = vector.extract_strided_slice %47 {offsets = [0, 41], sizes = [16, 358], strides = [1, 1]} : vector<16x400xbf16> to vector<16x358xbf16>
    %56 = vector.extract_strided_slice %47 {offsets = [0, 42], sizes = [16, 358], strides = [1, 1]} : vector<16x400xbf16> to vector<16x358xbf16>
    %57 = tpu.concatenate %48, %49, %50, %51, %52, %53, %54, %55, %56 in 0 : vector<16x358xbf16>, vector<16x358xbf16>, vector<16x358xbf16>, vector<16x358xbf16>, vector<16x358xbf16>, vector<16x358xbf16>, vector<16x358xbf16>, vector<16x358xbf16>, vector<16x358xbf16> -> vector<144x358xbf16>
    %c0_16 = arith.constant 0 : index
    %c0_17 = arith.constant 0 : index
    %58 = vector.load %arg7[%c0_16, %c0_17] : memref<16x144xbf16, #tpu.memory_space<vmem>>, vector<16x144xbf16>
    %cst_18 = arith.constant dense<0.000000e+00> : vector<16x358xf32>
    %59 = tpu.matmul %58, %57, %cst_18 {dimension_numbers = #tpu.dot_dimension_numbers<[1], [0], [0], [1], [0, 0, 1, 1], [], []>} : vector<16x144xbf16>, vector<144x358xbf16>, vector<16x358xf32> -> vector<16x358xf32>
    %c0_19 = arith.constant 0 : index
    %c0_20 = arith.constant 0 : index
    %60 = vector.load %arg8[%c0_19, %c0_20] : memref<16x1xf32, #tpu.memory_space<vmem>>, vector<16x1xf32>
    %61 = vector.broadcast %60 : vector<16x1xf32> to vector<16x358xf32>
    %62 = arith.addf %59, %61 : vector<16x358xf32>
    %cst_21 = arith.constant 0.000000e+00 : f32
    %63 = vector.broadcast %cst_21 : f32 to vector<16x358xf32>
    %64 = arith.maximumf %62, %63 : vector<16x358xf32>
    %65 = arith.truncf %64 : vector<16x358xf32> to vector<16x358xbf16>
    %66 = vector.extract_strided_slice %65 {offsets = [0, 0], sizes = [16, 316], strides = [1, 1]} : vector<16x358xbf16> to vector<16x316xbf16>
    %67 = vector.extract_strided_slice %65 {offsets = [0, 1], sizes = [16, 316], strides = [1, 1]} : vector<16x358xbf16> to vector<16x316xbf16>
    %68 = vector.extract_strided_slice %65 {offsets = [0, 2], sizes = [16, 316], strides = [1, 1]} : vector<16x358xbf16> to vector<16x316xbf16>
    %69 = vector.extract_strided_slice %65 {offsets = [0, 20], sizes = [16, 316], strides = [1, 1]} : vector<16x358xbf16> to vector<16x316xbf16>
    %70 = vector.extract_strided_slice %65 {offsets = [0, 21], sizes = [16, 316], strides = [1, 1]} : vector<16x358xbf16> to vector<16x316xbf16>
    %71 = vector.extract_strided_slice %65 {offsets = [0, 22], sizes = [16, 316], strides = [1, 1]} : vector<16x358xbf16> to vector<16x316xbf16>
    %72 = vector.extract_strided_slice %65 {offsets = [0, 40], sizes = [16, 316], strides = [1, 1]} : vector<16x358xbf16> to vector<16x316xbf16>
    %73 = vector.extract_strided_slice %65 {offsets = [0, 41], sizes = [16, 316], strides = [1, 1]} : vector<16x358xbf16> to vector<16x316xbf16>
    %74 = vector.extract_strided_slice %65 {offsets = [0, 42], sizes = [16, 316], strides = [1, 1]} : vector<16x358xbf16> to vector<16x316xbf16>
    %75 = tpu.concatenate %66, %67, %68, %69, %70, %71, %72, %73, %74 in 0 : vector<16x316xbf16>, vector<16x316xbf16>, vector<16x316xbf16>, vector<16x316xbf16>, vector<16x316xbf16>, vector<16x316xbf16>, vector<16x316xbf16>, vector<16x316xbf16>, vector<16x316xbf16> -> vector<144x316xbf16>
    %c0_22 = arith.constant 0 : index
    %c0_23 = arith.constant 0 : index
    %76 = vector.load %arg9[%c0_22, %c0_23] : memref<16x144xbf16, #tpu.memory_space<vmem>>, vector<16x144xbf16>
    %cst_24 = arith.constant dense<0.000000e+00> : vector<16x316xf32>
    %77 = tpu.matmul %76, %75, %cst_24 {dimension_numbers = #tpu.dot_dimension_numbers<[1], [0], [0], [1], [0, 0, 1, 1], [], []>} : vector<16x144xbf16>, vector<144x316xbf16>, vector<16x316xf32> -> vector<16x316xf32>
    %c0_25 = arith.constant 0 : index
    %c0_26 = arith.constant 0 : index
    %78 = vector.load %arg10[%c0_25, %c0_26] : memref<16x1xf32, #tpu.memory_space<vmem>>, vector<16x1xf32>
    %79 = vector.broadcast %78 : vector<16x1xf32> to vector<16x316xf32>
    %80 = arith.addf %77, %79 : vector<16x316xf32>
    %cst_27 = arith.constant 0.000000e+00 : f32
    %81 = vector.broadcast %cst_27 : f32 to vector<16x316xf32>
    %82 = arith.maximumf %80, %81 : vector<16x316xf32>
    %83 = arith.truncf %82 : vector<16x316xf32> to vector<16x316xbf16>
    %84 = vector.extract_strided_slice %82 {offsets = [0, 0], sizes = [16, 296], strides = [1, 1]} : vector<16x316xf32> to vector<16x296xf32>
    %85 = vector.extract_strided_slice %82 {offsets = [0, 20], sizes = [16, 296], strides = [1, 1]} : vector<16x316xf32> to vector<16x296xf32>
    %86 = arith.maximumf %84, %85 : vector<16x296xf32>
    %87 = vector.extract_strided_slice %86 {offsets = [0, 0], sizes = [16, 295], strides = [1, 1]} : vector<16x296xf32> to vector<16x295xf32>
    %88 = vector.extract_strided_slice %86 {offsets = [0, 1], sizes = [16, 295], strides = [1, 1]} : vector<16x296xf32> to vector<16x295xf32>
    %89 = arith.maximumf %87, %88 : vector<16x295xf32>
    %90 = arith.truncf %89 : vector<16x295xf32> to vector<16x295xbf16>
    %c0_28 = arith.constant 0 : index
    %c0_29 = arith.constant 0 : index
    %91 = vector.load %arg11[%c0_28, %c0_29] : memref<295x64xbf16, #tpu.memory_space<vmem>>, vector<295x64xbf16>
    %cst_30 = arith.constant dense<0.000000e+00> : vector<16x64xf32>
    %92 = tpu.matmul %90, %91, %cst_30 {dimension_numbers = #tpu.dot_dimension_numbers<[1], [0], [0], [1], [0, 0, 1, 1], [], []>} : vector<16x295xbf16>, vector<295x64xbf16>, vector<16x64xf32> -> vector<16x64xf32>
    %93 = arith.truncf %92 : vector<16x64xf32> to vector<16x64xbf16>
    %94 = vector.extract_strided_slice %93 {offsets = [0, 0], sizes = [16, 46], strides = [1, 1]} : vector<16x64xbf16> to vector<16x46xbf16>
    %95 = vector.extract_strided_slice %93 {offsets = [0, 1], sizes = [16, 46], strides = [1, 1]} : vector<16x64xbf16> to vector<16x46xbf16>
    %96 = vector.extract_strided_slice %93 {offsets = [0, 2], sizes = [16, 46], strides = [1, 1]} : vector<16x64xbf16> to vector<16x46xbf16>
    %97 = vector.extract_strided_slice %93 {offsets = [0, 8], sizes = [16, 46], strides = [1, 1]} : vector<16x64xbf16> to vector<16x46xbf16>
    %98 = vector.extract_strided_slice %93 {offsets = [0, 9], sizes = [16, 46], strides = [1, 1]} : vector<16x64xbf16> to vector<16x46xbf16>
    %99 = vector.extract_strided_slice %93 {offsets = [0, 10], sizes = [16, 46], strides = [1, 1]} : vector<16x64xbf16> to vector<16x46xbf16>
    %100 = vector.extract_strided_slice %93 {offsets = [0, 16], sizes = [16, 46], strides = [1, 1]} : vector<16x64xbf16> to vector<16x46xbf16>
    %101 = vector.extract_strided_slice %93 {offsets = [0, 17], sizes = [16, 46], strides = [1, 1]} : vector<16x64xbf16> to vector<16x46xbf16>
    %102 = vector.extract_strided_slice %93 {offsets = [0, 18], sizes = [16, 46], strides = [1, 1]} : vector<16x64xbf16> to vector<16x46xbf16>
    %103 = tpu.concatenate %94, %95, %96, %97, %98, %99, %100, %101, %102 in 0 : vector<16x46xbf16>, vector<16x46xbf16>, vector<16x46xbf16>, vector<16x46xbf16>, vector<16x46xbf16>, vector<16x46xbf16>, vector<16x46xbf16>, vector<16x46xbf16>, vector<16x46xbf16> -> vector<144x46xbf16>
    %c0_31 = arith.constant 0 : index
    %c0_32 = arith.constant 0 : index
    %104 = vector.load %arg12[%c0_31, %c0_32] : memref<32x144xbf16, #tpu.memory_space<vmem>>, vector<32x144xbf16>
    %cst_33 = arith.constant dense<0.000000e+00> : vector<32x46xf32>
    %105 = tpu.matmul %104, %103, %cst_33 {dimension_numbers = #tpu.dot_dimension_numbers<[1], [0], [0], [1], [0, 0, 1, 1], [], []>} : vector<32x144xbf16>, vector<144x46xbf16>, vector<32x46xf32> -> vector<32x46xf32>
    %c0_34 = arith.constant 0 : index
    %c0_35 = arith.constant 0 : index
    %106 = vector.load %arg13[%c0_34, %c0_35] : memref<32x1xf32, #tpu.memory_space<vmem>>, vector<32x1xf32>
    %107 = vector.broadcast %106 : vector<32x1xf32> to vector<32x46xf32>
    %108 = arith.addf %105, %107 : vector<32x46xf32>
    %cst_36 = arith.constant 0.000000e+00 : f32
    %109 = vector.broadcast %cst_36 : f32 to vector<32x46xf32>
    %110 = arith.maximumf %108, %109 : vector<32x46xf32>
    %111 = arith.truncf %110 : vector<32x46xf32> to vector<32x46xbf16>
    %112 = vector.extract_strided_slice %111 {offsets = [0, 0], sizes = [32, 28], strides = [1, 1]} : vector<32x46xbf16> to vector<32x28xbf16>
    %113 = vector.extract_strided_slice %111 {offsets = [0, 1], sizes = [32, 28], strides = [1, 1]} : vector<32x46xbf16> to vector<32x28xbf16>
    %114 = vector.extract_strided_slice %111 {offsets = [0, 2], sizes = [32, 28], strides = [1, 1]} : vector<32x46xbf16> to vector<32x28xbf16>
    %115 = vector.extract_strided_slice %111 {offsets = [0, 8], sizes = [32, 28], strides = [1, 1]} : vector<32x46xbf16> to vector<32x28xbf16>
    %116 = vector.extract_strided_slice %111 {offsets = [0, 9], sizes = [32, 28], strides = [1, 1]} : vector<32x46xbf16> to vector<32x28xbf16>
    %117 = vector.extract_strided_slice %111 {offsets = [0, 10], sizes = [32, 28], strides = [1, 1]} : vector<32x46xbf16> to vector<32x28xbf16>
    %118 = vector.extract_strided_slice %111 {offsets = [0, 16], sizes = [32, 28], strides = [1, 1]} : vector<32x46xbf16> to vector<32x28xbf16>
    %119 = vector.extract_strided_slice %111 {offsets = [0, 17], sizes = [32, 28], strides = [1, 1]} : vector<32x46xbf16> to vector<32x28xbf16>
    %120 = vector.extract_strided_slice %111 {offsets = [0, 18], sizes = [32, 28], strides = [1, 1]} : vector<32x46xbf16> to vector<32x28xbf16>
    %121 = tpu.concatenate %112, %113, %114, %115, %116, %117, %118, %119, %120 in 0 : vector<32x28xbf16>, vector<32x28xbf16>, vector<32x28xbf16>, vector<32x28xbf16>, vector<32x28xbf16>, vector<32x28xbf16>, vector<32x28xbf16>, vector<32x28xbf16>, vector<32x28xbf16> -> vector<288x28xbf16>
    %c0_37 = arith.constant 0 : index
    %c0_38 = arith.constant 0 : index
    %122 = vector.load %arg14[%c0_37, %c0_38] : memref<32x288xbf16, #tpu.memory_space<vmem>>, vector<32x288xbf16>
    %cst_39 = arith.constant dense<0.000000e+00> : vector<32x28xf32>
    %123 = tpu.matmul %122, %121, %cst_39 {dimension_numbers = #tpu.dot_dimension_numbers<[1], [0], [0], [1], [0, 0, 1, 1], [], []>} : vector<32x288xbf16>, vector<288x28xbf16>, vector<32x28xf32> -> vector<32x28xf32>
    %c0_40 = arith.constant 0 : index
    %c0_41 = arith.constant 0 : index
    %124 = vector.load %arg15[%c0_40, %c0_41] : memref<32x1xf32, #tpu.memory_space<vmem>>, vector<32x1xf32>
    %125 = vector.broadcast %124 : vector<32x1xf32> to vector<32x28xf32>
    %126 = arith.addf %123, %125 : vector<32x28xf32>
    %cst_42 = arith.constant 0.000000e+00 : f32
    %127 = vector.broadcast %cst_42 : f32 to vector<32x28xf32>
    %128 = arith.maximumf %126, %127 : vector<32x28xf32>
    %129 = arith.truncf %128 : vector<32x28xf32> to vector<32x28xbf16>
    %c0_43 = arith.constant 0 : index
    %c0_44 = arith.constant 0 : index
    %c0_45 = arith.constant 0 : index
    %130 = vector.load %arg16[%c0_43, %c0_44, %c0_45] : memref<4x28x148xbf16, #tpu.memory_space<vmem>>, vector<1x28x148xbf16>
    %131 = vector.shape_cast %130 : vector<1x28x148xbf16> to vector<28x148xbf16>
    %cst_46 = arith.constant dense<0.000000e+00> : vector<32x148xf32>
    %132 = tpu.matmul %129, %131, %cst_46 {dimension_numbers = #tpu.dot_dimension_numbers<[1], [0], [0], [1], [0, 0, 1, 1], [], []>} : vector<32x28xbf16>, vector<28x148xbf16>, vector<32x148xf32> -> vector<32x148xf32>
    %133 = arith.truncf %132 : vector<32x148xf32> to vector<32x148xbf16>
    %c1 = arith.constant 1 : index
    %c0_47 = arith.constant 0 : index
    %c0_48 = arith.constant 0 : index
    %134 = vector.load %arg16[%c1, %c0_47, %c0_48] : memref<4x28x148xbf16, #tpu.memory_space<vmem>>, vector<1x28x148xbf16>
    %135 = vector.shape_cast %134 : vector<1x28x148xbf16> to vector<28x148xbf16>
    %cst_49 = arith.constant dense<0.000000e+00> : vector<32x148xf32>
    %136 = tpu.matmul %129, %135, %cst_49 {dimension_numbers = #tpu.dot_dimension_numbers<[1], [0], [0], [1], [0, 0, 1, 1], [], []>} : vector<32x28xbf16>, vector<28x148xbf16>, vector<32x148xf32> -> vector<32x148xf32>
    %137 = arith.truncf %136 : vector<32x148xf32> to vector<32x148xbf16>
    %c2 = arith.constant 2 : index
    %c0_50 = arith.constant 0 : index
    %c0_51 = arith.constant 0 : index
    %138 = vector.load %arg16[%c2, %c0_50, %c0_51] : memref<4x28x148xbf16, #tpu.memory_space<vmem>>, vector<1x28x148xbf16>
    %139 = vector.shape_cast %138 : vector<1x28x148xbf16> to vector<28x148xbf16>
    %cst_52 = arith.constant dense<0.000000e+00> : vector<32x148xf32>
    %140 = tpu.matmul %129, %139, %cst_52 {dimension_numbers = #tpu.dot_dimension_numbers<[1], [0], [0], [1], [0, 0, 1, 1], [], []>} : vector<32x28xbf16>, vector<28x148xbf16>, vector<32x148xf32> -> vector<32x148xf32>
    %141 = arith.truncf %140 : vector<32x148xf32> to vector<32x148xbf16>
    %c3 = arith.constant 3 : index
    %c0_53 = arith.constant 0 : index
    %c0_54 = arith.constant 0 : index
    %142 = vector.load %arg16[%c3, %c0_53, %c0_54] : memref<4x28x148xbf16, #tpu.memory_space<vmem>>, vector<1x28x148xbf16>
    %143 = vector.shape_cast %142 : vector<1x28x148xbf16> to vector<28x148xbf16>
    %cst_55 = arith.constant dense<0.000000e+00> : vector<32x148xf32>
    %144 = tpu.matmul %129, %143, %cst_55 {dimension_numbers = #tpu.dot_dimension_numbers<[1], [0], [0], [1], [0, 0, 1, 1], [], []>} : vector<32x28xbf16>, vector<28x148xbf16>, vector<32x148xf32> -> vector<32x148xf32>
    %145 = arith.truncf %144 : vector<32x148xf32> to vector<32x148xbf16>
    %146 = tpu.concatenate %133, %137, %141, %145 in 0 : vector<32x148xbf16>, vector<32x148xbf16>, vector<32x148xbf16>, vector<32x148xbf16> -> vector<128x148xbf16>
    %c0_56 = arith.constant 0 : index
    %c0_57 = arith.constant 0 : index
    %147 = vector.load %arg17[%c0_56, %c0_57] : memref<16x128xbf16, #tpu.memory_space<vmem>>, vector<16x128xbf16>
    %cst_58 = arith.constant dense<0.000000e+00> : vector<16x148xf32>
    %148 = tpu.matmul %147, %146, %cst_58 {dimension_numbers = #tpu.dot_dimension_numbers<[1], [0], [0], [1], [0, 0, 1, 1], [], []>} : vector<16x128xbf16>, vector<128x148xbf16>, vector<16x148xf32> -> vector<16x148xf32>
    %c0_59 = arith.constant 0 : index
    %c0_60 = arith.constant 0 : index
    %149 = vector.load %arg18[%c0_59, %c0_60] : memref<16x1xf32, #tpu.memory_space<vmem>>, vector<16x1xf32>
    %150 = vector.broadcast %149 : vector<16x1xf32> to vector<16x148xf32>
    %151 = arith.addf %148, %150 : vector<16x148xf32>
    %152 = arith.truncf %151 : vector<16x148xf32> to vector<16x148xbf16>
    %153 = vector.extract_strided_slice %83 {offsets = [0, 84], sizes = [16, 106], strides = [1, 1]} : vector<16x316xbf16> to vector<16x106xbf16>
    %154 = vector.extract_strided_slice %152 {offsets = [0, 0], sizes = [16, 106], strides = [1, 1]} : vector<16x148xbf16> to vector<16x106xbf16>
    %155 = vector.extract_strided_slice %83 {offsets = [0, 85], sizes = [16, 106], strides = [1, 1]} : vector<16x316xbf16> to vector<16x106xbf16>
    %156 = vector.extract_strided_slice %152 {offsets = [0, 1], sizes = [16, 106], strides = [1, 1]} : vector<16x148xbf16> to vector<16x106xbf16>
    %157 = vector.extract_strided_slice %83 {offsets = [0, 86], sizes = [16, 106], strides = [1, 1]} : vector<16x316xbf16> to vector<16x106xbf16>
    %158 = vector.extract_strided_slice %152 {offsets = [0, 2], sizes = [16, 106], strides = [1, 1]} : vector<16x148xbf16> to vector<16x106xbf16>
    %159 = vector.extract_strided_slice %83 {offsets = [0, 104], sizes = [16, 106], strides = [1, 1]} : vector<16x316xbf16> to vector<16x106xbf16>
    %160 = vector.extract_strided_slice %152 {offsets = [0, 20], sizes = [16, 106], strides = [1, 1]} : vector<16x148xbf16> to vector<16x106xbf16>
    %161 = vector.extract_strided_slice %83 {offsets = [0, 105], sizes = [16, 106], strides = [1, 1]} : vector<16x316xbf16> to vector<16x106xbf16>
    %162 = vector.extract_strided_slice %152 {offsets = [0, 21], sizes = [16, 106], strides = [1, 1]} : vector<16x148xbf16> to vector<16x106xbf16>
    %163 = vector.extract_strided_slice %83 {offsets = [0, 106], sizes = [16, 106], strides = [1, 1]} : vector<16x316xbf16> to vector<16x106xbf16>
    %164 = vector.extract_strided_slice %152 {offsets = [0, 22], sizes = [16, 106], strides = [1, 1]} : vector<16x148xbf16> to vector<16x106xbf16>
    %165 = vector.extract_strided_slice %83 {offsets = [0, 124], sizes = [16, 106], strides = [1, 1]} : vector<16x316xbf16> to vector<16x106xbf16>
    %166 = vector.extract_strided_slice %152 {offsets = [0, 40], sizes = [16, 106], strides = [1, 1]} : vector<16x148xbf16> to vector<16x106xbf16>
    %167 = vector.extract_strided_slice %83 {offsets = [0, 125], sizes = [16, 106], strides = [1, 1]} : vector<16x316xbf16> to vector<16x106xbf16>
    %168 = vector.extract_strided_slice %152 {offsets = [0, 41], sizes = [16, 106], strides = [1, 1]} : vector<16x148xbf16> to vector<16x106xbf16>
    %169 = vector.extract_strided_slice %83 {offsets = [0, 126], sizes = [16, 106], strides = [1, 1]} : vector<16x316xbf16> to vector<16x106xbf16>
    %170 = vector.extract_strided_slice %152 {offsets = [0, 42], sizes = [16, 106], strides = [1, 1]} : vector<16x148xbf16> to vector<16x106xbf16>
    %171 = tpu.concatenate %153, %154, %155, %156, %157, %158, %159, %160, %161, %162, %163, %164, %165, %166, %167, %168 in 0 : vector<16x106xbf16>, vector<16x106xbf16>, vector<16x106xbf16>, vector<16x106xbf16>, vector<16x106xbf16>, vector<16x106xbf16>, vector<16x106xbf16>, vector<16x106xbf16>, vector<16x106xbf16>, vector<16x106xbf16>, vector<16x106xbf16>, vector<16x106xbf16>, vector<16x106xbf16>, vector<16x106xbf16>, vector<16x106xbf16>, vector<16x106xbf16> -> vector<256x106xbf16>
    %172 = tpu.concatenate %169, %170 in 0 : vector<16x106xbf16>, vector<16x106xbf16> -> vector<32x106xbf16>
    %173 = tpu.concatenate %171, %172 in 0 : vector<256x106xbf16>, vector<32x106xbf16> -> vector<288x106xbf16>
    %c0_61 = arith.constant 0 : index
    %c0_62 = arith.constant 0 : index
    %174 = vector.load %arg19[%c0_61, %c0_62] : memref<16x288xbf16, #tpu.memory_space<vmem>>, vector<16x288xbf16>
    %cst_63 = arith.constant dense<0.000000e+00> : vector<16x106xf32>
    %175 = tpu.matmul %174, %173, %cst_63 {dimension_numbers = #tpu.dot_dimension_numbers<[1], [0], [0], [1], [0, 0, 1, 1], [], []>} : vector<16x288xbf16>, vector<288x106xbf16>, vector<16x106xf32> -> vector<16x106xf32>
    %c0_64 = arith.constant 0 : index
    %c0_65 = arith.constant 0 : index
    %176 = vector.load %arg20[%c0_64, %c0_65] : memref<16x1xf32, #tpu.memory_space<vmem>>, vector<16x1xf32>
    %177 = vector.broadcast %176 : vector<16x1xf32> to vector<16x106xf32>
    %178 = arith.addf %175, %177 : vector<16x106xf32>
    %cst_66 = arith.constant 0.000000e+00 : f32
    %179 = vector.broadcast %cst_66 : f32 to vector<16x106xf32>
    %180 = arith.maximumf %178, %179 : vector<16x106xf32>
    %181 = arith.truncf %180 : vector<16x106xf32> to vector<16x106xbf16>
    %182 = vector.extract_strided_slice %181 {offsets = [0, 0], sizes = [16, 64], strides = [1, 1]} : vector<16x106xbf16> to vector<16x64xbf16>
    %183 = vector.extract_strided_slice %181 {offsets = [0, 1], sizes = [16, 64], strides = [1, 1]} : vector<16x106xbf16> to vector<16x64xbf16>
    %184 = vector.extract_strided_slice %181 {offsets = [0, 2], sizes = [16, 64], strides = [1, 1]} : vector<16x106xbf16> to vector<16x64xbf16>
    %185 = vector.extract_strided_slice %181 {offsets = [0, 20], sizes = [16, 64], strides = [1, 1]} : vector<16x106xbf16> to vector<16x64xbf16>
    %186 = vector.extract_strided_slice %181 {offsets = [0, 21], sizes = [16, 64], strides = [1, 1]} : vector<16x106xbf16> to vector<16x64xbf16>
    %187 = vector.extract_strided_slice %181 {offsets = [0, 22], sizes = [16, 64], strides = [1, 1]} : vector<16x106xbf16> to vector<16x64xbf16>
    %188 = vector.extract_strided_slice %181 {offsets = [0, 40], sizes = [16, 64], strides = [1, 1]} : vector<16x106xbf16> to vector<16x64xbf16>
    %189 = vector.extract_strided_slice %181 {offsets = [0, 41], sizes = [16, 64], strides = [1, 1]} : vector<16x106xbf16> to vector<16x64xbf16>
    %190 = vector.extract_strided_slice %181 {offsets = [0, 42], sizes = [16, 64], strides = [1, 1]} : vector<16x106xbf16> to vector<16x64xbf16>
    %191 = tpu.concatenate %182, %183, %184, %185, %186, %187, %188, %189, %190 in 0 : vector<16x64xbf16>, vector<16x64xbf16>, vector<16x64xbf16>, vector<16x64xbf16>, vector<16x64xbf16>, vector<16x64xbf16>, vector<16x64xbf16>, vector<16x64xbf16>, vector<16x64xbf16> -> vector<144x64xbf16>
    %c0_67 = arith.constant 0 : index
    %c0_68 = arith.constant 0 : index
    %192 = vector.load %arg21[%c0_67, %c0_68] : memref<16x144xbf16, #tpu.memory_space<vmem>>, vector<16x144xbf16>
    %cst_69 = arith.constant dense<0.000000e+00> : vector<16x64xf32>
    %193 = tpu.matmul %192, %191, %cst_69 {dimension_numbers = #tpu.dot_dimension_numbers<[1], [0], [0], [1], [0, 0, 1, 1], [], []>} : vector<16x144xbf16>, vector<144x64xbf16>, vector<16x64xf32> -> vector<16x64xf32>
    %c0_70 = arith.constant 0 : index
    %c0_71 = arith.constant 0 : index
    %194 = vector.load %arg22[%c0_70, %c0_71] : memref<16x1xf32, #tpu.memory_space<vmem>>, vector<16x1xf32>
    %195 = vector.broadcast %194 : vector<16x1xf32> to vector<16x64xf32>
    %196 = arith.addf %193, %195 : vector<16x64xf32>
    %cst_72 = arith.constant 0.000000e+00 : f32
    %197 = vector.broadcast %cst_72 : f32 to vector<16x64xf32>
    %198 = arith.maximumf %196, %197 : vector<16x64xf32>
    %199 = arith.truncf %198 : vector<16x64xf32> to vector<16x64xbf16>
    %c0_73 = arith.constant 0 : index
    %c0_74 = arith.constant 0 : index
    %c0_75 = arith.constant 0 : index
    %200 = vector.load %arg23[%c0_73, %c0_74, %c0_75] : memref<4x64x316xbf16, #tpu.memory_space<vmem>>, vector<1x64x316xbf16>
    %201 = vector.shape_cast %200 : vector<1x64x316xbf16> to vector<64x316xbf16>
    %cst_76 = arith.constant dense<0.000000e+00> : vector<16x316xf32>
    %202 = tpu.matmul %199, %201, %cst_76 {dimension_numbers = #tpu.dot_dimension_numbers<[1], [0], [0], [1], [0, 0, 1, 1], [], []>} : vector<16x64xbf16>, vector<64x316xbf16>, vector<16x316xf32> -> vector<16x316xf32>
    %203 = arith.truncf %202 : vector<16x316xf32> to vector<16x316xbf16>
    %c1_77 = arith.constant 1 : index
    %c0_78 = arith.constant 0 : index
    %c0_79 = arith.constant 0 : index
    %204 = vector.load %arg23[%c1_77, %c0_78, %c0_79] : memref<4x64x316xbf16, #tpu.memory_space<vmem>>, vector<1x64x316xbf16>
    %205 = vector.shape_cast %204 : vector<1x64x316xbf16> to vector<64x316xbf16>
    %cst_80 = arith.constant dense<0.000000e+00> : vector<16x316xf32>
    %206 = tpu.matmul %199, %205, %cst_80 {dimension_numbers = #tpu.dot_dimension_numbers<[1], [0], [0], [1], [0, 0, 1, 1], [], []>} : vector<16x64xbf16>, vector<64x316xbf16>, vector<16x316xf32> -> vector<16x316xf32>
    %207 = arith.truncf %206 : vector<16x316xf32> to vector<16x316xbf16>
    %c2_81 = arith.constant 2 : index
    %c0_82 = arith.constant 0 : index
    %c0_83 = arith.constant 0 : index
    %208 = vector.load %arg23[%c2_81, %c0_82, %c0_83] : memref<4x64x316xbf16, #tpu.memory_space<vmem>>, vector<1x64x316xbf16>
    %209 = vector.shape_cast %208 : vector<1x64x316xbf16> to vector<64x316xbf16>
    %cst_84 = arith.constant dense<0.000000e+00> : vector<16x316xf32>
    %210 = tpu.matmul %199, %209, %cst_84 {dimension_numbers = #tpu.dot_dimension_numbers<[1], [0], [0], [1], [0, 0, 1, 1], [], []>} : vector<16x64xbf16>, vector<64x316xbf16>, vector<16x316xf32> -> vector<16x316xf32>
    %211 = arith.truncf %210 : vector<16x316xf32> to vector<16x316xbf16>
    %c3_85 = arith.constant 3 : index
    %c0_86 = arith.constant 0 : index
    %c0_87 = arith.constant 0 : index
    %212 = vector.load %arg23[%c3_85, %c0_86, %c0_87] : memref<4x64x316xbf16, #tpu.memory_space<vmem>>, vector<1x64x316xbf16>
    %213 = vector.shape_cast %212 : vector<1x64x316xbf16> to vector<64x316xbf16>
    %cst_88 = arith.constant dense<0.000000e+00> : vector<16x316xf32>
    %214 = tpu.matmul %199, %213, %cst_88 {dimension_numbers = #tpu.dot_dimension_numbers<[1], [0], [0], [1], [0, 0, 1, 1], [], []>} : vector<16x64xbf16>, vector<64x316xbf16>, vector<16x316xf32> -> vector<16x316xf32>
    %215 = arith.truncf %214 : vector<16x316xf32> to vector<16x316xbf16>
    %216 = tpu.concatenate %203, %207, %211, %215 in 0 : vector<16x316xbf16>, vector<16x316xbf16>, vector<16x316xbf16>, vector<16x316xbf16> -> vector<64x316xbf16>
    %c0_89 = arith.constant 0 : index
    %c0_90 = arith.constant 0 : index
    %217 = vector.load %arg24[%c0_89, %c0_90] : memref<16x64xbf16, #tpu.memory_space<vmem>>, vector<16x64xbf16>
    %cst_91 = arith.constant dense<0.000000e+00> : vector<16x316xf32>
    %218 = tpu.matmul %217, %216, %cst_91 {dimension_numbers = #tpu.dot_dimension_numbers<[1], [0], [0], [1], [0, 0, 1, 1], [], []>} : vector<16x64xbf16>, vector<64x316xbf16>, vector<16x316xf32> -> vector<16x316xf32>
    %c0_92 = arith.constant 0 : index
    %c0_93 = arith.constant 0 : index
    %219 = vector.load %arg25[%c0_92, %c0_93] : memref<16x1xf32, #tpu.memory_space<vmem>>, vector<16x1xf32>
    %220 = vector.broadcast %219 : vector<16x1xf32> to vector<16x316xf32>
    %221 = arith.addf %218, %220 : vector<16x316xf32>
    %222 = arith.truncf %221 : vector<16x316xf32> to vector<16x316xbf16>
    %223 = vector.extract_strided_slice %37 {offsets = [0, 720], sizes = [16, 226], strides = [1, 1]} : vector<16x1756xbf16> to vector<16x226xbf16>
    %224 = vector.extract_strided_slice %222 {offsets = [0, 0], sizes = [16, 226], strides = [1, 1]} : vector<16x316xbf16> to vector<16x226xbf16>
    %225 = vector.extract_strided_slice %37 {offsets = [0, 721], sizes = [16, 226], strides = [1, 1]} : vector<16x1756xbf16> to vector<16x226xbf16>
    %226 = vector.extract_strided_slice %222 {offsets = [0, 1], sizes = [16, 226], strides = [1, 1]} : vector<16x316xbf16> to vector<16x226xbf16>
    %227 = vector.extract_strided_slice %37 {offsets = [0, 722], sizes = [16, 226], strides = [1, 1]} : vector<16x1756xbf16> to vector<16x226xbf16>
    %228 = vector.extract_strided_slice %222 {offsets = [0, 2], sizes = [16, 226], strides = [1, 1]} : vector<16x316xbf16> to vector<16x226xbf16>
    %229 = vector.extract_strided_slice %37 {offsets = [0, 764], sizes = [16, 226], strides = [1, 1]} : vector<16x1756xbf16> to vector<16x226xbf16>
    %230 = vector.extract_strided_slice %222 {offsets = [0, 44], sizes = [16, 226], strides = [1, 1]} : vector<16x316xbf16> to vector<16x226xbf16>
    %231 = vector.extract_strided_slice %37 {offsets = [0, 765], sizes = [16, 226], strides = [1, 1]} : vector<16x1756xbf16> to vector<16x226xbf16>
    %232 = vector.extract_strided_slice %222 {offsets = [0, 45], sizes = [16, 226], strides = [1, 1]} : vector<16x316xbf16> to vector<16x226xbf16>
    %233 = vector.extract_strided_slice %37 {offsets = [0, 766], sizes = [16, 226], strides = [1, 1]} : vector<16x1756xbf16> to vector<16x226xbf16>
    %234 = vector.extract_strided_slice %222 {offsets = [0, 46], sizes = [16, 226], strides = [1, 1]} : vector<16x316xbf16> to vector<16x226xbf16>
    %235 = vector.extract_strided_slice %37 {offsets = [0, 808], sizes = [16, 226], strides = [1, 1]} : vector<16x1756xbf16> to vector<16x226xbf16>
    %236 = vector.extract_strided_slice %222 {offsets = [0, 88], sizes = [16, 226], strides = [1, 1]} : vector<16x316xbf16> to vector<16x226xbf16>
    %237 = vector.extract_strided_slice %37 {offsets = [0, 809], sizes = [16, 226], strides = [1, 1]} : vector<16x1756xbf16> to vector<16x226xbf16>
    %238 = vector.extract_strided_slice %222 {offsets = [0, 89], sizes = [16, 226], strides = [1, 1]} : vector<16x316xbf16> to vector<16x226xbf16>
    %239 = vector.extract_strided_slice %37 {offsets = [0, 810], sizes = [16, 226], strides = [1, 1]} : vector<16x1756xbf16> to vector<16x226xbf16>
    %240 = vector.extract_strided_slice %222 {offsets = [0, 90], sizes = [16, 226], strides = [1, 1]} : vector<16x316xbf16> to vector<16x226xbf16>
    %241 = tpu.concatenate %223, %224, %225, %226, %227, %228, %229, %230, %231, %232, %233, %234, %235, %236, %237, %238 in 0 : vector<16x226xbf16>, vector<16x226xbf16>, vector<16x226xbf16>, vector<16x226xbf16>, vector<16x226xbf16>, vector<16x226xbf16>, vector<16x226xbf16>, vector<16x226xbf16>, vector<16x226xbf16>, vector<16x226xbf16>, vector<16x226xbf16>, vector<16x226xbf16>, vector<16x226xbf16>, vector<16x226xbf16>, vector<16x226xbf16>, vector<16x226xbf16> -> vector<256x226xbf16>
    %242 = tpu.concatenate %239, %240 in 0 : vector<16x226xbf16>, vector<16x226xbf16> -> vector<32x226xbf16>
    %243 = tpu.concatenate %241, %242 in 0 : vector<256x226xbf16>, vector<32x226xbf16> -> vector<288x226xbf16>
    %c0_94 = arith.constant 0 : index
    %c0_95 = arith.constant 0 : index
    %244 = vector.load %arg26[%c0_94, %c0_95] : memref<16x288xbf16, #tpu.memory_space<vmem>>, vector<16x288xbf16>
    %cst_96 = arith.constant dense<0.000000e+00> : vector<16x226xf32>
    %245 = tpu.matmul %244, %243, %cst_96 {dimension_numbers = #tpu.dot_dimension_numbers<[1], [0], [0], [1], [0, 0, 1, 1], [], []>} : vector<16x288xbf16>, vector<288x226xbf16>, vector<16x226xf32> -> vector<16x226xf32>
    %c0_97 = arith.constant 0 : index
    %c0_98 = arith.constant 0 : index
    %246 = vector.load %arg27[%c0_97, %c0_98] : memref<16x1xf32, #tpu.memory_space<vmem>>, vector<16x1xf32>
    %247 = vector.broadcast %246 : vector<16x1xf32> to vector<16x226xf32>
    %248 = arith.addf %245, %247 : vector<16x226xf32>
    %cst_99 = arith.constant 0.000000e+00 : f32
    %249 = vector.broadcast %cst_99 : f32 to vector<16x226xf32>
    %250 = arith.maximumf %248, %249 : vector<16x226xf32>
    %251 = arith.truncf %250 : vector<16x226xf32> to vector<16x226xbf16>
    %252 = vector.extract_strided_slice %251 {offsets = [0, 0], sizes = [16, 136], strides = [1, 1]} : vector<16x226xbf16> to vector<16x136xbf16>
    %253 = vector.extract_strided_slice %251 {offsets = [0, 1], sizes = [16, 136], strides = [1, 1]} : vector<16x226xbf16> to vector<16x136xbf16>
    %254 = vector.extract_strided_slice %251 {offsets = [0, 2], sizes = [16, 136], strides = [1, 1]} : vector<16x226xbf16> to vector<16x136xbf16>
    %255 = vector.extract_strided_slice %251 {offsets = [0, 44], sizes = [16, 136], strides = [1, 1]} : vector<16x226xbf16> to vector<16x136xbf16>
    %256 = vector.extract_strided_slice %251 {offsets = [0, 45], sizes = [16, 136], strides = [1, 1]} : vector<16x226xbf16> to vector<16x136xbf16>
    %257 = vector.extract_strided_slice %251 {offsets = [0, 46], sizes = [16, 136], strides = [1, 1]} : vector<16x226xbf16> to vector<16x136xbf16>
    %258 = vector.extract_strided_slice %251 {offsets = [0, 88], sizes = [16, 136], strides = [1, 1]} : vector<16x226xbf16> to vector<16x136xbf16>
    %259 = vector.extract_strided_slice %251 {offsets = [0, 89], sizes = [16, 136], strides = [1, 1]} : vector<16x226xbf16> to vector<16x136xbf16>
    %260 = vector.extract_strided_slice %251 {offsets = [0, 90], sizes = [16, 136], strides = [1, 1]} : vector<16x226xbf16> to vector<16x136xbf16>
    %261 = tpu.concatenate %252, %253, %254, %255, %256, %257, %258, %259, %260 in 0 : vector<16x136xbf16>, vector<16x136xbf16>, vector<16x136xbf16>, vector<16x136xbf16>, vector<16x136xbf16>, vector<16x136xbf16>, vector<16x136xbf16>, vector<16x136xbf16>, vector<16x136xbf16> -> vector<144x136xbf16>
    %c0_100 = arith.constant 0 : index
    %c0_101 = arith.constant 0 : index
    %262 = vector.load %arg28[%c0_100, %c0_101] : memref<16x144xbf16, #tpu.memory_space<vmem>>, vector<16x144xbf16>
    %cst_102 = arith.constant dense<0.000000e+00> : vector<16x136xf32>
    %263 = tpu.matmul %262, %261, %cst_102 {dimension_numbers = #tpu.dot_dimension_numbers<[1], [0], [0], [1], [0, 0, 1, 1], [], []>} : vector<16x144xbf16>, vector<144x136xbf16>, vector<16x136xf32> -> vector<16x136xf32>
    %c0_103 = arith.constant 0 : index
    %c0_104 = arith.constant 0 : index
    %264 = vector.load %arg29[%c0_103, %c0_104] : memref<16x1xf32, #tpu.memory_space<vmem>>, vector<16x1xf32>
    %265 = vector.broadcast %264 : vector<16x1xf32> to vector<16x136xf32>
    %266 = arith.addf %263, %265 : vector<16x136xf32>
    %cst_105 = arith.constant 0.000000e+00 : f32
    %267 = vector.broadcast %cst_105 : f32 to vector<16x136xf32>
    %268 = arith.maximumf %266, %267 : vector<16x136xf32>
    %269 = arith.truncf %268 : vector<16x136xf32> to vector<16x136xbf16>
    %c0_106 = arith.constant 0 : index
    %c0_107 = arith.constant 0 : index
    %270 = vector.load %arg32[%c0_106, %c0_107] : memref<136x16xbf16, #tpu.memory_space<vmem>>, vector<136x16xbf16>
    %cst_108 = arith.constant dense<0.000000e+00> : vector<16x16xf32>
    %271 = tpu.matmul %269, %270, %cst_108 {dimension_numbers = #tpu.dot_dimension_numbers<[1], [0], [0], [1], [0, 0, 1, 1], [], []>} : vector<16x136xbf16>, vector<136x16xbf16>, vector<16x16xf32> -> vector<16x16xf32>
    %272 = arith.truncf %271 : vector<16x16xf32> to vector<16x16xbf16>
    %c0_109 = arith.constant 0 : index
    %c0_110 = arith.constant 0 : index
    %273 = vector.load %arg30[%c0_109, %c0_110] : memref<8x16xbf16, #tpu.memory_space<vmem>>, vector<8x16xbf16>
    %cst_111 = arith.constant dense<0.000000e+00> : vector<8x16xf32>
    %274 = tpu.matmul %273, %272, %cst_111 {dimension_numbers = #tpu.dot_dimension_numbers<[1], [0], [0], [1], [0, 0, 1, 1], [], []>} : vector<8x16xbf16>, vector<16x16xbf16>, vector<8x16xf32> -> vector<8x16xf32>
    %c0_112 = arith.constant 0 : index
    %c0_113 = arith.constant 0 : index
    %275 = vector.load %arg31[%c0_112, %c0_113] : memref<8x1xf32, #tpu.memory_space<vmem>>, vector<8x1xf32>
    %276 = vector.broadcast %275 : vector<8x1xf32> to vector<8x16xf32>
    %277 = arith.addf %274, %276 : vector<8x16xf32>
    %c0_114 = arith.constant 0 : index
    %c0_115 = arith.constant 0 : index
    %c0_116 = arith.constant 0 : index
    %278 = vector.load %arg33[%c0_114, %c0_115, %c0_116] : memref<1x8x16xf32, #tpu.memory_space<vmem>>, vector<1x8x16xf32>
    %279 = vector.shape_cast %278 : vector<1x8x16xf32> to vector<8x16xf32>
    %280 = vector.shape_cast %277 : vector<8x16xf32> to vector<1x8x16xf32>
    tpu.vector_store %arg33[%c0_114, %c0_115, %c0_116], %280 {strides = array<i32>} : memref<1x8x16xf32, #tpu.memory_space<vmem>>, vector<1x8x16xf32>,
    return
  }
  func.func @transform_0(%arg0: i32) -> (i32, i32, i32) {
    %c0_i32 = arith.constant 0 : i32
    %c0_i32_0 = arith.constant 0 : i32
    %c0_i32_1 = arith.constant 0 : i32
    return %arg0, %c0_i32, %c0_i32_0 : i32, i32, i32
  }
  func.func @transform_1(%arg0: i32) -> (i32, i32) {
    %c0_i32 = arith.constant 0 : i32
    %c0_i32_0 = arith.constant 0 : i32
    %c0_i32_1 = arith.constant 0 : i32
    return %c0_i32, %c0_i32_0 : i32, i32
  }
  func.func @transform_2(%arg0: i32) -> (i32, i32) {
    %c0_i32 = arith.constant 0 : i32
    %c0_i32_0 = arith.constant 0 : i32
    %c0_i32_1 = arith.constant 0 : i32
    return %c0_i32, %c0_i32_0 : i32, i32
  }
  func.func @transform_3(%arg0: i32) -> (i32, i32) {
    %c0_i32 = arith.constant 0 : i32
    %c0_i32_0 = arith.constant 0 : i32
    %c0_i32_1 = arith.constant 0 : i32
    return %c0_i32, %c0_i32_0 : i32, i32
  }
  func.func @transform_4(%arg0: i32) -> (i32, i32) {
    %c0_i32 = arith.constant 0 : i32
    %c0_i32_0 = arith.constant 0 : i32
    %c0_i32_1 = arith.constant 0 : i32
    return %c0_i32, %c0_i32_0 : i32, i32
  }
  func.func @transform_5(%arg0: i32) -> (i32, i32) {
    %c0_i32 = arith.constant 0 : i32
    %c0_i32_0 = arith.constant 0 : i32
    %c0_i32_1 = arith.constant 0 : i32
    return %c0_i32, %c0_i32_0 : i32, i32
  }
  func.func @transform_6(%arg0: i32) -> (i32, i32) {
    %c0_i32 = arith.constant 0 : i32
    %c0_i32_0 = arith.constant 0 : i32
    %c0_i32_1 = arith.constant 0 : i32
    return %c0_i32, %c0_i32_0 : i32, i32
  }
  func.func @transform_7(%arg0: i32) -> (i32, i32) {
    %c0_i32 = arith.constant 0 : i32
    %c0_i32_0 = arith.constant 0 : i32
    %c0_i32_1 = arith.constant 0 : i32
    return %c0_i32, %c0_i32_0 : i32, i32
  }
  func.func @transform_8(%arg0: i32) -> (i32, i32) {
    %c0_i32 = arith.constant 0 : i32
    %c0_i32_0 = arith.constant 0 : i32
    %c0_i32_1 = arith.constant 0 : i32
    return %c0_i32, %c0_i32_0 : i32, i32
  }
  func.func @transform_9(%arg0: i32) -> (i32, i32) {
    %c0_i32 = arith.constant 0 : i32
    %c0_i32_0 = arith.constant 0 : i32
    %c0_i32_1 = arith.constant 0 : i32
    return %c0_i32, %c0_i32_0 : i32, i32
  }
  func.func @transform_10(%arg0: i32) -> (i32, i32) {
    %c0_i32 = arith.constant 0 : i32
    %c0_i32_0 = arith.constant 0 : i32
    %c0_i32_1 = arith.constant 0 : i32
    return %c0_i32, %c0_i32_0 : i32, i32
  }
  func.func @transform_11(%arg0: i32) -> (i32, i32) {
    %c0_i32 = arith.constant 0 : i32
    %c0_i32_0 = arith.constant 0 : i32
    %c0_i32_1 = arith.constant 0 : i32
    return %c0_i32, %c0_i32_0 : i32, i32
  }
  func.func @transform_12(%arg0: i32) -> (i32, i32) {
    %c0_i32 = arith.constant 0 : i32
    %c0_i32_0 = arith.constant 0 : i32
    %c0_i32_1 = arith.constant 0 : i32
    return %c0_i32, %c0_i32_0 : i32, i32
  }
  func.func @transform_13(%arg0: i32) -> (i32, i32) {
    %c0_i32 = arith.constant 0 : i32
    %c0_i32_0 = arith.constant 0 : i32
    %c0_i32_1 = arith.constant 0 : i32
    return %c0_i32, %c0_i32_0 : i32, i32
  }
  func.func @transform_14(%arg0: i32) -> (i32, i32) {
    %c0_i32 = arith.constant 0 : i32
    %c0_i32_0 = arith.constant 0 : i32
    %c0_i32_1 = arith.constant 0 : i32
    return %c0_i32, %c0_i32_0 : i32, i32
  }
  func.func @transform_15(%arg0: i32) -> (i32, i32, i32) {
    %c0_i32 = arith.constant 0 : i32
    %c0_i32_0 = arith.constant 0 : i32
    %c0_i32_1 = arith.constant 0 : i32
    %c0_i32_2 = arith.constant 0 : i32
    return %c0_i32, %c0_i32_0, %c0_i32_1 : i32, i32, i32
  }
  func.func @transform_16(%arg0: i32) -> (i32, i32) {
    %c0_i32 = arith.constant 0 : i32
    %c0_i32_0 = arith.constant 0 : i32
    %c0_i32_1 = arith.constant 0 : i32
    return %c0_i32, %c0_i32_0 : i32, i32
  }
  func.func @transform_17(%arg0: i32) -> (i32, i32) {
    %c0_i32 = arith.constant 0 : i32
    %c0_i32_0 = arith.constant 0 : i32
    %c0_i32_1 = arith.constant 0 : i32
    return %c0_i32, %c0_i32_0 : i32, i32
  }
  func.func @transform_18(%arg0: i32) -> (i32, i32) {
    %c0_i32 = arith.constant 0 : i32
    %c0_i32_0 = arith.constant 0 : i32
    %c0_i32_1 = arith.constant 0 : i32
    return %c0_i32, %c0_i32_0 : i32, i32
  }
  func.func @transform_19(%arg0: i32) -> (i32, i32) {
    %c0_i32 = arith.constant 0 : i32
    %c0_i32_0 = arith.constant 0 : i32
    %c0_i32_1 = arith.constant 0 : i32
    return %c0_i32, %c0_i32_0 : i32, i32
  }
  func.func @transform_20(%arg0: i32) -> (i32, i32) {
    %c0_i32 = arith.constant 0 : i32
    %c0_i32_0 = arith.constant 0 : i32
    %c0_i32_1 = arith.constant 0 : i32
    return %c0_i32, %c0_i32_0 : i32, i32
  }
  func.func @transform_21(%arg0: i32) -> (i32, i32) {
    %c0_i32 = arith.constant 0 : i32
    %c0_i32_0 = arith.constant 0 : i32
    %c0_i32_1 = arith.constant 0 : i32
    return %c0_i32, %c0_i32_0 : i32, i32
  }
  func.func @transform_22(%arg0: i32) -> (i32, i32, i32) {
    %c0_i32 = arith.constant 0 : i32
    %c0_i32_0 = arith.constant 0 : i32
    %c0_i32_1 = arith.constant 0 : i32
    %c0_i32_2 = arith.constant 0 : i32
    return %c0_i32, %c0_i32_0, %c0_i32_1 : i32, i32, i32
  }
  func.func @transform_23(%arg0: i32) -> (i32, i32) {
    %c0_i32 = arith.constant 0 : i32
    %c0_i32_0 = arith.constant 0 : i32
    %c0_i32_1 = arith.constant 0 : i32
    return %c0_i32, %c0_i32_0 : i32, i32
  }
  func.func @transform_24(%arg0: i32) -> (i32, i32) {
    %c0_i32 = arith.constant 0 : i32
    %c0_i32_0 = arith.constant 0 : i32
    %c0_i32_1 = arith.constant 0 : i32
    return %c0_i32, %c0_i32_0 : i32, i32
  }
  func.func @transform_25(%arg0: i32) -> (i32, i32) {
    %c0_i32 = arith.constant 0 : i32
    %c0_i32_0 = arith.constant 0 : i32
    %c0_i32_1 = arith.constant 0 : i32
    return %c0_i32, %c0_i32_0 : i32, i32
  }
  func.func @transform_26(%arg0: i32) -> (i32, i32) {
    %c0_i32 = arith.constant 0 : i32
    %c0_i32_0 = arith.constant 0 : i32
    %c0_i32_1 = arith.constant 0 : i32
    return %c0_i32, %c0_i32_0 : i32, i32
  }
  func.func @transform_27(%arg0: i32) -> (i32, i32) {
    %c0_i32 = arith.constant 0 : i32
    %c0_i32_0 = arith.constant 0 : i32
    %c0_i32_1 = arith.constant 0 : i32
    return %c0_i32, %c0_i32_0 : i32, i32
  }
  func.func @transform_28(%arg0: i32) -> (i32, i32) {
    %c0_i32 = arith.constant 0 : i32
    %c0_i32_0 = arith.constant 0 : i32
    %c0_i32_1 = arith.constant 0 : i32
    return %c0_i32, %c0_i32_0 : i32, i32
  }
  func.func @transform_29(%arg0: i32) -> (i32, i32) {
    %c0_i32 = arith.constant 0 : i32
    %c0_i32_0 = arith.constant 0 : i32
    %c0_i32_1 = arith.constant 0 : i32
    return %c0_i32, %c0_i32_0 : i32, i32
  }
  func.func @transform_30(%arg0: i32) -> (i32, i32) {
    %c0_i32 = arith.constant 0 : i32
    %c0_i32_0 = arith.constant 0 : i32
    %c0_i32_1 = arith.constant 0 : i32
    return %c0_i32, %c0_i32_0 : i32, i32
  }
  func.func @transform_31(%arg0: i32) -> (i32, i32) {
    %c0_i32 = arith.constant 0 : i32
    %c0_i32_0 = arith.constant 0 : i32
    %c0_i32_1 = arith.constant 0 : i32
    return %c0_i32, %c0_i32_0 : i32, i32
  }
  func.func @transform_32(%arg0: i32) -> (i32, i32, i32) {
    %c0_i32 = arith.constant 0 : i32
    %c0_i32_0 = arith.constant 0 : i32
    %c0_i32_1 = arith.constant 0 : i32
    return %arg0, %c0_i32, %c0_i32_0 : i32, i32, i32
  }
}

</mosaic_0001>

<llo_original>
// kernel: forward.1
$region0: #{forward.1}
  #allocation0 [shape = 'u32[]', space=smem, size = 0x4, offset = 0x4, fixed_abs, tag = 'smem constant byte address 0x4 - core index']
  #allocation1 [shape = 'u32[144,128]{1,0:T(1,128)}', space=vmem, size = 0x12000, scoped, tag = 'internal scratch']
  %s0 = inlined_call_operand.smem [shape: u32[33], index: -1, kind: input, shape index: {}]
  %s1 = sld [smem:[%s0]]
  %s2 = scalar_lea.smem %s0, 1
  %s3 = sld [smem:[%s2]]
  %s4 = scalar_lea.smem %s0, 2
  %s5 = sld [smem:[%s4]]
  %s6 = scalar_lea.smem %s0, 3
  %s7 = sld [smem:[%s6]]
  %s8 = scalar_lea.smem %s0, 4
  %s9 = sld [smem:[%s8]]
  %s10 = scalar_lea.smem %s0, 5
  %s11 = sld [smem:[%s10]]
  %s12 = scalar_lea.smem %s0, 6
  %s13 = sld [smem:[%s12]]
  %s14 = scalar_lea.smem %s0, 7
  %s15 = sld [smem:[%s14]]
  %s16 = scalar_lea.smem %s0, 8
  %s17 = sld [smem:[%s16]]
  %s18 = scalar_lea.smem %s0, 9
  %s19 = sld [smem:[%s18]]
  %s20 = scalar_lea.smem %s0, 10
  %s21 = sld [smem:[%s20]]
  %s22 = scalar_lea.smem %s0, 11
  %s23 = sld [smem:[%s22]]
  %s24 = scalar_lea.smem %s0, 12
  %s25 = sld [smem:[%s24]]
  %s26 = scalar_lea.smem %s0, 13
  %s27 = sld [smem:[%s26]]
  %s28 = scalar_lea.smem %s0, 14
  %s29 = sld [smem:[%s28]]
  %s30 = scalar_lea.smem %s0, 15
  %s31 = sld [smem:[%s30]]
  %s32 = scalar_lea.smem %s0, 16
  %s33 = sld [smem:[%s32]]
  %s34 = scalar_lea.smem %s0, 17
  %s35 = sld [smem:[%s34]]
  %s36 = scalar_lea.smem %s0, 18
  %s37 = sld [smem:[%s36]]
  %s38 = scalar_lea.smem %s0, 19
  %s39 = sld [smem:[%s38]]
  %s40 = scalar_lea.smem %s0, 20
  %s41 = sld [smem:[%s40]]
  %s42 = scalar_lea.smem %s0, 21
  %s43 = sld [smem:[%s42]]
  %s44 = scalar_lea.smem %s0, 22
  %s45 = sld [smem:[%s44]]
  %s46 = scalar_lea.smem %s0, 23
  %s47 = sld [smem:[%s46]]
  %s48 = scalar_lea.smem %s0, 24
  %s49 = sld [smem:[%s48]]
  %s50 = scalar_lea.smem %s0, 25
  %s51 = sld [smem:[%s50]]
  %s52 = scalar_lea.smem %s0, 26
  %s53 = sld [smem:[%s52]]
  %s54 = scalar_lea.smem %s0, 27
  %s55 = sld [smem:[%s54]]
  %s56 = scalar_lea.smem %s0, 28
  %s57 = sld [smem:[%s56]]
  %s58 = scalar_lea.smem %s0, 29
  %s59 = sld [smem:[%s58]]
  %s60 = scalar_lea.smem %s0, 30
  %s61 = sld [smem:[%s60]]
  %s62 = scalar_lea.smem %s0, 31
  %s63 = sld [smem:[%s62]]
  %s64 = scalar_lea.smem %s0, 32
  %s65 = sld [smem:[%s64]]
  %s66 = sld [smem:[#allocation0]]
  $region241: #{forward.1} parent=0
    _
  %s68 = ssub.s32 1, %s66
  %s69 = scalar_select 0, %s68, %s66
  $region1: #{forward.1} parent=0
    #allocation2 [shape = 'u8[8192]{0}', space=vmem, size = 0x2000, scoped, tag = 'input window, operand 2, single buffered']
    #allocation3 [shape = 's32[2]{0}', space=sflag, size = 0x8, scoped, tag = 'scoped memory for forward.1']
    #allocation4 [shape = 'u8[8192]{0}', space=vmem, size = 0x2000, scoped, tag = 'input window, operand 4, single buffered']
    #allocation5 [shape = 's32[1]{0}', space=sflag, size = 0x4, scoped, tag = 'scoped memory for forward.1']
    #allocation6 [shape = 'u8[1753088]{0}', space=vmem, size = 0x1ac000, scoped, tag = 'input window, operand 5, single buffered']
    #allocation7 [shape = 'u8[8192]{0}', space=vmem, size = 0x2000, scoped, tag = 'input window, operand 7, single buffered']
    #allocation8 [shape = 's32[1]{0}', space=sflag, size = 0x4, scoped, tag = 'scoped memory for forward.1']
    #allocation9 [shape = 'u8[8192]{0}', space=vmem, size = 0x2000, scoped, tag = 'input window, operand 9, single buffered']
    #allocation10 [shape = 'u8[75776]{0}', space=vmem, size = 0x12800, scoped, tag = 'input window, operand 10, single buffered']
    #allocation11 [shape = 's32[1]{0}', space=sflag, size = 0x4, scoped, tag = 'scoped memory for forward.1']
    #allocation12 [shape = 'u8[16384]{0}', space=vmem, size = 0x4000, scoped, tag = 'input window, operand 12, single buffered']
    #allocation13 [shape = 'u8[16384]{0}', space=vmem, size = 0x4000, scoped, tag = 'input window, operand 14, single buffered']
    #allocation14 [shape = 's32[1]{0}', space=sflag, size = 0x4, scoped, tag = 'scoped memory for forward.1']
    #allocation15 [shape = 'u8[65536]{0}', space=vmem, size = 0x10000, scoped, tag = 'input window, operand 15, single buffered']
    #allocation16 [shape = 'u8[4096]{0}', space=vmem, size = 0x1000, scoped, tag = 'input window, operand 16, single buffered']
    #allocation17 [shape = 's32[1]{0}', space=sflag, size = 0x4, scoped, tag = 'scoped memory for forward.1']
    #allocation18 [shape = 'u8[8192]{0}', space=vmem, size = 0x2000, scoped, tag = 'input window, operand 17, single buffered']
    #allocation19 [shape = 'u8[8192]{0}', space=vmem, size = 0x2000, scoped, tag = 'input window, operand 19, single buffered']
    #allocation20 [shape = 's32[1]{0}', space=sflag, size = 0x4, scoped, tag = 'scoped memory for forward.1']
    #allocation21 [shape = 'u8[8192]{0}', space=vmem, size = 0x2000, scoped, tag = 'input window, operand 21, single buffered']
    #allocation22 [shape = 'u8[4096]{0}', space=vmem, size = 0x1000, scoped, tag = 'input window, operand 23, single buffered']
    #allocation23 [shape = 's32[1]{0}', space=sflag, size = 0x4, scoped, tag = 'scoped memory for forward.1']
    #allocation24 [shape = 'u8[8192]{0}', space=vmem, size = 0x2000, scoped, tag = 'input window, operand 24, single buffered']
    #allocation25 [shape = 'u8[8192]{0}', space=vmem, size = 0x2000, scoped, tag = 'input window, operand 26, single buffered']
    #allocation26 [shape = 's32[1]{0}', space=sflag, size = 0x4, scoped, tag = 'scoped memory for forward.1']
    #allocation27 [shape = 'u8[8192]{0}', space=vmem, size = 0x2000, scoped, tag = 'input window, operand 28, single buffered']
    #allocation28 [shape = 'u8[2048]{0}', space=vmem, size = 0x800, scoped, tag = 'input window, operand 29, single buffered']
    #allocation29 [shape = 's32[1]{0}', space=sflag, size = 0x4, scoped, tag = 'scoped memory for forward.1']
    #allocation30 [shape = 'u8[4096]{0}', space=vmem, size = 0x1000, scoped, tag = 'input window, operand 30, single buffered']
    #allocation31 [shape = 'u8[34816]{0}', space=vmem, size = 0x8800, scoped, tag = 'input window, operand 31, single buffered']
    #allocation32 [shape = 's32[1]{0}', space=sflag, size = 0x4, scoped, tag = 'scoped memory for forward.1']
    %70 = vsyncpa [#allocation3], 0
    %71 = vsyncpa [#allocation5], 0
    %72 = vsyncpa [#allocation8], 0
    %73 = vsyncpa [#allocation11], 0
    %74 = vsyncpa [#allocation14], 0
    %75 = vsyncpa [#allocation17], 0
    %76 = vsyncpa [#allocation20], 0
    %77 = vsyncpa [#allocation23], 0
    %78 = vsyncpa [#allocation26], 0
    %79 = vsyncpa [#allocation29], 0
    %80 = vsyncpa [#allocation32], 0
    loop: start=0, step=1, limit=4
    $region2: #{forward.1} parent=1 // loop_pre_header
      _
    $region3: #{forward.1} parent=1 // loop_header
      %s82 = sphi 0, %s86
      %p83 = scmp.ge.s32.totalorder %s82, 4
      %s92 = sphi 0, %s94
      %s95 = sphi 0, %s92
      %s96 = sphi 0, %s95
      %s112 = sphi 0, %s96
      %s116 = sphi 0, %s116
      %s118 = sphi 0, %s116
      %s119 = sphi 0, %s118
      %s133 = sphi 0, %s119
      %s137 = sphi 0, %s137
      %s139 = sphi 0, %s137
      %s140 = sphi 0, %s139
      %s154 = sphi 0, %s140
      %s158 = sphi 0, %s158
      %s160 = sphi 0, %s158
      %s161 = sphi 0, %s160
      %s175 = sphi 0, %s161
      %s179 = sphi 0, %s179
      %s181 = sphi 0, %s179
      %s182 = sphi 0, %s181
      %s196 = sphi 0, %s182
      %s200 = sphi 0, %s200
      %s202 = sphi 0, %s200
      %s203 = sphi 0, %s202
      %s217 = sphi 0, %s203
      %s221 = sphi 0, %s221
      %s223 = sphi 0, %s221
      %s224 = sphi 0, %s223
      %s238 = sphi 0, %s224
      %s242 = sphi 0, %s242
      %s244 = sphi 0, %s242
      %s245 = sphi 0, %s244
      %s259 = sphi 0, %s245
      %s263 = sphi 0, %s263
      %s265 = sphi 0, %s263
      %s266 = sphi 0, %s265
      %s280 = sphi 0, %s266
      %s284 = sphi 0, %s284
      %s286 = sphi 0, %s284
      %s287 = sphi 0, %s286
      %s301 = sphi 0, %s287
      %s305 = sphi 0, %s305
      %s307 = sphi 0, %s305
      %s308 = sphi 0, %s307
      %s322 = sphi 0, %s308
      %s326 = sphi 0, %s326
      %s328 = sphi 0, %s326
      %s329 = sphi 0, %s328
      %s343 = sphi 0, %s329
      %s347 = sphi 0, %s347
      %s349 = sphi 0, %s347
      %s350 = sphi 0, %s349
      %s364 = sphi 0, %s350
      %s368 = sphi 0, %s368
      %s370 = sphi 0, %s368
      %s371 = sphi 0, %s370
      %s385 = sphi 0, %s371
      %s389 = sphi 0, %s389
      %s391 = sphi 0, %s389
      %s392 = sphi 0, %s391
      %s406 = sphi 0, %s392
      %s410 = sphi 0, %s410
      %s412 = sphi 0, %s410
      %s413 = sphi 0, %s412
      %s427 = sphi 0, %s413
      %s431 = sphi 0, %s431
      %s433 = sphi 0, %s431
      %s434 = sphi 0, %s433
      %s448 = sphi 0, %s434
      %s452 = sphi 0, %s452
      %s454 = sphi 0, %s452
      %s455 = sphi 0, %s454
      %s469 = sphi 0, %s455
      %s473 = sphi 0, %s473
      %s475 = sphi 0, %s473
      %s476 = sphi 0, %s475
      %s490 = sphi 0, %s476
      %s494 = sphi 0, %s494
      %s496 = sphi 0, %s494
      %s497 = sphi 0, %s496
      %s511 = sphi 0, %s497
      %s515 = sphi 0, %s515
      %s517 = sphi 0, %s515
      %s518 = sphi 0, %s517
      %s532 = sphi 0, %s518
      %s536 = sphi 0, %s536
      %s538 = sphi 0, %s536
      %s539 = sphi 0, %s538
      %s553 = sphi 0, %s539
      %s557 = sphi 0, %s557
      %s559 = sphi 0, %s557
      %s560 = sphi 0, %s559
      %s574 = sphi 0, %s560
      %s578 = sphi 0, %s578
      %s580 = sphi 0, %s578
      %s581 = sphi 0, %s580
      %s595 = sphi 0, %s581
      %s599 = sphi 0, %s599
      %s601 = sphi 0, %s599
      %s602 = sphi 0, %s601
      %s616 = sphi 0, %s602
      %s620 = sphi 0, %s620
      %s622 = sphi 0, %s620
      %s623 = sphi 0, %s622
      %s637 = sphi 0, %s623
      %s641 = sphi 0, %s641
      %s643 = sphi 0, %s641
      %s644 = sphi 0, %s643
      %s658 = sphi 0, %s644
      %s662 = sphi 0, %s662
      %s664 = sphi 0, %s662
      %s665 = sphi 0, %s664
      %s679 = sphi 0, %s665
      %s683 = sphi 0, %s683
      %s685 = sphi 0, %s683
      %s686 = sphi 0, %s685
      %s700 = sphi 0, %s686
      %s704 = sphi 0, %s704
      %s706 = sphi 0, %s704
      %s707 = sphi 0, %s706
      %s721 = sphi 0, %s707
      %s725 = sphi 0, %s725
      %s727 = sphi 0, %s725
      %s728 = sphi 0, %s727
      %s742 = sphi 0, %s728
      %s746 = sphi 0, %s746
      %s748 = sphi 0, %s746
      %s749 = sphi 0, %s748
      %s763 = sphi 0, %s749
      %s769 = sphi 0, %s771
      %s772 = sphi 0, %s769
      %s773 = sphi 0, %s772
      %s789 = sphi 0, %s773
    $region4: #{forward.1} parent=1 // loop_header_branch
      %85 = sbr.rel (%p83) target = $region8
    $region5: #{forward.1} parent=1 // loop_body
      %s87 = ssub.s32 %s82, 1
      %s88 = ssub.s32 %s82, 2
      %s89 = sadd.s32 %s82, 1
      %s90 = ssub.s32 %s82, %s89
      %p91 = scmp.eq.s32.totalorder %s90, 0
      %s93 = sadd.s32 %s92, 1
      %s94 = scalar_select %p91, %s92, %s93
      %p97 = pneg %p91
      %p98 = scmp.eq.s32.totalorder %s82, 1
      %p99 = por %p97, %p98
      %p100 = scmp.ne.s32.totalorder %s92, %s95
      %p101 = scmp.eq.s32.totalorder %s82, 0
      %p102 = por %p100, %p101
      %p103 = scmp.ne.s32.totalorder %s92, %s95
      %p104 = scmp.eq.s32.totalorder %s87, 1
      %p105 = por %p103, %p104
      %p106 = scmp.ne.s32.totalorder %s95, %s96
      %p107 = scmp.eq.s32.totalorder %s87, 0
      %p108 = por %p106, %p107
      %p109 = scmp.ne.s32.totalorder %s95, %s96
      %p110 = scmp.eq.s32.totalorder %s88, 1
      %p111 = por %p109, %p110
      %p113 = scmp.ne.s32.totalorder %s96, %s112
      %p114 = scmp.eq.s32.totalorder %s88, 0
      %p115 = por %p113, %p114
      %s117 = sadd.s32 %s116, 1
      %p120 = scmp.eq.s32.totalorder %s82, 1
      %p121 = scmp.ne.s32.totalorder %s116, %s118
      %p122 = scmp.eq.s32.totalorder %s82, 0
      %p123 = por %p121, %p122
      %p124 = scmp.ne.s32.totalorder %s116, %s118
      %p125 = scmp.eq.s32.totalorder %s87, 1
      %p126 = por %p124, %p125
      %p127 = scmp.ne.s32.totalorder %s118, %s119
      %p128 = scmp.eq.s32.totalorder %s87, 0
      %p129 = por %p127, %p128
      %p130 = scmp.ne.s32.totalorder %s118, %s119
      %p131 = scmp.eq.s32.totalorder %s88, 1
      %p132 = por %p130, %p131
      %p134 = scmp.ne.s32.totalorder %s119, %s133
      %p135 = scmp.eq.s32.totalorder %s88, 0
      %p136 = por %p134, %p135
      %s138 = sadd.s32 %s137, 1
      %p141 = scmp.eq.s32.totalorder %s82, 1
      %p142 = scmp.ne.s32.totalorder %s137, %s139
      %p143 = scmp.eq.s32.totalorder %s82, 0
      %p144 = por %p142, %p143
      %p145 = scmp.ne.s32.totalorder %s137, %s139
      %p146 = scmp.eq.s32.totalorder %s87, 1
      %p147 = por %p145, %p146
      %p148 = scmp.ne.s32.totalorder %s139, %s140
      %p149 = scmp.eq.s32.totalorder %s87, 0
      %p150 = por %p148, %p149
      %p151 = scmp.ne.s32.totalorder %s139, %s140
      %p152 = scmp.eq.s32.totalorder %s88, 1
      %p153 = por %p151, %p152
      %p155 = scmp.ne.s32.totalorder %s140, %s154
      %p156 = scmp.eq.s32.totalorder %s88, 0
      %p157 = por %p155, %p156
      %s159 = sadd.s32 %s158, 1
      %p162 = scmp.eq.s32.totalorder %s82, 1
      %p163 = scmp.ne.s32.totalorder %s158, %s160
      %p164 = scmp.eq.s32.totalorder %s82, 0
      %p165 = por %p163, %p164
      %p166 = scmp.ne.s32.totalorder %s158, %s160
      %p167 = scmp.eq.s32.totalorder %s87, 1
      %p168 = por %p166, %p167
      %p169 = scmp.ne.s32.totalorder %s160, %s161
      %p170 = scmp.eq.s32.totalorder %s87, 0
      %p171 = por %p169, %p170
      %p172 = scmp.ne.s32.totalorder %s160, %s161
      %p173 = scmp.eq.s32.totalorder %s88, 1
      %p174 = por %p172, %p173
      %p176 = scmp.ne.s32.totalorder %s161, %s175
      %p177 = scmp.eq.s32.totalorder %s88, 0
      %p178 = por %p176, %p177
      %s180 = sadd.s32 %s179, 1
      %p183 = scmp.eq.s32.totalorder %s82, 1
      %p184 = scmp.ne.s32.totalorder %s179, %s181
      %p185 = scmp.eq.s32.totalorder %s82, 0
      %p186 = por %p184, %p185
      %p187 = scmp.ne.s32.totalorder %s179, %s181
      %p188 = scmp.eq.s32.totalorder %s87, 1
      %p189 = por %p187, %p188
      %p190 = scmp.ne.s32.totalorder %s181, %s182
      %p191 = scmp.eq.s32.totalorder %s87, 0
      %p192 = por %p190, %p191
      %p193 = scmp.ne.s32.totalorder %s181, %s182
      %p194 = scmp.eq.s32.totalorder %s88, 1
      %p195 = por %p193, %p194
      %p197 = scmp.ne.s32.totalorder %s182, %s196
      %p198 = scmp.eq.s32.totalorder %s88, 0
      %p199 = por %p197, %p198
      %s201 = sadd.s32 %s200, 1
      %p204 = scmp.eq.s32.totalorder %s82, 1
      %p205 = scmp.ne.s32.totalorder %s200, %s202
      %p206 = scmp.eq.s32.totalorder %s82, 0
      %p207 = por %p205, %p206
      %p208 = scmp.ne.s32.totalorder %s200, %s202
      %p209 = scmp.eq.s32.totalorder %s87, 1
      %p210 = por %p208, %p209
      %p211 = scmp.ne.s32.totalorder %s202, %s203
      %p212 = scmp.eq.s32.totalorder %s87, 0
      %p213 = por %p211, %p212
      %p214 = scmp.ne.s32.totalorder %s202, %s203
      %p215 = scmp.eq.s32.totalorder %s88, 1
      %p216 = por %p214, %p215
      %p218 = scmp.ne.s32.totalorder %s203, %s217
      %p219 = scmp.eq.s32.totalorder %s88, 0
      %p220 = por %p218, %p219
      %s222 = sadd.s32 %s221, 1
      %p225 = scmp.eq.s32.totalorder %s82, 1
      %p226 = scmp.ne.s32.totalorder %s221, %s223
      %p227 = scmp.eq.s32.totalorder %s82, 0
      %p228 = por %p226, %p227
      %p229 = scmp.ne.s32.totalorder %s221, %s223
      %p230 = scmp.eq.s32.totalorder %s87, 1
      %p231 = por %p229, %p230
      %p232 = scmp.ne.s32.totalorder %s223, %s224
      %p233 = scmp.eq.s32.totalorder %s87, 0
      %p234 = por %p232, %p233
      %p235 = scmp.ne.s32.totalorder %s223, %s224
      %p236 = scmp.eq.s32.totalorder %s88, 1
      %p237 = por %p235, %p236
      %p239 = scmp.ne.s32.totalorder %s224, %s238
      %p240 = scmp.eq.s32.totalorder %s88, 0
      %p241 = por %p239, %p240
      %s243 = sadd.s32 %s242, 1
      %p246 = scmp.eq.s32.totalorder %s82, 1
      %p247 = scmp.ne.s32.totalorder %s242, %s244
      %p248 = scmp.eq.s32.totalorder %s82, 0
      %p249 = por %p247, %p248
      %p250 = scmp.ne.s32.totalorder %s242, %s244
      %p251 = scmp.eq.s32.totalorder %s87, 1
      %p252 = por %p250, %p251
      %p253 = scmp.ne.s32.totalorder %s244, %s245
      %p254 = scmp.eq.s32.totalorder %s87, 0
      %p255 = por %p253, %p254
      %p256 = scmp.ne.s32.totalorder %s244, %s245
      %p257 = scmp.eq.s32.totalorder %s88, 1
      %p258 = por %p256, %p257
      %p260 = scmp.ne.s32.totalorder %s245, %s259
      %p261 = scmp.eq.s32.totalorder %s88, 0
      %p262 = por %p260, %p261
      %s264 = sadd.s32 %s263, 1
      %p267 = scmp.eq.s32.totalorder %s82, 1
      %p268 = scmp.ne.s32.totalorder %s263, %s265
      %p269 = scmp.eq.s32.totalorder %s82, 0
      %p270 = por %p268, %p269
      %p271 = scmp.ne.s32.totalorder %s263, %s265
      %p272 = scmp.eq.s32.totalorder %s87, 1
      %p273 = por %p271, %p272
      %p274 = scmp.ne.s32.totalorder %s265, %s266
      %p275 = scmp.eq.s32.totalorder %s87, 0
      %p276 = por %p274, %p275
      %p277 = scmp.ne.s32.totalorder %s265, %s266
      %p278 = scmp.eq.s32.totalorder %s88, 1
      %p279 = por %p277, %p278
      %p281 = scmp.ne.s32.totalorder %s266, %s280
      %p282 = scmp.eq.s32.totalorder %s88, 0
      %p283 = por %p281, %p282
      %s285 = sadd.s32 %s284, 1
      %p288 = scmp.eq.s32.totalorder %s82, 1
      %p289 = scmp.ne.s32.totalorder %s284, %s286
      %p290 = scmp.eq.s32.totalorder %s82, 0
      %p291 = por %p289, %p290
      %p292 = scmp.ne.s32.totalorder %s284, %s286
      %p293 = scmp.eq.s32.totalorder %s87, 1
      %p294 = por %p292, %p293
      %p295 = scmp.ne.s32.totalorder %s286, %s287
      %p296 = scmp.eq.s32.totalorder %s87, 0
      %p297 = por %p295, %p296
      %p298 = scmp.ne.s32.totalorder %s286, %s287
      %p299 = scmp.eq.s32.totalorder %s88, 1
      %p300 = por %p298, %p299
      %p302 = scmp.ne.s32.totalorder %s287, %s301
      %p303 = scmp.eq.s32.totalorder %s88, 0
      %p304 = por %p302, %p303
      %s306 = sadd.s32 %s305, 1
      %p309 = scmp.eq.s32.totalorder %s82, 1
      %p310 = scmp.ne.s32.totalorder %s305, %s307
      %p311 = scmp.eq.s32.totalorder %s82, 0
      %p312 = por %p310, %p311
      %p313 = scmp.ne.s32.totalorder %s305, %s307
      %p314 = scmp.eq.s32.totalorder %s87, 1
      %p315 = por %p313, %p314
      %p316 = scmp.ne.s32.totalorder %s307, %s308
      %p317 = scmp.eq.s32.totalorder %s87, 0
      %p318 = por %p316, %p317
      %p319 = scmp.ne.s32.totalorder %s307, %s308
      %p320 = scmp.eq.s32.totalorder %s88, 1
      %p321 = por %p319, %p320
      %p323 = scmp.ne.s32.totalorder %s308, %s322
      %p324 = scmp.eq.s32.totalorder %s88, 0
      %p325 = por %p323, %p324
      %s327 = sadd.s32 %s326, 1
      %p330 = scmp.eq.s32.totalorder %s82, 1
      %p331 = scmp.ne.s32.totalorder %s326, %s328
      %p332 = scmp.eq.s32.totalorder %s82, 0
      %p333 = por %p331, %p332
      %p334 = scmp.ne.s32.totalorder %s326, %s328
      %p335 = scmp.eq.s32.totalorder %s87, 1
      %p336 = por %p334, %p335
      %p337 = scmp.ne.s32.totalorder %s328, %s329
      %p338 = scmp.eq.s32.totalorder %s87, 0
      %p339 = por %p337, %p338
      %p340 = scmp.ne.s32.totalorder %s328, %s329
      %p341 = scmp.eq.s32.totalorder %s88, 1
      %p342 = por %p340, %p341
      %p344 = scmp.ne.s32.totalorder %s329, %s343
      %p345 = scmp.eq.s32.totalorder %s88, 0
      %p346 = por %p344, %p345
      %s348 = sadd.s32 %s347, 1
      %p351 = scmp.eq.s32.totalorder %s82, 1
      %p352 = scmp.ne.s32.totalorder %s347, %s349
      %p353 = scmp.eq.s32.totalorder %s82, 0
      %p354 = por %p352, %p353
      %p355 = scmp.ne.s32.totalorder %s347, %s349
      %p356 = scmp.eq.s32.totalorder %s87, 1
      %p357 = por %p355, %p356
      %p358 = scmp.ne.s32.totalorder %s349, %s350
      %p359 = scmp.eq.s32.totalorder %s87, 0
      %p360 = por %p358, %p359
      %p361 = scmp.ne.s32.totalorder %s349, %s350
      %p362 = scmp.eq.s32.totalorder %s88, 1
      %p363 = por %p361, %p362
      %p365 = scmp.ne.s32.totalorder %s350, %s364
      %p366 = scmp.eq.s32.totalorder %s88, 0
      %p367 = por %p365, %p366
      %s369 = sadd.s32 %s368, 1
      %p372 = scmp.eq.s32.totalorder %s82, 1
      %p373 = scmp.ne.s32.totalorder %s368, %s370
      %p374 = scmp.eq.s32.totalorder %s82, 0
      %p375 = por %p373, %p374
      %p376 = scmp.ne.s32.totalorder %s368, %s370
      %p377 = scmp.eq.s32.totalorder %s87, 1
      %p378 = por %p376, %p377
      %p379 = scmp.ne.s32.totalorder %s370, %s371
      %p380 = scmp.eq.s32.totalorder %s87, 0
      %p381 = por %p379, %p380
      %p382 = scmp.ne.s32.totalorder %s370, %s371
      %p383 = scmp.eq.s32.totalorder %s88, 1
      %p384 = por %p382, %p383
      %p386 = scmp.ne.s32.totalorder %s371, %s385
      %p387 = scmp.eq.s32.totalorder %s88, 0
      %p388 = por %p386, %p387
      %s390 = sadd.s32 %s389, 1
      %p393 = scmp.eq.s32.totalorder %s82, 1
      %p394 = scmp.ne.s32.totalorder %s389, %s391
      %p395 = scmp.eq.s32.totalorder %s82, 0
      %p396 = por %p394, %p395
      %p397 = scmp.ne.s32.totalorder %s389, %s391
      %p398 = scmp.eq.s32.totalorder %s87, 1
      %p399 = por %p397, %p398
      %p400 = scmp.ne.s32.totalorder %s391, %s392
      %p401 = scmp.eq.s32.totalorder %s87, 0
      %p402 = por %p400, %p401
      %p403 = scmp.ne.s32.totalorder %s391, %s392
      %p404 = scmp.eq.s32.totalorder %s88, 1
      %p405 = por %p403, %p404
      %p407 = scmp.ne.s32.totalorder %s392, %s406
      %p408 = scmp.eq.s32.totalorder %s88, 0
      %p409 = por %p407, %p408
      %s411 = sadd.s32 %s410, 1
      %p414 = scmp.eq.s32.totalorder %s82, 1
      %p415 = scmp.ne.s32.totalorder %s410, %s412
      %p416 = scmp.eq.s32.totalorder %s82, 0
      %p417 = por %p415, %p416
      %p418 = scmp.ne.s32.totalorder %s410, %s412
      %p419 = scmp.eq.s32.totalorder %s87, 1
      %p420 = por %p418, %p419
      %p421 = scmp.ne.s32.totalorder %s412, %s413
      %p422 = scmp.eq.s32.totalorder %s87, 0
      %p423 = por %p421, %p422
      %p424 = scmp.ne.s32.totalorder %s412, %s413
      %p425 = scmp.eq.s32.totalorder %s88, 1
      %p426 = por %p424, %p425
      %p428 = scmp.ne.s32.totalorder %s413, %s427
      %p429 = scmp.eq.s32.totalorder %s88, 0
      %p430 = por %p428, %p429
      %s432 = sadd.s32 %s431, 1
      %p435 = scmp.eq.s32.totalorder %s82, 1
      %p436 = scmp.ne.s32.totalorder %s431, %s433
      %p437 = scmp.eq.s32.totalorder %s82, 0
      %p438 = por %p436, %p437
      %p439 = scmp.ne.s32.totalorder %s431, %s433
      %p440 = scmp.eq.s32.totalorder %s87, 1
      %p441 = por %p439, %p440
      %p442 = scmp.ne.s32.totalorder %s433, %s434
      %p443 = scmp.eq.s32.totalorder %s87, 0
      %p444 = por %p442, %p443
      %p445 = scmp.ne.s32.totalorder %s433, %s434
      %p446 = scmp.eq.s32.totalorder %s88, 1
      %p447 = por %p445, %p446
      %p449 = scmp.ne.s32.totalorder %s434, %s448
      %p450 = scmp.eq.s32.totalorder %s88, 0
      %p451 = por %p449, %p450
      %s453 = sadd.s32 %s452, 1
      %p456 = scmp.eq.s32.totalorder %s82, 1
      %p457 = scmp.ne.s32.totalorder %s452, %s454
      %p458 = scmp.eq.s32.totalorder %s82, 0
      %p459 = por %p457, %p458
      %p460 = scmp.ne.s32.totalorder %s452, %s454
      %p461 = scmp.eq.s32.totalorder %s87, 1
      %p462 = por %p460, %p461
      %p463 = scmp.ne.s32.totalorder %s454, %s455
      %p464 = scmp.eq.s32.totalorder %s87, 0
      %p465 = por %p463, %p464
      %p466 = scmp.ne.s32.totalorder %s454, %s455
      %p467 = scmp.eq.s32.totalorder %s88, 1
      %p468 = por %p466, %p467
      %p470 = scmp.ne.s32.totalorder %s455, %s469
      %p471 = scmp.eq.s32.totalorder %s88, 0
      %p472 = por %p470, %p471
      %s474 = sadd.s32 %s473, 1
      %p477 = scmp.eq.s32.totalorder %s82, 1
      %p478 = scmp.ne.s32.totalorder %s473, %s475
      %p479 = scmp.eq.s32.totalorder %s82, 0
      %p480 = por %p478, %p479
      %p481 = scmp.ne.s32.totalorder %s473, %s475
      %p482 = scmp.eq.s32.totalorder %s87, 1
      %p483 = por %p481, %p482
      %p484 = scmp.ne.s32.totalorder %s475, %s476
      %p485 = scmp.eq.s32.totalorder %s87, 0
      %p486 = por %p484, %p485
      %p487 = scmp.ne.s32.totalorder %s475, %s476
      %p488 = scmp.eq.s32.totalorder %s88, 1
      %p489 = por %p487, %p488
      %p491 = scmp.ne.s32.totalorder %s476, %s490
      %p492 = scmp.eq.s32.totalorder %s88, 0
      %p493 = por %p491, %p492
      %s495 = sadd.s32 %s494, 1
      %p498 = scmp.eq.s32.totalorder %s82, 1
      %p499 = scmp.ne.s32.totalorder %s494, %s496
      %p500 = scmp.eq.s32.totalorder %s82, 0
      %p501 = por %p499, %p500
      %p502 = scmp.ne.s32.totalorder %s494, %s496
      %p503 = scmp.eq.s32.totalorder %s87, 1
      %p504 = por %p502, %p503
      %p505 = scmp.ne.s32.totalorder %s496, %s497
      %p506 = scmp.eq.s32.totalorder %s87, 0
      %p507 = por %p505, %p506
      %p508 = scmp.ne.s32.totalorder %s496, %s497
      %p509 = scmp.eq.s32.totalorder %s88, 1
      %p510 = por %p508, %p509
      %p512 = scmp.ne.s32.totalorder %s497, %s511
      %p513 = scmp.eq.s32.totalorder %s88, 0
      %p514 = por %p512, %p513
      %s516 = sadd.s32 %s515, 1
      %p519 = scmp.eq.s32.totalorder %s82, 1
      %p520 = scmp.ne.s32.totalorder %s515, %s517
      %p521 = scmp.eq.s32.totalorder %s82, 0
      %p522 = por %p520, %p521
      %p523 = scmp.ne.s32.totalorder %s515, %s517
      %p524 = scmp.eq.s32.totalorder %s87, 1
      %p525 = por %p523, %p524
      %p526 = scmp.ne.s32.totalorder %s517, %s518
      %p527 = scmp.eq.s32.totalorder %s87, 0
      %p528 = por %p526, %p527
      %p529 = scmp.ne.s32.totalorder %s517, %s518
      %p530 = scmp.eq.s32.totalorder %s88, 1
      %p531 = por %p529, %p530
      %p533 = scmp.ne.s32.totalorder %s518, %s532
      %p534 = scmp.eq.s32.totalorder %s88, 0
      %p535 = por %p533, %p534
      %s537 = sadd.s32 %s536, 1
      %p540 = scmp.eq.s32.totalorder %s82, 1
      %p541 = scmp.ne.s32.totalorder %s536, %s538
      %p542 = scmp.eq.s32.totalorder %s82, 0
      %p543 = por %p541, %p542
      %p544 = scmp.ne.s32.totalorder %s536, %s538
      %p545 = scmp.eq.s32.totalorder %s87, 1
      %p546 = por %p544, %p545
      %p547 = scmp.ne.s32.totalorder %s538, %s539
      %p548 = scmp.eq.s32.totalorder %s87, 0
      %p549 = por %p547, %p548
      %p550 = scmp.ne.s32.totalorder %s538, %s539
      %p551 = scmp.eq.s32.totalorder %s88, 1
      %p552 = por %p550, %p551
      %p554 = scmp.ne.s32.totalorder %s539, %s553
      %p555 = scmp.eq.s32.totalorder %s88, 0
      %p556 = por %p554, %p555
      %s558 = sadd.s32 %s557, 1
      %p561 = scmp.eq.s32.totalorder %s82, 1
      %p562 = scmp.ne.s32.totalorder %s557, %s559
      %p563 = scmp.eq.s32.totalorder %s82, 0
      %p564 = por %p562, %p563
      %p565 = scmp.ne.s32.totalorder %s557, %s559
      %p566 = scmp.eq.s32.totalorder %s87, 1
      %p567 = por %p565, %p566
      %p568 = scmp.ne.s32.totalorder %s559, %s560
      %p569 = scmp.eq.s32.totalorder %s87, 0
      %p570 = por %p568, %p569
      %p571 = scmp.ne.s32.totalorder %s559, %s560
      %p572 = scmp.eq.s32.totalorder %s88, 1
      %p573 = por %p571, %p572
      %p575 = scmp.ne.s32.totalorder %s560, %s574
      %p576 = scmp.eq.s32.totalorder %s88, 0
      %p577 = por %p575, %p576
      %s579 = sadd.s32 %s578, 1
      %p582 = scmp.eq.s32.totalorder %s82, 1
      %p583 = scmp.ne.s32.totalorder %s578, %s580
      %p584 = scmp.eq.s32.totalorder %s82, 0
      %p585 = por %p583, %p584
      %p586 = scmp.ne.s32.totalorder %s578, %s580
      %p587 = scmp.eq.s32.totalorder %s87, 1
      %p588 = por %p586, %p587
      %p589 = scmp.ne.s32.totalorder %s580, %s581
      %p590 = scmp.eq.s32.totalorder %s87, 0
      %p591 = por %p589, %p590
      %p592 = scmp.ne.s32.totalorder %s580, %s581
      %p593 = scmp.eq.s32.totalorder %s88, 1
      %p594 = por %p592, %p593
      %p596 = scmp.ne.s32.totalorder %s581, %s595
      %p597 = scmp.eq.s32.totalorder %s88, 0
      %p598 = por %p596, %p597
      %s600 = sadd.s32 %s599, 1
      %p603 = scmp.eq.s32.totalorder %s82, 1
      %p604 = scmp.ne.s32.totalorder %s599, %s601
      %p605 = scmp.eq.s32.totalorder %s82, 0
      %p606 = por %p604, %p605
      %p607 = scmp.ne.s32.totalorder %s599, %s601
      %p608 = scmp.eq.s32.totalorder %s87, 1
      %p609 = por %p607, %p608
      %p610 = scmp.ne.s32.totalorder %s601, %s602
      %p611 = scmp.eq.s32.totalorder %s87, 0
      %p612 = por %p610, %p611
      %p613 = scmp.ne.s32.totalorder %s601, %s602
      %p614 = scmp.eq.s32.totalorder %s88, 1
      %p615 = por %p613, %p614
      %p617 = scmp.ne.s32.totalorder %s602, %s616
      %p618 = scmp.eq.s32.totalorder %s88, 0
      %p619 = por %p617, %p618
      %s621 = sadd.s32 %s620, 1
      %p624 = scmp.eq.s32.totalorder %s82, 1
      %p625 = scmp.ne.s32.totalorder %s620, %s622
      %p626 = scmp.eq.s32.totalorder %s82, 0
      %p627 = por %p625, %p626
      %p628 = scmp.ne.s32.totalorder %s620, %s622
      %p629 = scmp.eq.s32.totalorder %s87, 1
      %p630 = por %p628, %p629
      %p631 = scmp.ne.s32.totalorder %s622, %s623
      %p632 = scmp.eq.s32.totalorder %s87, 0
      %p633 = por %p631, %p632
      %p634 = scmp.ne.s32.totalorder %s622, %s623
      %p635 = scmp.eq.s32.totalorder %s88, 1
      %p636 = por %p634, %p635
      %p638 = scmp.ne.s32.totalorder %s623, %s637
      %p639 = scmp.eq.s32.totalorder %s88, 0
      %p640 = por %p638, %p639
      %s642 = sadd.s32 %s641, 1
      %p645 = scmp.eq.s32.totalorder %s82, 1
      %p646 = scmp.ne.s32.totalorder %s641, %s643
      %p647 = scmp.eq.s32.totalorder %s82, 0
      %p648 = por %p646, %p647
      %p649 = scmp.ne.s32.totalorder %s641, %s643
      %p650 = scmp.eq.s32.totalorder %s87, 1
      %p651 = por %p649, %p650
      %p652 = scmp.ne.s32.totalorder %s643, %s644
      %p653 = scmp.eq.s32.totalorder %s87, 0
      %p654 = por %p652, %p653
      %p655 = scmp.ne.s32.totalorder %s643, %s644
      %p656 = scmp.eq.s32.totalorder %s88, 1
      %p657 = por %p655, %p656
      %p659 = scmp.ne.s32.totalorder %s644, %s658
      %p660 = scmp.eq.s32.totalorder %s88, 0
      %p661 = por %p659, %p660
      %s663 = sadd.s32 %s662, 1
      %p666 = scmp.eq.s32.totalorder %s82, 1
      %p667 = scmp.ne.s32.totalorder %s662, %s664
      %p668 = scmp.eq.s32.totalorder %s82, 0
      %p669 = por %p667, %p668
      %p670 = scmp.ne.s32.totalorder %s662, %s664
      %p671 = scmp.eq.s32.totalorder %s87, 1
      %p672 = por %p670, %p671
      %p673 = scmp.ne.s32.totalorder %s664, %s665
      %p674 = scmp.eq.s32.totalorder %s87, 0
      %p675 = por %p673, %p674
      %p676 = scmp.ne.s32.totalorder %s664, %s665
      %p677 = scmp.eq.s32.totalorder %s88, 1
      %p678 = por %p676, %p677
      %p680 = scmp.ne.s32.totalorder %s665, %s679
      %p681 = scmp.eq.s32.totalorder %s88, 0
      %p682 = por %p680, %p681
      %s684 = sadd.s32 %s683, 1
      %p687 = scmp.eq.s32.totalorder %s82, 1
      %p688 = scmp.ne.s32.totalorder %s683, %s685
      %p689 = scmp.eq.s32.totalorder %s82, 0
      %p690 = por %p688, %p689
      %p691 = scmp.ne.s32.totalorder %s683, %s685
      %p692 = scmp.eq.s32.totalorder %s87, 1
      %p693 = por %p691, %p692
      %p694 = scmp.ne.s32.totalorder %s685, %s686
      %p695 = scmp.eq.s32.totalorder %s87, 0
      %p696 = por %p694, %p695
      %p697 = scmp.ne.s32.totalorder %s685, %s686
      %p698 = scmp.eq.s32.totalorder %s88, 1
      %p699 = por %p697, %p698
      %p701 = scmp.ne.s32.totalorder %s686, %s700
      %p702 = scmp.eq.s32.totalorder %s88, 0
      %p703 = por %p701, %p702
      %s705 = sadd.s32 %s704, 1
      %p708 = scmp.eq.s32.totalorder %s82, 1
      %p709 = scmp.ne.s32.totalorder %s704, %s706
      %p710 = scmp.eq.s32.totalorder %s82, 0
      %p711 = por %p709, %p710
      %p712 = scmp.ne.s32.totalorder %s704, %s706
      %p713 = scmp.eq.s32.totalorder %s87, 1
      %p714 = por %p712, %p713
      %p715 = scmp.ne.s32.totalorder %s706, %s707
      %p716 = scmp.eq.s32.totalorder %s87, 0
      %p717 = por %p715, %p716
      %p718 = scmp.ne.s32.totalorder %s706, %s707
      %p719 = scmp.eq.s32.totalorder %s88, 1
      %p720 = por %p718, %p719
      %p722 = scmp.ne.s32.totalorder %s707, %s721
      %p723 = scmp.eq.s32.totalorder %s88, 0
      %p724 = por %p722, %p723
      %s726 = sadd.s32 %s725, 1
      %p729 = scmp.eq.s32.totalorder %s82, 1
      %p730 = scmp.ne.s32.totalorder %s725, %s727
      %p731 = scmp.eq.s32.totalorder %s82, 0
      %p732 = por %p730, %p731
      %p733 = scmp.ne.s32.totalorder %s725, %s727
      %p734 = scmp.eq.s32.totalorder %s87, 1
      %p735 = por %p733, %p734
      %p736 = scmp.ne.s32.totalorder %s727, %s728
      %p737 = scmp.eq.s32.totalorder %s87, 0
      %p738 = por %p736, %p737
      %p739 = scmp.ne.s32.totalorder %s727, %s728
      %p740 = scmp.eq.s32.totalorder %s88, 1
      %p741 = por %p739, %p740
      %p743 = scmp.ne.s32.totalorder %s728, %s742
      %p744 = scmp.eq.s32.totalorder %s88, 0
      %p745 = por %p743, %p744
      %s747 = sadd.s32 %s746, 1
      %p750 = scmp.eq.s32.totalorder %s82, 1
      %p751 = scmp.ne.s32.totalorder %s746, %s748
      %p752 = scmp.eq.s32.totalorder %s82, 0
      %p753 = por %p751, %p752
      %p754 = scmp.ne.s32.totalorder %s746, %s748
      %p755 = scmp.eq.s32.totalorder %s87, 1
      %p756 = por %p754, %p755
      %p757 = scmp.ne.s32.totalorder %s748, %s749
      %p758 = scmp.eq.s32.totalorder %s87, 0
      %p759 = por %p757, %p758
      %p760 = scmp.ne.s32.totalorder %s748, %s749
      %p761 = scmp.eq.s32.totalorder %s88, 1
      %p762 = por %p760, %p761
      %p764 = scmp.ne.s32.totalorder %s749, %s763
      %p765 = scmp.eq.s32.totalorder %s88, 0
      %p766 = por %p764, %p765
      %s767 = ssub.s32 %s82, %s89
      %p768 = scmp.eq.s32.totalorder %s767, 0
      %s770 = sadd.s32 %s769, 1
      %s771 = scalar_select %p768, %s769, %s770
      %p774 = pneg %p768
      %p775 = scmp.eq.s32.totalorder %s82, 1
      %p776 = por %p774, %p775
      %p777 = scmp.ne.s32.totalorder %s769, %s772
      %p778 = scmp.eq.s32.totalorder %s82, 0
      %p779 = por %p777, %p778
      %p780 = scmp.ne.s32.totalorder %s769, %s772
      %p781 = scmp.eq.s32.totalorder %s87, 1
      %p782 = por %p780, %p781
      %p783 = scmp.ne.s32.totalorder %s772, %s773
      %p784 = scmp.eq.s32.totalorder %s87, 0
      %p785 = por %p783, %p784
      %p786 = scmp.ne.s32.totalorder %s772, %s773
      %p787 = scmp.eq.s32.totalorder %s88, 1
      %p788 = por %p786, %p787
      %p790 = scmp.ne.s32.totalorder %s773, %s789
      %p791 = scmp.eq.s32.totalorder %s88, 0
      %p792 = por %p790, %p791
      %p793 = scmp.le.s32.totalorder 1, %s82
      %p794 = scmp.lt.s32.totalorder %s82, 3
      %p795 = pnand %p793, %p794
      %p796 = pneg %p795
      // Predicated region
      $region9: #{forward.1} parent=5 // pred_check
        _
      $region10: #{forward.1} parent=5 // pred_check_branch
        %798 = sbr.rel (%p795) target = $region12
      $region11: #{forward.1} parent=5 // pred_region
        %s799 = ssub.s32 %s82, 1
        // Predicated region
        $region13: #{forward.1} parent=11 // pred_check
          %p800 = pneg %p129
        $region14: #{forward.1} parent=11 // pred_check_branch
          %802 = sbr.rel (%p800) target = $region16
        $region15: #{forward.1} parent=11 // pred_region
          _
        $region16: #{forward.1} parent=11 // pred_fallthru
          _
        // Predicated region
        $region17: #{forward.1} parent=11 // pred_check
          %p803 = pneg %p150
        $region18: #{forward.1} parent=11 // pred_check_branch
          %805 = sbr.rel (%p803) target = $region20
        $region19: #{forward.1} parent=11 // pred_region
          %s807 = ssub.s32 256, 256
          %808 = vsyncadd [#allocation3], %s807
          %s809 = sshll.u32 [#allocation2], 4
          %s810 = int_to_ptr.vmem [resolvable:$true] %s809
          %815 = dma.hbm_to_vmem [thread:$0]  %s5, 256, %s810, [#allocation3], 128, 128, 8
        $region20: #{forward.1} parent=11 // pred_fallthru
          _
        // Predicated region
        $region21: #{forward.1} parent=11 // pred_check
          %p816 = pneg %p171
        $region22: #{forward.1} parent=11 // pred_check_branch
          %818 = sbr.rel (%p816) target = $region24
        $region23: #{forward.1} parent=11 // pred_region
          _
        $region24: #{forward.1} parent=11 // pred_fallthru
          _
        // Predicated region
        $region25: #{forward.1} parent=11 // pred_check
          %p819 = pneg %p192
        $region26: #{forward.1} parent=11 // pred_check_branch
          %821 = sbr.rel (%p819) target = $region28
        $region27: #{forward.1} parent=11 // pred_region
          %s823 = ssub.s32 256, 256
          %824 = vsyncadd [#allocation5], %s823
          %s825 = sshll.u32 [#allocation4], 4
          %s826 = int_to_ptr.vmem [resolvable:$true] %s825
          %831 = dma.hbm_to_vmem [thread:$0]  %s9, 256, %s826, [#allocation5], 128, 128, 8
        $region28: #{forward.1} parent=11 // pred_fallthru
          _
        // Predicated region
        $region29: #{forward.1} parent=11 // pred_check
          %p832 = pneg %p213
        $region30: #{forward.1} parent=11 // pred_check_branch
          %834 = sbr.rel (%p832) target = $region32
        $region31: #{forward.1} parent=11 // pred_region
          %s836 = ssub.s32 54784, 54784
          %837 = vsyncadd [#allocation5], %s836
          %s838 = sshll.u32 [#allocation6], 4
          %s839 = int_to_ptr.vmem [resolvable:$true] %s838
          %844 = dma.hbm_to_vmem [thread:$0]  %s11, 54784, %s839, [#allocation5], 256, 256, 16
        $region32: #{forward.1} parent=11 // pred_fallthru
          _
        // Predicated region
        $region33: #{forward.1} parent=11 // pred_check
          %p845 = pneg %p234
        $region34: #{forward.1} parent=11 // pred_check_branch
          %847 = sbr.rel (%p845) target = $region36
        $region35: #{forward.1} parent=11 // pred_region
          _
        $region36: #{forward.1} parent=11 // pred_fallthru
          _
        // Predicated region
        $region37: #{forward.1} parent=11 // pred_check
          %p848 = pneg %p255
        $region38: #{forward.1} parent=11 // pred_check_branch
          %850 = sbr.rel (%p848) target = $region40
        $region39: #{forward.1} parent=11 // pred_region
          %s852 = ssub.s32 256, 256
          %853 = vsyncadd [#allocation8], %s852
          %s854 = sshll.u32 [#allocation7], 4
          %s855 = int_to_ptr.vmem [resolvable:$true] %s854
          %860 = dma.hbm_to_vmem [thread:$0]  %s15, 256, %s855, [#allocation8], 128, 128, 8
        $region40: #{forward.1} parent=11 // pred_fallthru
          _
        // Predicated region
        $region41: #{forward.1} parent=11 // pred_check
          %p861 = pneg %p276
        $region42: #{forward.1} parent=11 // pred_check_branch
          %863 = sbr.rel (%p861) target = $region44
        $region43: #{forward.1} parent=11 // pred_region
          _
        $region44: #{forward.1} parent=11 // pred_fallthru
          _
        // Predicated region
        $region45: #{forward.1} parent=11 // pred_check
          %p864 = pneg %p297
        $region46: #{forward.1} parent=11 // pred_check_branch
          %866 = sbr.rel (%p864) target = $region48
        $region47: #{forward.1} parent=11 // pred_region
          %s868 = ssub.s32 256, 256
          %869 = vsyncadd [#allocation8], %s868
          %s870 = sshll.u32 [#allocation9], 4
          %s871 = int_to_ptr.vmem [resolvable:$true] %s870
          %876 = dma.hbm_to_vmem [thread:$0]  %s19, 256, %s871, [#allocation8], 128, 128, 8
        $region48: #{forward.1} parent=11 // pred_fallthru
          _
        // Predicated region
        $region49: #{forward.1} parent=11 // pred_check
          %p877 = pneg %p318
        $region50: #{forward.1} parent=11 // pred_check_branch
          %879 = sbr.rel (%p877) target = $region52
        $region51: #{forward.1} parent=11 // pred_region
          %s881 = ssub.s32 2368, 2368
          %882 = vsyncadd [#allocation11], %s881
          %s883 = sshll.u32 [#allocation10], 4
          %s884 = int_to_ptr.vmem [resolvable:$true] %s883
          %889 = dma.hbm_to_vmem [thread:$0]  %s21, 2368, %s884, [#allocation11], 64, 64, 4
        $region52: #{forward.1} parent=11 // pred_fallthru
          _
        // Predicated region
        $region53: #{forward.1} parent=11 // pred_check
          %p890 = pneg %p339
        $region54: #{forward.1} parent=11 // pred_check_branch
          %892 = sbr.rel (%p890) target = $region56
        $region55: #{forward.1} parent=11 // pred_region
          _
        $region56: #{forward.1} parent=11 // pred_fallthru
          _
        // Predicated region
        $region57: #{forward.1} parent=11 // pred_check
          %p893 = pneg %p360
        $region58: #{forward.1} parent=11 // pred_check_branch
          %895 = sbr.rel (%p893) target = $region60
        $region59: #{forward.1} parent=11 // pred_region
          %s897 = ssub.s32 512, 512
          %898 = vsyncadd [#allocation11], %s897
          %s899 = sshll.u32 [#allocation12], 4
          %s900 = int_to_ptr.vmem [resolvable:$true] %s899
          %905 = dma.hbm_to_vmem [thread:$0]  %s25, 512, %s900, [#allocation11], 128, 128, 8
        $region60: #{forward.1} parent=11 // pred_fallthru
          _
        // Predicated region
        $region61: #{forward.1} parent=11 // pred_check
          %p906 = pneg %p381
        $region62: #{forward.1} parent=11 // pred_check_branch
          %908 = sbr.rel (%p906) target = $region64
        $region63: #{forward.1} parent=11 // pred_region
          _
        $region64: #{forward.1} parent=11 // pred_fallthru
          _
        // Predicated region
        $region65: #{forward.1} parent=11 // pred_check
          %p909 = pneg %p402
        $region66: #{forward.1} parent=11 // pred_check_branch
          %911 = sbr.rel (%p909) target = $region68
        $region67: #{forward.1} parent=11 // pred_region
          %s913 = ssub.s32 512, 512
          %914 = vsyncadd [#allocation14], %s913
          %s915 = sshll.u32 [#allocation13], 4
          %s916 = int_to_ptr.vmem [resolvable:$true] %s915
          %921 = dma.hbm_to_vmem [thread:$0]  %s29, 512, %s916, [#allocation14], 128, 128, 8
        $region68: #{forward.1} parent=11 // pred_fallthru
          _
        // Predicated region
        $region69: #{forward.1} parent=11 // pred_check
          %p922 = pneg %p423
        $region70: #{forward.1} parent=11 // pred_check_branch
          %924 = sbr.rel (%p922) target = $region72
        $region71: #{forward.1} parent=11 // pred_region
          %s926 = ssub.s32 2048, 2048
          %927 = vsyncadd [#allocation14], %s926
          %s928 = sshll.u32 [#allocation15], 4
          %s929 = int_to_ptr.vmem [resolvable:$true] %s928
          %934 = dma.hbm_to_vmem [thread:$0]  %s31, 2048, %s929, [#allocation14], 128, 128, 8
        $region72: #{forward.1} parent=11 // pred_fallthru
          _
        // Predicated region
        $region73: #{forward.1} parent=11 // pred_check
          %p935 = pneg %p444
        $region74: #{forward.1} parent=11 // pred_check_branch
          %937 = sbr.rel (%p935) target = $region76
        $region75: #{forward.1} parent=11 // pred_region
          %s939 = ssub.s32 128, 128
          %940 = vsyncadd [#allocation17], %s939
          %s941 = sshll.u32 [#allocation16], 4
          %s942 = int_to_ptr.vmem [resolvable:$true] %s941
          %947 = dma.hbm_to_vmem [thread:$0]  %s33, 128, %s942, [#allocation17], 64, 64, 4
        $region76: #{forward.1} parent=11 // pred_fallthru
          _
        // Predicated region
        $region77: #{forward.1} parent=11 // pred_check
          %p948 = pneg %p465
        $region78: #{forward.1} parent=11 // pred_check_branch
          %950 = sbr.rel (%p948) target = $region80
        $region79: #{forward.1} parent=11 // pred_region
          %s952 = ssub.s32 256, 256
          %953 = vsyncadd [#allocation17], %s952
          %s954 = sshll.u32 [#allocation18], 4
          %s955 = int_to_ptr.vmem [resolvable:$true] %s954
          %960 = dma.hbm_to_vmem [thread:$0]  %s35, 256, %s955, [#allocation17], 128, 128, 8
        $region80: #{forward.1} parent=11 // pred_fallthru
          _
        // Predicated region
        $region81: #{forward.1} parent=11 // pred_check
          %p961 = pneg %p486
        $region82: #{forward.1} parent=11 // pred_check_branch
          %963 = sbr.rel (%p961) target = $region84
        $region83: #{forward.1} parent=11 // pred_region
          _
        $region84: #{forward.1} parent=11 // pred_fallthru
          _
        // Predicated region
        $region85: #{forward.1} parent=11 // pred_check
          %p964 = pneg %p507
        $region86: #{forward.1} parent=11 // pred_check_branch
          %966 = sbr.rel (%p964) target = $region88
        $region87: #{forward.1} parent=11 // pred_region
          %s968 = ssub.s32 256, 256
          %969 = vsyncadd [#allocation20], %s968
          %s970 = sshll.u32 [#allocation19], 4
          %s971 = int_to_ptr.vmem [resolvable:$true] %s970
          %976 = dma.hbm_to_vmem [thread:$0]  %s39, 256, %s971, [#allocation20], 128, 128, 8
        $region88: #{forward.1} parent=11 // pred_fallthru
          _
        // Predicated region
        $region89: #{forward.1} parent=11 // pred_check
          %p977 = pneg %p528
        $region90: #{forward.1} parent=11 // pred_check_branch
          %979 = sbr.rel (%p977) target = $region92
        $region91: #{forward.1} parent=11 // pred_region
          _
        $region92: #{forward.1} parent=11 // pred_fallthru
          _
        // Predicated region
        $region93: #{forward.1} parent=11 // pred_check
          %p980 = pneg %p549
        $region94: #{forward.1} parent=11 // pred_check_branch
          %982 = sbr.rel (%p980) target = $region96
        $region95: #{forward.1} parent=11 // pred_region
          %s984 = ssub.s32 256, 256
          %985 = vsyncadd [#allocation20], %s984
          %s986 = sshll.u32 [#allocation21], 4
          %s987 = int_to_ptr.vmem [resolvable:$true] %s986
          %992 = dma.hbm_to_vmem [thread:$0]  %s43, 256, %s987, [#allocation20], 128, 128, 8
        $region96: #{forward.1} parent=11 // pred_fallthru
          _
        // Predicated region
        $region97: #{forward.1} parent=11 // pred_check
          %p993 = pneg %p570
        $region98: #{forward.1} parent=11 // pred_check_branch
          %995 = sbr.rel (%p993) target = $region100
        $region99: #{forward.1} parent=11 // pred_region
          _
        $region100: #{forward.1} parent=11 // pred_fallthru
          _
        // Predicated region
        $region101: #{forward.1} parent=11 // pred_check
          %p996 = pneg %p591
        $region102: #{forward.1} parent=11 // pred_check_branch
          %998 = sbr.rel (%p996) target = $region104
        $region103: #{forward.1} parent=11 // pred_region
          %s1000 = ssub.s32 128, 128
          %1001 = vsyncadd [#allocation23], %s1000
          %s1002 = sshll.u32 [#allocation22], 4
          %s1003 = int_to_ptr.vmem [resolvable:$true] %s1002
          %1008 = dma.hbm_to_vmem [thread:$0]  %s47, 128, %s1003, [#allocation23], 64, 64, 4
        $region104: #{forward.1} parent=11 // pred_fallthru
          _
        // Predicated region
        $region105: #{forward.1} parent=11 // pred_check
          %p1009 = pneg %p612
        $region106: #{forward.1} parent=11 // pred_check_branch
          %1011 = sbr.rel (%p1009) target = $region108
        $region107: #{forward.1} parent=11 // pred_region
          %s1013 = ssub.s32 256, 256
          %1014 = vsyncadd [#allocation23], %s1013
          %s1015 = sshll.u32 [#allocation24], 4
          %s1016 = int_to_ptr.vmem [resolvable:$true] %s1015
          %1021 = dma.hbm_to_vmem [thread:$0]  %s49, 256, %s1016, [#allocation23], 128, 128, 8
        $region108: #{forward.1} parent=11 // pred_fallthru
          _
        // Predicated region
        $region109: #{forward.1} parent=11 // pred_check
          %p1022 = pneg %p633
        $region110: #{forward.1} parent=11 // pred_check_branch
          %1024 = sbr.rel (%p1022) target = $region112
        $region111: #{forward.1} parent=11 // pred_region
          _
        $region112: #{forward.1} parent=11 // pred_fallthru
          _
        // Predicated region
        $region113: #{forward.1} parent=11 // pred_check
          %p1025 = pneg %p654
        $region114: #{forward.1} parent=11 // pred_check_branch
          %1027 = sbr.rel (%p1025) target = $region116
        $region115: #{forward.1} parent=11 // pred_region
          %s1029 = ssub.s32 256, 256
          %1030 = vsyncadd [#allocation26], %s1029
          %s1031 = sshll.u32 [#allocation25], 4
          %s1032 = int_to_ptr.vmem [resolvable:$true] %s1031
          %1037 = dma.hbm_to_vmem [thread:$0]  %s53, 256, %s1032, [#allocation26], 128, 128, 8
        $region116: #{forward.1} parent=11 // pred_fallthru
          _
        // Predicated region
        $region117: #{forward.1} parent=11 // pred_check
          %p1038 = pneg %p675
        $region118: #{forward.1} parent=11 // pred_check_branch
          %1040 = sbr.rel (%p1038) target = $region120
        $region119: #{forward.1} parent=11 // pred_region
          _
        $region120: #{forward.1} parent=11 // pred_fallthru
          _
        // Predicated region
        $region121: #{forward.1} parent=11 // pred_check
          %p1041 = pneg %p696
        $region122: #{forward.1} parent=11 // pred_check_branch
          %1043 = sbr.rel (%p1041) target = $region124
        $region123: #{forward.1} parent=11 // pred_region
          %s1045 = ssub.s32 256, 256
          %1046 = vsyncadd [#allocation26], %s1045
          %s1047 = sshll.u32 [#allocation27], 4
          %s1048 = int_to_ptr.vmem [resolvable:$true] %s1047
          %1053 = dma.hbm_to_vmem [thread:$0]  %s57, 256, %s1048, [#allocation26], 128, 128, 8
        $region124: #{forward.1} parent=11 // pred_fallthru
          _
        // Predicated region
        $region125: #{forward.1} parent=11 // pred_check
          %p1054 = pneg %p717
        $region126: #{forward.1} parent=11 // pred_check_branch
          %1056 = sbr.rel (%p1054) target = $region128
        $region127: #{forward.1} parent=11 // pred_region
          %s1058 = ssub.s32 64, 64
          %1059 = vsyncadd [#allocation29], %s1058
          %s1061 = sshll.u32 [#allocation28], 4
          %s1062 = int_to_ptr.vmem [resolvable:$true] %s1061
          %1064 = dma.hbm_to_vmem [thread:$0]  %s59, 64, %s1062, [#allocation29]
        $region128: #{forward.1} parent=11 // pred_fallthru
          _
        // Predicated region
        $region129: #{forward.1} parent=11 // pred_check
          %p1065 = pneg %p738
        $region130: #{forward.1} parent=11 // pred_check_branch
          %1067 = sbr.rel (%p1065) target = $region132
        $region131: #{forward.1} parent=11 // pred_region
          %s1069 = ssub.s32 128, 128
          %1070 = vsyncadd [#allocation29], %s1069
          %s1072 = sshll.u32 [#allocation30], 4
          %s1073 = int_to_ptr.vmem [resolvable:$true] %s1072
          %1075 = dma.hbm_to_vmem [thread:$0]  %s61, 128, %s1073, [#allocation29]
        $region132: #{forward.1} parent=11 // pred_fallthru
          _
        // Predicated region
        $region133: #{forward.1} parent=11 // pred_check
          %p1076 = pneg %p759
        $region134: #{forward.1} parent=11 // pred_check_branch
          %1078 = sbr.rel (%p1076) target = $region136
        $region135: #{forward.1} parent=11 // pred_region
          %s1080 = ssub.s32 1088, 1088
          %1081 = vsyncadd [#allocation32], %s1080
          %s1082 = sshll.u32 [#allocation31], 4
          %s1083 = int_to_ptr.vmem [resolvable:$true] %s1082
          %1088 = dma.hbm_to_vmem [thread:$0]  %s63, 1088, %s1083, [#allocation32], 64, 64, 4
        $region136: #{forward.1} parent=11 // pred_fallthru
          _
      $region12: #{forward.1} parent=5 // pred_fallthru
        _
      %p1089 = scmp.lt.s32.totalorder %s82, 2
      // Predicated region
      $region137: #{forward.1} parent=5 // pred_check
        %p1090 = pneg %p1089
      $region138: #{forward.1} parent=5 // pred_check_branch
        %1092 = sbr.rel (%p1090) target = $region140
      $region139: #{forward.1} parent=5 // pred_region
        // Predicated region
        $region141: #{forward.1} parent=139 // pred_check
          %p1093 = pneg %p102
        $region142: #{forward.1} parent=139 // pred_check_branch
          %1095 = sbr.rel (%p1093) target = $region144
        $region143: #{forward.1} parent=139 // pred_region
          %p1096 = scmp.lt.s32.totalorder %s82, 1
          %s1097 = scalar_select %p1096, %s82, 1
          %s1098 = smul.addr %s1097, 32
          %s1099 = smul.addr %s1098, 4
          %s1100 = scalar_lea.vmem %s1, %s1099
        $region144: #{forward.1} parent=139 // pred_fallthru
          _
      $region140: #{forward.1} parent=5 // pred_fallthru
        _
      %p1101 = scmp.le.s32.totalorder 1, %s82
      %p1102 = scmp.lt.s32.totalorder %s82, 3
      %p1103 = pnand %p1101, %p1102
      %p1104 = pneg %p1103
      // Predicated region
      $region145: #{forward.1} parent=5 // pred_check
        _
      $region146: #{forward.1} parent=5 // pred_check_branch
        %1106 = sbr.rel (%p1103) target = $region148
      $region147: #{forward.1} parent=5 // pred_region
        %s1107 = ssub.s32 %s82, 1
        // Predicated region
        $region149: #{forward.1} parent=147 // pred_check
          %p1108 = pneg %p150
        $region150: #{forward.1} parent=147 // pred_check_branch
          %1110 = sbr.rel (%p1108) target = $region152
        $region151: #{forward.1} parent=147 // pred_region
          %1111 = dma.done [#allocation3], 256
        $region152: #{forward.1} parent=147 // pred_fallthru
          _
        // Predicated region
        $region153: #{forward.1} parent=147 // pred_check
          %p1112 = pneg %p192
        $region154: #{forward.1} parent=147 // pred_check_branch
          %1114 = sbr.rel (%p1112) target = $region156
        $region155: #{forward.1} parent=147 // pred_region
          %1115 = dma.done [#allocation5], 256
        $region156: #{forward.1} parent=147 // pred_fallthru
          _
        // Predicated region
        $region157: #{forward.1} parent=147 // pred_check
          %p1116 = pneg %p213
        $region158: #{forward.1} parent=147 // pred_check_branch
          %1118 = sbr.rel (%p1116) target = $region160
        $region159: #{forward.1} parent=147 // pred_region
          %1119 = dma.done [#allocation5], 54784
        $region160: #{forward.1} parent=147 // pred_fallthru
          _
        // Predicated region
        $region161: #{forward.1} parent=147 // pred_check
          %p1120 = pneg %p255
        $region162: #{forward.1} parent=147 // pred_check_branch
          %1122 = sbr.rel (%p1120) target = $region164
        $region163: #{forward.1} parent=147 // pred_region
          %1123 = dma.done [#allocation8], 256
        $region164: #{forward.1} parent=147 // pred_fallthru
          _
        // Predicated region
        $region165: #{forward.1} parent=147 // pred_check
          %p1124 = pneg %p297
        $region166: #{forward.1} parent=147 // pred_check_branch
          %1126 = sbr.rel (%p1124) target = $region168
        $region167: #{forward.1} parent=147 // pred_region
          %1127 = dma.done [#allocation8], 256
        $region168: #{forward.1} parent=147 // pred_fallthru
          _
        // Predicated region
        $region169: #{forward.1} parent=147 // pred_check
          %p1128 = pneg %p318
        $region170: #{forward.1} parent=147 // pred_check_branch
          %1130 = sbr.rel (%p1128) target = $region172
        $region171: #{forward.1} parent=147 // pred_region
          %1131 = dma.done [#allocation11], 2368
        $region172: #{forward.1} parent=147 // pred_fallthru
          _
        // Predicated region
        $region173: #{forward.1} parent=147 // pred_check
          %p1132 = pneg %p360
        $region174: #{forward.1} parent=147 // pred_check_branch
          %1134 = sbr.rel (%p1132) target = $region176
        $region175: #{forward.1} parent=147 // pred_region
          %1135 = dma.done [#allocation11], 512
        $region176: #{forward.1} parent=147 // pred_fallthru
          _
        // Predicated region
        $region177: #{forward.1} parent=147 // pred_check
          %p1136 = pneg %p402
        $region178: #{forward.1} parent=147 // pred_check_branch
          %1138 = sbr.rel (%p1136) target = $region180
        $region179: #{forward.1} parent=147 // pred_region
          %1139 = dma.done [#allocation14], 512
        $region180: #{forward.1} parent=147 // pred_fallthru
          _
        // Predicated region
        $region181: #{forward.1} parent=147 // pred_check
          %p1140 = pneg %p423
        $region182: #{forward.1} parent=147 // pred_check_branch
          %1142 = sbr.rel (%p1140) target = $region184
        $region183: #{forward.1} parent=147 // pred_region
          %1143 = dma.done [#allocation14], 2048
        $region184: #{forward.1} parent=147 // pred_fallthru
          _
        // Predicated region
        $region185: #{forward.1} parent=147 // pred_check
          %p1144 = pneg %p444
        $region186: #{forward.1} parent=147 // pred_check_branch
          %1146 = sbr.rel (%p1144) target = $region188
        $region187: #{forward.1} parent=147 // pred_region
          %1147 = dma.done [#allocation17], 128
        $region188: #{forward.1} parent=147 // pred_fallthru
          _
        // Predicated region
        $region189: #{forward.1} parent=147 // pred_check
          %p1148 = pneg %p465
        $region190: #{forward.1} parent=147 // pred_check_branch
          %1150 = sbr.rel (%p1148) target = $region192
        $region191: #{forward.1} parent=147 // pred_region
          %1151 = dma.done [#allocation17], 256
        $region192: #{forward.1} parent=147 // pred_fallthru
          _
        // Predicated region
        $region193: #{forward.1} parent=147 // pred_check
          %p1152 = pneg %p507
        $region194: #{forward.1} parent=147 // pred_check_branch
          %1154 = sbr.rel (%p1152) target = $region196
        $region195: #{forward.1} parent=147 // pred_region
          %1155 = dma.done [#allocation20], 256
        $region196: #{forward.1} parent=147 // pred_fallthru
          _
        // Predicated region
        $region197: #{forward.1} parent=147 // pred_check
          %p1156 = pneg %p549
        $region198: #{forward.1} parent=147 // pred_check_branch
          %1158 = sbr.rel (%p1156) target = $region200
        $region199: #{forward.1} parent=147 // pred_region
          %1159 = dma.done [#allocation20], 256
        $region200: #{forward.1} parent=147 // pred_fallthru
          _
        // Predicated region
        $region201: #{forward.1} parent=147 // pred_check
          %p1160 = pneg %p591
        $region202: #{forward.1} parent=147 // pred_check_branch
          %1162 = sbr.rel (%p1160) target = $region204
        $region203: #{forward.1} parent=147 // pred_region
          %1163 = dma.done [#allocation23], 128
        $region204: #{forward.1} parent=147 // pred_fallthru
          _
        // Predicated region
        $region205: #{forward.1} parent=147 // pred_check
          %p1164 = pneg %p612
        $region206: #{forward.1} parent=147 // pred_check_branch
          %1166 = sbr.rel (%p1164) target = $region208
        $region207: #{forward.1} parent=147 // pred_region
          %1167 = dma.done [#allocation23], 256
        $region208: #{forward.1} parent=147 // pred_fallthru
          _
        // Predicated region
        $region209: #{forward.1} parent=147 // pred_check
          %p1168 = pneg %p654
        $region210: #{forward.1} parent=147 // pred_check_branch
          %1170 = sbr.rel (%p1168) target = $region212
        $region211: #{forward.1} parent=147 // pred_region
          %1171 = dma.done [#allocation26], 256
        $region212: #{forward.1} parent=147 // pred_fallthru
          _
        // Predicated region
        $region213: #{forward.1} parent=147 // pred_check
          %p1172 = pneg %p696
        $region214: #{forward.1} parent=147 // pred_check_branch
          %1174 = sbr.rel (%p1172) target = $region216
        $region215: #{forward.1} parent=147 // pred_region
          %1175 = dma.done [#allocation26], 256
        $region216: #{forward.1} parent=147 // pred_fallthru
          _
        // Predicated region
        $region217: #{forward.1} parent=147 // pred_check
          %p1176 = pneg %p717
        $region218: #{forward.1} parent=147 // pred_check_branch
          %1178 = sbr.rel (%p1176) target = $region220
        $region219: #{forward.1} parent=147 // pred_region
          %1179 = dma.done [#allocation29], 64
        $region220: #{forward.1} parent=147 // pred_fallthru
          _
        // Predicated region
        $region221: #{forward.1} parent=147 // pred_check
          %p1180 = pneg %p738
        $region222: #{forward.1} parent=147 // pred_check_branch
          %1182 = sbr.rel (%p1180) target = $region224
        $region223: #{forward.1} parent=147 // pred_region
          %1183 = dma.done [#allocation29], 128
        $region224: #{forward.1} parent=147 // pred_fallthru
          _
        // Predicated region
        $region225: #{forward.1} parent=147 // pred_check
          %p1184 = pneg %p759
        $region226: #{forward.1} parent=147 // pred_check_branch
          %1186 = sbr.rel (%p1184) target = $region228
        $region227: #{forward.1} parent=147 // pred_region
          %1187 = dma.done [#allocation32], 1088
        $region228: #{forward.1} parent=147 // pred_fallthru
          _
        %p1188 = scmp.lt.s32.totalorder %s87, 1
        %s1189 = scalar_select %p1188, %s87, 1
        %s1190 = smul.addr %s1189, 32
        %s1191 = smul.addr %s1190, 4
        %s1192 = scalar_lea.vmem %s1, %s1191
        %p1193 = pneg %p108
        %p1194 = pneg %p105
        %p1195 = pneg %p129
        %p1196 = pneg %p126
        %p1197 = pneg %p150
        %p1198 = pneg %p147
        %p1199 = pneg %p171
        %p1200 = pneg %p168
        %p1201 = pneg %p192
        %p1202 = pneg %p189
        %p1203 = pneg %p213
        %p1204 = pneg %p210
        %p1205 = pneg %p234
        %p1206 = pneg %p231
        %p1207 = pneg %p255
        %p1208 = pneg %p252
        %p1209 = pneg %p276
        %p1210 = pneg %p273
        %p1211 = pneg %p297
        %p1212 = pneg %p294
        %p1213 = pneg %p318
        %p1214 = pneg %p315
        %p1215 = pneg %p339
        %p1216 = pneg %p336
        %p1217 = pneg %p360
        %p1218 = pneg %p357
        %p1219 = pneg %p381
        %p1220 = pneg %p378
        %p1221 = pneg %p402
        %p1222 = pneg %p399
        %p1223 = pneg %p423
        %p1224 = pneg %p420
        %p1225 = pneg %p444
        %p1226 = pneg %p441
        %p1227 = pneg %p465
        %p1228 = pneg %p462
        %p1229 = pneg %p486
        %p1230 = pneg %p483
        %p1231 = pneg %p507
        %p1232 = pneg %p504
        %p1233 = pneg %p528
        %p1234 = pneg %p525
        %p1235 = pneg %p549
        %p1236 = pneg %p546
        %p1237 = pneg %p570
        %p1238 = pneg %p567
        %p1239 = pneg %p591
        %p1240 = pneg %p588
        %p1241 = pneg %p612
        %p1242 = pneg %p609
        %p1243 = pneg %p633
        %p1244 = pneg %p630
        %p1245 = pneg %p654
        %p1246 = pneg %p651
        %p1247 = pneg %p675
        %p1248 = pneg %p672
        %p1249 = pneg %p696
        %p1250 = pneg %p693
        %p1251 = pneg %p717
        %p1252 = pneg %p714
        %p1253 = pneg %p738
        %p1254 = pneg %p735
        %p1255 = pneg %p759
        %p1256 = pneg %p756
        %p1257 = pneg %p785
        %p1258 = pneg %p782
        %p1259 = scmp.lt.s32.totalorder %s87, 1
        %s1260 = scalar_select %p1259, %s87, 1
        %s1261 = smul.addr %s1260, 8
        %s1262 = scalar_lea.vmem %s65, %s1261
        %p1263 = scmp.lt.s32.totalorder %s87, 1
        %s1264 = scalar_select %p1263, %s87, 1
        %s1265 = smul.addr %s1264, 32
        %s1266 = smul.addr %s1265, 4
        %s1267 = scalar_lea.vmem %s1, %s1266
        %p1268 = scmp.lt.s32.totalorder %s87, 1
        %s1269 = scalar_select %p1268, %s87, 1
        %s1270 = smul.addr %s1269, 8
        %s1271 = scalar_lea.vmem %s65, %s1270
        %v1273 = vld [vmem:[%s1267] sm:$0xff]
        %v1274 = vld [vmem:[%s1267 + $0x8] sm:$0xff]
        %v1275 = vld [vmem:[%s1267 + $0x10] sm:$0xff]
        %v1276 = vld [vmem:[%s1267 + $0x18] sm:$0xff]
        %v1277 = vld [vmem:[%s1267 + $0x20] sm:$0xff]
        %v1278 = vld [vmem:[%s1267 + $0x28] sm:$0xff]
        %v1279 = vld [vmem:[%s1267 + $0x30] sm:$0xff]
        %v1280 = vld [vmem:[%s1267 + $0x38] sm:$0xff]
        %v1281 = vld [vmem:[%s1267 + $0x40] sm:$0xff]
        %v1282 = vld [vmem:[%s1267 + $0x48] sm:$0xff]
        %v1283 = vld [vmem:[%s1267 + $0x50] sm:$0xff]
        %v1284 = vld [vmem:[%s1267 + $0x58] sm:$0xff]
        %v1285 = vld [vmem:[%s1267 + $0x60] sm:$0xff]
        %v1286 = vld [vmem:[%s1267 + $0x68] sm:$0xff]
        %v1287 = vld [vmem:[%s1267 + $0x70] sm:$0xff]
        %v1288 = vld [vmem:[%s1267 + $0x78] sm:$0xff]
        %v1305 = vunpack.c.l.b16 %v1273
        %v1306 = vunpack.c.h.b16 %v1273
        %v1307 = vunpack.c.l.b16 %v1274
        %v1308 = vunpack.c.h.b16 %v1274
        %v1309 = vunpack.c.l.b16 %v1275
        %v1310 = vunpack.c.h.b16 %v1275
        %v1311 = vunpack.c.l.b16 %v1276
        %v1312 = vunpack.c.h.b16 %v1276
        %v1313 = vunpack.c.l.b16 %v1277
        %v1314 = vunpack.c.h.b16 %v1277
        %v1315 = vunpack.c.l.b16 %v1278
        %v1316 = vunpack.c.h.b16 %v1278
        %v1317 = vunpack.c.l.b16 %v1279
        %v1318 = vunpack.c.h.b16 %v1279
        %v1319 = vunpack.c.l.b16 %v1280
        %v1320 = vunpack.c.l.b16 %v1281
        %v1321 = vunpack.c.h.b16 %v1281
        %v1322 = vunpack.c.l.b16 %v1282
        %v1323 = vunpack.c.h.b16 %v1282
        %v1324 = vunpack.c.l.b16 %v1283
        %v1325 = vunpack.c.h.b16 %v1283
        %v1326 = vunpack.c.l.b16 %v1284
        %v1327 = vunpack.c.h.b16 %v1284
        %v1328 = vunpack.c.l.b16 %v1285
        %v1329 = vunpack.c.h.b16 %v1285
        %v1330 = vunpack.c.l.b16 %v1286
        %v1331 = vunpack.c.h.b16 %v1286
        %v1332 = vunpack.c.l.b16 %v1287
        %v1333 = vunpack.c.h.b16 %v1287
        %v1334 = vunpack.c.l.b16 %v1288
        %v1335 = vpack.c.b16 %v1320, %v1305
        %v1336 = vpack.c.b16 %v1321, %v1306
        %v1337 = vpack.c.b16 %v1322, %v1307
        %v1338 = vpack.c.b16 %v1323, %v1308
        %v1339 = vpack.c.b16 %v1324, %v1309
        %v1340 = vpack.c.b16 %v1325, %v1310
        %v1341 = vpack.c.b16 %v1326, %v1311
        %v1342 = vpack.c.b16 %v1327, %v1312
        %v1343 = vpack.c.b16 %v1328, %v1313
        %v1344 = vpack.c.b16 %v1329, %v1314
        %v1345 = vpack.c.b16 %v1330, %v1315
        %v1346 = vpack.c.b16 %v1331, %v1316
        %v1347 = vpack.c.b16 %v1332, %v1317
        %v1348 = vpack.c.b16 %v1333, %v1318
        %v1349 = vpack.c.b16 %v1334, %v1319
        %1365 = vrot.lane.b32.xlu0 %v1335, 127
        %v1366 = vpop.permute.xlu0 %1365
        %1367 = vrot.lane.b32.xlu0 %v1336, 127
        %v1368 = vpop.permute.xlu0 %1367
        %1369 = vrot.lane.b32.xlu0 %v1337, 127
        %v1370 = vpop.permute.xlu0 %1369
        %1371 = vrot.lane.b32.xlu0 %v1338, 127
        %v1372 = vpop.permute.xlu0 %1371
        %1373 = vrot.lane.b32.xlu0 %v1339, 127
        %v1374 = vpop.permute.xlu0 %1373
        %1375 = vrot.lane.b32.xlu0 %v1340, 127
        %v1376 = vpop.permute.xlu0 %1375
        %1377 = vrot.lane.b32.xlu0 %v1341, 127
        %v1378 = vpop.permute.xlu0 %1377
        %1379 = vrot.lane.b32.xlu0 %v1342, 127
        %v1380 = vpop.permute.xlu0 %1379
        %1381 = vrot.lane.b32.xlu0 %v1343, 127
        %v1382 = vpop.permute.xlu0 %1381
        %1383 = vrot.lane.b32.xlu0 %v1344, 127
        %v1384 = vpop.permute.xlu0 %1383
        %1385 = vrot.lane.b32.xlu0 %v1345, 127
        %v1386 = vpop.permute.xlu0 %1385
        %1387 = vrot.lane.b32.xlu0 %v1346, 127
        %v1388 = vpop.permute.xlu0 %1387
        %1389 = vrot.lane.b32.xlu0 %v1347, 127
        %v1390 = vpop.permute.xlu0 %1389
        %1391 = vrot.lane.b32.xlu0 %v1348, 127
        %v1392 = vpop.permute.xlu0 %1391
        %1393 = vrot.lane.b32.xlu0 %v1349, 127
        %v1394 = vpop.permute.xlu0 %1393
        %vm1395 = vcmask 1039360
        %v1396 = vsel %vm1395, %v1366, %v1368
        %v1397 = vsel %vm1395, %v1368, %v1370
        %v1398 = vsel %vm1395, %v1370, %v1372
        %v1399 = vsel %vm1395, %v1372, %v1374
        %v1400 = vsel %vm1395, %v1374, %v1376
        %v1401 = vsel %vm1395, %v1376, %v1378
        %v1402 = vsel %vm1395, %v1378, %v1380
        %v1403 = vsel %vm1395, %v1380, %v1382
        %v1404 = vsel %vm1395, %v1382, %v1384
        %v1405 = vsel %vm1395, %v1384, %v1386
        %v1406 = vsel %vm1395, %v1386, %v1388
        %v1407 = vsel %vm1395, %v1388, %v1390
        %v1408 = vsel %vm1395, %v1390, %v1392
        %v1409 = vsel %vm1395, %v1392, %v1394
        %1425 = vrot.lane.b32.xlu0 %v1335, 126
        %v1426 = vpop.permute.xlu0 %1425
        %1427 = vrot.lane.b32.xlu0 %v1336, 126
        %v1428 = vpop.permute.xlu0 %1427
        %1429 = vrot.lane.b32.xlu0 %v1337, 126
        %v1430 = vpop.permute.xlu0 %1429
        %1431 = vrot.lane.b32.xlu0 %v1338, 126
        %v1432 = vpop.permute.xlu0 %1431
        %1433 = vrot.lane.b32.xlu0 %v1339, 126
        %v1434 = vpop.permute.xlu0 %1433
        %1435 = vrot.lane.b32.xlu0 %v1340, 126
        %v1436 = vpop.permute.xlu0 %1435
        %1437 = vrot.lane.b32.xlu0 %v1341, 126
        %v1438 = vpop.permute.xlu0 %1437
        %1439 = vrot.lane.b32.xlu0 %v1342, 126
        %v1440 = vpop.permute.xlu0 %1439
        %1441 = vrot.lane.b32.xlu0 %v1343, 126
        %v1442 = vpop.permute.xlu0 %1441
        %1443 = vrot.lane.b32.xlu0 %v1344, 126
        %v1444 = vpop.permute.xlu0 %1443
        %1445 = vrot.lane.b32.xlu0 %v1345, 126
        %v1446 = vpop.permute.xlu0 %1445
        %1447 = vrot.lane.b32.xlu0 %v1346, 126
        %v1448 = vpop.permute.xlu0 %1447
        %1449 = vrot.lane.b32.xlu0 %v1347, 126
        %v1450 = vpop.permute.xlu0 %1449
        %1451 = vrot.lane.b32.xlu0 %v1348, 126
        %v1452 = vpop.permute.xlu0 %1451
        %1453 = vrot.lane.b32.xlu0 %v1349, 126
        %v1454 = vpop.permute.xlu0 %1453
        %vm1455 = vcmask 1031168
        %v1456 = vsel %vm1455, %v1426, %v1428
        %v1457 = vsel %vm1455, %v1428, %v1430
        %v1458 = vsel %vm1455, %v1430, %v1432
        %v1459 = vsel %vm1455, %v1432, %v1434
        %v1460 = vsel %vm1455, %v1434, %v1436
        %v1461 = vsel %vm1455, %v1436, %v1438
        %v1462 = vsel %vm1455, %v1438, %v1440
        %v1463 = vsel %vm1455, %v1440, %v1442
        %v1464 = vsel %vm1455, %v1442, %v1444
        %v1465 = vsel %vm1455, %v1444, %v1446
        %v1466 = vsel %vm1455, %v1446, %v1448
        %v1467 = vsel %vm1455, %v1448, %v1450
        %v1468 = vsel %vm1455, %v1450, %v1452
        %v1469 = vsel %vm1455, %v1452, %v1454
        %1485 = vrot.lane.b32.xlu0 %v1335, 84
        %v1486 = vpop.permute.xlu0 %1485
        %1487 = vrot.lane.b32.xlu0 %v1336, 84
        %v1488 = vpop.permute.xlu0 %1487
        %1489 = vrot.lane.b32.xlu0 %v1337, 84
        %v1490 = vpop.permute.xlu0 %1489
        %1491 = vrot.lane.b32.xlu0 %v1338, 84
        %v1492 = vpop.permute.xlu0 %1491
        %1493 = vrot.lane.b32.xlu0 %v1339, 84
        %v1494 = vpop.permute.xlu0 %1493
        %1495 = vrot.lane.b32.xlu0 %v1340, 84
        %v1496 = vpop.permute.xlu0 %1495
        %1497 = vrot.lane.b32.xlu0 %v1341, 84
        %v1498 = vpop.permute.xlu0 %1497
        %1499 = vrot.lane.b32.xlu0 %v1342, 84
        %v1500 = vpop.permute.xlu0 %1499
        %1501 = vrot.lane.b32.xlu0 %v1343, 84
        %v1502 = vpop.permute.xlu0 %1501
        %1503 = vrot.lane.b32.xlu0 %v1344, 84
        %v1504 = vpop.permute.xlu0 %1503
        %1505 = vrot.lane.b32.xlu0 %v1345, 84
        %v1506 = vpop.permute.xlu0 %1505
        %1507 = vrot.lane.b32.xlu0 %v1346, 84
        %v1508 = vpop.permute.xlu0 %1507
        %1509 = vrot.lane.b32.xlu0 %v1347, 84
        %v1510 = vpop.permute.xlu0 %1509
        %1511 = vrot.lane.b32.xlu0 %v1348, 84
        %v1512 = vpop.permute.xlu0 %1511
        %1513 = vrot.lane.b32.xlu0 %v1349, 84
        %v1514 = vpop.permute.xlu0 %1513
        %vm1515 = vcmask 687104
        %v1516 = vsel %vm1515, %v1486, %v1488
        %v1517 = vsel %vm1515, %v1488, %v1490
        %v1518 = vsel %vm1515, %v1490, %v1492
        %v1519 = vsel %vm1515, %v1492, %v1494
        %v1520 = vsel %vm1515, %v1494, %v1496
        %v1521 = vsel %vm1515, %v1496, %v1498
        %v1522 = vsel %vm1515, %v1498, %v1500
        %v1523 = vsel %vm1515, %v1500, %v1502
        %v1524 = vsel %vm1515, %v1502, %v1504
        %v1525 = vsel %vm1515, %v1504, %v1506
        %v1526 = vsel %vm1515, %v1506, %v1508
        %v1527 = vsel %vm1515, %v1508, %v1510
        %v1528 = vsel %vm1515, %v1510, %v1512
        %v1529 = vsel %vm1515, %v1512, %v1514
        %1545 = vrot.lane.b32.xlu0 %v1335, 83
        %v1546 = vpop.permute.xlu0 %1545
        %1547 = vrot.lane.b32.xlu0 %v1336, 83
        %v1548 = vpop.permute.xlu0 %1547
        %1549 = vrot.lane.b32.xlu0 %v1337, 83
        %v1550 = vpop.permute.xlu0 %1549
        %1551 = vrot.lane.b32.xlu0 %v1338, 83
        %v1552 = vpop.permute.xlu0 %1551
        %1553 = vrot.lane.b32.xlu0 %v1339, 83
        %v1554 = vpop.permute.xlu0 %1553
        %1555 = vrot.lane.b32.xlu0 %v1340, 83
        %v1556 = vpop.permute.xlu0 %1555
        %1557 = vrot.lane.b32.xlu0 %v1341, 83
        %v1558 = vpop.permute.xlu0 %1557
        %1559 = vrot.lane.b32.xlu0 %v1342, 83
        %v1560 = vpop.permute.xlu0 %1559
        %1561 = vrot.lane.b32.xlu0 %v1343, 83
        %v1562 = vpop.permute.xlu0 %1561
        %1563 = vrot.lane.b32.xlu0 %v1344, 83
        %v1564 = vpop.permute.xlu0 %1563
        %1565 = vrot.lane.b32.xlu0 %v1345, 83
        %v1566 = vpop.permute.xlu0 %1565
        %1567 = vrot.lane.b32.xlu0 %v1346, 83
        %v1568 = vpop.permute.xlu0 %1567
        %1569 = vrot.lane.b32.xlu0 %v1347, 83
        %v1570 = vpop.permute.xlu0 %1569
        %1571 = vrot.lane.b32.xlu0 %v1348, 83
        %v1572 = vpop.permute.xlu0 %1571
        %1573 = vrot.lane.b32.xlu0 %v1349, 83
        %v1574 = vpop.permute.xlu0 %1573
        %vm1575 = vcmask 678912
        %v1576 = vsel %vm1575, %v1546, %v1548
        %v1577 = vsel %vm1575, %v1548, %v1550
        %v1578 = vsel %vm1575, %v1550, %v1552
        %v1579 = vsel %vm1575, %v1552, %v1554
        %v1580 = vsel %vm1575, %v1554, %v1556
        %v1581 = vsel %vm1575, %v1556, %v1558
        %v1582 = vsel %vm1575, %v1558, %v1560
        %v1583 = vsel %vm1575, %v1560, %v1562
        %v1584 = vsel %vm1575, %v1562, %v1564
        %v1585 = vsel %vm1575, %v1564, %v1566
        %v1586 = vsel %vm1575, %v1566, %v1568
        %v1587 = vsel %vm1575, %v1568, %v1570
        %v1588 = vsel %vm1575, %v1570, %v1572
        %v1589 = vsel %vm1575, %v1572, %v1574
        %1605 = vrot.lane.b32.xlu0 %v1335, 82
        %v1606 = vpop.permute.xlu0 %1605
        %1607 = vrot.lane.b32.xlu0 %v1336, 82
        %v1608 = vpop.permute.xlu0 %1607
        %1609 = vrot.lane.b32.xlu0 %v1337, 82
        %v1610 = vpop.permute.xlu0 %1609
        %1611 = vrot.lane.b32.xlu0 %v1338, 82
        %v1612 = vpop.permute.xlu0 %1611
        %1613 = vrot.lane.b32.xlu0 %v1339, 82
        %v1614 = vpop.permute.xlu0 %1613
        %1615 = vrot.lane.b32.xlu0 %v1340, 82
        %v1616 = vpop.permute.xlu0 %1615
        %1617 = vrot.lane.b32.xlu0 %v1341, 82
        %v1618 = vpop.permute.xlu0 %1617
        %1619 = vrot.lane.b32.xlu0 %v1342, 82
        %v1620 = vpop.permute.xlu0 %1619
        %1621 = vrot.lane.b32.xlu0 %v1343, 82
        %v1622 = vpop.permute.xlu0 %1621
        %1623 = vrot.lane.b32.xlu0 %v1344, 82
        %v1624 = vpop.permute.xlu0 %1623
        %1625 = vrot.lane.b32.xlu0 %v1345, 82
        %v1626 = vpop.permute.xlu0 %1625
        %1627 = vrot.lane.b32.xlu0 %v1346, 82
        %v1628 = vpop.permute.xlu0 %1627
        %1629 = vrot.lane.b32.xlu0 %v1347, 82
        %v1630 = vpop.permute.xlu0 %1629
        %1631 = vrot.lane.b32.xlu0 %v1348, 82
        %v1632 = vpop.permute.xlu0 %1631
        %1633 = vrot.lane.b32.xlu0 %v1349, 82
        %v1634 = vpop.permute.xlu0 %1633
        %vm1635 = vcmask 670720
        %v1636 = vsel %vm1635, %v1606, %v1608
        %v1637 = vsel %vm1635, %v1608, %v1610
        %v1638 = vsel %vm1635, %v1610, %v1612
        %v1639 = vsel %vm1635, %v1612, %v1614
        %v1640 = vsel %vm1635, %v1614, %v1616
        %v1641 = vsel %vm1635, %v1616, %v1618
        %v1642 = vsel %vm1635, %v1618, %v1620
        %v1643 = vsel %vm1635, %v1620, %v1622
        %v1644 = vsel %vm1635, %v1622, %v1624
        %v1645 = vsel %vm1635, %v1624, %v1626
        %v1646 = vsel %vm1635, %v1626, %v1628
        %v1647 = vsel %vm1635, %v1628, %v1630
        %v1648 = vsel %vm1635, %v1630, %v1632
        %v1649 = vsel %vm1635, %v1632, %v1634
        %v1665 = vunpack.c.h.b16 %v1280
        %v1666 = vunpack.c.h.b16 %v1288
        %v1667 = vpack.c.b16 %v1666, %v1665
        %1668 = vrot.lane.b32.xlu0 %v1335, 40
        %v1669 = vpop.permute.xlu0 %1668
        %1670 = vrot.lane.b32.xlu0 %v1336, 40
        %v1671 = vpop.permute.xlu0 %1670
        %1672 = vrot.lane.b32.xlu0 %v1337, 40
        %v1673 = vpop.permute.xlu0 %1672
        %1674 = vrot.lane.b32.xlu0 %v1338, 40
        %v1675 = vpop.permute.xlu0 %1674
        %1676 = vrot.lane.b32.xlu0 %v1339, 40
        %v1677 = vpop.permute.xlu0 %1676
        %1678 = vrot.lane.b32.xlu0 %v1340, 40
        %v1679 = vpop.permute.xlu0 %1678
        %1680 = vrot.lane.b32.xlu0 %v1341, 40
        %v1681 = vpop.permute.xlu0 %1680
        %1682 = vrot.lane.b32.xlu0 %v1342, 40
        %v1683 = vpop.permute.xlu0 %1682
        %1684 = vrot.lane.b32.xlu0 %v1343, 40
        %v1685 = vpop.permute.xlu0 %1684
        %1686 = vrot.lane.b32.xlu0 %v1344, 40
        %v1687 = vpop.permute.xlu0 %1686
        %1688 = vrot.lane.b32.xlu0 %v1345, 40
        %v1689 = vpop.permute.xlu0 %1688
        %1690 = vrot.lane.b32.xlu0 %v1346, 40
        %v1691 = vpop.permute.xlu0 %1690
        %1692 = vrot.lane.b32.xlu0 %v1347, 40
        %v1693 = vpop.permute.xlu0 %1692
        %1694 = vrot.lane.b32.xlu0 %v1348, 40
        %v1695 = vpop.permute.xlu0 %1694
        %1696 = vrot.lane.b32.xlu0 %v1349, 40
        %v1697 = vpop.permute.xlu0 %1696
        %1698 = vrot.lane.b32.xlu0 %v1667, 40
        %v1699 = vpop.permute.xlu0 %1698
        %vm1700 = vcmask 326656
        %v1701 = vsel %vm1700, %v1669, %v1671
        %v1702 = vsel %vm1700, %v1671, %v1673
        %v1703 = vsel %vm1700, %v1673, %v1675
        %v1704 = vsel %vm1700, %v1675, %v1677
        %v1705 = vsel %vm1700, %v1677, %v1679
        %v1706 = vsel %vm1700, %v1679, %v1681
        %v1707 = vsel %vm1700, %v1681, %v1683
        %v1708 = vsel %vm1700, %v1683, %v1685
        %v1709 = vsel %vm1700, %v1685, %v1687
        %v1710 = vsel %vm1700, %v1687, %v1689
        %v1711 = vsel %vm1700, %v1689, %v1691
        %v1712 = vsel %vm1700, %v1691, %v1693
        %v1713 = vsel %vm1700, %v1693, %v1695
        %v1714 = vsel %vm1700, %v1695, %v1697
        %v1715 = vsel %vm1700, %v1697, %v1699
        %1731 = vrot.lane.b32.xlu0 %v1335, 39
        %v1732 = vpop.permute.xlu0 %1731
        %1733 = vrot.lane.b32.xlu0 %v1336, 39
        %v1734 = vpop.permute.xlu0 %1733
        %1735 = vrot.lane.b32.xlu0 %v1337, 39
        %v1736 = vpop.permute.xlu0 %1735
        %1737 = vrot.lane.b32.xlu0 %v1338, 39
        %v1738 = vpop.permute.xlu0 %1737
        %1739 = vrot.lane.b32.xlu0 %v1339, 39
        %v1740 = vpop.permute.xlu0 %1739
        %1741 = vrot.lane.b32.xlu0 %v1340, 39
        %v1742 = vpop.permute.xlu0 %1741
        %1743 = vrot.lane.b32.xlu0 %v1341, 39
        %v1744 = vpop.permute.xlu0 %1743
        %1745 = vrot.lane.b32.xlu0 %v1342, 39
        %v1746 = vpop.permute.xlu0 %1745
        %1747 = vrot.lane.b32.xlu0 %v1343, 39
        %v1748 = vpop.permute.xlu0 %1747
        %1749 = vrot.lane.b32.xlu0 %v1344, 39
        %v1750 = vpop.permute.xlu0 %1749
        %1751 = vrot.lane.b32.xlu0 %v1345, 39
        %v1752 = vpop.permute.xlu0 %1751
        %1753 = vrot.lane.b32.xlu0 %v1346, 39
        %v1754 = vpop.permute.xlu0 %1753
        %1755 = vrot.lane.b32.xlu0 %v1347, 39
        %v1756 = vpop.permute.xlu0 %1755
        %1757 = vrot.lane.b32.xlu0 %v1348, 39
        %v1758 = vpop.permute.xlu0 %1757
        %1759 = vrot.lane.b32.xlu0 %v1349, 39
        %v1760 = vpop.permute.xlu0 %1759
        %1761 = vrot.lane.b32.xlu0 %v1667, 39
        %v1762 = vpop.permute.xlu0 %1761
        %vm1763 = vcmask 318464
        %v1764 = vsel %vm1763, %v1732, %v1734
        %v1765 = vsel %vm1763, %v1734, %v1736
        %v1766 = vsel %vm1763, %v1736, %v1738
        %v1767 = vsel %vm1763, %v1738, %v1740
        %v1768 = vsel %vm1763, %v1740, %v1742
        %v1769 = vsel %vm1763, %v1742, %v1744
        %v1770 = vsel %vm1763, %v1744, %v1746
        %v1771 = vsel %vm1763, %v1746, %v1748
        %v1772 = vsel %vm1763, %v1748, %v1750
        %v1773 = vsel %vm1763, %v1750, %v1752
        %v1774 = vsel %vm1763, %v1752, %v1754
        %v1775 = vsel %vm1763, %v1754, %v1756
        %v1776 = vsel %vm1763, %v1756, %v1758
        %v1777 = vsel %vm1763, %v1758, %v1760
        %v1778 = vsel %vm1763, %v1760, %v1762
        %1794 = vrot.lane.b32.xlu0 %v1335, 38
        %v1795 = vpop.permute.xlu0 %1794
        %1796 = vrot.lane.b32.xlu0 %v1336, 38
        %v1797 = vpop.permute.xlu0 %1796
        %1798 = vrot.lane.b32.xlu0 %v1337, 38
        %v1799 = vpop.permute.xlu0 %1798
        %1800 = vrot.lane.b32.xlu0 %v1338, 38
        %v1801 = vpop.permute.xlu0 %1800
        %1802 = vrot.lane.b32.xlu0 %v1339, 38
        %v1803 = vpop.permute.xlu0 %1802
        %1804 = vrot.lane.b32.xlu0 %v1340, 38
        %v1805 = vpop.permute.xlu0 %1804
        %1806 = vrot.lane.b32.xlu0 %v1341, 38
        %v1807 = vpop.permute.xlu0 %1806
        %1808 = vrot.lane.b32.xlu0 %v1342, 38
        %v1809 = vpop.permute.xlu0 %1808
        %1810 = vrot.lane.b32.xlu0 %v1343, 38
        %v1811 = vpop.permute.xlu0 %1810
        %1812 = vrot.lane.b32.xlu0 %v1344, 38
        %v1813 = vpop.permute.xlu0 %1812
        %1814 = vrot.lane.b32.xlu0 %v1345, 38
        %v1815 = vpop.permute.xlu0 %1814
        %1816 = vrot.lane.b32.xlu0 %v1346, 38
        %v1817 = vpop.permute.xlu0 %1816
        %1818 = vrot.lane.b32.xlu0 %v1347, 38
        %v1819 = vpop.permute.xlu0 %1818
        %1820 = vrot.lane.b32.xlu0 %v1348, 38
        %v1821 = vpop.permute.xlu0 %1820
        %1822 = vrot.lane.b32.xlu0 %v1349, 38
        %v1823 = vpop.permute.xlu0 %1822
        %1824 = vrot.lane.b32.xlu0 %v1667, 38
        %v1825 = vpop.permute.xlu0 %1824
        %vm1826 = vcmask 310272
        %v1827 = vsel %vm1826, %v1795, %v1797
        %v1828 = vsel %vm1826, %v1797, %v1799
        %v1829 = vsel %vm1826, %v1799, %v1801
        %v1830 = vsel %vm1826, %v1801, %v1803
        %v1831 = vsel %vm1826, %v1803, %v1805
        %v1832 = vsel %vm1826, %v1805, %v1807
        %v1833 = vsel %vm1826, %v1807, %v1809
        %v1834 = vsel %vm1826, %v1809, %v1811
        %v1835 = vsel %vm1826, %v1811, %v1813
        %v1836 = vsel %vm1826, %v1813, %v1815
        %v1837 = vsel %vm1826, %v1815, %v1817
        %v1838 = vsel %vm1826, %v1817, %v1819
        %v1839 = vsel %vm1826, %v1819, %v1821
        %v1840 = vsel %vm1826, %v1821, %v1823
        %v1841 = vsel %vm1826, %v1823, %v1825
        %v1857 = vld [vmem:[%s3] sm:$0xff]
        %v1858 = vld [vmem:[%s3 + $0x8] sm:$0xff]
        %v1859 = vld [vmem:[#allocation2] sm:$0xff]
        %v1860 = vld [vmem:[#allocation2 + $0x8] sm:$0xff]
        %1862 = vset.pattern.permute.xlu0 0
        %1863 = vperm.xlu0 %1862, %v1859
        %v1864 = vpop.permute.xlu0 %1863
        %1867 = vset.pattern.permute.xlu0 0
        %1868 = vperm.xlu0 %1867, %v1860
        %v1869 = vpop.permute.xlu0 %1868
        %v1873 = vunpack.c.l.b16 %v1857
        %v1874 = vunpack.c.h.b16 %v1857
        %v1875 = vunpack.c.l.b16 %v1858
        %v1876 = vunpack.c.h.b16 %v1858
        %v1877 = vpack.c.b16 %v1875, %v1873
        %v1878 = vpack.c.b16 %v1876, %v1874
        %vm1880 = vcmask 130048
        %v1882 = vsel %vm1880, %v1878, 0
        %1884 = vmatprep.subr.bf16.mxu0 %v1336
        %1885 = vmatpush1.bf16.msra.mxu0 %v1335
        %1886 = vmatprep.subr.bf16.mxu0 %v1397
        %1887 = vmatpush1.bf16.msra.mxu0 %v1396
        %1888 = vmatprep.subr.bf16.mxu0 %v1457
        %1889 = vmatpush1.bf16.msra.mxu0 %v1456
        %1890 = vmatprep.subr.bf16.mxu0 %v1517
        %1891 = vmatpush1.bf16.msra.mxu0 %v1516
        %1892 = vmatprep.subr.bf16.mxu0 %v1577
        %1893 = vmatpush1.bf16.msra.mxu0 %v1576
        %1894 = vmatprep.subr.bf16.mxu0 %v1637
        %1895 = vmatpush1.bf16.msra.mxu0 %v1636
        %1896 = vmatprep.subr.bf16.mxu0 %v1702
        %1897 = vmatpush1.bf16.msra.mxu0 %v1701
        %1898 = vmatprep.subr.bf16.mxu0 %v1765
        %1899 = vmatpush1.bf16.msra.mxu0 %v1764
        %1900 = vmatprep.subr.bf16.mxu0 %v1828
        %1901 = vmatpush1.bf16.msra.mxu0 %v1827
        %1902 = vmatprep.subr.bf16.mxu0 0
        %1903 = vmatpush1.bf16.msra.mxu0 0
        %1904 = vmatprep.subr.bf16.mxu0 0
        %1905 = vmatpush1.bf16.msra.mxu0 0
        %1906 = vmatprep.subr.bf16.mxu0 0
        %1907 = vmatpush1.bf16.msra.mxu0 0
        %1908 = vmatprep.subr.bf16.mxu0 0
        %1909 = vmatpush1.bf16.msra.mxu0 0
        %1910 = vmatprep.subr.bf16.mxu0 0
        %1911 = vmatpush1.bf16.msra.mxu0 0
        %1912 = vmatprep.subr.bf16.mxu0 0
        %1913 = vmatpush1.bf16.msra.mxu0 0
        %1914 = vmatprep.subr.bf16.mxu0 0
        %1915 = vmatpush1.bf16.msra.mxu0 0
        %1916 = vmatprep.mubr.bf16.mxu0 %v1882
        %1917 = vmatmul.mubr.bf16.gmra.mrb[0].mxu0 %v1877
        %v1918 = vpop.f32.mrb[0].mxu0
        %v1919 = vadd.f32 %v1864, %v1918
        %v1920 = vpop.f32.mrb[0].mxu0
        %v1921 = vadd.f32 %v1864, %v1920
        %v1922 = vpop.f32.mrb[0].mxu0
        %v1923 = vadd.f32 %v1869, %v1922
        %v1924 = vpop.f32.mrb[0].mxu0
        %v1925 = vadd.f32 %v1869, %v1924
        %1926 = vdwg.mxu0
        %1927 = vmatprep.subr.bf16.mxu0 %v1338
        %1928 = vmatpush1.bf16.msra.mxu0 %v1337
        %1929 = vmatprep.subr.bf16.mxu0 %v1399
        %1930 = vmatpush1.bf16.msra.mxu0 %v1398
        %1931 = vmatprep.subr.bf16.mxu0 %v1459
        %1932 = vmatpush1.bf16.msra.mxu0 %v1458
        %1933 = vmatprep.subr.bf16.mxu0 %v1519
        %1934 = vmatpush1.bf16.msra.mxu0 %v1518
        %1935 = vmatprep.subr.bf16.mxu0 %v1579
        %1936 = vmatpush1.bf16.msra.mxu0 %v1578
        %1937 = vmatprep.subr.bf16.mxu0 %v1639
        %1938 = vmatpush1.bf16.msra.mxu0 %v1638
        %1939 = vmatprep.subr.bf16.mxu0 %v1704
        %1940 = vmatpush1.bf16.msra.mxu0 %v1703
        %1941 = vmatprep.subr.bf16.mxu0 %v1767
        %1942 = vmatpush1.bf16.msra.mxu0 %v1766
        %1943 = vmatprep.subr.bf16.mxu0 %v1830
        %1944 = vmatpush1.bf16.msra.mxu0 %v1829
        %1945 = vmatprep.subr.bf16.mxu0 0
        %1946 = vmatpush1.bf16.msra.mxu0 0
        %1947 = vmatprep.subr.bf16.mxu0 0
        %1948 = vmatpush1.bf16.msra.mxu0 0
        %1949 = vmatprep.subr.bf16.mxu0 0
        %1950 = vmatpush1.bf16.msra.mxu0 0
        %1951 = vmatprep.subr.bf16.mxu0 0
        %1952 = vmatpush1.bf16.msra.mxu0 0
        %1953 = vmatprep.subr.bf16.mxu0 0
        %1954 = vmatpush1.bf16.msra.mxu0 0
        %1955 = vmatprep.subr.bf16.mxu0 0
        %1956 = vmatpush1.bf16.msra.mxu0 0
        %1957 = vmatprep.subr.bf16.mxu0 0
        %1958 = vmatpush1.bf16.msra.mxu0 0
        %1959 = vmatprep.mubr.bf16.mxu0 %v1882
        %1960 = vmatmul.mubr.bf16.gmra.mrb[0].mxu0 %v1877
        %v1961 = vpop.f32.mrb[0].mxu0
        %v1962 = vadd.f32 %v1864, %v1961
        %v1963 = vpop.f32.mrb[0].mxu0
        %v1964 = vadd.f32 %v1864, %v1963
        %v1965 = vpop.f32.mrb[0].mxu0
        %v1966 = vadd.f32 %v1869, %v1965
        %v1967 = vpop.f32.mrb[0].mxu0
        %v1968 = vadd.f32 %v1869, %v1967
        %1969 = vdwg.mxu0
        %1970 = vmatprep.subr.bf16.mxu0 %v1340
        %1971 = vmatpush1.bf16.msra.mxu0 %v1339
        %1972 = vmatprep.subr.bf16.mxu0 %v1401
        %1973 = vmatpush1.bf16.msra.mxu0 %v1400
        %1974 = vmatprep.subr.bf16.mxu0 %v1461
        %1975 = vmatpush1.bf16.msra.mxu0 %v1460
        %1976 = vmatprep.subr.bf16.mxu0 %v1521
        %1977 = vmatpush1.bf16.msra.mxu0 %v1520
        %1978 = vmatprep.subr.bf16.mxu0 %v1581
        %1979 = vmatpush1.bf16.msra.mxu0 %v1580
        %1980 = vmatprep.subr.bf16.mxu0 %v1641
        %1981 = vmatpush1.bf16.msra.mxu0 %v1640
        %1982 = vmatprep.subr.bf16.mxu0 %v1706
        %1983 = vmatpush1.bf16.msra.mxu0 %v1705
        %1984 = vmatprep.subr.bf16.mxu0 %v1769
        %1985 = vmatpush1.bf16.msra.mxu0 %v1768
        %1986 = vmatprep.subr.bf16.mxu0 %v1832
        %1987 = vmatpush1.bf16.msra.mxu0 %v1831
        %1988 = vmatprep.subr.bf16.mxu0 0
        %1989 = vmatpush1.bf16.msra.mxu0 0
        %1990 = vmatprep.subr.bf16.mxu0 0
        %1991 = vmatpush1.bf16.msra.mxu0 0
        %1992 = vmatprep.subr.bf16.mxu0 0
        %1993 = vmatpush1.bf16.msra.mxu0 0
        %1994 = vmatprep.subr.bf16.mxu0 0
        %1995 = vmatpush1.bf16.msra.mxu0 0
        %1996 = vmatprep.subr.bf16.mxu0 0
        %1997 = vmatpush1.bf16.msra.mxu0 0
        %1998 = vmatprep.subr.bf16.mxu0 0
        %1999 = vmatpush1.bf16.msra.mxu0 0
        %2000 = vmatprep.subr.bf16.mxu0 0
        %2001 = vmatpush1.bf16.msra.mxu0 0
        %2002 = vmatprep.mubr.bf16.mxu0 %v1882
        %2003 = vmatmul.mubr.bf16.gmra.mrb[0].mxu0 %v1877
        %v2004 = vpop.f32.mrb[0].mxu0
        %v2005 = vadd.f32 %v1864, %v2004
        %v2006 = vpop.f32.mrb[0].mxu0
        %v2007 = vadd.f32 %v1864, %v2006
        %v2008 = vpop.f32.mrb[0].mxu0
        %v2009 = vadd.f32 %v1869, %v2008
        %v2010 = vpop.f32.mrb[0].mxu0
        %v2011 = vadd.f32 %v1869, %v2010
        %2012 = vdwg.mxu0
        %2013 = vmatprep.subr.bf16.mxu0 %v1342
        %2014 = vmatpush1.bf16.msra.mxu0 %v1341
        %2015 = vmatprep.subr.bf16.mxu0 %v1403
        %2016 = vmatpush1.bf16.msra.mxu0 %v1402
        %2017 = vmatprep.subr.bf16.mxu0 %v1463
        %2018 = vmatpush1.bf16.msra.mxu0 %v1462
        %2019 = vmatprep.subr.bf16.mxu0 %v1523
        %2020 = vmatpush1.bf16.msra.mxu0 %v1522
        %2021 = vmatprep.subr.bf16.mxu0 %v1583
        %2022 = vmatpush1.bf16.msra.mxu0 %v1582
        %2023 = vmatprep.subr.bf16.mxu0 %v1643
        %2024 = vmatpush1.bf16.msra.mxu0 %v1642
        %2025 = vmatprep.subr.bf16.mxu0 %v1708
        %2026 = vmatpush1.bf16.msra.mxu0 %v1707
        %2027 = vmatprep.subr.bf16.mxu0 %v1771
        %2028 = vmatpush1.bf16.msra.mxu0 %v1770
        %2029 = vmatprep.subr.bf16.mxu0 %v1834
        %2030 = vmatpush1.bf16.msra.mxu0 %v1833
        %2031 = vmatprep.subr.bf16.mxu0 0
        %2032 = vmatpush1.bf16.msra.mxu0 0
        %2033 = vmatprep.subr.bf16.mxu0 0
        %2034 = vmatpush1.bf16.msra.mxu0 0
        %2035 = vmatprep.subr.bf16.mxu0 0
        %2036 = vmatpush1.bf16.msra.mxu0 0
        %2037 = vmatprep.subr.bf16.mxu0 0
        %2038 = vmatpush1.bf16.msra.mxu0 0
        %2039 = vmatprep.subr.bf16.mxu0 0
        %2040 = vmatpush1.bf16.msra.mxu0 0
        %2041 = vmatprep.subr.bf16.mxu0 0
        %2042 = vmatpush1.bf16.msra.mxu0 0
        %2043 = vmatprep.subr.bf16.mxu0 0
        %2044 = vmatpush1.bf16.msra.mxu0 0
        %2045 = vmatprep.mubr.bf16.mxu0 %v1882
        %2046 = vmatmul.mubr.bf16.gmra.mrb[0].mxu0 %v1877
        %v2047 = vpop.f32.mrb[0].mxu0
        %v2048 = vadd.f32 %v1864, %v2047
        %v2049 = vpop.f32.mrb[0].mxu0
        %v2050 = vadd.f32 %v1864, %v2049
        %v2051 = vpop.f32.mrb[0].mxu0
        %v2052 = vadd.f32 %v1869, %v2051
        %v2053 = vpop.f32.mrb[0].mxu0
        %v2054 = vadd.f32 %v1869, %v2053
        %2055 = vdwg.mxu0
        %2056 = vmatprep.subr.bf16.mxu0 %v1344
        %2057 = vmatpush1.bf16.msra.mxu0 %v1343
        %2058 = vmatprep.subr.bf16.mxu0 %v1405
        %2059 = vmatpush1.bf16.msra.mxu0 %v1404
        %2060 = vmatprep.subr.bf16.mxu0 %v1465
        %2061 = vmatpush1.bf16.msra.mxu0 %v1464
        %2062 = vmatprep.subr.bf16.mxu0 %v1525
        %2063 = vmatpush1.bf16.msra.mxu0 %v1524
        %2064 = vmatprep.subr.bf16.mxu0 %v1585
        %2065 = vmatpush1.bf16.msra.mxu0 %v1584
        %2066 = vmatprep.subr.bf16.mxu0 %v1645
        %2067 = vmatpush1.bf16.msra.mxu0 %v1644
        %2068 = vmatprep.subr.bf16.mxu0 %v1710
        %2069 = vmatpush1.bf16.msra.mxu0 %v1709
        %2070 = vmatprep.subr.bf16.mxu0 %v1773
        %2071 = vmatpush1.bf16.msra.mxu0 %v1772
        %2072 = vmatprep.subr.bf16.mxu0 %v1836
        %2073 = vmatpush1.bf16.msra.mxu0 %v1835
        %2074 = vmatprep.subr.bf16.mxu0 0
        %2075 = vmatpush1.bf16.msra.mxu0 0
        %2076 = vmatprep.subr.bf16.mxu0 0
        %2077 = vmatpush1.bf16.msra.mxu0 0
        %2078 = vmatprep.subr.bf16.mxu0 0
        %2079 = vmatpush1.bf16.msra.mxu0 0
        %2080 = vmatprep.subr.bf16.mxu0 0
        %2081 = vmatpush1.bf16.msra.mxu0 0
        %2082 = vmatprep.subr.bf16.mxu0 0
        %2083 = vmatpush1.bf16.msra.mxu0 0
        %2084 = vmatprep.subr.bf16.mxu0 0
        %2085 = vmatpush1.bf16.msra.mxu0 0
        %2086 = vmatprep.subr.bf16.mxu0 0
        %2087 = vmatpush1.bf16.msra.mxu0 0
        %2088 = vmatprep.mubr.bf16.mxu0 %v1882
        %2089 = vmatmul.mubr.bf16.gmra.mrb[0].mxu0 %v1877
        %v2090 = vpop.f32.mrb[0].mxu0
        %v2091 = vadd.f32 %v1864, %v2090
        %v2092 = vpop.f32.mrb[0].mxu0
        %v2093 = vadd.f32 %v1864, %v2092
        %v2094 = vpop.f32.mrb[0].mxu0
        %v2095 = vadd.f32 %v1869, %v2094
        %v2096 = vpop.f32.mrb[0].mxu0
        %v2097 = vadd.f32 %v1869, %v2096
        %2098 = vdwg.mxu0
        %2099 = vmatprep.subr.bf16.mxu0 %v1346
        %2100 = vmatpush1.bf16.msra.mxu0 %v1345
        %2101 = vmatprep.subr.bf16.mxu0 %v1407
        %2102 = vmatpush1.bf16.msra.mxu0 %v1406
        %2103 = vmatprep.subr.bf16.mxu0 %v1467
        %2104 = vmatpush1.bf16.msra.mxu0 %v1466
        %2105 = vmatprep.subr.bf16.mxu0 %v1527
        %2106 = vmatpush1.bf16.msra.mxu0 %v1526
        %2107 = vmatprep.subr.bf16.mxu0 %v1587
        %2108 = vmatpush1.bf16.msra.mxu0 %v1586
        %2109 = vmatprep.subr.bf16.mxu0 %v1647
        %2110 = vmatpush1.bf16.msra.mxu0 %v1646
        %2111 = vmatprep.subr.bf16.mxu0 %v1712
        %2112 = vmatpush1.bf16.msra.mxu0 %v1711
        %2113 = vmatprep.subr.bf16.mxu0 %v1775
        %2114 = vmatpush1.bf16.msra.mxu0 %v1774
        %2115 = vmatprep.subr.bf16.mxu0 %v1838
        %2116 = vmatpush1.bf16.msra.mxu0 %v1837
        %2117 = vmatprep.subr.bf16.mxu0 0
        %2118 = vmatpush1.bf16.msra.mxu0 0
        %2119 = vmatprep.subr.bf16.mxu0 0
        %2120 = vmatpush1.bf16.msra.mxu0 0
        %2121 = vmatprep.subr.bf16.mxu0 0
        %2122 = vmatpush1.bf16.msra.mxu0 0
        %2123 = vmatprep.subr.bf16.mxu0 0
        %2124 = vmatpush1.bf16.msra.mxu0 0
        %2125 = vmatprep.subr.bf16.mxu0 0
        %2126 = vmatpush1.bf16.msra.mxu0 0
        %2127 = vmatprep.subr.bf16.mxu0 0
        %2128 = vmatpush1.bf16.msra.mxu0 0
        %2129 = vmatprep.subr.bf16.mxu0 0
        %2130 = vmatpush1.bf16.msra.mxu0 0
        %2131 = vmatprep.mubr.bf16.mxu0 %v1882
        %2132 = vmatmul.mubr.bf16.gmra.mrb[0].mxu0 %v1877
        %v2133 = vpop.f32.mrb[0].mxu0
        %v2134 = vadd.f32 %v1864, %v2133
        %v2135 = vpop.f32.mrb[0].mxu0
        %v2136 = vadd.f32 %v1864, %v2135
        %v2137 = vpop.f32.mrb[0].mxu0
        %v2138 = vadd.f32 %v1869, %v2137
        %v2139 = vpop.f32.mrb[0].mxu0
        %v2140 = vadd.f32 %v1869, %v2139
        %2141 = vdwg.mxu0
        %2142 = vmatprep.subr.bf16.mxu0 %v1348
        %2143 = vmatpush1.bf16.msra.mxu0 %v1347
        %2144 = vmatprep.subr.bf16.mxu0 %v1409
        %2145 = vmatpush1.bf16.msra.mxu0 %v1408
        %2146 = vmatprep.subr.bf16.mxu0 %v1469
        %2147 = vmatpush1.bf16.msra.mxu0 %v1468
        %2148 = vmatprep.subr.bf16.mxu0 %v1529
        %2149 = vmatpush1.bf16.msra.mxu0 %v1528
        %2150 = vmatprep.subr.bf16.mxu0 %v1589
        %2151 = vmatpush1.bf16.msra.mxu0 %v1588
        %2152 = vmatprep.subr.bf16.mxu0 %v1649
        %2153 = vmatpush1.bf16.msra.mxu0 %v1648
        %2154 = vmatprep.subr.bf16.mxu0 %v1714
        %2155 = vmatpush1.bf16.msra.mxu0 %v1713
        %2156 = vmatprep.subr.bf16.mxu0 %v1777
        %2157 = vmatpush1.bf16.msra.mxu0 %v1776
        %2158 = vmatprep.subr.bf16.mxu0 %v1840
        %2159 = vmatpush1.bf16.msra.mxu0 %v1839
        %2160 = vmatprep.subr.bf16.mxu0 0
        %2161 = vmatpush1.bf16.msra.mxu0 0
        %2162 = vmatprep.subr.bf16.mxu0 0
        %2163 = vmatpush1.bf16.msra.mxu0 0
        %2164 = vmatprep.subr.bf16.mxu0 0
        %2165 = vmatpush1.bf16.msra.mxu0 0
        %2166 = vmatprep.subr.bf16.mxu0 0
        %2167 = vmatpush1.bf16.msra.mxu0 0
        %2168 = vmatprep.subr.bf16.mxu0 0
        %2169 = vmatpush1.bf16.msra.mxu0 0
        %2170 = vmatprep.subr.bf16.mxu0 0
        %2171 = vmatpush1.bf16.msra.mxu0 0
        %2172 = vmatprep.subr.bf16.mxu0 0
        %2173 = vmatpush1.bf16.msra.mxu0 0
        %2174 = vmatprep.mubr.bf16.mxu0 %v1882
        %2175 = vmatmul.mubr.bf16.gmra.mrb[0].mxu0 %v1877
        %v2176 = vpop.f32.mrb[0].mxu0
        %v2177 = vadd.f32 %v1864, %v2176
        %v2178 = vpop.f32.mrb[0].mxu0
        %v2179 = vadd.f32 %v1864, %v2178
        %v2180 = vpop.f32.mrb[0].mxu0
        %v2181 = vadd.f32 %v1869, %v2180
        %v2182 = vpop.f32.mrb[0].mxu0
        %v2183 = vadd.f32 %v1869, %v2182
        %2184 = vdwg.mxu0
        %2185 = vmatprep.subr.bf16.mxu0 0
        %2186 = vmatpush1.bf16.msra.mxu0 %v1349
        %2187 = vmatprep.subr.bf16.mxu0 0
        %2188 = vmatpush1.bf16.msra.mxu0 %v1394
        %2189 = vmatprep.subr.bf16.mxu0 0
        %2190 = vmatpush1.bf16.msra.mxu0 %v1454
        %2191 = vmatprep.subr.bf16.mxu0 0
        %2192 = vmatpush1.bf16.msra.mxu0 %v1514
        %2193 = vmatprep.subr.bf16.mxu0 0
        %2194 = vmatpush1.bf16.msra.mxu0 %v1574
        %2195 = vmatprep.subr.bf16.mxu0 0
        %2196 = vmatpush1.bf16.msra.mxu0 %v1634
        %2197 = vmatprep.subr.bf16.mxu0 0
        %2198 = vmatpush1.bf16.msra.mxu0 %v1715
        %2199 = vmatprep.subr.bf16.mxu0 0
        %2200 = vmatpush1.bf16.msra.mxu0 %v1778
        %2201 = vmatprep.subr.bf16.mxu0 0
        %2202 = vmatpush1.bf16.msra.mxu0 %v1841
        %2203 = vmatprep.subr.bf16.mxu0 0
        %2204 = vmatpush1.bf16.msra.mxu0 0
        %2205 = vmatprep.subr.bf16.mxu0 0
        %2206 = vmatpush1.bf16.msra.mxu0 0
        %2207 = vmatprep.subr.bf16.mxu0 0
        %2208 = vmatpush1.bf16.msra.mxu0 0
        %2209 = vmatprep.subr.bf16.mxu0 0
        %2210 = vmatpush1.bf16.msra.mxu0 0
        %2211 = vmatprep.subr.bf16.mxu0 0
        %2212 = vmatpush1.bf16.msra.mxu0 0
        %2213 = vmatprep.subr.bf16.mxu0 0
        %2214 = vmatpush1.bf16.msra.mxu0 0
        %2215 = vmatprep.subr.bf16.mxu0 0
        %2216 = vmatpush1.bf16.msra.mxu0 0
        %2217 = vmatprep.mubr.bf16.mxu0 %v1882
        %2218 = vmatmul.mubr.bf16.gmra.mrb[0].mxu0 %v1877
        %v2219 = vpop.f32.mrb[0].mxu0
        %v2220 = vadd.f32 %v1864, %v2219
        %v2221 = vpop.f32.mrb[0].mxu0
        %v2222 = vpop.f32.mrb[0].mxu0
        %v2223 = vadd.f32 %v1869, %v2222
        %v2224 = vpop.f32.mrb[0].mxu0
        %2225 = vdwg.mxu0
        %v2226 = vmax.f32 %v1919, 0.0
        %v2227 = vmax.f32 %v1921, 0.0
        %v2228 = vmax.f32 %v1962, 0.0
        %v2229 = vmax.f32 %v1964, 0.0
        %v2230 = vmax.f32 %v2005, 0.0
        %v2231 = vmax.f32 %v2007, 0.0
        %v2232 = vmax.f32 %v2048, 0.0
        %v2233 = vmax.f32 %v2050, 0.0
        %v2234 = vmax.f32 %v2091, 0.0
        %v2235 = vmax.f32 %v2093, 0.0
        %v2236 = vmax.f32 %v2134, 0.0
        %v2237 = vmax.f32 %v2136, 0.0
        %v2238 = vmax.f32 %v2177, 0.0
        %v2239 = vmax.f32 %v2179, 0.0
        %v2240 = vmax.f32 %v2220, 0.0
        %v2241 = vmax.f32 %v1923, 0.0
        %v2242 = vmax.f32 %v1925, 0.0
        %v2243 = vmax.f32 %v1966, 0.0
        %v2244 = vmax.f32 %v1968, 0.0
        %v2245 = vmax.f32 %v2009, 0.0
        %v2246 = vmax.f32 %v2011, 0.0
        %v2247 = vmax.f32 %v2052, 0.0
        %v2248 = vmax.f32 %v2054, 0.0
        %v2249 = vmax.f32 %v2095, 0.0
        %v2250 = vmax.f32 %v2097, 0.0
        %v2251 = vmax.f32 %v2138, 0.0
        %v2252 = vmax.f32 %v2140, 0.0
        %v2253 = vmax.f32 %v2181, 0.0
        %v2254 = vmax.f32 %v2183, 0.0
        %v2255 = vmax.f32 %v2223, 0.0
        %v2256 = vpack.c.bf16 %v2241, %v2226
        %v2257 = vpack.c.bf16 %v2242, %v2227
        %v2258 = vpack.c.bf16 %v2243, %v2228
        %v2259 = vpack.c.bf16 %v2244, %v2229
        %v2260 = vpack.c.bf16 %v2245, %v2230
        %v2261 = vpack.c.bf16 %v2246, %v2231
        %v2262 = vpack.c.bf16 %v2247, %v2232
        %v2263 = vpack.c.bf16 %v2248, %v2233
        %v2264 = vpack.c.bf16 %v2249, %v2234
        %v2265 = vpack.c.bf16 %v2250, %v2235
        %v2266 = vpack.c.bf16 %v2251, %v2236
        %v2267 = vpack.c.bf16 %v2252, %v2237
        %v2268 = vpack.c.bf16 %v2253, %v2238
        %v2269 = vpack.c.bf16 %v2254, %v2239
        %v2270 = vpack.c.bf16 %v2255, %v2240
        %2285 = vrot.lane.b32.xlu0 %v2256, 127
        %v2286 = vpop.permute.xlu0 %2285
        %2287 = vrot.lane.b32.xlu0 %v2257, 127
        %v2288 = vpop.permute.xlu0 %2287
        %2289 = vrot.lane.b32.xlu0 %v2258, 127
        %v2290 = vpop.permute.xlu0 %2289
        %2291 = vrot.lane.b32.xlu0 %v2259, 127
        %v2292 = vpop.permute.xlu0 %2291
        %2293 = vrot.lane.b32.xlu0 %v2260, 127
        %v2294 = vpop.permute.xlu0 %2293
        %2295 = vrot.lane.b32.xlu0 %v2261, 127
        %v2296 = vpop.permute.xlu0 %2295
        %2297 = vrot.lane.b32.xlu0 %v2262, 127
        %v2298 = vpop.permute.xlu0 %2297
        %2299 = vrot.lane.b32.xlu0 %v2263, 127
        %v2300 = vpop.permute.xlu0 %2299
        %2301 = vrot.lane.b32.xlu0 %v2264, 127
        %v2302 = vpop.permute.xlu0 %2301
        %2303 = vrot.lane.b32.xlu0 %v2265, 127
        %v2304 = vpop.permute.xlu0 %2303
        %2305 = vrot.lane.b32.xlu0 %v2266, 127
        %v2306 = vpop.permute.xlu0 %2305
        %2307 = vrot.lane.b32.xlu0 %v2267, 127
        %v2308 = vpop.permute.xlu0 %2307
        %2309 = vrot.lane.b32.xlu0 %v2268, 127
        %v2310 = vpop.permute.xlu0 %2309
        %2311 = vrot.lane.b32.xlu0 %v2269, 127
        %v2312 = vpop.permute.xlu0 %2311
        %v2313 = vsel %vm1395, %v2286, %v2288
        %v2314 = vsel %vm1395, %v2288, %v2290
        %v2315 = vsel %vm1395, %v2290, %v2292
        %v2316 = vsel %vm1395, %v2292, %v2294
        %v2317 = vsel %vm1395, %v2294, %v2296
        %v2318 = vsel %vm1395, %v2296, %v2298
        %v2319 = vsel %vm1395, %v2298, %v2300
        %v2320 = vsel %vm1395, %v2300, %v2302
        %v2321 = vsel %vm1395, %v2302, %v2304
        %v2322 = vsel %vm1395, %v2304, %v2306
        %v2323 = vsel %vm1395, %v2306, %v2308
        %v2324 = vsel %vm1395, %v2308, %v2310
        %v2325 = vsel %vm1395, %v2310, %v2312
        %2340 = vrot.lane.b32.xlu0 %v2256, 126
        %v2341 = vpop.permute.xlu0 %2340
        %2342 = vrot.lane.b32.xlu0 %v2257, 126
        %v2343 = vpop.permute.xlu0 %2342
        %2344 = vrot.lane.b32.xlu0 %v2258, 126
        %v2345 = vpop.permute.xlu0 %2344
        %2346 = vrot.lane.b32.xlu0 %v2259, 126
        %v2347 = vpop.permute.xlu0 %2346
        %2348 = vrot.lane.b32.xlu0 %v2260, 126
        %v2349 = vpop.permute.xlu0 %2348
        %2350 = vrot.lane.b32.xlu0 %v2261, 126
        %v2351 = vpop.permute.xlu0 %2350
        %2352 = vrot.lane.b32.xlu0 %v2262, 126
        %v2353 = vpop.permute.xlu0 %2352
        %2354 = vrot.lane.b32.xlu0 %v2263, 126
        %v2355 = vpop.permute.xlu0 %2354
        %2356 = vrot.lane.b32.xlu0 %v2264, 126
        %v2357 = vpop.permute.xlu0 %2356
        %2358 = vrot.lane.b32.xlu0 %v2265, 126
        %v2359 = vpop.permute.xlu0 %2358
        %2360 = vrot.lane.b32.xlu0 %v2266, 126
        %v2361 = vpop.permute.xlu0 %2360
        %2362 = vrot.lane.b32.xlu0 %v2267, 126
        %v2363 = vpop.permute.xlu0 %2362
        %2364 = vrot.lane.b32.xlu0 %v2268, 126
        %v2365 = vpop.permute.xlu0 %2364
        %2366 = vrot.lane.b32.xlu0 %v2269, 126
        %v2367 = vpop.permute.xlu0 %2366
        %v2368 = vsel %vm1455, %v2341, %v2343
        %v2369 = vsel %vm1455, %v2343, %v2345
        %v2370 = vsel %vm1455, %v2345, %v2347
        %v2371 = vsel %vm1455, %v2347, %v2349
        %v2372 = vsel %vm1455, %v2349, %v2351
        %v2373 = vsel %vm1455, %v2351, %v2353
        %v2374 = vsel %vm1455, %v2353, %v2355
        %v2375 = vsel %vm1455, %v2355, %v2357
        %v2376 = vsel %vm1455, %v2357, %v2359
        %v2377 = vsel %vm1455, %v2359, %v2361
        %v2378 = vsel %vm1455, %v2361, %v2363
        %v2379 = vsel %vm1455, %v2363, %v2365
        %v2380 = vsel %vm1455, %v2365, %v2367
        %2396 = vrot.lane.b32.xlu0 %v2256, 84
        %v2397 = vpop.permute.xlu0 %2396
        %2398 = vrot.lane.b32.xlu0 %v2257, 84
        %v2399 = vpop.permute.xlu0 %2398
        %2400 = vrot.lane.b32.xlu0 %v2258, 84
        %v2401 = vpop.permute.xlu0 %2400
        %2402 = vrot.lane.b32.xlu0 %v2259, 84
        %v2403 = vpop.permute.xlu0 %2402
        %2404 = vrot.lane.b32.xlu0 %v2260, 84
        %v2405 = vpop.permute.xlu0 %2404
        %2406 = vrot.lane.b32.xlu0 %v2261, 84
        %v2407 = vpop.permute.xlu0 %2406
        %2408 = vrot.lane.b32.xlu0 %v2262, 84
        %v2409 = vpop.permute.xlu0 %2408
        %2410 = vrot.lane.b32.xlu0 %v2263, 84
        %v2411 = vpop.permute.xlu0 %2410
        %2412 = vrot.lane.b32.xlu0 %v2264, 84
        %v2413 = vpop.permute.xlu0 %2412
        %2414 = vrot.lane.b32.xlu0 %v2265, 84
        %v2415 = vpop.permute.xlu0 %2414
        %2416 = vrot.lane.b32.xlu0 %v2266, 84
        %v2417 = vpop.permute.xlu0 %2416
        %2418 = vrot.lane.b32.xlu0 %v2267, 84
        %v2419 = vpop.permute.xlu0 %2418
        %2420 = vrot.lane.b32.xlu0 %v2268, 84
        %v2421 = vpop.permute.xlu0 %2420
        %2422 = vrot.lane.b32.xlu0 %v2269, 84
        %v2423 = vpop.permute.xlu0 %2422
        %2424 = vrot.lane.b32.xlu0 %v2270, 84
        %v2425 = vpop.permute.xlu0 %2424
        %v2426 = vsel %vm1515, %v2397, %v2399
        %v2427 = vsel %vm1515, %v2399, %v2401
        %v2428 = vsel %vm1515, %v2401, %v2403
        %v2429 = vsel %vm1515, %v2403, %v2405
        %v2430 = vsel %vm1515, %v2405, %v2407
        %v2431 = vsel %vm1515, %v2407, %v2409
        %v2432 = vsel %vm1515, %v2409, %v2411
        %v2433 = vsel %vm1515, %v2411, %v2413
        %v2434 = vsel %vm1515, %v2413, %v2415
        %v2435 = vsel %vm1515, %v2415, %v2417
        %v2436 = vsel %vm1515, %v2417, %v2419
        %v2437 = vsel %vm1515, %v2419, %v2421
        %v2438 = vsel %vm1515, %v2421, %v2423
        %v2439 = vsel %vm1515, %v2423, %v2425
        %2454 = vrot.lane.b32.xlu0 %v2256, 83
        %v2455 = vpop.permute.xlu0 %2454
        %2456 = vrot.lane.b32.xlu0 %v2257, 83
        %v2457 = vpop.permute.xlu0 %2456
        %2458 = vrot.lane.b32.xlu0 %v2258, 83
        %v2459 = vpop.permute.xlu0 %2458
        %2460 = vrot.lane.b32.xlu0 %v2259, 83
        %v2461 = vpop.permute.xlu0 %2460
        %2462 = vrot.lane.b32.xlu0 %v2260, 83
        %v2463 = vpop.permute.xlu0 %2462
        %2464 = vrot.lane.b32.xlu0 %v2261, 83
        %v2465 = vpop.permute.xlu0 %2464
        %2466 = vrot.lane.b32.xlu0 %v2262, 83
        %v2467 = vpop.permute.xlu0 %2466
        %2468 = vrot.lane.b32.xlu0 %v2263, 83
        %v2469 = vpop.permute.xlu0 %2468
        %2470 = vrot.lane.b32.xlu0 %v2264, 83
        %v2471 = vpop.permute.xlu0 %2470
        %2472 = vrot.lane.b32.xlu0 %v2265, 83
        %v2473 = vpop.permute.xlu0 %2472
        %2474 = vrot.lane.b32.xlu0 %v2266, 83
        %v2475 = vpop.permute.xlu0 %2474
        %2476 = vrot.lane.b32.xlu0 %v2267, 83
        %v2477 = vpop.permute.xlu0 %2476
        %2478 = vrot.lane.b32.xlu0 %v2268, 83
        %v2479 = vpop.permute.xlu0 %2478
        %2480 = vrot.lane.b32.xlu0 %v2269, 83
        %v2481 = vpop.permute.xlu0 %2480
        %2482 = vrot.lane.b32.xlu0 %v2270, 83
        %v2483 = vpop.permute.xlu0 %2482
        %v2484 = vsel %vm1575, %v2455, %v2457
        %v2485 = vsel %vm1575, %v2457, %v2459
        %v2486 = vsel %vm1575, %v2459, %v2461
        %v2487 = vsel %vm1575, %v2461, %v2463
        %v2488 = vsel %vm1575, %v2463, %v2465
        %v2489 = vsel %vm1575, %v2465, %v2467
        %v2490 = vsel %vm1575, %v2467, %v2469
        %v2491 = vsel %vm1575, %v2469, %v2471
        %v2492 = vsel %vm1575, %v2471, %v2473
        %v2493 = vsel %vm1575, %v2473, %v2475
        %v2494 = vsel %vm1575, %v2475, %v2477
        %v2495 = vsel %vm1575, %v2477, %v2479
        %v2496 = vsel %vm1575, %v2479, %v2481
        %v2497 = vsel %vm1575, %v2481, %v2483
        %2512 = vrot.lane.b32.xlu0 %v2256, 82
        %v2513 = vpop.permute.xlu0 %2512
        %2514 = vrot.lane.b32.xlu0 %v2257, 82
        %v2515 = vpop.permute.xlu0 %2514
        %2516 = vrot.lane.b32.xlu0 %v2258, 82
        %v2517 = vpop.permute.xlu0 %2516
        %2518 = vrot.lane.b32.xlu0 %v2259, 82
        %v2519 = vpop.permute.xlu0 %2518
        %2520 = vrot.lane.b32.xlu0 %v2260, 82
        %v2521 = vpop.permute.xlu0 %2520
        %2522 = vrot.lane.b32.xlu0 %v2261, 82
        %v2523 = vpop.permute.xlu0 %2522
        %2524 = vrot.lane.b32.xlu0 %v2262, 82
        %v2525 = vpop.permute.xlu0 %2524
        %2526 = vrot.lane.b32.xlu0 %v2263, 82
        %v2527 = vpop.permute.xlu0 %2526
        %2528 = vrot.lane.b32.xlu0 %v2264, 82
        %v2529 = vpop.permute.xlu0 %2528
        %2530 = vrot.lane.b32.xlu0 %v2265, 82
        %v2531 = vpop.permute.xlu0 %2530
        %2532 = vrot.lane.b32.xlu0 %v2266, 82
        %v2533 = vpop.permute.xlu0 %2532
        %2534 = vrot.lane.b32.xlu0 %v2267, 82
        %v2535 = vpop.permute.xlu0 %2534
        %2536 = vrot.lane.b32.xlu0 %v2268, 82
        %v2537 = vpop.permute.xlu0 %2536
        %2538 = vrot.lane.b32.xlu0 %v2269, 82
        %v2539 = vpop.permute.xlu0 %2538
        %2540 = vrot.lane.b32.xlu0 %v2270, 82
        %v2541 = vpop.permute.xlu0 %2540
        %v2542 = vsel %vm1635, %v2513, %v2515
        %v2543 = vsel %vm1635, %v2515, %v2517
        %v2544 = vsel %vm1635, %v2517, %v2519
        %v2545 = vsel %vm1635, %v2519, %v2521
        %v2546 = vsel %vm1635, %v2521, %v2523
        %v2547 = vsel %vm1635, %v2523, %v2525
        %v2548 = vsel %vm1635, %v2525, %v2527
        %v2549 = vsel %vm1635, %v2527, %v2529
        %v2550 = vsel %vm1635, %v2529, %v2531
        %v2551 = vsel %vm1635, %v2531, %v2533
        %v2552 = vsel %vm1635, %v2533, %v2535
        %v2553 = vsel %vm1635, %v2535, %v2537
        %v2554 = vsel %vm1635, %v2537, %v2539
        %v2555 = vsel %vm1635, %v2539, %v2541
        %2570 = vrot.lane.b32.xlu0 %v2256, 40
        %v2571 = vpop.permute.xlu0 %2570
        %2572 = vrot.lane.b32.xlu0 %v2257, 40
        %v2573 = vpop.permute.xlu0 %2572
        %2574 = vrot.lane.b32.xlu0 %v2258, 40
        %v2575 = vpop.permute.xlu0 %2574
        %2576 = vrot.lane.b32.xlu0 %v2259, 40
        %v2577 = vpop.permute.xlu0 %2576
        %2578 = vrot.lane.b32.xlu0 %v2260, 40
        %v2579 = vpop.permute.xlu0 %2578
        %2580 = vrot.lane.b32.xlu0 %v2261, 40
        %v2581 = vpop.permute.xlu0 %2580
        %2582 = vrot.lane.b32.xlu0 %v2262, 40
        %v2583 = vpop.permute.xlu0 %2582
        %2584 = vrot.lane.b32.xlu0 %v2263, 40
        %v2585 = vpop.permute.xlu0 %2584
        %2586 = vrot.lane.b32.xlu0 %v2264, 40
        %v2587 = vpop.permute.xlu0 %2586
        %2588 = vrot.lane.b32.xlu0 %v2265, 40
        %v2589 = vpop.permute.xlu0 %2588
        %2590 = vrot.lane.b32.xlu0 %v2266, 40
        %v2591 = vpop.permute.xlu0 %2590
        %2592 = vrot.lane.b32.xlu0 %v2267, 40
        %v2593 = vpop.permute.xlu0 %2592
        %2594 = vrot.lane.b32.xlu0 %v2268, 40
        %v2595 = vpop.permute.xlu0 %2594
        %2596 = vrot.lane.b32.xlu0 %v2269, 40
        %v2597 = vpop.permute.xlu0 %2596
        %2598 = vrot.lane.b32.xlu0 %v2270, 40
        %v2599 = vpop.permute.xlu0 %2598
        %v2600 = vsel %vm1700, %v2571, %v2573
        %v2601 = vsel %vm1700, %v2573, %v2575
        %v2602 = vsel %vm1700, %v2575, %v2577
        %v2603 = vsel %vm1700, %v2577, %v2579
        %v2604 = vsel %vm1700, %v2579, %v2581
        %v2605 = vsel %vm1700, %v2581, %v2583
        %v2606 = vsel %vm1700, %v2583, %v2585
        %v2607 = vsel %vm1700, %v2585, %v2587
        %v2608 = vsel %vm1700, %v2587, %v2589
        %v2609 = vsel %vm1700, %v2589, %v2591
        %v2610 = vsel %vm1700, %v2591, %v2593
        %v2611 = vsel %vm1700, %v2593, %v2595
        %v2612 = vsel %vm1700, %v2595, %v2597
        %v2613 = vsel %vm1700, %v2597, %v2599
        %2628 = vrot.lane.b32.xlu0 %v2256, 39
        %v2629 = vpop.permute.xlu0 %2628
        %2630 = vrot.lane.b32.xlu0 %v2257, 39
        %v2631 = vpop.permute.xlu0 %2630
        %2632 = vrot.lane.b32.xlu0 %v2258, 39
        %v2633 = vpop.permute.xlu0 %2632
        %2634 = vrot.lane.b32.xlu0 %v2259, 39
        %v2635 = vpop.permute.xlu0 %2634
        %2636 = vrot.lane.b32.xlu0 %v2260, 39
        %v2637 = vpop.permute.xlu0 %2636
        %2638 = vrot.lane.b32.xlu0 %v2261, 39
        %v2639 = vpop.permute.xlu0 %2638
        %2640 = vrot.lane.b32.xlu0 %v2262, 39
        %v2641 = vpop.permute.xlu0 %2640
        %2642 = vrot.lane.b32.xlu0 %v2263, 39
        %v2643 = vpop.permute.xlu0 %2642
        %2644 = vrot.lane.b32.xlu0 %v2264, 39
        %v2645 = vpop.permute.xlu0 %2644
        %2646 = vrot.lane.b32.xlu0 %v2265, 39
        %v2647 = vpop.permute.xlu0 %2646
        %2648 = vrot.lane.b32.xlu0 %v2266, 39
        %v2649 = vpop.permute.xlu0 %2648
        %2650 = vrot.lane.b32.xlu0 %v2267, 39
        %v2651 = vpop.permute.xlu0 %2650
        %2652 = vrot.lane.b32.xlu0 %v2268, 39
        %v2653 = vpop.permute.xlu0 %2652
        %2654 = vrot.lane.b32.xlu0 %v2269, 39
        %v2655 = vpop.permute.xlu0 %2654
        %2656 = vrot.lane.b32.xlu0 %v2270, 39
        %v2657 = vpop.permute.xlu0 %2656
        %v2658 = vsel %vm1763, %v2629, %v2631
        %v2659 = vsel %vm1763, %v2631, %v2633
        %v2660 = vsel %vm1763, %v2633, %v2635
        %v2661 = vsel %vm1763, %v2635, %v2637
        %v2662 = vsel %vm1763, %v2637, %v2639
        %v2663 = vsel %vm1763, %v2639, %v2641
        %v2664 = vsel %vm1763, %v2641, %v2643
        %v2665 = vsel %vm1763, %v2643, %v2645
        %v2666 = vsel %vm1763, %v2645, %v2647
        %v2667 = vsel %vm1763, %v2647, %v2649
        %v2668 = vsel %vm1763, %v2649, %v2651
        %v2669 = vsel %vm1763, %v2651, %v2653
        %v2670 = vsel %vm1763, %v2653, %v2655
        %v2671 = vsel %vm1763, %v2655, %v2657
        %2686 = vrot.lane.b32.xlu0 %v2256, 38
        %v2687 = vpop.permute.xlu0 %2686
        %2688 = vrot.lane.b32.xlu0 %v2257, 38
        %v2689 = vpop.permute.xlu0 %2688
        %2690 = vrot.lane.b32.xlu0 %v2258, 38
        %v2691 = vpop.permute.xlu0 %2690
        %2692 = vrot.lane.b32.xlu0 %v2259, 38
        %v2693 = vpop.permute.xlu0 %2692
        %2694 = vrot.lane.b32.xlu0 %v2260, 38
        %v2695 = vpop.permute.xlu0 %2694
        %2696 = vrot.lane.b32.xlu0 %v2261, 38
        %v2697 = vpop.permute.xlu0 %2696
        %2698 = vrot.lane.b32.xlu0 %v2262, 38
        %v2699 = vpop.permute.xlu0 %2698
        %2700 = vrot.lane.b32.xlu0 %v2263, 38
        %v2701 = vpop.permute.xlu0 %2700
        %2702 = vrot.lane.b32.xlu0 %v2264, 38
        %v2703 = vpop.permute.xlu0 %2702
        %2704 = vrot.lane.b32.xlu0 %v2265, 38
        %v2705 = vpop.permute.xlu0 %2704
        %2706 = vrot.lane.b32.xlu0 %v2266, 38
        %v2707 = vpop.permute.xlu0 %2706
        %2708 = vrot.lane.b32.xlu0 %v2267, 38
        %v2709 = vpop.permute.xlu0 %2708
        %2710 = vrot.lane.b32.xlu0 %v2268, 38
        %v2711 = vpop.permute.xlu0 %2710
        %2712 = vrot.lane.b32.xlu0 %v2269, 38
        %v2713 = vpop.permute.xlu0 %2712
        %2714 = vrot.lane.b32.xlu0 %v2270, 38
        %v2715 = vpop.permute.xlu0 %2714
        %v2716 = vsel %vm1826, %v2687, %v2689
        %v2717 = vsel %vm1826, %v2689, %v2691
        %v2718 = vsel %vm1826, %v2691, %v2693
        %v2719 = vsel %vm1826, %v2693, %v2695
        %v2720 = vsel %vm1826, %v2695, %v2697
        %v2721 = vsel %vm1826, %v2697, %v2699
        %v2722 = vsel %vm1826, %v2699, %v2701
        %v2723 = vsel %vm1826, %v2701, %v2703
        %v2724 = vsel %vm1826, %v2703, %v2705
        %v2725 = vsel %vm1826, %v2705, %v2707
        %v2726 = vsel %vm1826, %v2707, %v2709
        %v2727 = vsel %vm1826, %v2709, %v2711
        %v2728 = vsel %vm1826, %v2711, %v2713
        %v2729 = vsel %vm1826, %v2713, %v2715
        %v2744 = vld [vmem:[%s7] sm:$0xff]
        %v2745 = vld [vmem:[%s7 + $0x8] sm:$0xff]
        %v2746 = vld [vmem:[#allocation4] sm:$0xff]
        %v2747 = vld [vmem:[#allocation4 + $0x8] sm:$0xff]
        %2749 = vset.pattern.permute.xlu0 0
        %2750 = vperm.xlu0 %2749, %v2746
        %v2751 = vpop.permute.xlu0 %2750
        %2754 = vset.pattern.permute.xlu0 0
        %2755 = vperm.xlu0 %2754, %v2747
        %v2756 = vpop.permute.xlu0 %2755
        %v2760 = vunpack.c.l.b16 %v2744
        %v2761 = vunpack.c.h.b16 %v2744
        %v2762 = vunpack.c.l.b16 %v2745
        %v2763 = vunpack.c.h.b16 %v2745
        %v2764 = vpack.c.b16 %v2762, %v2760
        %v2765 = vpack.c.b16 %v2763, %v2761
        %v2768 = vsel %vm1880, %v2765, 0
        %2770 = vmatprep.subr.bf16.mxu0 %v2257
        %2771 = vmatpush1.bf16.msra.mxu0 %v2256
        %2772 = vmatprep.subr.bf16.mxu0 %v2314
        %2773 = vmatpush1.bf16.msra.mxu0 %v2313
        %2774 = vmatprep.subr.bf16.mxu0 %v2369
        %2775 = vmatpush1.bf16.msra.mxu0 %v2368
        %2776 = vmatprep.subr.bf16.mxu0 %v2427
        %2777 = vmatpush1.bf16.msra.mxu0 %v2426
        %2778 = vmatprep.subr.bf16.mxu0 %v2485
        %2779 = vmatpush1.bf16.msra.mxu0 %v2484
        %2780 = vmatprep.subr.bf16.mxu0 %v2543
        %2781 = vmatpush1.bf16.msra.mxu0 %v2542
        %2782 = vmatprep.subr.bf16.mxu0 %v2601
        %2783 = vmatpush1.bf16.msra.mxu0 %v2600
        %2784 = vmatprep.subr.bf16.mxu0 %v2659
        %2785 = vmatpush1.bf16.msra.mxu0 %v2658
        %2786 = vmatprep.subr.bf16.mxu0 %v2717
        %2787 = vmatpush1.bf16.msra.mxu0 %v2716
        %2788 = vmatprep.subr.bf16.mxu0 0
        %2789 = vmatpush1.bf16.msra.mxu0 0
        %2790 = vmatprep.subr.bf16.mxu0 0
        %2791 = vmatpush1.bf16.msra.mxu0 0
        %2792 = vmatprep.subr.bf16.mxu0 0
        %2793 = vmatpush1.bf16.msra.mxu0 0
        %2794 = vmatprep.subr.bf16.mxu0 0
        %2795 = vmatpush1.bf16.msra.mxu0 0
        %2796 = vmatprep.subr.bf16.mxu0 0
        %2797 = vmatpush1.bf16.msra.mxu0 0
        %2798 = vmatprep.subr.bf16.mxu0 0
        %2799 = vmatpush1.bf16.msra.mxu0 0
        %2800 = vmatprep.subr.bf16.mxu0 0
        %2801 = vmatpush1.bf16.msra.mxu0 0
        %2802 = vmatprep.mubr.bf16.mxu0 %v2768
        %2803 = vmatmul.mubr.bf16.gmra.mrb[0].mxu0 %v2764
        %v2804 = vpop.f32.mrb[0].mxu0
        %v2805 = vadd.f32 %v2751, %v2804
        %v2806 = vpop.f32.mrb[0].mxu0
        %v2807 = vadd.f32 %v2751, %v2806
        %v2808 = vpop.f32.mrb[0].mxu0
        %v2809 = vadd.f32 %v2756, %v2808
        %v2810 = vpop.f32.mrb[0].mxu0
        %v2811 = vadd.f32 %v2756, %v2810
        %2812 = vdwg.mxu0
        %2813 = vmatprep.subr.bf16.mxu0 %v2259
        %2814 = vmatpush1.bf16.msra.mxu0 %v2258
        %2815 = vmatprep.subr.bf16.mxu0 %v2316
        %2816 = vmatpush1.bf16.msra.mxu0 %v2315
        %2817 = vmatprep.subr.bf16.mxu0 %v2371
        %2818 = vmatpush1.bf16.msra.mxu0 %v2370
        %2819 = vmatprep.subr.bf16.mxu0 %v2429
        %2820 = vmatpush1.bf16.msra.mxu0 %v2428
        %2821 = vmatprep.subr.bf16.mxu0 %v2487
        %2822 = vmatpush1.bf16.msra.mxu0 %v2486
        %2823 = vmatprep.subr.bf16.mxu0 %v2545
        %2824 = vmatpush1.bf16.msra.mxu0 %v2544
        %2825 = vmatprep.subr.bf16.mxu0 %v2603
        %2826 = vmatpush1.bf16.msra.mxu0 %v2602
        %2827 = vmatprep.subr.bf16.mxu0 %v2661
        %2828 = vmatpush1.bf16.msra.mxu0 %v2660
        %2829 = vmatprep.subr.bf16.mxu0 %v2719
        %2830 = vmatpush1.bf16.msra.mxu0 %v2718
        %2831 = vmatprep.subr.bf16.mxu0 0
        %2832 = vmatpush1.bf16.msra.mxu0 0
        %2833 = vmatprep.subr.bf16.mxu0 0
        %2834 = vmatpush1.bf16.msra.mxu0 0
        %2835 = vmatprep.subr.bf16.mxu0 0
        %2836 = vmatpush1.bf16.msra.mxu0 0
        %2837 = vmatprep.subr.bf16.mxu0 0
        %2838 = vmatpush1.bf16.msra.mxu0 0
        %2839 = vmatprep.subr.bf16.mxu0 0
        %2840 = vmatpush1.bf16.msra.mxu0 0
        %2841 = vmatprep.subr.bf16.mxu0 0
        %2842 = vmatpush1.bf16.msra.mxu0 0
        %2843 = vmatprep.subr.bf16.mxu0 0
        %2844 = vmatpush1.bf16.msra.mxu0 0
        %2845 = vmatprep.mubr.bf16.mxu0 %v2768
        %2846 = vmatmul.mubr.bf16.gmra.mrb[0].mxu0 %v2764
        %v2847 = vpop.f32.mrb[0].mxu0
        %v2848 = vadd.f32 %v2751, %v2847
        %v2849 = vpop.f32.mrb[0].mxu0
        %v2850 = vadd.f32 %v2751, %v2849
        %v2851 = vpop.f32.mrb[0].mxu0
        %v2852 = vadd.f32 %v2756, %v2851
        %v2853 = vpop.f32.mrb[0].mxu0
        %v2854 = vadd.f32 %v2756, %v2853
        %2855 = vdwg.mxu0
        %2856 = vmatprep.subr.bf16.mxu0 %v2261
        %2857 = vmatpush1.bf16.msra.mxu0 %v2260
        %2858 = vmatprep.subr.bf16.mxu0 %v2318
        %2859 = vmatpush1.bf16.msra.mxu0 %v2317
        %2860 = vmatprep.subr.bf16.mxu0 %v2373
        %2861 = vmatpush1.bf16.msra.mxu0 %v2372
        %2862 = vmatprep.subr.bf16.mxu0 %v2431
        %2863 = vmatpush1.bf16.msra.mxu0 %v2430
        %2864 = vmatprep.subr.bf16.mxu0 %v2489
        %2865 = vmatpush1.bf16.msra.mxu0 %v2488
        %2866 = vmatprep.subr.bf16.mxu0 %v2547
        %2867 = vmatpush1.bf16.msra.mxu0 %v2546
        %2868 = vmatprep.subr.bf16.mxu0 %v2605
        %2869 = vmatpush1.bf16.msra.mxu0 %v2604
        %2870 = vmatprep.subr.bf16.mxu0 %v2663
        %2871 = vmatpush1.bf16.msra.mxu0 %v2662
        %2872 = vmatprep.subr.bf16.mxu0 %v2721
        %2873 = vmatpush1.bf16.msra.mxu0 %v2720
        %2874 = vmatprep.subr.bf16.mxu0 0
        %2875 = vmatpush1.bf16.msra.mxu0 0
        %2876 = vmatprep.subr.bf16.mxu0 0
        %2877 = vmatpush1.bf16.msra.mxu0 0
        %2878 = vmatprep.subr.bf16.mxu0 0
        %2879 = vmatpush1.bf16.msra.mxu0 0
        %2880 = vmatprep.subr.bf16.mxu0 0
        %2881 = vmatpush1.bf16.msra.mxu0 0
        %2882 = vmatprep.subr.bf16.mxu0 0
        %2883 = vmatpush1.bf16.msra.mxu0 0
        %2884 = vmatprep.subr.bf16.mxu0 0
        %2885 = vmatpush1.bf16.msra.mxu0 0
        %2886 = vmatprep.subr.bf16.mxu0 0
        %2887 = vmatpush1.bf16.msra.mxu0 0
        %2888 = vmatprep.mubr.bf16.mxu0 %v2768
        %2889 = vmatmul.mubr.bf16.gmra.mrb[0].mxu0 %v2764
        %v2890 = vpop.f32.mrb[0].mxu0
        %v2891 = vadd.f32 %v2751, %v2890
        %v2892 = vpop.f32.mrb[0].mxu0
        %v2893 = vadd.f32 %v2751, %v2892
        %v2894 = vpop.f32.mrb[0].mxu0
        %v2895 = vadd.f32 %v2756, %v2894
        %v2896 = vpop.f32.mrb[0].mxu0
        %v2897 = vadd.f32 %v2756, %v2896
        %2898 = vdwg.mxu0
        %2899 = vmatprep.subr.bf16.mxu0 %v2263
        %2900 = vmatpush1.bf16.msra.mxu0 %v2262
        %2901 = vmatprep.subr.bf16.mxu0 %v2320
        %2902 = vmatpush1.bf16.msra.mxu0 %v2319
        %2903 = vmatprep.subr.bf16.mxu0 %v2375
        %2904 = vmatpush1.bf16.msra.mxu0 %v2374
        %2905 = vmatprep.subr.bf16.mxu0 %v2433
        %2906 = vmatpush1.bf16.msra.mxu0 %v2432
        %2907 = vmatprep.subr.bf16.mxu0 %v2491
        %2908 = vmatpush1.bf16.msra.mxu0 %v2490
        %2909 = vmatprep.subr.bf16.mxu0 %v2549
        %2910 = vmatpush1.bf16.msra.mxu0 %v2548
        %2911 = vmatprep.subr.bf16.mxu0 %v2607
        %2912 = vmatpush1.bf16.msra.mxu0 %v2606
        %2913 = vmatprep.subr.bf16.mxu0 %v2665
        %2914 = vmatpush1.bf16.msra.mxu0 %v2664
        %2915 = vmatprep.subr.bf16.mxu0 %v2723
        %2916 = vmatpush1.bf16.msra.mxu0 %v2722
        %2917 = vmatprep.subr.bf16.mxu0 0
        %2918 = vmatpush1.bf16.msra.mxu0 0
        %2919 = vmatprep.subr.bf16.mxu0 0
        %2920 = vmatpush1.bf16.msra.mxu0 0
        %2921 = vmatprep.subr.bf16.mxu0 0
        %2922 = vmatpush1.bf16.msra.mxu0 0
        %2923 = vmatprep.subr.bf16.mxu0 0
        %2924 = vmatpush1.bf16.msra.mxu0 0
        %2925 = vmatprep.subr.bf16.mxu0 0
        %2926 = vmatpush1.bf16.msra.mxu0 0
        %2927 = vmatprep.subr.bf16.mxu0 0
        %2928 = vmatpush1.bf16.msra.mxu0 0
        %2929 = vmatprep.subr.bf16.mxu0 0
        %2930 = vmatpush1.bf16.msra.mxu0 0
        %2931 = vmatprep.mubr.bf16.mxu0 %v2768
        %2932 = vmatmul.mubr.bf16.gmra.mrb[0].mxu0 %v2764
        %v2933 = vpop.f32.mrb[0].mxu0
        %v2934 = vadd.f32 %v2751, %v2933
        %v2935 = vpop.f32.mrb[0].mxu0
        %v2936 = vadd.f32 %v2751, %v2935
        %v2937 = vpop.f32.mrb[0].mxu0
        %v2938 = vadd.f32 %v2756, %v2937
        %v2939 = vpop.f32.mrb[0].mxu0
        %v2940 = vadd.f32 %v2756, %v2939
        %2941 = vdwg.mxu0
        %2942 = vmatprep.subr.bf16.mxu0 %v2265
        %2943 = vmatpush1.bf16.msra.mxu0 %v2264
        %2944 = vmatprep.subr.bf16.mxu0 %v2322
        %2945 = vmatpush1.bf16.msra.mxu0 %v2321
        %2946 = vmatprep.subr.bf16.mxu0 %v2377
        %2947 = vmatpush1.bf16.msra.mxu0 %v2376
        %2948 = vmatprep.subr.bf16.mxu0 %v2435
        %2949 = vmatpush1.bf16.msra.mxu0 %v2434
        %2950 = vmatprep.subr.bf16.mxu0 %v2493
        %2951 = vmatpush1.bf16.msra.mxu0 %v2492
        %2952 = vmatprep.subr.bf16.mxu0 %v2551
        %2953 = vmatpush1.bf16.msra.mxu0 %v2550
        %2954 = vmatprep.subr.bf16.mxu0 %v2609
        %2955 = vmatpush1.bf16.msra.mxu0 %v2608
        %2956 = vmatprep.subr.bf16.mxu0 %v2667
        %2957 = vmatpush1.bf16.msra.mxu0 %v2666
        %2958 = vmatprep.subr.bf16.mxu0 %v2725
        %2959 = vmatpush1.bf16.msra.mxu0 %v2724
        %2960 = vmatprep.subr.bf16.mxu0 0
        %2961 = vmatpush1.bf16.msra.mxu0 0
        %2962 = vmatprep.subr.bf16.mxu0 0
        %2963 = vmatpush1.bf16.msra.mxu0 0
        %2964 = vmatprep.subr.bf16.mxu0 0
        %2965 = vmatpush1.bf16.msra.mxu0 0
        %2966 = vmatprep.subr.bf16.mxu0 0
        %2967 = vmatpush1.bf16.msra.mxu0 0
        %2968 = vmatprep.subr.bf16.mxu0 0
        %2969 = vmatpush1.bf16.msra.mxu0 0
        %2970 = vmatprep.subr.bf16.mxu0 0
        %2971 = vmatpush1.bf16.msra.mxu0 0
        %2972 = vmatprep.subr.bf16.mxu0 0
        %2973 = vmatpush1.bf16.msra.mxu0 0
        %2974 = vmatprep.mubr.bf16.mxu0 %v2768
        %2975 = vmatmul.mubr.bf16.gmra.mrb[0].mxu0 %v2764
        %v2976 = vpop.f32.mrb[0].mxu0
        %v2977 = vadd.f32 %v2751, %v2976
        %v2978 = vpop.f32.mrb[0].mxu0
        %v2979 = vadd.f32 %v2751, %v2978
        %v2980 = vpop.f32.mrb[0].mxu0
        %v2981 = vadd.f32 %v2756, %v2980
        %v2982 = vpop.f32.mrb[0].mxu0
        %v2983 = vadd.f32 %v2756, %v2982
        %2984 = vdwg.mxu0
        %2985 = vmatprep.subr.bf16.mxu0 %v2267
        %2986 = vmatpush1.bf16.msra.mxu0 %v2266
        %2987 = vmatprep.subr.bf16.mxu0 %v2324
        %2988 = vmatpush1.bf16.msra.mxu0 %v2323
        %2989 = vmatprep.subr.bf16.mxu0 %v2379
        %2990 = vmatpush1.bf16.msra.mxu0 %v2378
        %2991 = vmatprep.subr.bf16.mxu0 %v2437
        %2992 = vmatpush1.bf16.msra.mxu0 %v2436
        %2993 = vmatprep.subr.bf16.mxu0 %v2495
        %2994 = vmatpush1.bf16.msra.mxu0 %v2494
        %2995 = vmatprep.subr.bf16.mxu0 %v2553
        %2996 = vmatpush1.bf16.msra.mxu0 %v2552
        %2997 = vmatprep.subr.bf16.mxu0 %v2611
        %2998 = vmatpush1.bf16.msra.mxu0 %v2610
        %2999 = vmatprep.subr.bf16.mxu0 %v2669
        %3000 = vmatpush1.bf16.msra.mxu0 %v2668
        %3001 = vmatprep.subr.bf16.mxu0 %v2727
        %3002 = vmatpush1.bf16.msra.mxu0 %v2726
        %3003 = vmatprep.subr.bf16.mxu0 0
        %3004 = vmatpush1.bf16.msra.mxu0 0
        %3005 = vmatprep.subr.bf16.mxu0 0
        %3006 = vmatpush1.bf16.msra.mxu0 0
        %3007 = vmatprep.subr.bf16.mxu0 0
        %3008 = vmatpush1.bf16.msra.mxu0 0
        %3009 = vmatprep.subr.bf16.mxu0 0
        %3010 = vmatpush1.bf16.msra.mxu0 0
        %3011 = vmatprep.subr.bf16.mxu0 0
        %3012 = vmatpush1.bf16.msra.mxu0 0
        %3013 = vmatprep.subr.bf16.mxu0 0
        %3014 = vmatpush1.bf16.msra.mxu0 0
        %3015 = vmatprep.subr.bf16.mxu0 0
        %3016 = vmatpush1.bf16.msra.mxu0 0
        %3017 = vmatprep.mubr.bf16.mxu0 %v2768
        %3018 = vmatmul.mubr.bf16.gmra.mrb[0].mxu0 %v2764
        %v3019 = vpop.f32.mrb[0].mxu0
        %v3020 = vadd.f32 %v2751, %v3019
        %v3021 = vpop.f32.mrb[0].mxu0
        %v3022 = vadd.f32 %v2751, %v3021
        %v3023 = vpop.f32.mrb[0].mxu0
        %v3024 = vadd.f32 %v2756, %v3023
        %v3025 = vpop.f32.mrb[0].mxu0
        %v3026 = vadd.f32 %v2756, %v3025
        %3027 = vdwg.mxu0
        %3028 = vmatprep.subr.bf16.mxu0 %v2269
        %3029 = vmatpush1.bf16.msra.mxu0 %v2268
        %3030 = vmatprep.subr.bf16.mxu0 %v2312
        %3031 = vmatpush1.bf16.msra.mxu0 %v2325
        %3032 = vmatprep.subr.bf16.mxu0 %v2367
        %3033 = vmatpush1.bf16.msra.mxu0 %v2380
        %3034 = vmatprep.subr.bf16.mxu0 %v2439
        %3035 = vmatpush1.bf16.msra.mxu0 %v2438
        %3036 = vmatprep.subr.bf16.mxu0 %v2497
        %3037 = vmatpush1.bf16.msra.mxu0 %v2496
        %3038 = vmatprep.subr.bf16.mxu0 %v2555
        %3039 = vmatpush1.bf16.msra.mxu0 %v2554
        %3040 = vmatprep.subr.bf16.mxu0 %v2613
        %3041 = vmatpush1.bf16.msra.mxu0 %v2612
        %3042 = vmatprep.subr.bf16.mxu0 %v2671
        %3043 = vmatpush1.bf16.msra.mxu0 %v2670
        %3044 = vmatprep.subr.bf16.mxu0 %v2729
        %3045 = vmatpush1.bf16.msra.mxu0 %v2728
        %3046 = vmatprep.subr.bf16.mxu0 0
        %3047 = vmatpush1.bf16.msra.mxu0 0
        %3048 = vmatprep.subr.bf16.mxu0 0
        %3049 = vmatpush1.bf16.msra.mxu0 0
        %3050 = vmatprep.subr.bf16.mxu0 0
        %3051 = vmatpush1.bf16.msra.mxu0 0
        %3052 = vmatprep.subr.bf16.mxu0 0
        %3053 = vmatpush1.bf16.msra.mxu0 0
        %3054 = vmatprep.subr.bf16.mxu0 0
        %3055 = vmatpush1.bf16.msra.mxu0 0
        %3056 = vmatprep.subr.bf16.mxu0 0
        %3057 = vmatpush1.bf16.msra.mxu0 0
        %3058 = vmatprep.subr.bf16.mxu0 0
        %3059 = vmatpush1.bf16.msra.mxu0 0
        %3060 = vmatprep.mubr.bf16.mxu0 %v2768
        %3061 = vmatmul.mubr.bf16.gmra.mrb[0].mxu0 %v2764
        %v3062 = vpop.f32.mrb[0].mxu0
        %v3063 = vadd.f32 %v2751, %v3062
        %v3064 = vpop.f32.mrb[0].mxu0
        %v3065 = vadd.f32 %v2751, %v3064
        %v3066 = vpop.f32.mrb[0].mxu0
        %v3067 = vadd.f32 %v2756, %v3066
        %v3068 = vpop.f32.mrb[0].mxu0
        %v3069 = vadd.f32 %v2756, %v3068
        %3070 = vdwg.mxu0
        %v3071 = vmax.f32 %v2805, 0.0
        %v3072 = vmax.f32 %v2807, 0.0
        %v3073 = vmax.f32 %v2848, 0.0
        %v3074 = vmax.f32 %v2850, 0.0
        %v3075 = vmax.f32 %v2891, 0.0
        %v3076 = vmax.f32 %v2893, 0.0
        %v3077 = vmax.f32 %v2934, 0.0
        %v3078 = vmax.f32 %v2936, 0.0
        %v3079 = vmax.f32 %v2977, 0.0
        %v3080 = vmax.f32 %v2979, 0.0
        %v3081 = vmax.f32 %v3020, 0.0
        %v3082 = vmax.f32 %v3022, 0.0
        %v3083 = vmax.f32 %v3063, 0.0
        %v3084 = vmax.f32 %v3065, 0.0
        %v3085 = vmax.f32 %v2809, 0.0
        %v3086 = vmax.f32 %v2811, 0.0
        %v3087 = vmax.f32 %v2852, 0.0
        %v3088 = vmax.f32 %v2854, 0.0
        %v3089 = vmax.f32 %v2895, 0.0
        %v3090 = vmax.f32 %v2897, 0.0
        %v3091 = vmax.f32 %v2938, 0.0
        %v3092 = vmax.f32 %v2940, 0.0
        %v3093 = vmax.f32 %v2981, 0.0
        %v3094 = vmax.f32 %v2983, 0.0
        %v3095 = vmax.f32 %v3024, 0.0
        %v3096 = vmax.f32 %v3026, 0.0
        %v3097 = vmax.f32 %v3067, 0.0
        %v3098 = vmax.f32 %v3069, 0.0
        %v3099 = vpack.c.bf16 %v3090, %v3076
        %v3100 = vpack.c.bf16 %v3091, %v3077
        %v3101 = vpack.c.bf16 %v3092, %v3078
        %v3102 = vpack.c.bf16 %v3093, %v3079
        %3131 = vrot.lane.b32.xlu0 %v3071, 84
        %v3132 = vpop.permute.xlu0 %3131
        %3133 = vrot.lane.b32.xlu0 %v3072, 84
        %v3134 = vpop.permute.xlu0 %3133
        %3135 = vrot.lane.b32.xlu0 %v3073, 84
        %v3136 = vpop.permute.xlu0 %3135
        %3137 = vrot.lane.b32.xlu0 %v3074, 84
        %v3138 = vpop.permute.xlu0 %3137
        %3139 = vrot.lane.b32.xlu0 %v3075, 84
        %v3140 = vpop.permute.xlu0 %3139
        %3141 = vrot.lane.b32.xlu0 %v3076, 84
        %v3142 = vpop.permute.xlu0 %3141
        %3143 = vrot.lane.b32.xlu0 %v3077, 84
        %v3144 = vpop.permute.xlu0 %3143
        %3145 = vrot.lane.b32.xlu0 %v3078, 84
        %v3146 = vpop.permute.xlu0 %3145
        %3147 = vrot.lane.b32.xlu0 %v3079, 84
        %v3148 = vpop.permute.xlu0 %3147
        %3149 = vrot.lane.b32.xlu0 %v3080, 84
        %v3150 = vpop.permute.xlu0 %3149
        %3151 = vrot.lane.b32.xlu0 %v3081, 84
        %v3152 = vpop.permute.xlu0 %3151
        %3153 = vrot.lane.b32.xlu0 %v3082, 84
        %v3154 = vpop.permute.xlu0 %3153
        %3155 = vrot.lane.b32.xlu0 %v3083, 84
        %v3156 = vpop.permute.xlu0 %3155
        %3157 = vrot.lane.b32.xlu0 %v3084, 84
        %v3158 = vpop.permute.xlu0 %3157
        %3159 = vrot.lane.b32.xlu0 %v3085, 84
        %v3160 = vpop.permute.xlu0 %3159
        %3161 = vrot.lane.b32.xlu0 %v3086, 84
        %v3162 = vpop.permute.xlu0 %3161
        %3163 = vrot.lane.b32.xlu0 %v3087, 84
        %v3164 = vpop.permute.xlu0 %3163
        %3165 = vrot.lane.b32.xlu0 %v3088, 84
        %v3166 = vpop.permute.xlu0 %3165
        %3167 = vrot.lane.b32.xlu0 %v3089, 84
        %v3168 = vpop.permute.xlu0 %3167
        %3169 = vrot.lane.b32.xlu0 %v3090, 84
        %v3170 = vpop.permute.xlu0 %3169
        %3171 = vrot.lane.b32.xlu0 %v3091, 84
        %v3172 = vpop.permute.xlu0 %3171
        %3173 = vrot.lane.b32.xlu0 %v3092, 84
        %v3174 = vpop.permute.xlu0 %3173
        %3175 = vrot.lane.b32.xlu0 %v3093, 84
        %v3176 = vpop.permute.xlu0 %3175
        %3177 = vrot.lane.b32.xlu0 %v3094, 84
        %v3178 = vpop.permute.xlu0 %3177
        %3179 = vrot.lane.b32.xlu0 %v3095, 84
        %v3180 = vpop.permute.xlu0 %3179
        %3181 = vrot.lane.b32.xlu0 %v3096, 84
        %v3182 = vpop.permute.xlu0 %3181
        %3183 = vrot.lane.b32.xlu0 %v3097, 84
        %v3184 = vpop.permute.xlu0 %3183
        %3185 = vrot.lane.b32.xlu0 %v3098, 84
        %v3186 = vpop.permute.xlu0 %3185
        %vm3187 = vcmask 687104
        %v3188 = vsel %vm3187, %v3132, %v3134
        %v3189 = vsel %vm3187, %v3134, %v3136
        %v3190 = vsel %vm3187, %v3136, %v3138
        %v3191 = vsel %vm3187, %v3138, %v3140
        %v3192 = vsel %vm3187, %v3140, %v3142
        %v3193 = vsel %vm3187, %v3142, %v3144
        %v3194 = vsel %vm3187, %v3144, %v3146
        %v3195 = vsel %vm3187, %v3146, %v3148
        %v3196 = vsel %vm3187, %v3148, %v3150
        %v3197 = vsel %vm3187, %v3150, %v3152
        %v3198 = vsel %vm3187, %v3152, %v3154
        %v3199 = vsel %vm3187, %v3154, %v3156
        %v3200 = vsel %vm3187, %v3156, %v3158
        %v3201 = vsel %vm3187, %v3160, %v3162
        %v3202 = vsel %vm3187, %v3162, %v3164
        %v3203 = vsel %vm3187, %v3164, %v3166
        %v3204 = vsel %vm3187, %v3166, %v3168
        %v3205 = vsel %vm3187, %v3168, %v3170
        %v3206 = vsel %vm3187, %v3170, %v3172
        %v3207 = vsel %vm3187, %v3172, %v3174
        %v3208 = vsel %vm3187, %v3174, %v3176
        %v3209 = vsel %vm3187, %v3176, %v3178
        %v3210 = vsel %vm3187, %v3178, %v3180
        %v3211 = vsel %vm3187, %v3180, %v3182
        %v3212 = vsel %vm3187, %v3182, %v3184
        %v3213 = vsel %vm3187, %v3184, %v3186
        %v3242 = vmax.f32 %v3071, %v3188
        %v3243 = vmax.f32 %v3072, %v3189
        %v3244 = vmax.f32 %v3073, %v3190
        %v3245 = vmax.f32 %v3074, %v3191
        %v3246 = vmax.f32 %v3075, %v3192
        %v3247 = vmax.f32 %v3076, %v3193
        %v3248 = vmax.f32 %v3077, %v3194
        %v3249 = vmax.f32 %v3078, %v3195
        %v3250 = vmax.f32 %v3079, %v3196
        %v3251 = vmax.f32 %v3080, %v3197
        %v3252 = vmax.f32 %v3081, %v3198
        %v3253 = vmax.f32 %v3082, %v3199
        %v3254 = vmax.f32 %v3083, %v3200
        %v3255 = vmax.f32 %v3084, %v3158
        %v3256 = vmax.f32 %v3085, %v3201
        %v3257 = vmax.f32 %v3086, %v3202
        %v3258 = vmax.f32 %v3087, %v3203
        %v3259 = vmax.f32 %v3088, %v3204
        %v3260 = vmax.f32 %v3089, %v3205
        %v3261 = vmax.f32 %v3090, %v3206
        %v3262 = vmax.f32 %v3091, %v3207
        %v3263 = vmax.f32 %v3092, %v3208
        %v3264 = vmax.f32 %v3093, %v3209
        %v3265 = vmax.f32 %v3094, %v3210
        %v3266 = vmax.f32 %v3095, %v3211
        %v3267 = vmax.f32 %v3096, %v3212
        %v3268 = vmax.f32 %v3097, %v3213
        %v3269 = vmax.f32 %v3098, %v3186
        %3298 = vrot.lane.b32.xlu0 %v3242, 127
        %v3299 = vpop.permute.xlu0 %3298
        %3300 = vrot.lane.b32.xlu0 %v3243, 127
        %v3301 = vpop.permute.xlu0 %3300
        %3302 = vrot.lane.b32.xlu0 %v3244, 127
        %v3303 = vpop.permute.xlu0 %3302
        %3304 = vrot.lane.b32.xlu0 %v3245, 127
        %v3305 = vpop.permute.xlu0 %3304
        %3306 = vrot.lane.b32.xlu0 %v3246, 127
        %v3307 = vpop.permute.xlu0 %3306
        %3308 = vrot.lane.b32.xlu0 %v3247, 127
        %v3309 = vpop.permute.xlu0 %3308
        %3310 = vrot.lane.b32.xlu0 %v3248, 127
        %v3311 = vpop.permute.xlu0 %3310
        %3312 = vrot.lane.b32.xlu0 %v3249, 127
        %v3313 = vpop.permute.xlu0 %3312
        %3314 = vrot.lane.b32.xlu0 %v3250, 127
        %v3315 = vpop.permute.xlu0 %3314
        %3316 = vrot.lane.b32.xlu0 %v3251, 127
        %v3317 = vpop.permute.xlu0 %3316
        %3318 = vrot.lane.b32.xlu0 %v3252, 127
        %v3319 = vpop.permute.xlu0 %3318
        %3320 = vrot.lane.b32.xlu0 %v3253, 127
        %v3321 = vpop.permute.xlu0 %3320
        %3322 = vrot.lane.b32.xlu0 %v3254, 127
        %v3323 = vpop.permute.xlu0 %3322
        %3324 = vrot.lane.b32.xlu0 %v3255, 127
        %v3325 = vpop.permute.xlu0 %3324
        %3326 = vrot.lane.b32.xlu0 %v3256, 127
        %v3327 = vpop.permute.xlu0 %3326
        %3328 = vrot.lane.b32.xlu0 %v3257, 127
        %v3329 = vpop.permute.xlu0 %3328
        %3330 = vrot.lane.b32.xlu0 %v3258, 127
        %v3331 = vpop.permute.xlu0 %3330
        %3332 = vrot.lane.b32.xlu0 %v3259, 127
        %v3333 = vpop.permute.xlu0 %3332
        %3334 = vrot.lane.b32.xlu0 %v3260, 127
        %v3335 = vpop.permute.xlu0 %3334
        %3336 = vrot.lane.b32.xlu0 %v3261, 127
        %v3337 = vpop.permute.xlu0 %3336
        %3338 = vrot.lane.b32.xlu0 %v3262, 127
        %v3339 = vpop.permute.xlu0 %3338
        %3340 = vrot.lane.b32.xlu0 %v3263, 127
        %v3341 = vpop.permute.xlu0 %3340
        %3342 = vrot.lane.b32.xlu0 %v3264, 127
        %v3343 = vpop.permute.xlu0 %3342
        %3344 = vrot.lane.b32.xlu0 %v3265, 127
        %v3345 = vpop.permute.xlu0 %3344
        %3346 = vrot.lane.b32.xlu0 %v3266, 127
        %v3347 = vpop.permute.xlu0 %3346
        %3348 = vrot.lane.b32.xlu0 %v3267, 127
        %v3349 = vpop.permute.xlu0 %3348
        %3350 = vrot.lane.b32.xlu0 %v3268, 127
        %v3351 = vpop.permute.xlu0 %3350
        %3352 = vrot.lane.b32.xlu0 %v3269, 127
        %v3353 = vpop.permute.xlu0 %3352
        %vm3354 = vcmask 1039360
        %v3355 = vsel %vm3354, %v3299, %v3301
        %v3356 = vsel %vm3354, %v3301, %v3303
        %v3357 = vsel %vm3354, %v3303, %v3305
        %v3358 = vsel %vm3354, %v3305, %v3307
        %v3359 = vsel %vm3354, %v3307, %v3309
        %v3360 = vsel %vm3354, %v3309, %v3311
        %v3361 = vsel %vm3354, %v3311, %v3313
        %v3362 = vsel %vm3354, %v3313, %v3315
        %v3363 = vsel %vm3354, %v3315, %v3317
        %v3364 = vsel %vm3354, %v3317, %v3319
        %v3365 = vsel %vm3354, %v3319, %v3321
        %v3366 = vsel %vm3354, %v3321, %v3323
        %v3367 = vsel %vm3354, %v3323, %v3325
        %v3368 = vsel %vm3354, %v3327, %v3329
        %v3369 = vsel %vm3354, %v3329, %v3331
        %v3370 = vsel %vm3354, %v3331, %v3333
        %v3371 = vsel %vm3354, %v3333, %v3335
        %v3372 = vsel %vm3354, %v3335, %v3337
        %v3373 = vsel %vm3354, %v3337, %v3339
        %v3374 = vsel %vm3354, %v3339, %v3341
        %v3375 = vsel %vm3354, %v3341, %v3343
        %v3376 = vsel %vm3354, %v3343, %v3345
        %v3377 = vsel %vm3354, %v3345, %v3347
        %v3378 = vsel %vm3354, %v3347, %v3349
        %v3379 = vsel %vm3354, %v3349, %v3351
        %v3380 = vsel %vm3354, %v3351, %v3353
        %v3409 = vmax.f32 %v3242, %v3355
        %v3410 = vmax.f32 %v3243, %v3356
        %v3411 = vmax.f32 %v3244, %v3357
        %v3412 = vmax.f32 %v3245, %v3358
        %v3413 = vmax.f32 %v3246, %v3359
        %v3414 = vmax.f32 %v3247, %v3360
        %v3415 = vmax.f32 %v3248, %v3361
        %v3416 = vmax.f32 %v3249, %v3362
        %v3417 = vmax.f32 %v3250, %v3363
        %v3418 = vmax.f32 %v3251, %v3364
        %v3419 = vmax.f32 %v3252, %v3365
        %v3420 = vmax.f32 %v3253, %v3366
        %v3421 = vmax.f32 %v3254, %v3367
        %v3422 = vmax.f32 %v3255, %v3325
        %v3423 = vmax.f32 %v3256, %v3368
        %v3424 = vmax.f32 %v3257, %v3369
        %v3425 = vmax.f32 %v3258, %v3370
        %v3426 = vmax.f32 %v3259, %v3371
        %v3427 = vmax.f32 %v3260, %v3372
        %v3428 = vmax.f32 %v3261, %v3373
        %v3429 = vmax.f32 %v3262, %v3374
        %v3430 = vmax.f32 %v3263, %v3375
        %v3431 = vmax.f32 %v3264, %v3376
        %v3432 = vmax.f32 %v3265, %v3377
        %v3433 = vmax.f32 %v3266, %v3378
        %v3434 = vmax.f32 %v3267, %v3379
        %v3435 = vmax.f32 %v3268, %v3380
        %v3436 = vmax.f32 %v3269, %v3353
        %v3437 = vpack.c.bf16 %v3423, %v3409
        %v3438 = vpack.c.bf16 %v3424, %v3410
        %v3439 = vpack.c.bf16 %v3425, %v3411
        %v3440 = vpack.c.bf16 %v3426, %v3412
        %v3441 = vpack.c.bf16 %v3427, %v3413
        %v3442 = vpack.c.bf16 %v3428, %v3414
        %v3443 = vpack.c.bf16 %v3429, %v3415
        %v3444 = vpack.c.bf16 %v3430, %v3416
        %v3445 = vpack.c.bf16 %v3431, %v3417
        %v3446 = vpack.c.bf16 %v3432, %v3418
        %v3447 = vpack.c.bf16 %v3433, %v3419
        %v3448 = vpack.c.bf16 %v3434, %v3420
        %v3449 = vpack.c.bf16 %v3435, %v3421
        %v3450 = vpack.c.bf16 %v3436, %v3422
        %v3451 = vld [vmem:[#allocation6] sm:$0xff]
        %v3452 = vld [vmem:[#allocation6 + $0x8] sm:$0xff]
        %v3453 = vld [vmem:[#allocation6 + $0x10] sm:$0xff]
        %v3454 = vld [vmem:[#allocation6 + $0x18] sm:$0xff]
        %v3455 = vld [vmem:[#allocation6 + $0x20] sm:$0xff]
        %v3456 = vld [vmem:[#allocation6 + $0x28] sm:$0xff]
        %v3457 = vld [vmem:[#allocation6 + $0x30] sm:$0xff]
        %v3458 = vld [vmem:[#allocation6 + $0x38] sm:$0xff]
        %v3459 = vld [vmem:[#allocation6 + $0x40] sm:$0xff]
        %v3460 = vld [vmem:[#allocation6 + $0x48] sm:$0xff]
        %v3461 = vld [vmem:[#allocation6 + $0x50] sm:$0xff]
        %v3462 = vld [vmem:[#allocation6 + $0x58] sm:$0xff]
        %v3463 = vld [vmem:[#allocation6 + $0x60] sm:$0xff]
        %v3464 = vld [vmem:[#allocation6 + $0x68] sm:$0xff]
        %v3465 = vld [vmem:[#allocation6 + $0x70] sm:$0xff]
        %v3466 = vld [vmem:[#allocation6 + $0x78] sm:$0xff]
        %v3467 = vld [vmem:[#allocation6 + $0x80] sm:$0xff]
        %v3468 = vld [vmem:[#allocation6 + $0x88] sm:$0xff]
        %v3469 = vld [vmem:[#allocation6 + $0x90] sm:$0xff]
        %v3470 = vld [vmem:[#allocation6 + $0x98] sm:$0xff]
        %v3471 = vld [vmem:[#allocation6 + $0xa0] sm:$0xff]
        %v3472 = vld [vmem:[#allocation6 + $0xa8] sm:$0xff]
        %v3473 = vld [vmem:[#allocation6 + $0xb0] sm:$0xff]
        %v3474 = vld [vmem:[#allocation6 + $0xb8] sm:$0xff]
        %v3475 = vld [vmem:[#allocation6 + $0xc0] sm:$0xff]
        %v3476 = vld [vmem:[#allocation6 + $0xc8] sm:$0xff]
        %v3477 = vld [vmem:[#allocation6 + $0xd0] sm:$0xff]
        %v3478 = vld [vmem:[#allocation6 + $0xd8] sm:$0xff]
        %v3479 = vld [vmem:[#allocation6 + $0xe0] sm:$0xff]
        %v3480 = vld [vmem:[#allocation6 + $0xe8] sm:$0xff]
        %v3481 = vld [vmem:[#allocation6 + $0xf0] sm:$0xff]
        %v3482 = vld [vmem:[#allocation6 + $0xf8] sm:$0xff]
        %v3483 = vld [vmem:[#allocation6 + $0x100] sm:$0xff]
        %v3484 = vld [vmem:[#allocation6 + $0x108] sm:$0xff]
        %v3485 = vld [vmem:[#allocation6 + $0x110] sm:$0xff]
        %v3486 = vld [vmem:[#allocation6 + $0x118] sm:$0xff]
        %v3487 = vld [vmem:[#allocation6 + $0x120] sm:$0xff]
        %v3488 = vld [vmem:[#allocation6 + $0x128] sm:$0xff]
        %v3489 = vld [vmem:[#allocation6 + $0x130] sm:$0xff]
        %v3490 = vld [vmem:[#allocation6 + $0x138] sm:$0xff]
        %v3491 = vld [vmem:[#allocation6 + $0x140] sm:$0xff]
        %v3492 = vld [vmem:[#allocation6 + $0x148] sm:$0xff]
        %v3493 = vld [vmem:[#allocation6 + $0x150] sm:$0xff]
        %v3494 = vld [vmem:[#allocation6 + $0x158] sm:$0xff]
        %v3495 = vld [vmem:[#allocation6 + $0x160] sm:$0xff]
        %v3496 = vld [vmem:[#allocation6 + $0x168] sm:$0xff]
        %v3497 = vld [vmem:[#allocation6 + $0x170] sm:$0xff]
        %v3498 = vld [vmem:[#allocation6 + $0x178] sm:$0xff]
        %v3499 = vld [vmem:[#allocation6 + $0x180] sm:$0xff]
        %v3500 = vld [vmem:[#allocation6 + $0x188] sm:$0xff]
        %v3501 = vld [vmem:[#allocation6 + $0x190] sm:$0xff]
        %v3502 = vld [vmem:[#allocation6 + $0x198] sm:$0xff]
        %v3503 = vld [vmem:[#allocation6 + $0x1a0] sm:$0xff]
        %v3504 = vld [vmem:[#allocation6 + $0x1a8] sm:$0xff]
        %v3505 = vld [vmem:[#allocation6 + $0x1b0] sm:$0xff]
        %v3506 = vld [vmem:[#allocation6 + $0x1b8] sm:$0xff]
        %v3507 = vld [vmem:[#allocation6 + $0x1c0] sm:$0xff]
        %v3508 = vld [vmem:[#allocation6 + $0x1c8] sm:$0xff]
        %v3509 = vld [vmem:[#allocation6 + $0x1d0] sm:$0xff]
        %v3510 = vld [vmem:[#allocation6 + $0x1d8] sm:$0xff]
        %v3511 = vld [vmem:[#allocation6 + $0x1e0] sm:$0xff]
        %v3512 = vld [vmem:[#allocation6 + $0x1e8] sm:$0xff]
        %v3513 = vld [vmem:[#allocation6 + $0x1f0] sm:$0xff]
        %v3514 = vld [vmem:[#allocation6 + $0x1f8] sm:$0xff]
        %v3515 = vld [vmem:[#allocation6 + $0x200] sm:$0xff]
        %v3516 = vld [vmem:[#allocation6 + $0x208] sm:$0xff]
        %v3517 = vld [vmem:[#allocation6 + $0x210] sm:$0xff]
        %v3518 = vld [vmem:[#allocation6 + $0x218] sm:$0xff]
        %v3519 = vld [vmem:[#allocation6 + $0x220] sm:$0xff]
        %v3520 = vld [vmem:[#allocation6 + $0x228] sm:$0xff]
        %v3521 = vld [vmem:[#allocation6 + $0x230] sm:$0xff]
        %v3522 = vld [vmem:[#allocation6 + $0x238] sm:$0xff]
        %v3523 = vld [vmem:[#allocation6 + $0x240] sm:$0xff]
        %v3524 = vld [vmem:[#allocation6 + $0x248] sm:$0xff]
        %v3525 = vld [vmem:[#allocation6 + $0x250] sm:$0xff]
        %v3526 = vld [vmem:[#allocation6 + $0x258] sm:$0xff]
        %v3527 = vld [vmem:[#allocation6 + $0x260] sm:$0xff]
        %v3528 = vld [vmem:[#allocation6 + $0x268] sm:$0xff]
        %v3529 = vld [vmem:[#allocation6 + $0x270] sm:$0xff]
        %v3530 = vld [vmem:[#allocation6 + $0x278] sm:$0xff]
        %v3531 = vld [vmem:[#allocation6 + $0x280] sm:$0xff]
        %v3532 = vld [vmem:[#allocation6 + $0x288] sm:$0xff]
        %v3533 = vld [vmem:[#allocation6 + $0x290] sm:$0xff]
        %v3534 = vld [vmem:[#allocation6 + $0x298] sm:$0xff]
        %v3535 = vld [vmem:[#allocation6 + $0x2a0] sm:$0xff]
        %v3536 = vld [vmem:[#allocation6 + $0x2a8] sm:$0xff]
        %v3537 = vld [vmem:[#allocation6 + $0x2b0] sm:$0xff]
        %v3538 = vld [vmem:[#allocation6 + $0x2b8] sm:$0xff]
        %v3539 = vld [vmem:[#allocation6 + $0x2c0] sm:$0xff]
        %v3540 = vld [vmem:[#allocation6 + $0x2c8] sm:$0xff]
        %v3541 = vld [vmem:[#allocation6 + $0x2d0] sm:$0xff]
        %v3542 = vld [vmem:[#allocation6 + $0x2d8] sm:$0xff]
        %v3543 = vld [vmem:[#allocation6 + $0x2e0] sm:$0xff]
        %v3544 = vld [vmem:[#allocation6 + $0x2e8] sm:$0xff]
        %v3545 = vld [vmem:[#allocation6 + $0x2f0] sm:$0xff]
        %v3546 = vld [vmem:[#allocation6 + $0x2f8] sm:$0xff]
        %v3547 = vld [vmem:[#allocation6 + $0x300] sm:$0xff]
        %v3548 = vld [vmem:[#allocation6 + $0x308] sm:$0xff]
        %v3549 = vld [vmem:[#allocation6 + $0x310] sm:$0xff]
        %v3550 = vld [vmem:[#allocation6 + $0x318] sm:$0xff]
        %v3551 = vld [vmem:[#allocation6 + $0x320] sm:$0xff]
        %v3552 = vld [vmem:[#allocation6 + $0x328] sm:$0xff]
        %v3553 = vld [vmem:[#allocation6 + $0x330] sm:$0xff]
        %v3554 = vld [vmem:[#allocation6 + $0x338] sm:$0xff]
        %v3555 = vld [vmem:[#allocation6 + $0x340] sm:$0xff]
        %v3556 = vld [vmem:[#allocation6 + $0x348] sm:$0xff]
        %v3557 = vld [vmem:[#allocation6 + $0x350] sm:$0xff]
        %v3558 = vld [vmem:[#allocation6 + $0x358] sm:$0xff]
        %v3559 = vld [vmem:[#allocation6 + $0x360] sm:$0xff]
        %v3560 = vld [vmem:[#allocation6 + $0x368] sm:$0xff]
        %v3561 = vld [vmem:[#allocation6 + $0x370] sm:$0xff]
        %v3562 = vld [vmem:[#allocation6 + $0x378] sm:$0xff]
        %v3563 = vld [vmem:[#allocation6 + $0x380] sm:$0xff]
        %v3564 = vld [vmem:[#allocation6 + $0x388] sm:$0xff]
        %v3565 = vld [vmem:[#allocation6 + $0x390] sm:$0xff]
        %v3566 = vld [vmem:[#allocation6 + $0x398] sm:$0xff]
        %v3567 = vld [vmem:[#allocation6 + $0x3a0] sm:$0xff]
        %v3568 = vld [vmem:[#allocation6 + $0x3a8] sm:$0xff]
        %v3569 = vld [vmem:[#allocation6 + $0x3b0] sm:$0xff]
        %v3570 = vld [vmem:[#allocation6 + $0x3b8] sm:$0xff]
        %v3571 = vld [vmem:[#allocation6 + $0x3c0] sm:$0xff]
        %v3572 = vld [vmem:[#allocation6 + $0x3c8] sm:$0xff]
        %v3573 = vld [vmem:[#allocation6 + $0x3d0] sm:$0xff]
        %v3574 = vld [vmem:[#allocation6 + $0x3d8] sm:$0xff]
        %v3575 = vld [vmem:[#allocation6 + $0x3e0] sm:$0xff]
        %v3576 = vld [vmem:[#allocation6 + $0x3e8] sm:$0xff]
        %v3577 = vld [vmem:[#allocation6 + $0x3f0] sm:$0xff]
        %v3578 = vld [vmem:[#allocation6 + $0x3f8] sm:$0xff]
        %v3579 = vld [vmem:[#allocation6 + $0x400] sm:$0xff]
        %v3580 = vld [vmem:[#allocation6 + $0x408] sm:$0xff]
        %v3581 = vld [vmem:[#allocation6 + $0x410] sm:$0xff]
        %v3582 = vld [vmem:[#allocation6 + $0x418] sm:$0xff]
        %v3583 = vld [vmem:[#allocation6 + $0x420] sm:$0xff]
        %v3584 = vld [vmem:[#allocation6 + $0x428] sm:$0xff]
        %v3585 = vld [vmem:[#allocation6 + $0x430] sm:$0xff]
        %v3586 = vld [vmem:[#allocation6 + $0x438] sm:$0xff]
        %v3587 = vld [vmem:[#allocation6 + $0x440] sm:$0xff]
        %v3588 = vld [vmem:[#allocation6 + $0x448] sm:$0xff]
        %v3589 = vld [vmem:[#allocation6 + $0x450] sm:$0xff]
        %v3590 = vld [vmem:[#allocation6 + $0x458] sm:$0xff]
        %v3591 = vld [vmem:[#allocation6 + $0x460] sm:$0xff]
        %v3592 = vld [vmem:[#allocation6 + $0x468] sm:$0xff]
        %v3593 = vld [vmem:[#allocation6 + $0x470] sm:$0xff]
        %v3594 = vld [vmem:[#allocation6 + $0x478] sm:$0xff]
        %v3595 = vld [vmem:[#allocation6 + $0x480] sm:$0xff]
        %v3596 = vld [vmem:[#allocation6 + $0x488] sm:$0xff]
        %v3597 = vld [vmem:[#allocation6 + $0x490] sm:$0xff]
        %v3598 = vld [vmem:[#allocation6 + $0x498] sm:$0xff]
        %v3599 = vld [vmem:[#allocation6 + $0x4a0] sm:$0xff]
        %v3600 = vld [vmem:[#allocation6 + $0x4a8] sm:$0xff]
        %v3601 = vld [vmem:[#allocation6 + $0x4b0] sm:$0xff]
        %v3602 = vld [vmem:[#allocation6 + $0x4b8] sm:$0xff]
        %v3603 = vld [vmem:[#allocation6 + $0x4c0] sm:$0xff]
        %v3604 = vld [vmem:[#allocation6 + $0x4c8] sm:$0xff]
        %v3605 = vld [vmem:[#allocation6 + $0x4d0] sm:$0xff]
        %v3606 = vld [vmem:[#allocation6 + $0x4d8] sm:$0xff]
        %v3607 = vld [vmem:[#allocation6 + $0x4e0] sm:$0xff]
        %v3608 = vld [vmem:[#allocation6 + $0x4e8] sm:$0xff]
        %v3609 = vld [vmem:[#allocation6 + $0x4f0] sm:$0xff]
        %v3610 = vld [vmem:[#allocation6 + $0x4f8] sm:$0xff]
        %v3611 = vld [vmem:[#allocation6 + $0x500] sm:$0xff]
        %v3612 = vld [vmem:[#allocation6 + $0x508] sm:$0xff]
        %v3613 = vld [vmem:[#allocation6 + $0x510] sm:$0xff]
        %v3614 = vld [vmem:[#allocation6 + $0x518] sm:$0xff]
        %v3615 = vld [vmem:[#allocation6 + $0x520] sm:$0xff]
        %v3616 = vld [vmem:[#allocation6 + $0x528] sm:$0xff]
        %v3617 = vld [vmem:[#allocation6 + $0x530] sm:$0xff]
        %v3618 = vld [vmem:[#allocation6 + $0x538] sm:$0xff]
        %v3619 = vld [vmem:[#allocation6 + $0x540] sm:$0xff]
        %v3620 = vld [vmem:[#allocation6 + $0x548] sm:$0xff]
        %v3621 = vld [vmem:[#allocation6 + $0x550] sm:$0xff]
        %v3622 = vld [vmem:[#allocation6 + $0x558] sm:$0xff]
        %v3623 = vld [vmem:[#allocation6 + $0x560] sm:$0xff]
        %v3624 = vld [vmem:[#allocation6 + $0x568] sm:$0xff]
        %v3625 = vld [vmem:[#allocation6 + $0x570] sm:$0xff]
        %v3626 = vld [vmem:[#allocation6 + $0x578] sm:$0xff]
        %v3627 = vld [vmem:[#allocation6 + $0x580] sm:$0xff]
        %v3628 = vld [vmem:[#allocation6 + $0x588] sm:$0xff]
        %v3629 = vld [vmem:[#allocation6 + $0x590] sm:$0xff]
        %v3630 = vld [vmem:[#allocation6 + $0x598] sm:$0xff]
        %v3631 = vld [vmem:[#allocation6 + $0x5a0] sm:$0xff]
        %v3632 = vld [vmem:[#allocation6 + $0x5a8] sm:$0xff]
        %v3633 = vld [vmem:[#allocation6 + $0x5b0] sm:$0xff]
        %v3634 = vld [vmem:[#allocation6 + $0x5b8] sm:$0xff]
        %v3635 = vld [vmem:[#allocation6 + $0x5c0] sm:$0xff]
        %v3636 = vld [vmem:[#allocation6 + $0x5c8] sm:$0xff]
        %v3637 = vld [vmem:[#allocation6 + $0x5d0] sm:$0xff]
        %v3638 = vld [vmem:[#allocation6 + $0x5d8] sm:$0xff]
        %v3639 = vld [vmem:[#allocation6 + $0x5e0] sm:$0xff]
        %v3640 = vld [vmem:[#allocation6 + $0x5e8] sm:$0xff]
        %v3641 = vld [vmem:[#allocation6 + $0x5f0] sm:$0xff]
        %v3642 = vld [vmem:[#allocation6 + $0x5f8] sm:$0xff]
        %v3643 = vld [vmem:[#allocation6 + $0x600] sm:$0xff]
        %v3644 = vld [vmem:[#allocation6 + $0x608] sm:$0xff]
        %v3645 = vld [vmem:[#allocation6 + $0x610] sm:$0xff]
        %v3646 = vld [vmem:[#allocation6 + $0x618] sm:$0xff]
        %v3647 = vld [vmem:[#allocation6 + $0x620] sm:$0xff]
        %v3648 = vld [vmem:[#allocation6 + $0x628] sm:$0xff]
        %v3649 = vld [vmem:[#allocation6 + $0x630] sm:$0xff]
        %v3650 = vld [vmem:[#allocation6 + $0x638] sm:$0xff]
        %v3651 = vld [vmem:[#allocation6 + $0x640] sm:$0xff]
        %v3652 = vld [vmem:[#allocation6 + $0x648] sm:$0xff]
        %v3653 = vld [vmem:[#allocation6 + $0x650] sm:$0xff]
        %v3654 = vld [vmem:[#allocation6 + $0x658] sm:$0xff]
        %v3655 = vld [vmem:[#allocation6 + $0x660] sm:$0xff]
        %v3656 = vld [vmem:[#allocation6 + $0x668] sm:$0xff]
        %v3657 = vld [vmem:[#allocation6 + $0x670] sm:$0xff]
        %v3658 = vld [vmem:[#allocation6 + $0x678] sm:$0xff]
        %v3659 = vld [vmem:[#allocation6 + $0x680] sm:$0xff]
        %v3660 = vld [vmem:[#allocation6 + $0x688] sm:$0xff]
        %v3661 = vld [vmem:[#allocation6 + $0x690] sm:$0xff]
        %v3662 = vld [vmem:[#allocation6 + $0x698] sm:$0xff]
        %v3663 = vld [vmem:[#allocation6 + $0x6a0] sm:$0xff]
        %v3664 = vld [vmem:[#allocation6 + $0x6a8] sm:$0xff]
        %v3665 = vld [vmem:[#allocation6 + $0x6b0] sm:$0xff]
        %v3666 = vld [vmem:[#allocation6 + $0x6b8] sm:$0xff]
        %v3667 = vld [vmem:[#allocation6 + $0x6c0] sm:$0xff]
        %v3668 = vld [vmem:[#allocation6 + $0x6c8] sm:$0xff]
        %v3669 = vld [vmem:[#allocation6 + $0x6d0] sm:$0xff]
        %v3670 = vld [vmem:[#allocation6 + $0x6d8] sm:$0xff]
        %v3671 = vld [vmem:[#allocation6 + $0x6e0] sm:$0xff]
        %v3672 = vld [vmem:[#allocation6 + $0x6e8] sm:$0xff]
        %v3673 = vld [vmem:[#allocation6 + $0x6f0] sm:$0xff]
        %v3674 = vld [vmem:[#allocation6 + $0x6f8] sm:$0xff]
        %v3675 = vld [vmem:[#allocation6 + $0x700] sm:$0xff]
        %v3676 = vld [vmem:[#allocation6 + $0x708] sm:$0xff]
        %v3677 = vld [vmem:[#allocation6 + $0x710] sm:$0xff]
        %v3678 = vld [vmem:[#allocation6 + $0x718] sm:$0xff]
        %v3679 = vld [vmem:[#allocation6 + $0x720] sm:$0xff]
        %v3680 = vld [vmem:[#allocation6 + $0x728] sm:$0xff]
        %v3681 = vld [vmem:[#allocation6 + $0x730] sm:$0xff]
        %v3682 = vld [vmem:[#allocation6 + $0x738] sm:$0xff]
        %v3683 = vld [vmem:[#allocation6 + $0x740] sm:$0xff]
        %v3684 = vld [vmem:[#allocation6 + $0x748] sm:$0xff]
        %v3685 = vld [vmem:[#allocation6 + $0x750] sm:$0xff]
        %v3686 = vld [vmem:[#allocation6 + $0x758] sm:$0xff]
        %v3687 = vld [vmem:[#allocation6 + $0x760] sm:$0xff]
        %v3688 = vld [vmem:[#allocation6 + $0x768] sm:$0xff]
        %v3689 = vld [vmem:[#allocation6 + $0x770] sm:$0xff]
        %v3690 = vld [vmem:[#allocation6 + $0x778] sm:$0xff]
        %v3691 = vld [vmem:[#allocation6 + $0x780] sm:$0xff]
        %v3692 = vld [vmem:[#allocation6 + $0x788] sm:$0xff]
        %v3693 = vld [vmem:[#allocation6 + $0x790] sm:$0xff]
        %v3694 = vld [vmem:[#allocation6 + $0x798] sm:$0xff]
        %v3695 = vld [vmem:[#allocation6 + $0x7a0] sm:$0xff]
        %v3696 = vld [vmem:[#allocation6 + $0x7a8] sm:$0xff]
        %v3697 = vld [vmem:[#allocation6 + $0x7b0] sm:$0xff]
        %v3698 = vld [vmem:[#allocation6 + $0x7b8] sm:$0xff]
        %v3699 = vld [vmem:[#allocation6 + $0x7c0] sm:$0xff]
        %v3700 = vld [vmem:[#allocation6 + $0x7c8] sm:$0xff]
        %v3701 = vld [vmem:[#allocation6 + $0x7d0] sm:$0xff]
        %v3702 = vld [vmem:[#allocation6 + $0x7d8] sm:$0xff]
        %v3703 = vld [vmem:[#allocation6 + $0x7e0] sm:$0xff]
        %v3704 = vld [vmem:[#allocation6 + $0x7e8] sm:$0xff]
        %v3705 = vld [vmem:[#allocation6 + $0x7f0] sm:$0xff]
        %v3706 = vld [vmem:[#allocation6 + $0x7f8] sm:$0xff]
        %v3707 = vld [vmem:[#allocation6 + $0x800] sm:$0xff]
        %v3708 = vld [vmem:[#allocation6 + $0x808] sm:$0xff]
        %v3709 = vld [vmem:[#allocation6 + $0x810] sm:$0xff]
        %v3710 = vld [vmem:[#allocation6 + $0x818] sm:$0xff]
        %v3711 = vld [vmem:[#allocation6 + $0x820] sm:$0xff]
        %v3712 = vld [vmem:[#allocation6 + $0x828] sm:$0xff]
        %v3713 = vld [vmem:[#allocation6 + $0x830] sm:$0xff]
        %v3714 = vld [vmem:[#allocation6 + $0x838] sm:$0xff]
        %v3715 = vld [vmem:[#allocation6 + $0x840] sm:$0xff]
        %v3716 = vld [vmem:[#allocation6 + $0x848] sm:$0xff]
        %v3717 = vld [vmem:[#allocation6 + $0x850] sm:$0xff]
        %v3718 = vld [vmem:[#allocation6 + $0x858] sm:$0xff]
        %v3719 = vld [vmem:[#allocation6 + $0x860] sm:$0xff]
        %v3720 = vld [vmem:[#allocation6 + $0x868] sm:$0xff]
        %v3721 = vld [vmem:[#allocation6 + $0x870] sm:$0xff]
        %v3722 = vld [vmem:[#allocation6 + $0x878] sm:$0xff]
        %v3723 = vld [vmem:[#allocation6 + $0x880] sm:$0xff]
        %v3724 = vld [vmem:[#allocation6 + $0x888] sm:$0xff]
        %v3725 = vld [vmem:[#allocation6 + $0x890] sm:$0xff]
        %v3726 = vld [vmem:[#allocation6 + $0x898] sm:$0xff]
        %v3727 = vld [vmem:[#allocation6 + $0x8a0] sm:$0xff]
        %v3728 = vld [vmem:[#allocation6 + $0x8a8] sm:$0xff]
        %v3729 = vld [vmem:[#allocation6 + $0x8b0] sm:$0xff]
        %v3730 = vld [vmem:[#allocation6 + $0x8b8] sm:$0xff]
        %v3731 = vld [vmem:[#allocation6 + $0x8c0] sm:$0xff]
        %v3732 = vld [vmem:[#allocation6 + $0x8c8] sm:$0xff]
        %v3733 = vld [vmem:[#allocation6 + $0x8d0] sm:$0xff]
        %v3734 = vld [vmem:[#allocation6 + $0x8d8] sm:$0xff]
        %v3735 = vld [vmem:[#allocation6 + $0x8e0] sm:$0xff]
        %v3736 = vld [vmem:[#allocation6 + $0x8e8] sm:$0xff]
        %v3737 = vld [vmem:[#allocation6 + $0x8f0] sm:$0xff]
        %v3738 = vld [vmem:[#allocation6 + $0x8f8] sm:$0xff]
        %v3739 = vld [vmem:[#allocation6 + $0x900] sm:$0xff]
        %v3740 = vld [vmem:[#allocation6 + $0x908] sm:$0xff]
        %v3741 = vld [vmem:[#allocation6 + $0x910] sm:$0xff]
        %v3742 = vld [vmem:[#allocation6 + $0x918] sm:$0xff]
        %v3743 = vld [vmem:[#allocation6 + $0x920] sm:$0xff]
        %v3744 = vld [vmem:[#allocation6 + $0x928] sm:$0xff]
        %v3745 = vld [vmem:[#allocation6 + $0x930] sm:$0xff]
        %v3746 = vld [vmem:[#allocation6 + $0x938] sm:$0xff]
        %v3747 = vld [vmem:[#allocation6 + $0x940] sm:$0xff]
        %v3748 = vld [vmem:[#allocation6 + $0x948] sm:$0xff]
        %v3749 = vld [vmem:[#allocation6 + $0x950] sm:$0xff]
        %v3750 = vld [vmem:[#allocation6 + $0x958] sm:$0xff]
        %v3751 = vld [vmem:[#allocation6 + $0x960] sm:$0xff]
        %v3752 = vld [vmem:[#allocation6 + $0x968] sm:$0xff]
        %v3753 = vld [vmem:[#allocation6 + $0x970] sm:$0xff]
        %v3754 = vld [vmem:[#allocation6 + $0x978] sm:$0xff]
        %v3755 = vld [vmem:[#allocation6 + $0x980] sm:$0xff]
        %v3756 = vld [vmem:[#allocation6 + $0x988] sm:$0xff]
        %v3757 = vld [vmem:[#allocation6 + $0x990] sm:$0xff]
        %v3758 = vld [vmem:[#allocation6 + $0x998] sm:$0xff]
        %v3759 = vld [vmem:[#allocation6 + $0x9a0] sm:$0xff]
        %v3760 = vld [vmem:[#allocation6 + $0x9a8] sm:$0xff]
        %v3761 = vld [vmem:[#allocation6 + $0x9b0] sm:$0xff]
        %v3762 = vld [vmem:[#allocation6 + $0x9b8] sm:$0xff]
        %v3763 = vld [vmem:[#allocation6 + $0x9c0] sm:$0xff]
        %v3764 = vld [vmem:[#allocation6 + $0x9c8] sm:$0xff]
        %v3765 = vld [vmem:[#allocation6 + $0x9d0] sm:$0xff]
        %v3766 = vld [vmem:[#allocation6 + $0x9d8] sm:$0xff]
        %v3767 = vld [vmem:[#allocation6 + $0x9e0] sm:$0xff]
        %v3768 = vld [vmem:[#allocation6 + $0x9e8] sm:$0xff]
        %v3769 = vld [vmem:[#allocation6 + $0x9f0] sm:$0xff]
        %v3770 = vld [vmem:[#allocation6 + $0x9f8] sm:$0xff]
        %v3771 = vld [vmem:[#allocation6 + $0xa00] sm:$0xff]
        %v3772 = vld [vmem:[#allocation6 + $0xa08] sm:$0xff]
        %v3773 = vld [vmem:[#allocation6 + $0xa10] sm:$0xff]
        %v3774 = vld [vmem:[#allocation6 + $0xa18] sm:$0xff]
        %v3775 = vld [vmem:[#allocation6 + $0xa20] sm:$0xff]
        %v3776 = vld [vmem:[#allocation6 + $0xa28] sm:$0xff]
        %v3777 = vld [vmem:[#allocation6 + $0xa30] sm:$0xff]
        %v3778 = vld [vmem:[#allocation6 + $0xa38] sm:$0xff]
        %v3779 = vld [vmem:[#allocation6 + $0xa40] sm:$0xff]
        %v3780 = vld [vmem:[#allocation6 + $0xa48] sm:$0xff]
        %v3781 = vld [vmem:[#allocation6 + $0xa50] sm:$0xff]
        %v3782 = vld [vmem:[#allocation6 + $0xa58] sm:$0xff]
        %v3783 = vld [vmem:[#allocation6 + $0xa60] sm:$0xff]
        %v3784 = vld [vmem:[#allocation6 + $0xa68] sm:$0xff]
        %v3785 = vld [vmem:[#allocation6 + $0xa70] sm:$0xff]
        %v3786 = vld [vmem:[#allocation6 + $0xa78] sm:$0xff]
        %v3787 = vld [vmem:[#allocation6 + $0xa80] sm:$0xff]
        %v3788 = vld [vmem:[#allocation6 + $0xa88] sm:$0xff]
        %v3789 = vld [vmem:[#allocation6 + $0xa90] sm:$0xff]
        %v3790 = vld [vmem:[#allocation6 + $0xa98] sm:$0xff]
        %v3791 = vld [vmem:[#allocation6 + $0xaa0] sm:$0xff]
        %v3792 = vld [vmem:[#allocation6 + $0xaa8] sm:$0xff]
        %v3793 = vld [vmem:[#allocation6 + $0xab0] sm:$0xff]
        %v3794 = vld [vmem:[#allocation6 + $0xab8] sm:$0xff]
        %v3795 = vld [vmem:[#allocation6 + $0xac0] sm:$0xff]
        %v3796 = vld [vmem:[#allocation6 + $0xac8] sm:$0xff]
        %v3797 = vld [vmem:[#allocation6 + $0xad0] sm:$0xff]
        %v3798 = vld [vmem:[#allocation6 + $0xad8] sm:$0xff]
        %v3799 = vld [vmem:[#allocation6 + $0xae0] sm:$0xff]
        %v3800 = vld [vmem:[#allocation6 + $0xae8] sm:$0xff]
        %v3801 = vld [vmem:[#allocation6 + $0xaf0] sm:$0xff]
        %v3802 = vld [vmem:[#allocation6 + $0xaf8] sm:$0xff]
        %v3803 = vld [vmem:[#allocation6 + $0xb00] sm:$0xff]
        %v3804 = vld [vmem:[#allocation6 + $0xb08] sm:$0xff]
        %v3805 = vld [vmem:[#allocation6 + $0xb10] sm:$0xff]
        %v3806 = vld [vmem:[#allocation6 + $0xb18] sm:$0xff]
        %v3807 = vld [vmem:[#allocation6 + $0xb20] sm:$0xff]
        %v3808 = vld [vmem:[#allocation6 + $0xb28] sm:$0xff]
        %v3809 = vld [vmem:[#allocation6 + $0xb30] sm:$0xff]
        %v3810 = vld [vmem:[#allocation6 + $0xb38] sm:$0xff]
        %v3811 = vld [vmem:[#allocation6 + $0xb40] sm:$0xff]
        %v3812 = vld [vmem:[#allocation6 + $0xb48] sm:$0xff]
        %v3813 = vld [vmem:[#allocation6 + $0xb50] sm:$0xff]
        %v3814 = vld [vmem:[#allocation6 + $0xb58] sm:$0xff]
        %v3815 = vld [vmem:[#allocation6 + $0xb60] sm:$0xff]
        %v3816 = vld [vmem:[#allocation6 + $0xb68] sm:$0xff]
        %v3817 = vld [vmem:[#allocation6 + $0xb70] sm:$0xff]
        %v3818 = vld [vmem:[#allocation6 + $0xb78] sm:$0xff]
        %v3819 = vld [vmem:[#allocation6 + $0xb80] sm:$0xff]
        %v3820 = vld [vmem:[#allocation6 + $0xb88] sm:$0xff]
        %v3821 = vld [vmem:[#allocation6 + $0xb90] sm:$0xff]
        %v3822 = vld [vmem:[#allocation6 + $0xb98] sm:$0xff]
        %v3823 = vld [vmem:[#allocation6 + $0xba0] sm:$0xff]
        %v3824 = vld [vmem:[#allocation6 + $0xba8] sm:$0xff]
        %v3825 = vld [vmem:[#allocation6 + $0xbb0] sm:$0xff]
        %v3826 = vld [vmem:[#allocation6 + $0xbb8] sm:$0xff]
        %v3827 = vld [vmem:[#allocation6 + $0xbc0] sm:$0xff]
        %v3828 = vld [vmem:[#allocation6 + $0xbc8] sm:$0xff]
        %v3829 = vld [vmem:[#allocation6 + $0xbd0] sm:$0xff]
        %v3830 = vld [vmem:[#allocation6 + $0xbd8] sm:$0xff]
        %v3831 = vld [vmem:[#allocation6 + $0xbe0] sm:$0xff]
        %v3832 = vld [vmem:[#allocation6 + $0xbe8] sm:$0xff]
        %v3833 = vld [vmem:[#allocation6 + $0xbf0] sm:$0xff]
        %v3834 = vld [vmem:[#allocation6 + $0xbf8] sm:$0xff]
        %v3835 = vld [vmem:[#allocation6 + $0xc00] sm:$0xff]
        %v3836 = vld [vmem:[#allocation6 + $0xc08] sm:$0xff]
        %v3837 = vld [vmem:[#allocation6 + $0xc10] sm:$0xff]
        %v3838 = vld [vmem:[#allocation6 + $0xc18] sm:$0xff]
        %v3839 = vld [vmem:[#allocation6 + $0xc20] sm:$0xff]
        %v3840 = vld [vmem:[#allocation6 + $0xc28] sm:$0xff]
        %v3841 = vld [vmem:[#allocation6 + $0xc30] sm:$0xff]
        %v3842 = vld [vmem:[#allocation6 + $0xc38] sm:$0xff]
        %v3843 = vld [vmem:[#allocation6 + $0xc40] sm:$0xff]
        %v3844 = vld [vmem:[#allocation6 + $0xc48] sm:$0xff]
        %v3845 = vld [vmem:[#allocation6 + $0xc50] sm:$0xff]
        %v3846 = vld [vmem:[#allocation6 + $0xc58] sm:$0xff]
        %v3847 = vld [vmem:[#allocation6 + $0xc60] sm:$0xff]
        %v3848 = vld [vmem:[#allocation6 + $0xc68] sm:$0xff]
        %v3849 = vld [vmem:[#allocation6 + $0xc70] sm:$0xff]
        %v3850 = vld [vmem:[#allocation6 + $0xc78] sm:$0xff]
        %v3851 = vld [vmem:[#allocation6 + $0xc80] sm:$0xff]
        %v3852 = vld [vmem:[#allocation6 + $0xc88] sm:$0xff]
        %v3853 = vld [vmem:[#allocation6 + $0xc90] sm:$0xff]
        %v3854 = vld [vmem:[#allocation6 + $0xc98] sm:$0xff]
        %v3855 = vld [vmem:[#allocation6 + $0xca0] sm:$0xff]
        %v3856 = vld [vmem:[#allocation6 + $0xca8] sm:$0xff]
        %v3857 = vld [vmem:[#allocation6 + $0xcb0] sm:$0xff]
        %v3858 = vld [vmem:[#allocation6 + $0xcb8] sm:$0xff]
        %v3859 = vld [vmem:[#allocation6 + $0xcc0] sm:$0xff]
        %v3860 = vld [vmem:[#allocation6 + $0xcc8] sm:$0xff]
        %v3861 = vld [vmem:[#allocation6 + $0xcd0] sm:$0xff]
        %v3862 = vld [vmem:[#allocation6 + $0xcd8] sm:$0xff]
        %v3863 = vld [vmem:[#allocation6 + $0xce0] sm:$0xff]
        %v3864 = vld [vmem:[#allocation6 + $0xce8] sm:$0xff]
        %v3865 = vld [vmem:[#allocation6 + $0xcf0] sm:$0xff]
        %v3866 = vld [vmem:[#allocation6 + $0xcf8] sm:$0xff]
        %v3867 = vld [vmem:[#allocation6 + $0xd00] sm:$0xff]
        %v3868 = vld [vmem:[#allocation6 + $0xd08] sm:$0xff]
        %v3869 = vld [vmem:[#allocation6 + $0xd10] sm:$0xff]
        %v3870 = vld [vmem:[#allocation6 + $0xd18] sm:$0xff]
        %v3871 = vld [vmem:[#allocation6 + $0xd20] sm:$0xff]
        %v3872 = vld [vmem:[#allocation6 + $0xd28] sm:$0xff]
        %v3873 = vld [vmem:[#allocation6 + $0xd30] sm:$0xff]
        %v3874 = vld [vmem:[#allocation6 + $0xd38] sm:$0xff]
        %v3875 = vld [vmem:[#allocation6 + $0xd40] sm:$0xff]
        %v3876 = vld [vmem:[#allocation6 + $0xd48] sm:$0xff]
        %v3877 = vld [vmem:[#allocation6 + $0xd50] sm:$0xff]
        %v3878 = vld [vmem:[#allocation6 + $0xd58] sm:$0xff]
        %v4307 = vunpack.c.l.b16 %v3451
        %v4308 = vunpack.c.h.b16 %v3451
        %v4309 = vunpack.c.l.b16 %v3452
        %v4310 = vunpack.c.h.b16 %v3452
        %v4311 = vunpack.c.l.b16 %v3453
        %v4312 = vunpack.c.h.b16 %v3453
        %v4313 = vunpack.c.l.b16 %v3454
        %v4314 = vunpack.c.h.b16 %v3454
        %v4315 = vunpack.c.l.b16 %v3455
        %v4316 = vunpack.c.h.b16 %v3455
        %v4317 = vunpack.c.l.b16 %v3456
        %v4318 = vunpack.c.h.b16 %v3456
        %v4319 = vunpack.c.l.b16 %v3457
        %v4320 = vunpack.c.h.b16 %v3457
        %v4321 = vunpack.c.l.b16 %v3458
        %v4322 = vunpack.c.h.b16 %v3458
        %v4323 = vunpack.c.l.b16 %v3459
        %v4324 = vunpack.c.h.b16 %v3459
        %v4325 = vunpack.c.l.b16 %v3460
        %v4326 = vunpack.c.h.b16 %v3460
        %v4327 = vunpack.c.l.b16 %v3461
        %v4328 = vunpack.c.h.b16 %v3461
        %v4329 = vunpack.c.l.b16 %v3462
        %v4330 = vunpack.c.h.b16 %v3462
        %v4331 = vunpack.c.l.b16 %v3463
        %v4332 = vunpack.c.h.b16 %v3463
        %v4333 = vunpack.c.l.b16 %v3464
        %v4334 = vunpack.c.h.b16 %v3464
        %v4335 = vunpack.c.l.b16 %v3465
        %v4336 = vunpack.c.h.b16 %v3465
        %v4337 = vunpack.c.l.b16 %v3466
        %v4338 = vunpack.c.h.b16 %v3466
        %v4339 = vunpack.c.l.b16 %v3467
        %v4340 = vunpack.c.h.b16 %v3467
        %v4341 = vunpack.c.l.b16 %v3468
        %v4342 = vunpack.c.h.b16 %v3468
        %v4343 = vunpack.c.l.b16 %v3469
        %v4344 = vunpack.c.h.b16 %v3469
        %v4345 = vunpack.c.l.b16 %v3470
        %v4346 = vunpack.c.h.b16 %v3470
        %v4347 = vunpack.c.l.b16 %v3471
        %v4348 = vunpack.c.h.b16 %v3471
        %v4349 = vunpack.c.l.b16 %v3472
        %v4350 = vunpack.c.h.b16 %v3472
        %v4351 = vunpack.c.l.b16 %v3473
        %v4352 = vunpack.c.h.b16 %v3473
        %v4353 = vunpack.c.l.b16 %v3474
        %v4354 = vunpack.c.h.b16 %v3474
        %v4355 = vunpack.c.l.b16 %v3475
        %v4356 = vunpack.c.h.b16 %v3475
        %v4357 = vunpack.c.l.b16 %v3476
        %v4358 = vunpack.c.h.b16 %v3476
        %v4359 = vunpack.c.l.b16 %v3477
        %v4360 = vunpack.c.h.b16 %v3477
        %v4361 = vunpack.c.l.b16 %v3478
        %v4362 = vunpack.c.h.b16 %v3478
        %v4363 = vunpack.c.l.b16 %v3479
        %v4364 = vunpack.c.h.b16 %v3479
        %v4365 = vunpack.c.l.b16 %v3480
        %v4366 = vunpack.c.h.b16 %v3480
        %v4367 = vunpack.c.l.b16 %v3481
        %v4368 = vunpack.c.h.b16 %v3481
        %v4369 = vunpack.c.l.b16 %v3482
        %v4370 = vunpack.c.h.b16 %v3482
        %v4371 = vunpack.c.l.b16 %v3483
        %v4372 = vunpack.c.h.b16 %v3483
        %v4373 = vunpack.c.l.b16 %v3484
        %v4374 = vunpack.c.h.b16 %v3484
        %v4375 = vunpack.c.l.b16 %v3485
        %v4376 = vunpack.c.h.b16 %v3485
        %v4377 = vunpack.c.l.b16 %v3486
        %v4378 = vunpack.c.h.b16 %v3486
        %v4379 = vunpack.c.l.b16 %v3487
        %v4380 = vunpack.c.h.b16 %v3487
        %v4381 = vunpack.c.l.b16 %v3488
        %v4382 = vunpack.c.h.b16 %v3488
        %v4383 = vunpack.c.l.b16 %v3489
        %v4384 = vunpack.c.h.b16 %v3489
        %v4385 = vunpack.c.l.b16 %v3490
        %v4386 = vunpack.c.h.b16 %v3490
        %v4387 = vunpack.c.l.b16 %v3491
        %v4388 = vunpack.c.h.b16 %v3491
        %v4389 = vunpack.c.l.b16 %v3492
        %v4390 = vunpack.c.h.b16 %v3492
        %v4391 = vunpack.c.l.b16 %v3493
        %v4392 = vunpack.c.h.b16 %v3493
        %v4393 = vunpack.c.l.b16 %v3494
        %v4394 = vunpack.c.h.b16 %v3494
        %v4395 = vunpack.c.l.b16 %v3495
        %v4396 = vunpack.c.h.b16 %v3495
        %v4397 = vunpack.c.l.b16 %v3496
        %v4398 = vunpack.c.h.b16 %v3496
        %v4399 = vunpack.c.l.b16 %v3497
        %v4400 = vunpack.c.h.b16 %v3497
        %v4401 = vunpack.c.l.b16 %v3498
        %v4402 = vunpack.c.h.b16 %v3498
        %v4403 = vunpack.c.l.b16 %v3499
        %v4404 = vunpack.c.h.b16 %v3499
        %v4405 = vunpack.c.l.b16 %v3500
        %v4406 = vunpack.c.h.b16 %v3500
        %v4407 = vunpack.c.l.b16 %v3501
        %v4408 = vunpack.c.h.b16 %v3501
        %v4409 = vunpack.c.l.b16 %v3502
        %v4410 = vunpack.c.h.b16 %v3502
        %v4411 = vunpack.c.l.b16 %v3503
        %v4412 = vunpack.c.h.b16 %v3503
        %v4413 = vunpack.c.l.b16 %v3504
        %v4414 = vunpack.c.h.b16 %v3504
        %v4415 = vunpack.c.l.b16 %v3505
        %v4416 = vunpack.c.h.b16 %v3505
        %v4417 = vunpack.c.l.b16 %v3506
        %v4418 = vunpack.c.h.b16 %v3506
        %v4419 = vunpack.c.l.b16 %v3507
        %v4420 = vunpack.c.h.b16 %v3507
        %v4421 = vunpack.c.l.b16 %v3508
        %v4422 = vunpack.c.h.b16 %v3508
        %v4423 = vunpack.c.l.b16 %v3509
        %v4424 = vunpack.c.h.b16 %v3509
        %v4425 = vunpack.c.l.b16 %v3510
        %v4426 = vunpack.c.h.b16 %v3510
        %v4427 = vunpack.c.l.b16 %v3511
        %v4428 = vunpack.c.h.b16 %v3511
        %v4429 = vunpack.c.l.b16 %v3512
        %v4430 = vunpack.c.h.b16 %v3512
        %v4431 = vunpack.c.l.b16 %v3513
        %v4432 = vunpack.c.h.b16 %v3513
        %v4433 = vunpack.c.l.b16 %v3514
        %v4434 = vunpack.c.h.b16 %v3514
        %v4435 = vunpack.c.l.b16 %v3515
        %v4436 = vunpack.c.h.b16 %v3515
        %v4437 = vunpack.c.l.b16 %v3516
        %v4438 = vunpack.c.h.b16 %v3516
        %v4439 = vunpack.c.l.b16 %v3517
        %v4440 = vunpack.c.h.b16 %v3517
        %v4441 = vunpack.c.l.b16 %v3518
        %v4442 = vunpack.c.h.b16 %v3518
        %v4443 = vunpack.c.l.b16 %v3519
        %v4444 = vunpack.c.h.b16 %v3519
        %v4445 = vunpack.c.l.b16 %v3520
        %v4446 = vunpack.c.h.b16 %v3520
        %v4447 = vunpack.c.l.b16 %v3521
        %v4448 = vunpack.c.h.b16 %v3521
        %v4449 = vunpack.c.l.b16 %v3522
        %v4450 = vunpack.c.h.b16 %v3522
        %v4451 = vunpack.c.l.b16 %v3523
        %v4452 = vunpack.c.h.b16 %v3523
        %v4453 = vunpack.c.l.b16 %v3524
        %v4454 = vunpack.c.h.b16 %v3524
        %v4455 = vunpack.c.l.b16 %v3525
        %v4456 = vunpack.c.h.b16 %v3525
        %v4457 = vunpack.c.l.b16 %v3526
        %v4458 = vunpack.c.h.b16 %v3526
        %v4459 = vunpack.c.l.b16 %v3527
        %v4460 = vunpack.c.h.b16 %v3527
        %v4461 = vunpack.c.l.b16 %v3528
        %v4462 = vunpack.c.h.b16 %v3528
        %v4463 = vunpack.c.l.b16 %v3529
        %v4464 = vunpack.c.h.b16 %v3529
        %v4465 = vunpack.c.l.b16 %v3530
        %v4466 = vunpack.c.h.b16 %v3530
        %v4467 = vunpack.c.l.b16 %v3531
        %v4468 = vunpack.c.h.b16 %v3531
        %v4469 = vunpack.c.l.b16 %v3532
        %v4470 = vunpack.c.h.b16 %v3532
        %v4471 = vunpack.c.l.b16 %v3533
        %v4472 = vunpack.c.h.b16 %v3533
        %v4473 = vunpack.c.l.b16 %v3534
        %v4474 = vunpack.c.h.b16 %v3534
        %v4475 = vunpack.c.l.b16 %v3535
        %v4476 = vunpack.c.h.b16 %v3535
        %v4477 = vunpack.c.l.b16 %v3536
        %v4478 = vunpack.c.h.b16 %v3536
        %v4479 = vunpack.c.l.b16 %v3537
        %v4480 = vunpack.c.h.b16 %v3537
        %v4481 = vunpack.c.l.b16 %v3538
        %v4482 = vunpack.c.h.b16 %v3538
        %v4483 = vunpack.c.l.b16 %v3539
        %v4484 = vunpack.c.h.b16 %v3539
        %v4485 = vunpack.c.l.b16 %v3540
        %v4486 = vunpack.c.h.b16 %v3540
        %v4487 = vunpack.c.l.b16 %v3541
        %v4488 = vunpack.c.h.b16 %v3541
        %v4489 = vunpack.c.l.b16 %v3542
        %v4490 = vunpack.c.h.b16 %v3542
        %v4491 = vunpack.c.l.b16 %v3543
        %v4492 = vunpack.c.h.b16 %v3543
        %v4493 = vunpack.c.l.b16 %v3544
        %v4494 = vunpack.c.h.b16 %v3544
        %v4495 = vunpack.c.l.b16 %v3545
        %v4496 = vunpack.c.h.b16 %v3545
        %v4497 = vunpack.c.l.b16 %v3546
        %v4498 = vunpack.c.h.b16 %v3546
        %v4499 = vunpack.c.l.b16 %v3547
        %v4500 = vunpack.c.h.b16 %v3547
        %v4501 = vunpack.c.l.b16 %v3548
        %v4502 = vunpack.c.h.b16 %v3548
        %v4503 = vunpack.c.l.b16 %v3549
        %v4504 = vunpack.c.h.b16 %v3549
        %v4505 = vunpack.c.l.b16 %v3550
        %v4506 = vunpack.c.h.b16 %v3550
        %v4507 = vunpack.c.l.b16 %v3551
        %v4508 = vunpack.c.h.b16 %v3551
        %v4509 = vunpack.c.l.b16 %v3552
        %v4510 = vunpack.c.h.b16 %v3552
        %v4511 = vunpack.c.l.b16 %v3553
        %v4512 = vunpack.c.h.b16 %v3553
        %v4513 = vunpack.c.l.b16 %v3554
        %v4514 = vunpack.c.h.b16 %v3554
        %v4515 = vunpack.c.l.b16 %v3555
        %v4516 = vunpack.c.h.b16 %v3555
        %v4517 = vunpack.c.l.b16 %v3556
        %v4518 = vunpack.c.h.b16 %v3556
        %v4519 = vunpack.c.l.b16 %v3557
        %v4520 = vunpack.c.h.b16 %v3557
        %v4521 = vunpack.c.l.b16 %v3558
        %v4522 = vunpack.c.h.b16 %v3558
        %v4523 = vunpack.c.l.b16 %v3559
        %v4524 = vunpack.c.h.b16 %v3559
        %v4525 = vunpack.c.l.b16 %v3560
        %v4526 = vunpack.c.h.b16 %v3560
        %v4527 = vunpack.c.l.b16 %v3561
        %v4528 = vunpack.c.h.b16 %v3561
        %v4529 = vunpack.c.l.b16 %v3562
        %v4530 = vunpack.c.h.b16 %v3562
        %v4531 = vunpack.c.l.b16 %v3563
        %v4532 = vunpack.c.h.b16 %v3563
        %v4533 = vunpack.c.l.b16 %v3564
        %v4534 = vunpack.c.h.b16 %v3564
        %v4535 = vunpack.c.l.b16 %v3565
        %v4536 = vunpack.c.h.b16 %v3565
        %v4537 = vunpack.c.l.b16 %v3566
        %v4538 = vunpack.c.h.b16 %v3566
        %v4539 = vunpack.c.l.b16 %v3567
        %v4540 = vunpack.c.h.b16 %v3567
        %v4541 = vunpack.c.l.b16 %v3568
        %v4542 = vunpack.c.h.b16 %v3568
        %v4543 = vunpack.c.l.b16 %v3569
        %v4544 = vunpack.c.h.b16 %v3569
        %v4545 = vunpack.c.l.b16 %v3570
        %v4546 = vunpack.c.h.b16 %v3570
        %v4547 = vunpack.c.l.b16 %v3571
        %v4548 = vunpack.c.h.b16 %v3571
        %v4549 = vunpack.c.l.b16 %v3572
        %v4550 = vunpack.c.h.b16 %v3572
        %v4551 = vunpack.c.l.b16 %v3573
        %v4552 = vunpack.c.h.b16 %v3573
        %v4553 = vunpack.c.l.b16 %v3574
        %v4554 = vunpack.c.h.b16 %v3574
        %v4555 = vunpack.c.l.b16 %v3575
        %v4556 = vunpack.c.h.b16 %v3575
        %v4557 = vunpack.c.l.b16 %v3576
        %v4558 = vunpack.c.h.b16 %v3576
        %v4559 = vunpack.c.l.b16 %v3577
        %v4560 = vunpack.c.h.b16 %v3577
        %v4561 = vunpack.c.l.b16 %v3578
        %v4562 = vunpack.c.h.b16 %v3578
        %v4563 = vunpack.c.l.b16 %v3579
        %v4564 = vunpack.c.h.b16 %v3579
        %v4565 = vunpack.c.l.b16 %v3580
        %v4566 = vunpack.c.h.b16 %v3580
        %v4567 = vunpack.c.l.b16 %v3581
        %v4568 = vunpack.c.h.b16 %v3581
        %v4569 = vunpack.c.l.b16 %v3582
        %v4570 = vunpack.c.h.b16 %v3582
        %v4571 = vunpack.c.l.b16 %v3583
        %v4572 = vunpack.c.h.b16 %v3583
        %v4573 = vunpack.c.l.b16 %v3584
        %v4574 = vunpack.c.h.b16 %v3584
        %v4575 = vunpack.c.l.b16 %v3585
        %v4576 = vunpack.c.h.b16 %v3585
        %v4577 = vunpack.c.l.b16 %v3586
        %v4578 = vunpack.c.h.b16 %v3586
        %v4579 = vunpack.c.l.b16 %v3587
        %v4580 = vunpack.c.h.b16 %v3587
        %v4581 = vunpack.c.l.b16 %v3588
        %v4582 = vunpack.c.h.b16 %v3588
        %v4583 = vunpack.c.l.b16 %v3589
        %v4584 = vunpack.c.h.b16 %v3589
        %v4585 = vunpack.c.l.b16 %v3590
        %v4586 = vunpack.c.h.b16 %v3590
        %v4587 = vunpack.c.l.b16 %v3591
        %v4588 = vunpack.c.h.b16 %v3591
        %v4589 = vunpack.c.l.b16 %v3592
        %v4590 = vunpack.c.h.b16 %v3592
        %v4591 = vunpack.c.l.b16 %v3593
        %v4592 = vunpack.c.h.b16 %v3593
        %v4593 = vunpack.c.l.b16 %v3594
        %v4594 = vunpack.c.h.b16 %v3594
        %v4595 = vunpack.c.l.b16 %v3595
        %v4596 = vunpack.c.h.b16 %v3595
        %v4597 = vunpack.c.l.b16 %v3596
        %v4598 = vunpack.c.h.b16 %v3596
        %v4599 = vunpack.c.l.b16 %v3597
        %v4600 = vunpack.c.h.b16 %v3597
        %v4601 = vunpack.c.l.b16 %v3598
        %v4602 = vunpack.c.h.b16 %v3598
        %v4603 = vunpack.c.l.b16 %v3599
        %v4604 = vunpack.c.h.b16 %v3599
        %v4605 = vunpack.c.l.b16 %v3600
        %v4606 = vunpack.c.h.b16 %v3600
        %v4607 = vunpack.c.l.b16 %v3601
        %v4608 = vunpack.c.h.b16 %v3601
        %v4609 = vunpack.c.l.b16 %v3602
        %v4610 = vunpack.c.h.b16 %v3602
        %v4611 = vunpack.c.l.b16 %v3603
        %v4612 = vunpack.c.h.b16 %v3603
        %v4613 = vunpack.c.l.b16 %v3604
        %v4614 = vunpack.c.h.b16 %v3604
        %v4615 = vunpack.c.l.b16 %v3605
        %v4616 = vunpack.c.h.b16 %v3605
        %v4617 = vunpack.c.l.b16 %v3606
        %v4618 = vunpack.c.h.b16 %v3606
        %v4619 = vunpack.c.l.b16 %v3607
        %v4620 = vunpack.c.h.b16 %v3607
        %v4621 = vunpack.c.l.b16 %v3608
        %v4622 = vunpack.c.h.b16 %v3608
        %v4623 = vunpack.c.l.b16 %v3609
        %v4624 = vunpack.c.h.b16 %v3609
        %v4625 = vunpack.c.l.b16 %v3610
        %v4626 = vunpack.c.h.b16 %v3610
        %v4627 = vunpack.c.l.b16 %v3611
        %v4628 = vunpack.c.h.b16 %v3611
        %v4629 = vunpack.c.l.b16 %v3612
        %v4630 = vunpack.c.h.b16 %v3612
        %v4631 = vunpack.c.l.b16 %v3613
        %v4632 = vunpack.c.h.b16 %v3613
        %v4633 = vunpack.c.l.b16 %v3614
        %v4634 = vunpack.c.h.b16 %v3614
        %v4635 = vunpack.c.l.b16 %v3615
        %v4636 = vunpack.c.h.b16 %v3615
        %v4637 = vunpack.c.l.b16 %v3616
        %v4638 = vunpack.c.h.b16 %v3616
        %v4639 = vunpack.c.l.b16 %v3617
        %v4640 = vunpack.c.h.b16 %v3617
        %v4641 = vunpack.c.l.b16 %v3618
        %v4642 = vunpack.c.h.b16 %v3618
        %v4643 = vunpack.c.l.b16 %v3619
        %v4644 = vunpack.c.h.b16 %v3619
        %v4645 = vunpack.c.l.b16 %v3620
        %v4646 = vunpack.c.h.b16 %v3620
        %v4647 = vunpack.c.l.b16 %v3621
        %v4648 = vunpack.c.h.b16 %v3621
        %v4649 = vunpack.c.l.b16 %v3622
        %v4650 = vunpack.c.h.b16 %v3622
        %v4651 = vunpack.c.l.b16 %v3623
        %v4652 = vunpack.c.h.b16 %v3623
        %v4653 = vunpack.c.l.b16 %v3624
        %v4654 = vunpack.c.h.b16 %v3624
        %v4655 = vunpack.c.l.b16 %v3625
        %v4656 = vunpack.c.h.b16 %v3625
        %v4657 = vunpack.c.l.b16 %v3626
        %v4658 = vunpack.c.h.b16 %v3626
        %v4659 = vunpack.c.l.b16 %v3627
        %v4660 = vunpack.c.h.b16 %v3627
        %v4661 = vunpack.c.l.b16 %v3628
        %v4662 = vunpack.c.h.b16 %v3628
        %v4663 = vunpack.c.l.b16 %v3629
        %v4664 = vunpack.c.h.b16 %v3629
        %v4665 = vunpack.c.l.b16 %v3630
        %v4666 = vunpack.c.h.b16 %v3630
        %v4667 = vunpack.c.l.b16 %v3631
        %v4668 = vunpack.c.h.b16 %v3631
        %v4669 = vunpack.c.l.b16 %v3632
        %v4670 = vunpack.c.h.b16 %v3632
        %v4671 = vunpack.c.l.b16 %v3633
        %v4672 = vunpack.c.h.b16 %v3633
        %v4673 = vunpack.c.l.b16 %v3634
        %v4674 = vunpack.c.h.b16 %v3634
        %v4675 = vunpack.c.l.b16 %v3635
        %v4676 = vunpack.c.h.b16 %v3635
        %v4677 = vunpack.c.l.b16 %v3636
        %v4678 = vunpack.c.h.b16 %v3636
        %v4679 = vunpack.c.l.b16 %v3637
        %v4680 = vunpack.c.h.b16 %v3637
        %v4681 = vunpack.c.l.b16 %v3638
        %v4682 = vunpack.c.h.b16 %v3638
        %v4683 = vunpack.c.l.b16 %v3639
        %v4684 = vunpack.c.h.b16 %v3639
        %v4685 = vunpack.c.l.b16 %v3640
        %v4686 = vunpack.c.h.b16 %v3640
        %v4687 = vunpack.c.l.b16 %v3641
        %v4688 = vunpack.c.h.b16 %v3641
        %v4689 = vunpack.c.l.b16 %v3642
        %v4690 = vunpack.c.h.b16 %v3642
        %v4691 = vunpack.c.l.b16 %v3643
        %v4692 = vunpack.c.h.b16 %v3643
        %v4693 = vunpack.c.l.b16 %v3644
        %v4694 = vunpack.c.h.b16 %v3644
        %v4695 = vunpack.c.l.b16 %v3645
        %v4696 = vunpack.c.h.b16 %v3645
        %v4697 = vunpack.c.l.b16 %v3646
        %v4698 = vunpack.c.h.b16 %v3646
        %v4699 = vunpack.c.l.b16 %v3647
        %v4700 = vunpack.c.h.b16 %v3647
        %v4701 = vunpack.c.l.b16 %v3648
        %v4702 = vunpack.c.h.b16 %v3648
        %v4703 = vunpack.c.l.b16 %v3649
        %v4704 = vunpack.c.h.b16 %v3649
        %v4705 = vunpack.c.l.b16 %v3650
        %v4706 = vunpack.c.h.b16 %v3650
        %v4707 = vunpack.c.l.b16 %v3651
        %v4708 = vunpack.c.h.b16 %v3651
        %v4709 = vunpack.c.l.b16 %v3652
        %v4710 = vunpack.c.h.b16 %v3652
        %v4711 = vunpack.c.l.b16 %v3653
        %v4712 = vunpack.c.h.b16 %v3653
        %v4713 = vunpack.c.l.b16 %v3654
        %v4714 = vunpack.c.h.b16 %v3654
        %v4715 = vunpack.c.l.b16 %v3655
        %v4716 = vunpack.c.h.b16 %v3655
        %v4717 = vunpack.c.l.b16 %v3656
        %v4718 = vunpack.c.h.b16 %v3656
        %v4719 = vunpack.c.l.b16 %v3657
        %v4720 = vunpack.c.h.b16 %v3657
        %v4721 = vunpack.c.l.b16 %v3658
        %v4722 = vunpack.c.h.b16 %v3658
        %v4723 = vunpack.c.l.b16 %v3659
        %v4724 = vunpack.c.h.b16 %v3659
        %v4725 = vunpack.c.l.b16 %v3660
        %v4726 = vunpack.c.h.b16 %v3660
        %v4727 = vunpack.c.l.b16 %v3661
        %v4728 = vunpack.c.h.b16 %v3661
        %v4729 = vunpack.c.l.b16 %v3662
        %v4730 = vunpack.c.h.b16 %v3662
        %v4731 = vunpack.c.l.b16 %v3663
        %v4732 = vunpack.c.h.b16 %v3663
        %v4733 = vunpack.c.l.b16 %v3664
        %v4734 = vunpack.c.h.b16 %v3664
        %v4735 = vunpack.c.l.b16 %v3665
        %v4736 = vunpack.c.h.b16 %v3665
        %v4737 = vunpack.c.l.b16 %v3666
        %v4738 = vunpack.c.h.b16 %v3666
        %v4739 = vunpack.c.l.b16 %v3667
        %v4740 = vunpack.c.h.b16 %v3667
        %v4741 = vunpack.c.l.b16 %v3668
        %v4742 = vunpack.c.h.b16 %v3668
        %v4743 = vunpack.c.l.b16 %v3669
        %v4744 = vunpack.c.h.b16 %v3669
        %v4745 = vunpack.c.l.b16 %v3670
        %v4746 = vunpack.c.h.b16 %v3670
        %v4747 = vunpack.c.l.b16 %v3671
        %v4748 = vunpack.c.h.b16 %v3671
        %v4749 = vunpack.c.l.b16 %v3672
        %v4750 = vunpack.c.h.b16 %v3672
        %v4751 = vunpack.c.l.b16 %v3673
        %v4752 = vunpack.c.h.b16 %v3673
        %v4753 = vunpack.c.l.b16 %v3674
        %v4754 = vunpack.c.h.b16 %v3674
        %v4755 = vunpack.c.l.b16 %v3675
        %v4756 = vunpack.c.h.b16 %v3675
        %v4757 = vunpack.c.l.b16 %v3676
        %v4758 = vunpack.c.h.b16 %v3676
        %v4759 = vunpack.c.l.b16 %v3677
        %v4760 = vunpack.c.h.b16 %v3677
        %v4761 = vunpack.c.l.b16 %v3678
        %v4762 = vunpack.c.h.b16 %v3678
        %v4763 = vunpack.c.l.b16 %v3679
        %v4764 = vunpack.c.h.b16 %v3679
        %v4765 = vunpack.c.l.b16 %v3680
        %v4766 = vunpack.c.h.b16 %v3680
        %v4767 = vunpack.c.l.b16 %v3681
        %v4768 = vunpack.c.h.b16 %v3681
        %v4769 = vunpack.c.l.b16 %v3682
        %v4770 = vunpack.c.h.b16 %v3682
        %v4771 = vunpack.c.l.b16 %v3683
        %v4772 = vunpack.c.h.b16 %v3683
        %v4773 = vunpack.c.l.b16 %v3684
        %v4774 = vunpack.c.h.b16 %v3684
        %v4775 = vunpack.c.l.b16 %v3685
        %v4776 = vunpack.c.h.b16 %v3685
        %v4777 = vunpack.c.l.b16 %v3686
        %v4778 = vunpack.c.h.b16 %v3686
        %v4779 = vunpack.c.l.b16 %v3687
        %v4780 = vunpack.c.h.b16 %v3687
        %v4781 = vunpack.c.l.b16 %v3688
        %v4782 = vunpack.c.h.b16 %v3688
        %v4783 = vunpack.c.l.b16 %v3689
        %v4784 = vunpack.c.h.b16 %v3689
        %v4785 = vunpack.c.l.b16 %v3690
        %v4786 = vunpack.c.h.b16 %v3690
        %v4787 = vunpack.c.l.b16 %v3691
        %v4788 = vunpack.c.h.b16 %v3691
        %v4789 = vunpack.c.l.b16 %v3692
        %v4790 = vunpack.c.h.b16 %v3692
        %v4791 = vunpack.c.l.b16 %v3693
        %v4792 = vunpack.c.h.b16 %v3693
        %v4793 = vunpack.c.l.b16 %v3694
        %v4794 = vunpack.c.h.b16 %v3694
        %v4795 = vunpack.c.l.b16 %v3695
        %v4796 = vunpack.c.h.b16 %v3695
        %v4797 = vunpack.c.l.b16 %v3696
        %v4798 = vunpack.c.h.b16 %v3696
        %v4799 = vunpack.c.l.b16 %v3697
        %v4800 = vunpack.c.h.b16 %v3697
        %v4801 = vunpack.c.l.b16 %v3698
        %v4802 = vunpack.c.h.b16 %v3698
        %v4803 = vunpack.c.l.b16 %v3699
        %v4804 = vunpack.c.h.b16 %v3699
        %v4805 = vunpack.c.l.b16 %v3700
        %v4806 = vunpack.c.h.b16 %v3700
        %v4807 = vunpack.c.l.b16 %v3701
        %v4808 = vunpack.c.h.b16 %v3701
        %v4809 = vunpack.c.l.b16 %v3702
        %v4810 = vunpack.c.h.b16 %v3702
        %v4811 = vunpack.c.l.b16 %v3703
        %v4812 = vunpack.c.h.b16 %v3703
        %v4813 = vunpack.c.l.b16 %v3704
        %v4814 = vunpack.c.h.b16 %v3704
        %v4815 = vunpack.c.l.b16 %v3705
        %v4816 = vunpack.c.h.b16 %v3705
        %v4817 = vunpack.c.l.b16 %v3706
        %v4818 = vunpack.c.h.b16 %v3706
        %v4819 = vunpack.c.l.b16 %v3707
        %v4820 = vunpack.c.h.b16 %v3707
        %v4821 = vunpack.c.l.b16 %v3708
        %v4822 = vunpack.c.h.b16 %v3708
        %v4823 = vunpack.c.l.b16 %v3709
        %v4824 = vunpack.c.h.b16 %v3709
        %v4825 = vunpack.c.l.b16 %v3710
        %v4826 = vunpack.c.h.b16 %v3710
        %v4827 = vunpack.c.l.b16 %v3711
        %v4828 = vunpack.c.h.b16 %v3711
        %v4829 = vunpack.c.l.b16 %v3712
        %v4830 = vunpack.c.h.b16 %v3712
        %v4831 = vunpack.c.l.b16 %v3713
        %v4832 = vunpack.c.h.b16 %v3713
        %v4833 = vunpack.c.l.b16 %v3714
        %v4834 = vunpack.c.h.b16 %v3714
        %v4835 = vunpack.c.l.b16 %v3715
        %v4836 = vunpack.c.h.b16 %v3715
        %v4837 = vunpack.c.l.b16 %v3716
        %v4838 = vunpack.c.h.b16 %v3716
        %v4839 = vunpack.c.l.b16 %v3717
        %v4840 = vunpack.c.h.b16 %v3717
        %v4841 = vunpack.c.l.b16 %v3718
        %v4842 = vunpack.c.h.b16 %v3718
        %v4843 = vunpack.c.l.b16 %v3719
        %v4844 = vunpack.c.h.b16 %v3719
        %v4845 = vunpack.c.l.b16 %v3720
        %v4846 = vunpack.c.h.b16 %v3720
        %v4847 = vunpack.c.l.b16 %v3721
        %v4848 = vunpack.c.h.b16 %v3721
        %v4849 = vunpack.c.l.b16 %v3722
        %v4850 = vunpack.c.h.b16 %v3722
        %v4851 = vunpack.c.l.b16 %v3723
        %v4852 = vunpack.c.h.b16 %v3723
        %v4853 = vunpack.c.l.b16 %v3724
        %v4854 = vunpack.c.h.b16 %v3724
        %v4855 = vunpack.c.l.b16 %v3725
        %v4856 = vunpack.c.h.b16 %v3725
        %v4857 = vunpack.c.l.b16 %v3726
        %v4858 = vunpack.c.h.b16 %v3726
        %v4859 = vunpack.c.l.b16 %v3727
        %v4860 = vunpack.c.h.b16 %v3727
        %v4861 = vunpack.c.l.b16 %v3728
        %v4862 = vunpack.c.h.b16 %v3728
        %v4863 = vunpack.c.l.b16 %v3729
        %v4864 = vunpack.c.h.b16 %v3729
        %v4865 = vunpack.c.l.b16 %v3730
        %v4866 = vunpack.c.h.b16 %v3730
        %v4867 = vunpack.c.l.b16 %v3731
        %v4868 = vunpack.c.h.b16 %v3731
        %v4869 = vunpack.c.l.b16 %v3732
        %v4870 = vunpack.c.h.b16 %v3732
        %v4871 = vunpack.c.l.b16 %v3733
        %v4872 = vunpack.c.h.b16 %v3733
        %v4873 = vunpack.c.l.b16 %v3734
        %v4874 = vunpack.c.h.b16 %v3734
        %v4875 = vunpack.c.l.b16 %v3735
        %v4876 = vunpack.c.h.b16 %v3735
        %v4877 = vunpack.c.l.b16 %v3736
        %v4878 = vunpack.c.h.b16 %v3736
        %v4879 = vunpack.c.l.b16 %v3737
        %v4880 = vunpack.c.h.b16 %v3737
        %v4881 = vunpack.c.l.b16 %v3738
        %v4882 = vunpack.c.h.b16 %v3738
        %v4883 = vunpack.c.l.b16 %v3739
        %v4884 = vunpack.c.h.b16 %v3739
        %v4885 = vunpack.c.l.b16 %v3740
        %v4886 = vunpack.c.h.b16 %v3740
        %v4887 = vunpack.c.l.b16 %v3741
        %v4888 = vunpack.c.h.b16 %v3741
        %v4889 = vunpack.c.l.b16 %v3742
        %v4890 = vunpack.c.h.b16 %v3742
        %v4891 = vunpack.c.l.b16 %v3743
        %v4892 = vunpack.c.h.b16 %v3743
        %v4893 = vunpack.c.l.b16 %v3744
        %v4894 = vunpack.c.h.b16 %v3744
        %v4895 = vunpack.c.l.b16 %v3745
        %v4896 = vunpack.c.h.b16 %v3745
        %v4897 = vunpack.c.l.b16 %v3746
        %v4898 = vunpack.c.h.b16 %v3746
        %v4899 = vunpack.c.l.b16 %v3747
        %v4900 = vunpack.c.h.b16 %v3747
        %v4901 = vunpack.c.l.b16 %v3748
        %v4902 = vunpack.c.h.b16 %v3748
        %v4903 = vunpack.c.l.b16 %v3749
        %v4904 = vunpack.c.h.b16 %v3749
        %v4905 = vunpack.c.l.b16 %v3750
        %v4906 = vunpack.c.h.b16 %v3750
        %v4907 = vunpack.c.l.b16 %v3751
        %v4908 = vunpack.c.h.b16 %v3751
        %v4909 = vunpack.c.l.b16 %v3752
        %v4910 = vunpack.c.h.b16 %v3752
        %v4911 = vunpack.c.l.b16 %v3753
        %v4912 = vunpack.c.h.b16 %v3753
        %v4913 = vunpack.c.l.b16 %v3754
        %v4914 = vunpack.c.h.b16 %v3754
        %v4915 = vunpack.c.l.b16 %v3755
        %v4916 = vunpack.c.h.b16 %v3755
        %v4917 = vunpack.c.l.b16 %v3756
        %v4918 = vunpack.c.h.b16 %v3756
        %v4919 = vunpack.c.l.b16 %v3757
        %v4920 = vunpack.c.h.b16 %v3757
        %v4921 = vunpack.c.l.b16 %v3758
        %v4922 = vunpack.c.h.b16 %v3758
        %v4923 = vunpack.c.l.b16 %v3759
        %v4924 = vunpack.c.h.b16 %v3759
        %v4925 = vunpack.c.l.b16 %v3760
        %v4926 = vunpack.c.h.b16 %v3760
        %v4927 = vunpack.c.l.b16 %v3761
        %v4928 = vunpack.c.h.b16 %v3761
        %v4929 = vunpack.c.l.b16 %v3762
        %v4930 = vunpack.c.h.b16 %v3762
        %v4931 = vunpack.c.l.b16 %v3763
        %v4932 = vunpack.c.h.b16 %v3763
        %v4933 = vunpack.c.l.b16 %v3764
        %v4934 = vunpack.c.h.b16 %v3764
        %v4935 = vunpack.c.l.b16 %v3765
        %v4936 = vunpack.c.h.b16 %v3765
        %v4937 = vunpack.c.l.b16 %v3766
        %v4938 = vunpack.c.h.b16 %v3766
        %v4939 = vunpack.c.l.b16 %v3767
        %v4940 = vunpack.c.h.b16 %v3767
        %v4941 = vunpack.c.l.b16 %v3768
        %v4942 = vunpack.c.h.b16 %v3768
        %v4943 = vunpack.c.l.b16 %v3769
        %v4944 = vunpack.c.h.b16 %v3769
        %v4945 = vunpack.c.l.b16 %v3770
        %v4946 = vunpack.c.h.b16 %v3770
        %v4947 = vunpack.c.l.b16 %v3771
        %v4948 = vunpack.c.h.b16 %v3771
        %v4949 = vunpack.c.l.b16 %v3772
        %v4950 = vunpack.c.h.b16 %v3772
        %v4951 = vunpack.c.l.b16 %v3773
        %v4952 = vunpack.c.h.b16 %v3773
        %v4953 = vunpack.c.l.b16 %v3774
        %v4954 = vunpack.c.h.b16 %v3774
        %v4955 = vunpack.c.l.b16 %v3775
        %v4956 = vunpack.c.h.b16 %v3775
        %v4957 = vunpack.c.l.b16 %v3776
        %v4958 = vunpack.c.h.b16 %v3776
        %v4959 = vunpack.c.l.b16 %v3777
        %v4960 = vunpack.c.h.b16 %v3777
        %v4961 = vunpack.c.l.b16 %v3778
        %v4962 = vunpack.c.h.b16 %v3778
        %v4963 = vunpack.c.l.b16 %v3779
        %v4964 = vunpack.c.h.b16 %v3779
        %v4965 = vunpack.c.l.b16 %v3780
        %v4966 = vunpack.c.h.b16 %v3780
        %v4967 = vunpack.c.l.b16 %v3781
        %v4968 = vunpack.c.h.b16 %v3781
        %v4969 = vunpack.c.l.b16 %v3782
        %v4970 = vunpack.c.h.b16 %v3782
        %v4971 = vunpack.c.l.b16 %v3783
        %v4972 = vunpack.c.h.b16 %v3783
        %v4973 = vunpack.c.l.b16 %v3784
        %v4974 = vunpack.c.h.b16 %v3784
        %v4975 = vunpack.c.l.b16 %v3785
        %v4976 = vunpack.c.h.b16 %v3785
        %v4977 = vunpack.c.l.b16 %v3786
        %v4978 = vunpack.c.h.b16 %v3786
        %v4979 = vunpack.c.l.b16 %v3787
        %v4980 = vunpack.c.h.b16 %v3787
        %v4981 = vunpack.c.l.b16 %v3788
        %v4982 = vunpack.c.h.b16 %v3788
        %v4983 = vunpack.c.l.b16 %v3789
        %v4984 = vunpack.c.h.b16 %v3789
        %v4985 = vunpack.c.l.b16 %v3790
        %v4986 = vunpack.c.h.b16 %v3790
        %v4987 = vunpack.c.l.b16 %v3791
        %v4988 = vunpack.c.h.b16 %v3791
        %v4989 = vunpack.c.l.b16 %v3792
        %v4990 = vunpack.c.h.b16 %v3792
        %v4991 = vunpack.c.l.b16 %v3793
        %v4992 = vunpack.c.h.b16 %v3793
        %v4993 = vunpack.c.l.b16 %v3794
        %v4994 = vunpack.c.h.b16 %v3794
        %v4995 = vunpack.c.l.b16 %v3795
        %v4996 = vunpack.c.h.b16 %v3795
        %v4997 = vunpack.c.l.b16 %v3796
        %v4998 = vunpack.c.h.b16 %v3796
        %v4999 = vunpack.c.l.b16 %v3797
        %v5000 = vunpack.c.h.b16 %v3797
        %v5001 = vunpack.c.l.b16 %v3798
        %v5002 = vunpack.c.h.b16 %v3798
        %v5003 = vunpack.c.l.b16 %v3799
        %v5004 = vunpack.c.h.b16 %v3799
        %v5005 = vunpack.c.l.b16 %v3800
        %v5006 = vunpack.c.h.b16 %v3800
        %v5007 = vunpack.c.l.b16 %v3801
        %v5008 = vunpack.c.h.b16 %v3801
        %v5009 = vunpack.c.l.b16 %v3802
        %v5010 = vunpack.c.h.b16 %v3802
        %v5011 = vunpack.c.l.b16 %v3803
        %v5012 = vunpack.c.h.b16 %v3803
        %v5013 = vunpack.c.l.b16 %v3804
        %v5014 = vunpack.c.h.b16 %v3804
        %v5015 = vunpack.c.l.b16 %v3805
        %v5016 = vunpack.c.h.b16 %v3805
        %v5017 = vunpack.c.l.b16 %v3806
        %v5018 = vunpack.c.h.b16 %v3806
        %v5019 = vunpack.c.l.b16 %v3807
        %v5020 = vunpack.c.h.b16 %v3807
        %v5021 = vunpack.c.l.b16 %v3808
        %v5022 = vunpack.c.h.b16 %v3808
        %v5023 = vunpack.c.l.b16 %v3809
        %v5024 = vunpack.c.h.b16 %v3809
        %v5025 = vunpack.c.l.b16 %v3810
        %v5026 = vunpack.c.h.b16 %v3810
        %v5027 = vunpack.c.l.b16 %v3811
        %v5028 = vunpack.c.h.b16 %v3811
        %v5029 = vunpack.c.l.b16 %v3812
        %v5030 = vunpack.c.h.b16 %v3812
        %v5031 = vunpack.c.l.b16 %v3813
        %v5032 = vunpack.c.h.b16 %v3813
        %v5033 = vunpack.c.l.b16 %v3814
        %v5034 = vunpack.c.h.b16 %v3814
        %v5035 = vunpack.c.l.b16 %v3815
        %v5036 = vunpack.c.h.b16 %v3815
        %v5037 = vunpack.c.l.b16 %v3816
        %v5038 = vunpack.c.h.b16 %v3816
        %v5039 = vunpack.c.l.b16 %v3817
        %v5040 = vunpack.c.h.b16 %v3817
        %v5041 = vunpack.c.l.b16 %v3818
        %v5042 = vunpack.c.h.b16 %v3818
        %v5043 = vunpack.c.l.b16 %v3819
        %v5044 = vunpack.c.h.b16 %v3819
        %v5045 = vunpack.c.l.b16 %v3820
        %v5046 = vunpack.c.h.b16 %v3820
        %v5047 = vunpack.c.l.b16 %v3821
        %v5048 = vunpack.c.h.b16 %v3821
        %v5049 = vunpack.c.l.b16 %v3822
        %v5050 = vunpack.c.h.b16 %v3822
        %v5051 = vunpack.c.l.b16 %v3823
        %v5052 = vunpack.c.h.b16 %v3823
        %v5053 = vunpack.c.l.b16 %v3824
        %v5054 = vunpack.c.h.b16 %v3824
        %v5055 = vunpack.c.l.b16 %v3825
        %v5056 = vunpack.c.h.b16 %v3825
        %v5057 = vunpack.c.l.b16 %v3826
        %v5058 = vunpack.c.h.b16 %v3826
        %v5059 = vunpack.c.l.b16 %v3827
        %v5060 = vunpack.c.h.b16 %v3827
        %v5061 = vunpack.c.l.b16 %v3828
        %v5062 = vunpack.c.h.b16 %v3828
        %v5063 = vunpack.c.l.b16 %v3829
        %v5064 = vunpack.c.h.b16 %v3829
        %v5065 = vunpack.c.l.b16 %v3830
        %v5066 = vunpack.c.h.b16 %v3830
        %v5067 = vunpack.c.l.b16 %v3831
        %v5068 = vunpack.c.h.b16 %v3831
        %v5069 = vunpack.c.l.b16 %v3832
        %v5070 = vunpack.c.h.b16 %v3832
        %v5071 = vunpack.c.l.b16 %v3833
        %v5072 = vunpack.c.h.b16 %v3833
        %v5073 = vunpack.c.l.b16 %v3834
        %v5074 = vunpack.c.h.b16 %v3834
        %v5075 = vunpack.c.l.b16 %v3835
        %v5076 = vunpack.c.h.b16 %v3835
        %v5077 = vunpack.c.l.b16 %v3836
        %v5078 = vunpack.c.h.b16 %v3836
        %v5079 = vunpack.c.l.b16 %v3837
        %v5080 = vunpack.c.h.b16 %v3837
        %v5081 = vunpack.c.l.b16 %v3838
        %v5082 = vunpack.c.h.b16 %v3838
        %v5083 = vunpack.c.l.b16 %v3839
        %v5084 = vunpack.c.h.b16 %v3839
        %v5085 = vunpack.c.l.b16 %v3840
        %v5086 = vunpack.c.h.b16 %v3840
        %v5087 = vunpack.c.l.b16 %v3841
        %v5088 = vunpack.c.h.b16 %v3841
        %v5089 = vunpack.c.l.b16 %v3842
        %v5090 = vunpack.c.h.b16 %v3842
        %v5091 = vunpack.c.l.b16 %v3843
        %v5092 = vunpack.c.h.b16 %v3843
        %v5093 = vunpack.c.l.b16 %v3844
        %v5094 = vunpack.c.h.b16 %v3844
        %v5095 = vunpack.c.l.b16 %v3845
        %v5096 = vunpack.c.h.b16 %v3845
        %v5097 = vunpack.c.l.b16 %v3846
        %v5098 = vunpack.c.h.b16 %v3846
        %v5099 = vunpack.c.l.b16 %v3847
        %v5100 = vunpack.c.h.b16 %v3847
        %v5101 = vunpack.c.l.b16 %v3848
        %v5102 = vunpack.c.h.b16 %v3848
        %v5103 = vunpack.c.l.b16 %v3849
        %v5104 = vunpack.c.h.b16 %v3849
        %v5105 = vunpack.c.l.b16 %v3850
        %v5106 = vunpack.c.h.b16 %v3850
        %v5107 = vunpack.c.l.b16 %v3851
        %v5108 = vunpack.c.h.b16 %v3851
        %v5109 = vunpack.c.l.b16 %v3852
        %v5110 = vunpack.c.h.b16 %v3852
        %v5111 = vunpack.c.l.b16 %v3853
        %v5112 = vunpack.c.h.b16 %v3853
        %v5113 = vunpack.c.l.b16 %v3854
        %v5114 = vunpack.c.h.b16 %v3854
        %v5115 = vunpack.c.l.b16 %v3855
        %v5116 = vunpack.c.h.b16 %v3855
        %v5117 = vunpack.c.l.b16 %v3856
        %v5118 = vunpack.c.h.b16 %v3856
        %v5119 = vunpack.c.l.b16 %v3857
        %v5120 = vunpack.c.h.b16 %v3857
        %v5121 = vunpack.c.l.b16 %v3858
        %v5122 = vunpack.c.h.b16 %v3858
        %v5123 = vunpack.c.l.b16 %v3859
        %v5124 = vunpack.c.h.b16 %v3859
        %v5125 = vunpack.c.l.b16 %v3860
        %v5126 = vunpack.c.h.b16 %v3860
        %v5127 = vunpack.c.l.b16 %v3861
        %v5128 = vunpack.c.h.b16 %v3861
        %v5129 = vunpack.c.l.b16 %v3862
        %v5130 = vunpack.c.h.b16 %v3862
        %v5131 = vunpack.c.l.b16 %v3863
        %v5132 = vunpack.c.h.b16 %v3863
        %v5133 = vunpack.c.l.b16 %v3864
        %v5134 = vunpack.c.h.b16 %v3864
        %v5135 = vunpack.c.l.b16 %v3865
        %v5136 = vunpack.c.h.b16 %v3865
        %v5137 = vunpack.c.l.b16 %v3866
        %v5138 = vunpack.c.h.b16 %v3866
        %v5139 = vunpack.c.l.b16 %v3867
        %v5140 = vunpack.c.h.b16 %v3867
        %v5141 = vunpack.c.l.b16 %v3868
        %v5142 = vunpack.c.h.b16 %v3868
        %v5143 = vunpack.c.l.b16 %v3869
        %v5144 = vunpack.c.h.b16 %v3869
        %v5145 = vunpack.c.l.b16 %v3870
        %v5146 = vunpack.c.h.b16 %v3870
        %v5147 = vunpack.c.l.b16 %v3871
        %v5148 = vunpack.c.h.b16 %v3871
        %v5149 = vunpack.c.l.b16 %v3872
        %v5150 = vunpack.c.h.b16 %v3872
        %v5151 = vunpack.c.l.b16 %v3873
        %v5152 = vunpack.c.h.b16 %v3873
        %v5153 = vunpack.c.l.b16 %v3874
        %v5154 = vunpack.c.h.b16 %v3874
        %v5155 = vunpack.c.l.b16 %v3875
        %v5156 = vunpack.c.h.b16 %v3875
        %v5157 = vunpack.c.l.b16 %v3876
        %v5158 = vunpack.c.h.b16 %v3876
        %v5159 = vunpack.c.l.b16 %v3877
        %v5160 = vunpack.c.h.b16 %v3877
        %v5161 = vunpack.c.l.b16 %v3878
        %v5162 = vunpack.c.h.b16 %v3878
        %v5163 = vpack.c.b16 %v4311, %v4307
        %v5164 = vpack.c.b16 %v4312, %v4308
        %v5165 = vpack.c.b16 %v4313, %v4309
        %v5166 = vpack.c.b16 %v4314, %v4310
        %v5167 = vpack.c.b16 %v4319, %v4315
        %v5168 = vpack.c.b16 %v4320, %v4316
        %v5169 = vpack.c.b16 %v4321, %v4317
        %v5170 = vpack.c.b16 %v4322, %v4318
        %v5171 = vpack.c.b16 %v4327, %v4323
        %v5172 = vpack.c.b16 %v4328, %v4324
        %v5173 = vpack.c.b16 %v4329, %v4325
        %v5174 = vpack.c.b16 %v4330, %v4326
        %v5175 = vpack.c.b16 %v4335, %v4331
        %v5176 = vpack.c.b16 %v4336, %v4332
        %v5177 = vpack.c.b16 %v4337, %v4333
        %v5178 = vpack.c.b16 %v4338, %v4334
        %v5179 = vpack.c.b16 %v4343, %v4339
        %v5180 = vpack.c.b16 %v4344, %v4340
        %v5181 = vpack.c.b16 %v4345, %v4341
        %v5182 = vpack.c.b16 %v4346, %v4342
        %v5183 = vpack.c.b16 %v4351, %v4347
        %v5184 = vpack.c.b16 %v4352, %v4348
        %v5185 = vpack.c.b16 %v4353, %v4349
        %v5186 = vpack.c.b16 %v4354, %v4350
        %v5187 = vpack.c.b16 %v4359, %v4355
        %v5188 = vpack.c.b16 %v4360, %v4356
        %v5189 = vpack.c.b16 %v4361, %v4357
        %v5190 = vpack.c.b16 %v4362, %v4358
        %v5191 = vpack.c.b16 %v4367, %v4363
        %v5192 = vpack.c.b16 %v4368, %v4364
        %v5193 = vpack.c.b16 %v4369, %v4365
        %v5194 = vpack.c.b16 %v4370, %v4366
        %v5195 = vpack.c.b16 %v4375, %v4371
        %v5196 = vpack.c.b16 %v4376, %v4372
        %v5197 = vpack.c.b16 %v4377, %v4373
        %v5198 = vpack.c.b16 %v4378, %v4374
        %v5199 = vpack.c.b16 %v4383, %v4379
        %v5200 = vpack.c.b16 %v4384, %v4380
        %v5201 = vpack.c.b16 %v4385, %v4381
        %v5202 = vpack.c.b16 %v4386, %v4382
        %v5203 = vpack.c.b16 %v4391, %v4387
        %v5204 = vpack.c.b16 %v4392, %v4388
        %v5205 = vpack.c.b16 %v4393, %v4389
        %v5206 = vpack.c.b16 %v4394, %v4390
        %v5207 = vpack.c.b16 %v4399, %v4395
        %v5208 = vpack.c.b16 %v4400, %v4396
        %v5209 = vpack.c.b16 %v4401, %v4397
        %v5210 = vpack.c.b16 %v4402, %v4398
        %v5211 = vpack.c.b16 %v4407, %v4403
        %v5212 = vpack.c.b16 %v4408, %v4404
        %v5213 = vpack.c.b16 %v4409, %v4405
        %v5214 = vpack.c.b16 %v4410, %v4406
        %v5215 = vpack.c.b16 %v4415, %v4411
        %v5216 = vpack.c.b16 %v4416, %v4412
        %v5217 = vpack.c.b16 %v4417, %v4413
        %v5218 = vpack.c.b16 %v4418, %v4414
        %v5219 = vpack.c.b16 %v4423, %v4419
        %v5220 = vpack.c.b16 %v4424, %v4420
        %v5221 = vpack.c.b16 %v4425, %v4421
        %v5222 = vpack.c.b16 %v4426, %v4422
        %v5223 = vpack.c.b16 %v4431, %v4427
        %v5224 = vpack.c.b16 %v4432, %v4428
        %v5225 = vpack.c.b16 %v4433, %v4429
        %v5226 = vpack.c.b16 %v4434, %v4430
        %v5227 = vpack.c.b16 %v4439, %v4435
        %v5228 = vpack.c.b16 %v4440, %v4436
        %v5229 = vpack.c.b16 %v4441, %v4437
        %v5230 = vpack.c.b16 %v4442, %v4438
        %v5231 = vpack.c.b16 %v4447, %v4443
        %v5232 = vpack.c.b16 %v4448, %v4444
        %v5233 = vpack.c.b16 %v4449, %v4445
        %v5234 = vpack.c.b16 %v4450, %v4446
        %v5235 = vpack.c.b16 %v4455, %v4451
        %v5236 = vpack.c.b16 %v4456, %v4452
        %v5237 = vpack.c.b16 %v4457, %v4453
        %v5238 = vpack.c.b16 %v4458, %v4454
        %v5239 = vpack.c.b16 %v4463, %v4459
        %v5240 = vpack.c.b16 %v4464, %v4460
        %v5241 = vpack.c.b16 %v4465, %v4461
        %v5242 = vpack.c.b16 %v4466, %v4462
        %v5243 = vpack.c.b16 %v4471, %v4467
        %v5244 = vpack.c.b16 %v4472, %v4468
        %v5245 = vpack.c.b16 %v4473, %v4469
        %v5246 = vpack.c.b16 %v4474, %v4470
        %v5247 = vpack.c.b16 %v4479, %v4475
        %v5248 = vpack.c.b16 %v4480, %v4476
        %v5249 = vpack.c.b16 %v4481, %v4477
        %v5250 = vpack.c.b16 %v4482, %v4478
        %v5251 = vpack.c.b16 %v4487, %v4483
        %v5252 = vpack.c.b16 %v4488, %v4484
        %v5253 = vpack.c.b16 %v4489, %v4485
        %v5254 = vpack.c.b16 %v4490, %v4486
        %v5255 = vpack.c.b16 %v4495, %v4491
        %v5256 = vpack.c.b16 %v4496, %v4492
        %v5257 = vpack.c.b16 %v4497, %v4493
        %v5258 = vpack.c.b16 %v4498, %v4494
        %v5259 = vpack.c.b16 %v4503, %v4499
        %v5260 = vpack.c.b16 %v4504, %v4500
        %v5261 = vpack.c.b16 %v4505, %v4501
        %v5262 = vpack.c.b16 %v4506, %v4502
        %v5263 = vpack.c.b16 %v4511, %v4507
        %v5264 = vpack.c.b16 %v4512, %v4508
        %v5265 = vpack.c.b16 %v4513, %v4509
        %v5266 = vpack.c.b16 %v4514, %v4510
        %v5267 = vpack.c.b16 %v4519, %v4515
        %v5268 = vpack.c.b16 %v4520, %v4516
        %v5269 = vpack.c.b16 %v4521, %v4517
        %v5270 = vpack.c.b16 %v4522, %v4518
        %v5271 = vpack.c.b16 %v4527, %v4523
        %v5272 = vpack.c.b16 %v4528, %v4524
        %v5273 = vpack.c.b16 %v4529, %v4525
        %v5274 = vpack.c.b16 %v4530, %v4526
        %v5275 = vpack.c.b16 %v4535, %v4531
        %v5276 = vpack.c.b16 %v4536, %v4532
        %v5277 = vpack.c.b16 %v4537, %v4533
        %v5278 = vpack.c.b16 %v4538, %v4534
        %v5279 = vpack.c.b16 %v4543, %v4539
        %v5280 = vpack.c.b16 %v4544, %v4540
        %v5281 = vpack.c.b16 %v4545, %v4541
        %v5282 = vpack.c.b16 %v4546, %v4542
        %v5283 = vpack.c.b16 %v4551, %v4547
        %v5284 = vpack.c.b16 %v4552, %v4548
        %v5285 = vpack.c.b16 %v4553, %v4549
        %v5286 = vpack.c.b16 %v4554, %v4550
        %v5287 = vpack.c.b16 %v4559, %v4555
        %v5288 = vpack.c.b16 %v4560, %v4556
        %v5289 = vpack.c.b16 %v4561, %v4557
        %v5290 = vpack.c.b16 %v4562, %v4558
        %v5291 = vpack.c.b16 %v4567, %v4563
        %v5292 = vpack.c.b16 %v4568, %v4564
        %v5293 = vpack.c.b16 %v4569, %v4565
        %v5294 = vpack.c.b16 %v4570, %v4566
        %v5295 = vpack.c.b16 %v4575, %v4571
        %v5296 = vpack.c.b16 %v4576, %v4572
        %v5297 = vpack.c.b16 %v4577, %v4573
        %v5298 = vpack.c.b16 %v4578, %v4574
        %v5299 = vpack.c.b16 %v4583, %v4579
        %v5300 = vpack.c.b16 %v4584, %v4580
        %v5301 = vpack.c.b16 %v4585, %v4581
        %v5302 = vpack.c.b16 %v4586, %v4582
        %v5303 = vpack.c.b16 %v4591, %v4587
        %v5304 = vpack.c.b16 %v4592, %v4588
        %v5305 = vpack.c.b16 %v4593, %v4589
        %v5306 = vpack.c.b16 %v4594, %v4590
        %v5307 = vpack.c.b16 %v4599, %v4595
        %v5308 = vpack.c.b16 %v4600, %v4596
        %v5309 = vpack.c.b16 %v4601, %v4597
        %v5310 = vpack.c.b16 %v4602, %v4598
        %v5311 = vpack.c.b16 %v4607, %v4603
        %v5312 = vpack.c.b16 %v4608, %v4604
        %v5313 = vpack.c.b16 %v4609, %v4605
        %v5314 = vpack.c.b16 %v4610, %v4606
        %v5315 = vpack.c.b16 %v4615, %v4611
        %v5316 = vpack.c.b16 %v4616, %v4612
        %v5317 = vpack.c.b16 %v4617, %v4613
        %v5318 = vpack.c.b16 %v4618, %v4614
        %v5319 = vpack.c.b16 %v4623, %v4619
        %v5320 = vpack.c.b16 %v4624, %v4620
        %v5321 = vpack.c.b16 %v4625, %v4621
        %v5322 = vpack.c.b16 %v4626, %v4622
        %v5323 = vpack.c.b16 %v4631, %v4627
        %v5324 = vpack.c.b16 %v4632, %v4628
        %v5325 = vpack.c.b16 %v4633, %v4629
        %v5326 = vpack.c.b16 %v4634, %v4630
        %v5327 = vpack.c.b16 %v4639, %v4635
        %v5328 = vpack.c.b16 %v4640, %v4636
        %v5329 = vpack.c.b16 %v4641, %v4637
        %v5330 = vpack.c.b16 %v4642, %v4638
        %v5331 = vpack.c.b16 %v4647, %v4643
        %v5332 = vpack.c.b16 %v4648, %v4644
        %v5333 = vpack.c.b16 %v4649, %v4645
        %v5334 = vpack.c.b16 %v4650, %v4646
        %v5335 = vpack.c.b16 %v4655, %v4651
        %v5336 = vpack.c.b16 %v4656, %v4652
        %v5337 = vpack.c.b16 %v4657, %v4653
        %v5338 = vpack.c.b16 %v4658, %v4654
        %v5339 = vpack.c.b16 %v4663, %v4659
        %v5340 = vpack.c.b16 %v4664, %v4660
        %v5341 = vpack.c.b16 %v4665, %v4661
        %v5342 = vpack.c.b16 %v4666, %v4662
        %v5343 = vpack.c.b16 %v4671, %v4667
        %v5344 = vpack.c.b16 %v4672, %v4668
        %v5345 = vpack.c.b16 %v4673, %v4669
        %v5346 = vpack.c.b16 %v4674, %v4670
        %v5347 = vpack.c.b16 %v4679, %v4675
        %v5348 = vpack.c.b16 %v4680, %v4676
        %v5349 = vpack.c.b16 %v4681, %v4677
        %v5350 = vpack.c.b16 %v4682, %v4678
        %v5351 = vpack.c.b16 %v4687, %v4683
        %v5352 = vpack.c.b16 %v4688, %v4684
        %v5353 = vpack.c.b16 %v4689, %v4685
        %v5354 = vpack.c.b16 %v4690, %v4686
        %v5355 = vpack.c.b16 %v4695, %v4691
        %v5356 = vpack.c.b16 %v4696, %v4692
        %v5357 = vpack.c.b16 %v4697, %v4693
        %v5358 = vpack.c.b16 %v4698, %v4694
        %v5359 = vpack.c.b16 %v4703, %v4699
        %v5360 = vpack.c.b16 %v4704, %v4700
        %v5361 = vpack.c.b16 %v4705, %v4701
        %v5362 = vpack.c.b16 %v4706, %v4702
        %v5363 = vpack.c.b16 %v4711, %v4707
        %v5364 = vpack.c.b16 %v4712, %v4708
        %v5365 = vpack.c.b16 %v4713, %v4709
        %v5366 = vpack.c.b16 %v4714, %v4710
        %v5367 = vpack.c.b16 %v4719, %v4715
        %v5368 = vpack.c.b16 %v4720, %v4716
        %v5369 = vpack.c.b16 %v4721, %v4717
        %v5370 = vpack.c.b16 %v4722, %v4718
        %v5371 = vpack.c.b16 %v4727, %v4723
        %v5372 = vpack.c.b16 %v4728, %v4724
        %v5373 = vpack.c.b16 %v4729, %v4725
        %v5374 = vpack.c.b16 %v4730, %v4726
        %v5375 = vpack.c.b16 %v4735, %v4731
        %v5376 = vpack.c.b16 %v4736, %v4732
        %v5377 = vpack.c.b16 %v4737, %v4733
        %v5378 = vpack.c.b16 %v4738, %v4734
        %v5379 = vpack.c.b16 %v4743, %v4739
        %v5380 = vpack.c.b16 %v4744, %v4740
        %v5381 = vpack.c.b16 %v4745, %v4741
        %v5382 = vpack.c.b16 %v4746, %v4742
        %v5383 = vpack.c.b16 %v4751, %v4747
        %v5384 = vpack.c.b16 %v4752, %v4748
        %v5385 = vpack.c.b16 %v4753, %v4749
        %v5386 = vpack.c.b16 %v4754, %v4750
        %v5387 = vpack.c.b16 %v4759, %v4755
        %v5388 = vpack.c.b16 %v4760, %v4756
        %v5389 = vpack.c.b16 %v4761, %v4757
        %v5390 = vpack.c.b16 %v4762, %v4758
        %v5391 = vpack.c.b16 %v4767, %v4763
        %v5392 = vpack.c.b16 %v4768, %v4764
        %v5393 = vpack.c.b16 %v4769, %v4765
        %v5394 = vpack.c.b16 %v4770, %v4766
        %v5395 = vpack.c.b16 %v4775, %v4771
        %v5396 = vpack.c.b16 %v4776, %v4772
        %v5397 = vpack.c.b16 %v4777, %v4773
        %v5398 = vpack.c.b16 %v4778, %v4774
        %v5399 = vpack.c.b16 %v4783, %v4779
        %v5400 = vpack.c.b16 %v4784, %v4780
        %v5401 = vpack.c.b16 %v4785, %v4781
        %v5402 = vpack.c.b16 %v4786, %v4782
        %v5403 = vpack.c.b16 %v4791, %v4787
        %v5404 = vpack.c.b16 %v4792, %v4788
        %v5405 = vpack.c.b16 %v4793, %v4789
        %v5406 = vpack.c.b16 %v4794, %v4790
        %v5407 = vpack.c.b16 %v4799, %v4795
        %v5408 = vpack.c.b16 %v4800, %v4796
        %v5409 = vpack.c.b16 %v4801, %v4797
        %v5410 = vpack.c.b16 %v4802, %v4798
        %v5411 = vpack.c.b16 %v4807, %v4803
        %v5412 = vpack.c.b16 %v4808, %v4804
        %v5413 = vpack.c.b16 %v4809, %v4805
        %v5414 = vpack.c.b16 %v4810, %v4806
        %v5415 = vpack.c.b16 %v4815, %v4811
        %v5416 = vpack.c.b16 %v4816, %v4812
        %v5417 = vpack.c.b16 %v4817, %v4813
        %v5418 = vpack.c.b16 %v4818, %v4814
        %v5419 = vpack.c.b16 %v4823, %v4819
        %v5420 = vpack.c.b16 %v4824, %v4820
        %v5421 = vpack.c.b16 %v4825, %v4821
        %v5422 = vpack.c.b16 %v4826, %v4822
        %v5423 = vpack.c.b16 %v4831, %v4827
        %v5424 = vpack.c.b16 %v4832, %v4828
        %v5425 = vpack.c.b16 %v4833, %v4829
        %v5426 = vpack.c.b16 %v4834, %v4830
        %v5427 = vpack.c.b16 %v4839, %v4835
        %v5428 = vpack.c.b16 %v4840, %v4836
        %v5429 = vpack.c.b16 %v4841, %v4837
        %v5430 = vpack.c.b16 %v4842, %v4838
        %v5431 = vpack.c.b16 %v4847, %v4843
        %v5432 = vpack.c.b16 %v4848, %v4844
        %v5433 = vpack.c.b16 %v4849, %v4845
        %v5434 = vpack.c.b16 %v4850, %v4846
        %v5435 = vpack.c.b16 %v4855, %v4851
        %v5436 = vpack.c.b16 %v4856, %v4852
        %v5437 = vpack.c.b16 %v4857, %v4853
        %v5438 = vpack.c.b16 %v4858, %v4854
        %v5439 = vpack.c.b16 %v4863, %v4859
        %v5440 = vpack.c.b16 %v4864, %v4860
        %v5441 = vpack.c.b16 %v4865, %v4861
        %v5442 = vpack.c.b16 %v4866, %v4862
        %v5443 = vpack.c.b16 %v4871, %v4867
        %v5444 = vpack.c.b16 %v4872, %v4868
        %v5445 = vpack.c.b16 %v4873, %v4869
        %v5446 = vpack.c.b16 %v4874, %v4870
        %v5447 = vpack.c.b16 %v4879, %v4875
        %v5448 = vpack.c.b16 %v4880, %v4876
        %v5449 = vpack.c.b16 %v4881, %v4877
        %v5450 = vpack.c.b16 %v4882, %v4878
        %v5451 = vpack.c.b16 %v4887, %v4883
        %v5452 = vpack.c.b16 %v4888, %v4884
        %v5453 = vpack.c.b16 %v4889, %v4885
        %v5454 = vpack.c.b16 %v4890, %v4886
        %v5455 = vpack.c.b16 %v4895, %v4891
        %v5456 = vpack.c.b16 %v4896, %v4892
        %v5457 = vpack.c.b16 %v4897, %v4893
        %v5458 = vpack.c.b16 %v4898, %v4894
        %v5459 = vpack.c.b16 %v4903, %v4899
        %v5460 = vpack.c.b16 %v4904, %v4900
        %v5461 = vpack.c.b16 %v4905, %v4901
        %v5462 = vpack.c.b16 %v4906, %v4902
        %v5463 = vpack.c.b16 %v4911, %v4907
        %v5464 = vpack.c.b16 %v4912, %v4908
        %v5465 = vpack.c.b16 %v4913, %v4909
        %v5466 = vpack.c.b16 %v4914, %v4910
        %v5467 = vpack.c.b16 %v4919, %v4915
        %v5468 = vpack.c.b16 %v4920, %v4916
        %v5469 = vpack.c.b16 %v4921, %v4917
        %v5470 = vpack.c.b16 %v4922, %v4918
        %v5471 = vpack.c.b16 %v4927, %v4923
        %v5472 = vpack.c.b16 %v4928, %v4924
        %v5473 = vpack.c.b16 %v4929, %v4925
        %v5474 = vpack.c.b16 %v4930, %v4926
        %v5475 = vpack.c.b16 %v4935, %v4931
        %v5476 = vpack.c.b16 %v4936, %v4932
        %v5477 = vpack.c.b16 %v4937, %v4933
        %v5478 = vpack.c.b16 %v4938, %v4934
        %v5479 = vpack.c.b16 %v4943, %v4939
        %v5480 = vpack.c.b16 %v4944, %v4940
        %v5481 = vpack.c.b16 %v4945, %v4941
        %v5482 = vpack.c.b16 %v4946, %v4942
        %v5483 = vpack.c.b16 %v4951, %v4947
        %v5484 = vpack.c.b16 %v4952, %v4948
        %v5485 = vpack.c.b16 %v4953, %v4949
        %v5486 = vpack.c.b16 %v4954, %v4950
        %v5487 = vpack.c.b16 %v4959, %v4955
        %v5488 = vpack.c.b16 %v4960, %v4956
        %v5489 = vpack.c.b16 %v4961, %v4957
        %v5490 = vpack.c.b16 %v4962, %v4958
        %v5491 = vpack.c.b16 %v4967, %v4963
        %v5492 = vpack.c.b16 %v4968, %v4964
        %v5493 = vpack.c.b16 %v4969, %v4965
        %v5494 = vpack.c.b16 %v4970, %v4966
        %v5495 = vpack.c.b16 %v4975, %v4971
        %v5496 = vpack.c.b16 %v4976, %v4972
        %v5497 = vpack.c.b16 %v4977, %v4973
        %v5498 = vpack.c.b16 %v4978, %v4974
        %v5499 = vpack.c.b16 %v4983, %v4979
        %v5500 = vpack.c.b16 %v4984, %v4980
        %v5501 = vpack.c.b16 %v4985, %v4981
        %v5502 = vpack.c.b16 %v4986, %v4982
        %v5503 = vpack.c.b16 %v4991, %v4987
        %v5504 = vpack.c.b16 %v4992, %v4988
        %v5505 = vpack.c.b16 %v4993, %v4989
        %v5506 = vpack.c.b16 %v4994, %v4990
        %v5507 = vpack.c.b16 %v4999, %v4995
        %v5508 = vpack.c.b16 %v5000, %v4996
        %v5509 = vpack.c.b16 %v5001, %v4997
        %v5510 = vpack.c.b16 %v5002, %v4998
        %v5511 = vpack.c.b16 %v5007, %v5003
        %v5512 = vpack.c.b16 %v5008, %v5004
        %v5513 = vpack.c.b16 %v5009, %v5005
        %v5514 = vpack.c.b16 %v5010, %v5006
        %v5515 = vpack.c.b16 %v5015, %v5011
        %v5516 = vpack.c.b16 %v5016, %v5012
        %v5517 = vpack.c.b16 %v5017, %v5013
        %v5518 = vpack.c.b16 %v5018, %v5014
        %v5519 = vpack.c.b16 %v5023, %v5019
        %v5520 = vpack.c.b16 %v5024, %v5020
        %v5521 = vpack.c.b16 %v5025, %v5021
        %v5522 = vpack.c.b16 %v5026, %v5022
        %v5523 = vpack.c.b16 %v5031, %v5027
        %v5524 = vpack.c.b16 %v5032, %v5028
        %v5525 = vpack.c.b16 %v5033, %v5029
        %v5526 = vpack.c.b16 %v5034, %v5030
        %v5527 = vpack.c.b16 %v5039, %v5035
        %v5528 = vpack.c.b16 %v5040, %v5036
        %v5529 = vpack.c.b16 %v5041, %v5037
        %v5530 = vpack.c.b16 %v5042, %v5038
        %v5531 = vpack.c.b16 %v5047, %v5043
        %v5532 = vpack.c.b16 %v5048, %v5044
        %v5533 = vpack.c.b16 %v5049, %v5045
        %v5534 = vpack.c.b16 %v5050, %v5046
        %v5535 = vpack.c.b16 %v5055, %v5051
        %v5536 = vpack.c.b16 %v5056, %v5052
        %v5537 = vpack.c.b16 %v5057, %v5053
        %v5538 = vpack.c.b16 %v5058, %v5054
        %v5539 = vpack.c.b16 %v5063, %v5059
        %v5540 = vpack.c.b16 %v5064, %v5060
        %v5541 = vpack.c.b16 %v5065, %v5061
        %v5542 = vpack.c.b16 %v5066, %v5062
        %v5543 = vpack.c.b16 %v5071, %v5067
        %v5544 = vpack.c.b16 %v5072, %v5068
        %v5545 = vpack.c.b16 %v5073, %v5069
        %v5546 = vpack.c.b16 %v5074, %v5070
        %v5547 = vpack.c.b16 %v5079, %v5075
        %v5548 = vpack.c.b16 %v5080, %v5076
        %v5549 = vpack.c.b16 %v5081, %v5077
        %v5550 = vpack.c.b16 %v5082, %v5078
        %v5551 = vpack.c.b16 %v5087, %v5083
        %v5552 = vpack.c.b16 %v5088, %v5084
        %v5553 = vpack.c.b16 %v5089, %v5085
        %v5554 = vpack.c.b16 %v5090, %v5086
        %v5555 = vpack.c.b16 %v5095, %v5091
        %v5556 = vpack.c.b16 %v5096, %v5092
        %v5557 = vpack.c.b16 %v5097, %v5093
        %v5558 = vpack.c.b16 %v5098, %v5094
        %v5559 = vpack.c.b16 %v5103, %v5099
        %v5560 = vpack.c.b16 %v5104, %v5100
        %v5561 = vpack.c.b16 %v5105, %v5101
        %v5562 = vpack.c.b16 %v5106, %v5102
        %v5563 = vpack.c.b16 %v5111, %v5107
        %v5564 = vpack.c.b16 %v5112, %v5108
        %v5565 = vpack.c.b16 %v5113, %v5109
        %v5566 = vpack.c.b16 %v5114, %v5110
        %v5567 = vpack.c.b16 %v5119, %v5115
        %v5568 = vpack.c.b16 %v5120, %v5116
        %v5569 = vpack.c.b16 %v5121, %v5117
        %v5570 = vpack.c.b16 %v5122, %v5118
        %v5571 = vpack.c.b16 %v5127, %v5123
        %v5572 = vpack.c.b16 %v5128, %v5124
        %v5573 = vpack.c.b16 %v5129, %v5125
        %v5574 = vpack.c.b16 %v5130, %v5126
        %v5575 = vpack.c.b16 %v5135, %v5131
        %v5576 = vpack.c.b16 %v5136, %v5132
        %v5577 = vpack.c.b16 %v5137, %v5133
        %v5578 = vpack.c.b16 %v5138, %v5134
        %v5579 = vpack.c.b16 %v5143, %v5139
        %v5580 = vpack.c.b16 %v5144, %v5140
        %v5581 = vpack.c.b16 %v5145, %v5141
        %v5582 = vpack.c.b16 %v5146, %v5142
        %v5583 = vpack.c.b16 %v5151, %v5147
        %v5584 = vpack.c.b16 %v5152, %v5148
        %v5585 = vpack.c.b16 %v5153, %v5149
        %v5586 = vpack.c.b16 %v5154, %v5150
        %v5587 = vpack.c.b16 %v5159, %v5155
        %v5588 = vpack.c.b16 %v5160, %v5156
        %v5589 = vpack.c.b16 %v5161, %v5157
        %v5590 = vpack.c.b16 %v5162, %v5158
        %vm6015 = vcmask 384000
        %v6017 = vsel %vm6015, %v3450, 0
        %vm6019 = vcmask 1046528
        %vm6020 = vcmask 1047552
        %v6021 = vsel %vm6019, 4294967295, 65535
        %v6022 = vsel %vm6020, %v6021, 0
        %v6024 = vand.u32 %v5587, %v6022
        %v6027 = vand.u32 %v5588, %v6022
        %v6030 = vand.u32 %v5589, %v6022
        %v6033 = vand.u32 %v5590, %v6022
        %6035 = vmatprep.subr.bf16.mxu0 %v5164
        %6036 = vmatpush1.bf16.msra.mxu0 %v5163
        %6037 = vmatprep.subr.bf16.mxu0 %v5168
        %6038 = vmatpush1.bf16.msra.mxu0 %v5167
        %6039 = vmatprep.subr.bf16.mxu0 %v5172
        %6040 = vmatpush1.bf16.msra.mxu0 %v5171
        %6041 = vmatprep.subr.bf16.mxu0 %v5176
        %6042 = vmatpush1.bf16.msra.mxu0 %v5175
        %6043 = vmatprep.subr.bf16.mxu0 %v5180
        %6044 = vmatpush1.bf16.msra.mxu0 %v5179
        %6045 = vmatprep.subr.bf16.mxu0 %v5184
        %6046 = vmatpush1.bf16.msra.mxu0 %v5183
        %6047 = vmatprep.subr.bf16.mxu0 %v5188
        %6048 = vmatpush1.bf16.msra.mxu0 %v5187
        %6049 = vmatprep.subr.bf16.mxu0 %v5192
        %6050 = vmatpush1.bf16.msra.mxu0 %v5191
        %6051 = vmatprep.subr.bf16.mxu0 %v5196
        %6052 = vmatpush1.bf16.msra.mxu0 %v5195
        %6053 = vmatprep.subr.bf16.mxu0 %v5200
        %6054 = vmatpush1.bf16.msra.mxu0 %v5199
        %6055 = vmatprep.subr.bf16.mxu0 %v5204
        %6056 = vmatpush1.bf16.msra.mxu0 %v5203
        %6057 = vmatprep.subr.bf16.mxu0 %v5208
        %6058 = vmatpush1.bf16.msra.mxu0 %v5207
        %6059 = vmatprep.subr.bf16.mxu0 %v5212
        %6060 = vmatpush1.bf16.msra.mxu0 %v5211
        %6061 = vmatprep.subr.bf16.mxu0 %v5216
        %6062 = vmatpush1.bf16.msra.mxu0 %v5215
        %6063 = vmatprep.subr.bf16.mxu0 %v5220
        %6064 = vmatpush1.bf16.msra.mxu0 %v5219
        %6065 = vmatprep.subr.bf16.mxu0 %v5224
        %6066 = vmatpush1.bf16.msra.mxu0 %v5223
        %6067 = vmatprep.mubr.bf16.mxu0 %v3438
        %6068 = vmatmul.mubr.bf16.gmra.mrb[0].mxu0 %v3437
        %v6069 = vpop.f32.mrb[0].mxu0
        %v6070 = vadd.f32 0.0, %v6069
        %v6071 = vpop.f32.mrb[0].mxu0
        %v6072 = vadd.f32 0.0, %v6071
        %v6073 = vpop.f32.mrb[0].mxu0
        %v6074 = vadd.f32 0.0, %v6073
        %v6075 = vpop.f32.mrb[0].mxu0
        %v6076 = vadd.f32 0.0, %v6075
        %6077 = vdwg.mxu0
        %6078 = vmatprep.subr.bf16.mxu0 %v5228
        %6079 = vmatpush1.bf16.msra.mxu0 %v5227
        %6080 = vmatprep.subr.bf16.mxu0 %v5232
        %6081 = vmatpush1.bf16.msra.mxu0 %v5231
        %6082 = vmatprep.subr.bf16.mxu0 %v5236
        %6083 = vmatpush1.bf16.msra.mxu0 %v5235
        %6084 = vmatprep.subr.bf16.mxu0 %v5240
        %6085 = vmatpush1.bf16.msra.mxu0 %v5239
        %6086 = vmatprep.subr.bf16.mxu0 %v5244
        %6087 = vmatpush1.bf16.msra.mxu0 %v5243
        %6088 = vmatprep.subr.bf16.mxu0 %v5248
        %6089 = vmatpush1.bf16.msra.mxu0 %v5247
        %6090 = vmatprep.subr.bf16.mxu0 %v5252
        %6091 = vmatpush1.bf16.msra.mxu0 %v5251
        %6092 = vmatprep.subr.bf16.mxu0 %v5256
        %6093 = vmatpush1.bf16.msra.mxu0 %v5255
        %6094 = vmatprep.subr.bf16.mxu0 %v5260
        %6095 = vmatpush1.bf16.msra.mxu0 %v5259
        %6096 = vmatprep.subr.bf16.mxu0 %v5264
        %6097 = vmatpush1.bf16.msra.mxu0 %v5263
        %6098 = vmatprep.subr.bf16.mxu0 %v5268
        %6099 = vmatpush1.bf16.msra.mxu0 %v5267
        %6100 = vmatprep.subr.bf16.mxu0 %v5272
        %6101 = vmatpush1.bf16.msra.mxu0 %v5271
        %6102 = vmatprep.subr.bf16.mxu0 %v5276
        %6103 = vmatpush1.bf16.msra.mxu0 %v5275
        %6104 = vmatprep.subr.bf16.mxu0 %v5280
        %6105 = vmatpush1.bf16.msra.mxu0 %v5279
        %6106 = vmatprep.subr.bf16.mxu0 %v5284
        %6107 = vmatpush1.bf16.msra.mxu0 %v5283
        %6108 = vmatprep.subr.bf16.mxu0 %v5288
        %6109 = vmatpush1.bf16.msra.mxu0 %v5287
        %6110 = vmatprep.mubr.bf16.mxu0 %v3440
        %6111 = vmatmul.mubr.bf16.gmra.mrb[0].mxu0 %v3439
        %v6112 = vpop.f32.mrb[0].mxu0
        %v6113 = vadd.f32 %v6070, %v6112
        %v6114 = vpop.f32.mrb[0].mxu0
        %v6115 = vadd.f32 %v6072, %v6114
        %v6116 = vpop.f32.mrb[0].mxu0
        %v6117 = vadd.f32 %v6074, %v6116
        %v6118 = vpop.f32.mrb[0].mxu0
        %v6119 = vadd.f32 %v6076, %v6118
        %6120 = vdwg.mxu0
        %6121 = vmatprep.subr.bf16.mxu0 %v5292
        %6122 = vmatpush1.bf16.msra.mxu0 %v5291
        %6123 = vmatprep.subr.bf16.mxu0 %v5296
        %6124 = vmatpush1.bf16.msra.mxu0 %v5295
        %6125 = vmatprep.subr.bf16.mxu0 %v5300
        %6126 = vmatpush1.bf16.msra.mxu0 %v5299
        %6127 = vmatprep.subr.bf16.mxu0 %v5304
        %6128 = vmatpush1.bf16.msra.mxu0 %v5303
        %6129 = vmatprep.subr.bf16.mxu0 %v5308
        %6130 = vmatpush1.bf16.msra.mxu0 %v5307
        %6131 = vmatprep.subr.bf16.mxu0 %v5312
        %6132 = vmatpush1.bf16.msra.mxu0 %v5311
        %6133 = vmatprep.subr.bf16.mxu0 %v5316
        %6134 = vmatpush1.bf16.msra.mxu0 %v5315
        %6135 = vmatprep.subr.bf16.mxu0 %v5320
        %6136 = vmatpush1.bf16.msra.mxu0 %v5319
        %6137 = vmatprep.subr.bf16.mxu0 %v5324
        %6138 = vmatpush1.bf16.msra.mxu0 %v5323
        %6139 = vmatprep.subr.bf16.mxu0 %v5328
        %6140 = vmatpush1.bf16.msra.mxu0 %v5327
        %6141 = vmatprep.subr.bf16.mxu0 %v5332
        %6142 = vmatpush1.bf16.msra.mxu0 %v5331
        %6143 = vmatprep.subr.bf16.mxu0 %v5336
        %6144 = vmatpush1.bf16.msra.mxu0 %v5335
        %6145 = vmatprep.subr.bf16.mxu0 %v5340
        %6146 = vmatpush1.bf16.msra.mxu0 %v5339
        %6147 = vmatprep.subr.bf16.mxu0 %v5344
        %6148 = vmatpush1.bf16.msra.mxu0 %v5343
        %6149 = vmatprep.subr.bf16.mxu0 %v5348
        %6150 = vmatpush1.bf16.msra.mxu0 %v5347
        %6151 = vmatprep.subr.bf16.mxu0 %v5352
        %6152 = vmatpush1.bf16.msra.mxu0 %v5351
        %6153 = vmatprep.mubr.bf16.mxu0 %v3442
        %6154 = vmatmul.mubr.bf16.gmra.mrb[0].mxu0 %v3441
        %v6155 = vpop.f32.mrb[0].mxu0
        %v6156 = vadd.f32 %v6113, %v6155
        %v6157 = vpop.f32.mrb[0].mxu0
        %v6158 = vadd.f32 %v6115, %v6157
        %v6159 = vpop.f32.mrb[0].mxu0
        %v6160 = vadd.f32 %v6117, %v6159
        %v6161 = vpop.f32.mrb[0].mxu0
        %v6162 = vadd.f32 %v6119, %v6161
        %6163 = vdwg.mxu0
        %6164 = vmatprep.subr.bf16.mxu0 %v5356
        %6165 = vmatpush1.bf16.msra.mxu0 %v5355
        %6166 = vmatprep.subr.bf16.mxu0 %v5360
        %6167 = vmatpush1.bf16.msra.mxu0 %v5359
        %6168 = vmatprep.subr.bf16.mxu0 %v5364
        %6169 = vmatpush1.bf16.msra.mxu0 %v5363
        %6170 = vmatprep.subr.bf16.mxu0 %v5368
        %6171 = vmatpush1.bf16.msra.mxu0 %v5367
        %6172 = vmatprep.subr.bf16.mxu0 %v5372
        %6173 = vmatpush1.bf16.msra.mxu0 %v5371
        %6174 = vmatprep.subr.bf16.mxu0 %v5376
        %6175 = vmatpush1.bf16.msra.mxu0 %v5375
        %6176 = vmatprep.subr.bf16.mxu0 %v5380
        %6177 = vmatpush1.bf16.msra.mxu0 %v5379
        %6178 = vmatprep.subr.bf16.mxu0 %v5384
        %6179 = vmatpush1.bf16.msra.mxu0 %v5383
        %6180 = vmatprep.subr.bf16.mxu0 %v5388
        %6181 = vmatpush1.bf16.msra.mxu0 %v5387
        %6182 = vmatprep.subr.bf16.mxu0 %v5392
        %6183 = vmatpush1.bf16.msra.mxu0 %v5391
        %6184 = vmatprep.subr.bf16.mxu0 %v5396
        %6185 = vmatpush1.bf16.msra.mxu0 %v5395
        %6186 = vmatprep.subr.bf16.mxu0 %v5400
        %6187 = vmatpush1.bf16.msra.mxu0 %v5399
        %6188 = vmatprep.subr.bf16.mxu0 %v5404
        %6189 = vmatpush1.bf16.msra.mxu0 %v5403
        %6190 = vmatprep.subr.bf16.mxu0 %v5408
        %6191 = vmatpush1.bf16.msra.mxu0 %v5407
        %6192 = vmatprep.subr.bf16.mxu0 %v5412
        %6193 = vmatpush1.bf16.msra.mxu0 %v5411
        %6194 = vmatprep.subr.bf16.mxu0 %v5416
        %6195 = vmatpush1.bf16.msra.mxu0 %v5415
        %6196 = vmatprep.mubr.bf16.mxu0 %v3444
        %6197 = vmatmul.mubr.bf16.gmra.mrb[0].mxu0 %v3443
        %v6198 = vpop.f32.mrb[0].mxu0
        %v6199 = vadd.f32 %v6156, %v6198
        %v6200 = vpop.f32.mrb[0].mxu0
        %v6201 = vadd.f32 %v6158, %v6200
        %v6202 = vpop.f32.mrb[0].mxu0
        %v6203 = vadd.f32 %v6160, %v6202
        %v6204 = vpop.f32.mrb[0].mxu0
        %v6205 = vadd.f32 %v6162, %v6204
        %6206 = vdwg.mxu0
        %6207 = vmatprep.subr.bf16.mxu0 %v5420
        %6208 = vmatpush1.bf16.msra.mxu0 %v5419
        %6209 = vmatprep.subr.bf16.mxu0 %v5424
        %6210 = vmatpush1.bf16.msra.mxu0 %v5423
        %6211 = vmatprep.subr.bf16.mxu0 %v5428
        %6212 = vmatpush1.bf16.msra.mxu0 %v5427
        %6213 = vmatprep.subr.bf16.mxu0 %v5432
        %6214 = vmatpush1.bf16.msra.mxu0 %v5431
        %6215 = vmatprep.subr.bf16.mxu0 %v5436
        %6216 = vmatpush1.bf16.msra.mxu0 %v5435
        %6217 = vmatprep.subr.bf16.mxu0 %v5440
        %6218 = vmatpush1.bf16.msra.mxu0 %v5439
        %6219 = vmatprep.subr.bf16.mxu0 %v5444
        %6220 = vmatpush1.bf16.msra.mxu0 %v5443
        %6221 = vmatprep.subr.bf16.mxu0 %v5448
        %6222 = vmatpush1.bf16.msra.mxu0 %v5447
        %6223 = vmatprep.subr.bf16.mxu0 %v5452
        %6224 = vmatpush1.bf16.msra.mxu0 %v5451
        %6225 = vmatprep.subr.bf16.mxu0 %v5456
        %6226 = vmatpush1.bf16.msra.mxu0 %v5455
        %6227 = vmatprep.subr.bf16.mxu0 %v5460
        %6228 = vmatpush1.bf16.msra.mxu0 %v5459
        %6229 = vmatprep.subr.bf16.mxu0 %v5464
        %6230 = vmatpush1.bf16.msra.mxu0 %v5463
        %6231 = vmatprep.subr.bf16.mxu0 %v5468
        %6232 = vmatpush1.bf16.msra.mxu0 %v5467
        %6233 = vmatprep.subr.bf16.mxu0 %v5472
        %6234 = vmatpush1.bf16.msra.mxu0 %v5471
        %6235 = vmatprep.subr.bf16.mxu0 %v5476
        %6236 = vmatpush1.bf16.msra.mxu0 %v5475
        %6237 = vmatprep.subr.bf16.mxu0 %v5480
        %6238 = vmatpush1.bf16.msra.mxu0 %v5479
        %6239 = vmatprep.mubr.bf16.mxu0 %v3446
        %6240 = vmatmul.mubr.bf16.gmra.mrb[0].mxu0 %v3445
        %v6241 = vpop.f32.mrb[0].mxu0
        %v6242 = vadd.f32 %v6199, %v6241
        %v6243 = vpop.f32.mrb[0].mxu0
        %v6244 = vadd.f32 %v6201, %v6243
        %v6245 = vpop.f32.mrb[0].mxu0
        %v6246 = vadd.f32 %v6203, %v6245
        %v6247 = vpop.f32.mrb[0].mxu0
        %v6248 = vadd.f32 %v6205, %v6247
        %6249 = vdwg.mxu0
        %6250 = vmatprep.subr.bf16.mxu0 %v5484
        %6251 = vmatpush1.bf16.msra.mxu0 %v5483
        %6252 = vmatprep.subr.bf16.mxu0 %v5488
        %6253 = vmatpush1.bf16.msra.mxu0 %v5487
        %6254 = vmatprep.subr.bf16.mxu0 %v5492
        %6255 = vmatpush1.bf16.msra.mxu0 %v5491
        %6256 = vmatprep.subr.bf16.mxu0 %v5496
        %6257 = vmatpush1.bf16.msra.mxu0 %v5495
        %6258 = vmatprep.subr.bf16.mxu0 %v5500
        %6259 = vmatpush1.bf16.msra.mxu0 %v5499
        %6260 = vmatprep.subr.bf16.mxu0 %v5504
        %6261 = vmatpush1.bf16.msra.mxu0 %v5503
        %6262 = vmatprep.subr.bf16.mxu0 %v5508
        %6263 = vmatpush1.bf16.msra.mxu0 %v5507
        %6264 = vmatprep.subr.bf16.mxu0 %v5512
        %6265 = vmatpush1.bf16.msra.mxu0 %v5511
        %6266 = vmatprep.subr.bf16.mxu0 %v5516
        %6267 = vmatpush1.bf16.msra.mxu0 %v5515
        %6268 = vmatprep.subr.bf16.mxu0 %v5520
        %6269 = vmatpush1.bf16.msra.mxu0 %v5519
        %6270 = vmatprep.subr.bf16.mxu0 %v5524
        %6271 = vmatpush1.bf16.msra.mxu0 %v5523
        %6272 = vmatprep.subr.bf16.mxu0 %v5528
        %6273 = vmatpush1.bf16.msra.mxu0 %v5527
        %6274 = vmatprep.subr.bf16.mxu0 %v5532
        %6275 = vmatpush1.bf16.msra.mxu0 %v5531
        %6276 = vmatprep.subr.bf16.mxu0 %v5536
        %6277 = vmatpush1.bf16.msra.mxu0 %v5535
        %6278 = vmatprep.subr.bf16.mxu0 %v5540
        %6279 = vmatpush1.bf16.msra.mxu0 %v5539
        %6280 = vmatprep.subr.bf16.mxu0 %v5544
        %6281 = vmatpush1.bf16.msra.mxu0 %v5543
        %6282 = vmatprep.mubr.bf16.mxu0 %v3448
        %6283 = vmatmul.mubr.bf16.gmra.mrb[0].mxu0 %v3447
        %v6284 = vpop.f32.mrb[0].mxu0
        %v6285 = vadd.f32 %v6242, %v6284
        %v6286 = vpop.f32.mrb[0].mxu0
        %v6287 = vadd.f32 %v6244, %v6286
        %v6288 = vpop.f32.mrb[0].mxu0
        %v6289 = vadd.f32 %v6246, %v6288
        %v6290 = vpop.f32.mrb[0].mxu0
        %v6291 = vadd.f32 %v6248, %v6290
        %6292 = vdwg.mxu0
        %6293 = vmatprep.subr.bf16.mxu0 %v5548
        %6294 = vmatpush1.bf16.msra.mxu0 %v5547
        %6295 = vmatprep.subr.bf16.mxu0 %v5552
        %6296 = vmatpush1.bf16.msra.mxu0 %v5551
        %6297 = vmatprep.subr.bf16.mxu0 %v5556
        %6298 = vmatpush1.bf16.msra.mxu0 %v5555
        %6299 = vmatprep.subr.bf16.mxu0 %v5560
        %6300 = vmatpush1.bf16.msra.mxu0 %v5559
        %6301 = vmatprep.subr.bf16.mxu0 %v5564
        %6302 = vmatpush1.bf16.msra.mxu0 %v5563
        %6303 = vmatprep.subr.bf16.mxu0 %v5568
        %6304 = vmatpush1.bf16.msra.mxu0 %v5567
        %6305 = vmatprep.subr.bf16.mxu0 %v5572
        %6306 = vmatpush1.bf16.msra.mxu0 %v5571
        %6307 = vmatprep.subr.bf16.mxu0 %v5576
        %6308 = vmatpush1.bf16.msra.mxu0 %v5575
        %6309 = vmatprep.subr.bf16.mxu0 %v5580
        %6310 = vmatpush1.bf16.msra.mxu0 %v5579
        %6311 = vmatprep.subr.bf16.mxu0 %v5584
        %6312 = vmatpush1.bf16.msra.mxu0 %v5583
        %6313 = vmatprep.subr.bf16.mxu0 %v6027
        %6314 = vmatpush1.bf16.msra.mxu0 %v6024
        %6315 = vmatprep.subr.bf16.mxu0 0
        %6316 = vmatpush1.bf16.msra.mxu0 0
        %6317 = vmatprep.subr.bf16.mxu0 0
        %6318 = vmatpush1.bf16.msra.mxu0 0
        %6319 = vmatprep.subr.bf16.mxu0 0
        %6320 = vmatpush1.bf16.msra.mxu0 0
        %6321 = vmatprep.subr.bf16.mxu0 0
        %6322 = vmatpush1.bf16.msra.mxu0 0
        %6323 = vmatprep.subr.bf16.mxu0 0
        %6324 = vmatpush1.bf16.msra.mxu0 0
        %6325 = vmatprep.mubr.bf16.mxu0 %v6017
        %6326 = vmatmul.mubr.bf16.gmra.mrb[0].mxu0 %v3449
        %v6327 = vpop.f32.mrb[0].mxu0
        %v6328 = vadd.f32 %v6285, %v6327
        %v6329 = vpop.f32.mrb[0].mxu0
        %v6330 = vadd.f32 %v6287, %v6329
        %v6331 = vpop.f32.mrb[0].mxu0
        %v6332 = vadd.f32 %v6289, %v6331
        %v6333 = vpop.f32.mrb[0].mxu0
        %v6334 = vadd.f32 %v6291, %v6333
        %6335 = vdwg.mxu0
        %6336 = vmatprep.subr.bf16.mxu0 %v5166
        %6337 = vmatpush1.bf16.msra.mxu0 %v5165
        %6338 = vmatprep.subr.bf16.mxu0 %v5170
        %6339 = vmatpush1.bf16.msra.mxu0 %v5169
        %6340 = vmatprep.subr.bf16.mxu0 %v5174
        %6341 = vmatpush1.bf16.msra.mxu0 %v5173
        %6342 = vmatprep.subr.bf16.mxu0 %v5178
        %6343 = vmatpush1.bf16.msra.mxu0 %v5177
        %6344 = vmatprep.subr.bf16.mxu0 %v5182
        %6345 = vmatpush1.bf16.msra.mxu0 %v5181
        %6346 = vmatprep.subr.bf16.mxu0 %v5186
        %6347 = vmatpush1.bf16.msra.mxu0 %v5185
        %6348 = vmatprep.subr.bf16.mxu0 %v5190
        %6349 = vmatpush1.bf16.msra.mxu0 %v5189
        %6350 = vmatprep.subr.bf16.mxu0 %v5194
        %6351 = vmatpush1.bf16.msra.mxu0 %v5193
        %6352 = vmatprep.subr.bf16.mxu0 %v5198
        %6353 = vmatpush1.bf16.msra.mxu0 %v5197
        %6354 = vmatprep.subr.bf16.mxu0 %v5202
        %6355 = vmatpush1.bf16.msra.mxu0 %v5201
        %6356 = vmatprep.subr.bf16.mxu0 %v5206
        %6357 = vmatpush1.bf16.msra.mxu0 %v5205
        %6358 = vmatprep.subr.bf16.mxu0 %v5210
        %6359 = vmatpush1.bf16.msra.mxu0 %v5209
        %6360 = vmatprep.subr.bf16.mxu0 %v5214
        %6361 = vmatpush1.bf16.msra.mxu0 %v5213
        %6362 = vmatprep.subr.bf16.mxu0 %v5218
        %6363 = vmatpush1.bf16.msra.mxu0 %v5217
        %6364 = vmatprep.subr.bf16.mxu0 %v5222
        %6365 = vmatpush1.bf16.msra.mxu0 %v5221
        %6366 = vmatprep.subr.bf16.mxu0 %v5226
        %6367 = vmatpush1.bf16.msra.mxu0 %v5225
        %6368 = vmatprep.mubr.bf16.mxu0 %v3438
        %6369 = vmatmul.mubr.bf16.gmra.mrb[0].mxu0 %v3437
        %v6370 = vpop.f32.mrb[0].mxu0
        %v6371 = vadd.f32 0.0, %v6370
        %v6372 = vpop.f32.mrb[0].mxu0
        %v6373 = vadd.f32 0.0, %v6372
        %v6374 = vpop.f32.mrb[0].mxu0
        %v6375 = vadd.f32 0.0, %v6374
        %v6376 = vpop.f32.mrb[0].mxu0
        %v6377 = vadd.f32 0.0, %v6376
        %6378 = vdwg.mxu0
        %6379 = vmatprep.subr.bf16.mxu0 %v5230
        %6380 = vmatpush1.bf16.msra.mxu0 %v5229
        %6381 = vmatprep.subr.bf16.mxu0 %v5234
        %6382 = vmatpush1.bf16.msra.mxu0 %v5233
        %6383 = vmatprep.subr.bf16.mxu0 %v5238
        %6384 = vmatpush1.bf16.msra.mxu0 %v5237
        %6385 = vmatprep.subr.bf16.mxu0 %v5242
        %6386 = vmatpush1.bf16.msra.mxu0 %v5241
        %6387 = vmatprep.subr.bf16.mxu0 %v5246
        %6388 = vmatpush1.bf16.msra.mxu0 %v5245
        %6389 = vmatprep.subr.bf16.mxu0 %v5250
        %6390 = vmatpush1.bf16.msra.mxu0 %v5249
        %6391 = vmatprep.subr.bf16.mxu0 %v5254
        %6392 = vmatpush1.bf16.msra.mxu0 %v5253
        %6393 = vmatprep.subr.bf16.mxu0 %v5258
        %6394 = vmatpush1.bf16.msra.mxu0 %v5257
        %6395 = vmatprep.subr.bf16.mxu0 %v5262
        %6396 = vmatpush1.bf16.msra.mxu0 %v5261
        %6397 = vmatprep.subr.bf16.mxu0 %v5266
        %6398 = vmatpush1.bf16.msra.mxu0 %v5265
        %6399 = vmatprep.subr.bf16.mxu0 %v5270
        %6400 = vmatpush1.bf16.msra.mxu0 %v5269
        %6401 = vmatprep.subr.bf16.mxu0 %v5274
        %6402 = vmatpush1.bf16.msra.mxu0 %v5273
        %6403 = vmatprep.subr.bf16.mxu0 %v5278
        %6404 = vmatpush1.bf16.msra.mxu0 %v5277
        %6405 = vmatprep.subr.bf16.mxu0 %v5282
        %6406 = vmatpush1.bf16.msra.mxu0 %v5281
        %6407 = vmatprep.subr.bf16.mxu0 %v5286
        %6408 = vmatpush1.bf16.msra.mxu0 %v5285
        %6409 = vmatprep.subr.bf16.mxu0 %v5290
        %6410 = vmatpush1.bf16.msra.mxu0 %v5289
        %6411 = vmatprep.mubr.bf16.mxu0 %v3440
        %6412 = vmatmul.mubr.bf16.gmra.mrb[0].mxu0 %v3439
        %v6413 = vpop.f32.mrb[0].mxu0
        %v6414 = vadd.f32 %v6371, %v6413
        %v6415 = vpop.f32.mrb[0].mxu0
        %v6416 = vadd.f32 %v6373, %v6415
        %v6417 = vpop.f32.mrb[0].mxu0
        %v6418 = vadd.f32 %v6375, %v6417
        %v6419 = vpop.f32.mrb[0].mxu0
        %v6420 = vadd.f32 %v6377, %v6419
        %6421 = vdwg.mxu0
        %6422 = vmatprep.subr.bf16.mxu0 %v5294
        %6423 = vmatpush1.bf16.msra.mxu0 %v5293
        %6424 = vmatprep.subr.bf16.mxu0 %v5298
        %6425 = vmatpush1.bf16.msra.mxu0 %v5297
        %6426 = vmatprep.subr.bf16.mxu0 %v5302
        %6427 = vmatpush1.bf16.msra.mxu0 %v5301
        %6428 = vmatprep.subr.bf16.mxu0 %v5306
        %6429 = vmatpush1.bf16.msra.mxu0 %v5305
        %6430 = vmatprep.subr.bf16.mxu0 %v5310
        %6431 = vmatpush1.bf16.msra.mxu0 %v5309
        %6432 = vmatprep.subr.bf16.mxu0 %v5314
        %6433 = vmatpush1.bf16.msra.mxu0 %v5313
        %6434 = vmatprep.subr.bf16.mxu0 %v5318
        %6435 = vmatpush1.bf16.msra.mxu0 %v5317
        %6436 = vmatprep.subr.bf16.mxu0 %v5322
        %6437 = vmatpush1.bf16.msra.mxu0 %v5321
        %6438 = vmatprep.subr.bf16.mxu0 %v5326
        %6439 = vmatpush1.bf16.msra.mxu0 %v5325
        %6440 = vmatprep.subr.bf16.mxu0 %v5330
        %6441 = vmatpush1.bf16.msra.mxu0 %v5329
        %6442 = vmatprep.subr.bf16.mxu0 %v5334
        %6443 = vmatpush1.bf16.msra.mxu0 %v5333
        %6444 = vmatprep.subr.bf16.mxu0 %v5338
        %6445 = vmatpush1.bf16.msra.mxu0 %v5337
        %6446 = vmatprep.subr.bf16.mxu0 %v5342
        %6447 = vmatpush1.bf16.msra.mxu0 %v5341
        %6448 = vmatprep.subr.bf16.mxu0 %v5346
        %6449 = vmatpush1.bf16.msra.mxu0 %v5345
        %6450 = vmatprep.subr.bf16.mxu0 %v5350
        %6451 = vmatpush1.bf16.msra.mxu0 %v5349
        %6452 = vmatprep.subr.bf16.mxu0 %v5354
        %6453 = vmatpush1.bf16.msra.mxu0 %v5353
        %6454 = vmatprep.mubr.bf16.mxu0 %v3442
        %6455 = vmatmul.mubr.bf16.gmra.mrb[0].mxu0 %v3441
        %v6456 = vpop.f32.mrb[0].mxu0
        %v6457 = vadd.f32 %v6414, %v6456
        %v6458 = vpop.f32.mrb[0].mxu0
        %v6459 = vadd.f32 %v6416, %v6458
        %v6460 = vpop.f32.mrb[0].mxu0
        %v6461 = vadd.f32 %v6418, %v6460
        %v6462 = vpop.f32.mrb[0].mxu0
        %v6463 = vadd.f32 %v6420, %v6462
        %6464 = vdwg.mxu0
        %6465 = vmatprep.subr.bf16.mxu0 %v5358
        %6466 = vmatpush1.bf16.msra.mxu0 %v5357
        %6467 = vmatprep.subr.bf16.mxu0 %v5362
        %6468 = vmatpush1.bf16.msra.mxu0 %v5361
        %6469 = vmatprep.subr.bf16.mxu0 %v5366
        %6470 = vmatpush1.bf16.msra.mxu0 %v5365
        %6471 = vmatprep.subr.bf16.mxu0 %v5370
        %6472 = vmatpush1.bf16.msra.mxu0 %v5369
        %6473 = vmatprep.subr.bf16.mxu0 %v5374
        %6474 = vmatpush1.bf16.msra.mxu0 %v5373
        %6475 = vmatprep.subr.bf16.mxu0 %v5378
        %6476 = vmatpush1.bf16.msra.mxu0 %v5377
        %6477 = vmatprep.subr.bf16.mxu0 %v5382
        %6478 = vmatpush1.bf16.msra.mxu0 %v5381
        %6479 = vmatprep.subr.bf16.mxu0 %v5386
        %6480 = vmatpush1.bf16.msra.mxu0 %v5385
        %6481 = vmatprep.subr.bf16.mxu0 %v5390
        %6482 = vmatpush1.bf16.msra.mxu0 %v5389
        %6483 = vmatprep.subr.bf16.mxu0 %v5394
        %6484 = vmatpush1.bf16.msra.mxu0 %v5393
        %6485 = vmatprep.subr.bf16.mxu0 %v5398
        %6486 = vmatpush1.bf16.msra.mxu0 %v5397
        %6487 = vmatprep.subr.bf16.mxu0 %v5402
        %6488 = vmatpush1.bf16.msra.mxu0 %v5401
        %6489 = vmatprep.subr.bf16.mxu0 %v5406
        %6490 = vmatpush1.bf16.msra.mxu0 %v5405
        %6491 = vmatprep.subr.bf16.mxu0 %v5410
        %6492 = vmatpush1.bf16.msra.mxu0 %v5409
        %6493 = vmatprep.subr.bf16.mxu0 %v5414
        %6494 = vmatpush1.bf16.msra.mxu0 %v5413
        %6495 = vmatprep.subr.bf16.mxu0 %v5418
        %6496 = vmatpush1.bf16.msra.mxu0 %v5417
        %6497 = vmatprep.mubr.bf16.mxu0 %v3444
        %6498 = vmatmul.mubr.bf16.gmra.mrb[0].mxu0 %v3443
        %v6499 = vpop.f32.mrb[0].mxu0
        %v6500 = vadd.f32 %v6457, %v6499
        %v6501 = vpop.f32.mrb[0].mxu0
        %v6502 = vadd.f32 %v6459, %v6501
        %v6503 = vpop.f32.mrb[0].mxu0
        %v6504 = vadd.f32 %v6461, %v6503
        %v6505 = vpop.f32.mrb[0].mxu0
        %v6506 = vadd.f32 %v6463, %v6505
        %6507 = vdwg.mxu0
        %6508 = vmatprep.subr.bf16.mxu0 %v5422
        %6509 = vmatpush1.bf16.msra.mxu0 %v5421
        %6510 = vmatprep.subr.bf16.mxu0 %v5426
        %6511 = vmatpush1.bf16.msra.mxu0 %v5425
        %6512 = vmatprep.subr.bf16.mxu0 %v5430
        %6513 = vmatpush1.bf16.msra.mxu0 %v5429
        %6514 = vmatprep.subr.bf16.mxu0 %v5434
        %6515 = vmatpush1.bf16.msra.mxu0 %v5433
        %6516 = vmatprep.subr.bf16.mxu0 %v5438
        %6517 = vmatpush1.bf16.msra.mxu0 %v5437
        %6518 = vmatprep.subr.bf16.mxu0 %v5442
        %6519 = vmatpush1.bf16.msra.mxu0 %v5441
        %6520 = vmatprep.subr.bf16.mxu0 %v5446
        %6521 = vmatpush1.bf16.msra.mxu0 %v5445
        %6522 = vmatprep.subr.bf16.mxu0 %v5450
        %6523 = vmatpush1.bf16.msra.mxu0 %v5449
        %6524 = vmatprep.subr.bf16.mxu0 %v5454
        %6525 = vmatpush1.bf16.msra.mxu0 %v5453
        %6526 = vmatprep.subr.bf16.mxu0 %v5458
        %6527 = vmatpush1.bf16.msra.mxu0 %v5457
        %6528 = vmatprep.subr.bf16.mxu0 %v5462
        %6529 = vmatpush1.bf16.msra.mxu0 %v5461
        %6530 = vmatprep.subr.bf16.mxu0 %v5466
        %6531 = vmatpush1.bf16.msra.mxu0 %v5465
        %6532 = vmatprep.subr.bf16.mxu0 %v5470
        %6533 = vmatpush1.bf16.msra.mxu0 %v5469
        %6534 = vmatprep.subr.bf16.mxu0 %v5474
        %6535 = vmatpush1.bf16.msra.mxu0 %v5473
        %6536 = vmatprep.subr.bf16.mxu0 %v5478
        %6537 = vmatpush1.bf16.msra.mxu0 %v5477
        %6538 = vmatprep.subr.bf16.mxu0 %v5482
        %6539 = vmatpush1.bf16.msra.mxu0 %v5481
        %6540 = vmatprep.mubr.bf16.mxu0 %v3446
        %6541 = vmatmul.mubr.bf16.gmra.mrb[0].mxu0 %v3445
        %v6542 = vpop.f32.mrb[0].mxu0
        %v6543 = vadd.f32 %v6500, %v6542
        %v6544 = vpop.f32.mrb[0].mxu0
        %v6545 = vadd.f32 %v6502, %v6544
        %v6546 = vpop.f32.mrb[0].mxu0
        %v6547 = vadd.f32 %v6504, %v6546
        %v6548 = vpop.f32.mrb[0].mxu0
        %v6549 = vadd.f32 %v6506, %v6548
        %6550 = vdwg.mxu0
        %6551 = vmatprep.subr.bf16.mxu0 %v5486
        %6552 = vmatpush1.bf16.msra.mxu0 %v5485
        %6553 = vmatprep.subr.bf16.mxu0 %v5490
        %6554 = vmatpush1.bf16.msra.mxu0 %v5489
        %6555 = vmatprep.subr.bf16.mxu0 %v5494
        %6556 = vmatpush1.bf16.msra.mxu0 %v5493
        %6557 = vmatprep.subr.bf16.mxu0 %v5498
        %6558 = vmatpush1.bf16.msra.mxu0 %v5497
        %6559 = vmatprep.subr.bf16.mxu0 %v5502
        %6560 = vmatpush1.bf16.msra.mxu0 %v5501
        %6561 = vmatprep.subr.bf16.mxu0 %v5506
        %6562 = vmatpush1.bf16.msra.mxu0 %v5505
        %6563 = vmatprep.subr.bf16.mxu0 %v5510
        %6564 = vmatpush1.bf16.msra.mxu0 %v5509
        %6565 = vmatprep.subr.bf16.mxu0 %v5514
        %6566 = vmatpush1.bf16.msra.mxu0 %v5513
        %6567 = vmatprep.subr.bf16.mxu0 %v5518
        %6568 = vmatpush1.bf16.msra.mxu0 %v5517
        %6569 = vmatprep.subr.bf16.mxu0 %v5522
        %6570 = vmatpush1.bf16.msra.mxu0 %v5521
        %6571 = vmatprep.subr.bf16.mxu0 %v5526
        %6572 = vmatpush1.bf16.msra.mxu0 %v5525
        %6573 = vmatprep.subr.bf16.mxu0 %v5530
        %6574 = vmatpush1.bf16.msra.mxu0 %v5529
        %6575 = vmatprep.subr.bf16.mxu0 %v5534
        %6576 = vmatpush1.bf16.msra.mxu0 %v5533
        %6577 = vmatprep.subr.bf16.mxu0 %v5538
        %6578 = vmatpush1.bf16.msra.mxu0 %v5537
        %6579 = vmatprep.subr.bf16.mxu0 %v5542
        %6580 = vmatpush1.bf16.msra.mxu0 %v5541
        %6581 = vmatprep.subr.bf16.mxu0 %v5546
        %6582 = vmatpush1.bf16.msra.mxu0 %v5545
        %6583 = vmatprep.mubr.bf16.mxu0 %v3448
        %6584 = vmatmul.mubr.bf16.gmra.mrb[0].mxu0 %v3447
        %v6585 = vpop.f32.mrb[0].mxu0
        %v6586 = vadd.f32 %v6543, %v6585
        %v6587 = vpop.f32.mrb[0].mxu0
        %v6588 = vadd.f32 %v6545, %v6587
        %v6589 = vpop.f32.mrb[0].mxu0
        %v6590 = vadd.f32 %v6547, %v6589
        %v6591 = vpop.f32.mrb[0].mxu0
        %v6592 = vadd.f32 %v6549, %v6591
        %6593 = vdwg.mxu0
        %6594 = vmatprep.subr.bf16.mxu0 %v5550
        %6595 = vmatpush1.bf16.msra.mxu0 %v5549
        %6596 = vmatprep.subr.bf16.mxu0 %v5554
        %6597 = vmatpush1.bf16.msra.mxu0 %v5553
        %6598 = vmatprep.subr.bf16.mxu0 %v5558
        %6599 = vmatpush1.bf16.msra.mxu0 %v5557
        %6600 = vmatprep.subr.bf16.mxu0 %v5562
        %6601 = vmatpush1.bf16.msra.mxu0 %v5561
        %6602 = vmatprep.subr.bf16.mxu0 %v5566
        %6603 = vmatpush1.bf16.msra.mxu0 %v5565
        %6604 = vmatprep.subr.bf16.mxu0 %v5570
        %6605 = vmatpush1.bf16.msra.mxu0 %v5569
        %6606 = vmatprep.subr.bf16.mxu0 %v5574
        %6607 = vmatpush1.bf16.msra.mxu0 %v5573
        %6608 = vmatprep.subr.bf16.mxu0 %v5578
        %6609 = vmatpush1.bf16.msra.mxu0 %v5577
        %6610 = vmatprep.subr.bf16.mxu0 %v5582
        %6611 = vmatpush1.bf16.msra.mxu0 %v5581
        %6612 = vmatprep.subr.bf16.mxu0 %v5586
        %6613 = vmatpush1.bf16.msra.mxu0 %v5585
        %6614 = vmatprep.subr.bf16.mxu0 %v6033
        %6615 = vmatpush1.bf16.msra.mxu0 %v6030
        %6616 = vmatprep.subr.bf16.mxu0 0
        %6617 = vmatpush1.bf16.msra.mxu0 0
        %6618 = vmatprep.subr.bf16.mxu0 0
        %6619 = vmatpush1.bf16.msra.mxu0 0
        %6620 = vmatprep.subr.bf16.mxu0 0
        %6621 = vmatpush1.bf16.msra.mxu0 0
        %6622 = vmatprep.subr.bf16.mxu0 0
        %6623 = vmatpush1.bf16.msra.mxu0 0
        %6624 = vmatprep.subr.bf16.mxu0 0
        %6625 = vmatpush1.bf16.msra.mxu0 0
        %6626 = vmatprep.mubr.bf16.mxu0 %v6017
        %6627 = vmatmul.mubr.bf16.gmra.mrb[0].mxu0 %v3449
        %v6628 = vpop.f32.mrb[0].mxu0
        %v6629 = vadd.f32 %v6586, %v6628
        %v6630 = vpop.f32.mrb[0].mxu0
        %v6631 = vadd.f32 %v6588, %v6630
        %v6632 = vpop.f32.mrb[0].mxu0
        %v6633 = vadd.f32 %v6590, %v6632
        %v6634 = vpop.f32.mrb[0].mxu0
        %v6635 = vadd.f32 %v6592, %v6634
        %6636 = vdwg.mxu0
        %v6637 = vpack.c.bf16 %v6332, %v6328
        %v6638 = vpack.c.bf16 %v6334, %v6330
        %v6639 = vpack.c.bf16 %v6633, %v6629
        %v6640 = vpack.c.bf16 %v6635, %v6631
        %6644 = vrot.lane.b32.xlu0 %v6637, 127
        %v6645 = vpop.permute.xlu0 %6644
        %6646 = vrot.lane.b32.xlu0 %v6638, 127
        %v6647 = vpop.permute.xlu0 %6646
        %6648 = vrot.lane.b32.xlu0 %v6639, 127
        %v6649 = vpop.permute.xlu0 %6648
        %v6650 = vsel %vm1395, %v6645, %v6647
        %v6651 = vsel %vm1395, %v6647, %v6649
        %6655 = vrot.lane.b32.xlu0 %v6637, 126
        %v6656 = vpop.permute.xlu0 %6655
        %6657 = vrot.lane.b32.xlu0 %v6638, 126
        %v6658 = vpop.permute.xlu0 %6657
        %6659 = vrot.lane.b32.xlu0 %v6639, 126
        %v6660 = vpop.permute.xlu0 %6659
        %v6661 = vsel %vm1455, %v6656, %v6658
        %v6662 = vsel %vm1455, %v6658, %v6660
        %6666 = vrot.lane.b32.xlu0 %v6637, 108
        %v6667 = vpop.permute.xlu0 %6666
        %6668 = vrot.lane.b32.xlu0 %v6638, 108
        %v6669 = vpop.permute.xlu0 %6668
        %6670 = vrot.lane.b32.xlu0 %v6639, 108
        %v6671 = vpop.permute.xlu0 %6670
        %vm6672 = vcmask 883712
        %v6673 = vsel %vm6672, %v6667, %v6669
        %v6674 = vsel %vm6672, %v6669, %v6671
        %6678 = vrot.lane.b32.xlu0 %v6637, 107
        %v6679 = vpop.permute.xlu0 %6678
        %6680 = vrot.lane.b32.xlu0 %v6638, 107
        %v6681 = vpop.permute.xlu0 %6680
        %6682 = vrot.lane.b32.xlu0 %v6639, 107
        %v6683 = vpop.permute.xlu0 %6682
        %vm6684 = vcmask 875520
        %v6685 = vsel %vm6684, %v6679, %v6681
        %v6686 = vsel %vm6684, %v6681, %v6683
        %6690 = vrot.lane.b32.xlu0 %v6637, 106
        %v6691 = vpop.permute.xlu0 %6690
        %6692 = vrot.lane.b32.xlu0 %v6638, 106
        %v6693 = vpop.permute.xlu0 %6692
        %6694 = vrot.lane.b32.xlu0 %v6639, 106
        %v6695 = vpop.permute.xlu0 %6694
        %vm6696 = vcmask 867328
        %v6697 = vsel %vm6696, %v6691, %v6693
        %v6698 = vsel %vm6696, %v6693, %v6695
        %6703 = vrot.lane.b32.xlu0 %v6637, 88
        %v6704 = vpop.permute.xlu0 %6703
        %6705 = vrot.lane.b32.xlu0 %v6638, 88
        %v6706 = vpop.permute.xlu0 %6705
        %6707 = vrot.lane.b32.xlu0 %v6639, 88
        %v6708 = vpop.permute.xlu0 %6707
        %6709 = vrot.lane.b32.xlu0 %v6640, 88
        %v6710 = vpop.permute.xlu0 %6709
        %vm6711 = vcmask 719872
        %v6712 = vsel %vm6711, %v6704, %v6706
        %v6713 = vsel %vm6711, %v6706, %v6708
        %v6714 = vsel %vm6711, %v6708, %v6710
        %6718 = vrot.lane.b32.xlu0 %v6637, 87
        %v6719 = vpop.permute.xlu0 %6718
        %6720 = vrot.lane.b32.xlu0 %v6638, 87
        %v6721 = vpop.permute.xlu0 %6720
        %6722 = vrot.lane.b32.xlu0 %v6639, 87
        %v6723 = vpop.permute.xlu0 %6722
        %6724 = vrot.lane.b32.xlu0 %v6640, 87
        %v6725 = vpop.permute.xlu0 %6724
        %vm6726 = vcmask 711680
        %v6727 = vsel %vm6726, %v6719, %v6721
        %v6728 = vsel %vm6726, %v6721, %v6723
        %v6729 = vsel %vm6726, %v6723, %v6725
        %6733 = vrot.lane.b32.xlu0 %v6637, 86
        %v6734 = vpop.permute.xlu0 %6733
        %6735 = vrot.lane.b32.xlu0 %v6638, 86
        %v6736 = vpop.permute.xlu0 %6735
        %6737 = vrot.lane.b32.xlu0 %v6639, 86
        %v6738 = vpop.permute.xlu0 %6737
        %6739 = vrot.lane.b32.xlu0 %v6640, 86
        %v6740 = vpop.permute.xlu0 %6739
        %vm6741 = vcmask 703488
        %v6742 = vsel %vm6741, %v6734, %v6736
        %v6743 = vsel %vm6741, %v6736, %v6738
        %v6744 = vsel %vm6741, %v6738, %v6740
        %v6748 = vld [vmem:[%s13] sm:$0xff]
        %v6749 = vld [vmem:[%s13 + $0x8] sm:$0xff]
        %v6750 = vld [vmem:[#allocation7] sm:$0xff]
        %v6751 = vld [vmem:[#allocation7 + $0x8] sm:$0xff]
        %6753 = vset.pattern.permute.xlu0 0
        %6754 = vperm.xlu0 %6753, %v6750
        %v6755 = vpop.permute.xlu0 %6754
        %6758 = vset.pattern.permute.xlu0 0
        %6759 = vperm.xlu0 %6758, %v6751
        %v6760 = vpop.permute.xlu0 %6759
        %v6764 = vunpack.c.l.b16 %v6748
        %v6765 = vunpack.c.h.b16 %v6748
        %v6766 = vunpack.c.l.b16 %v6749
        %v6767 = vunpack.c.h.b16 %v6749
        %v6768 = vpack.c.b16 %v6766, %v6764
        %v6769 = vpack.c.b16 %v6767, %v6765
        %v6772 = vsel %vm1880, %v6769, 0
        %6774 = vmatprep.subr.bf16.mxu0 %v6638
        %6775 = vmatpush1.bf16.msra.mxu0 %v6637
        %6776 = vmatprep.subr.bf16.mxu0 %v6651
        %6777 = vmatpush1.bf16.msra.mxu0 %v6650
        %6778 = vmatprep.subr.bf16.mxu0 %v6662
        %6779 = vmatpush1.bf16.msra.mxu0 %v6661
        %6780 = vmatprep.subr.bf16.mxu0 %v6674
        %6781 = vmatpush1.bf16.msra.mxu0 %v6673
        %6782 = vmatprep.subr.bf16.mxu0 %v6686
        %6783 = vmatpush1.bf16.msra.mxu0 %v6685
        %6784 = vmatprep.subr.bf16.mxu0 %v6698
        %6785 = vmatpush1.bf16.msra.mxu0 %v6697
        %6786 = vmatprep.subr.bf16.mxu0 %v6713
        %6787 = vmatpush1.bf16.msra.mxu0 %v6712
        %6788 = vmatprep.subr.bf16.mxu0 %v6728
        %6789 = vmatpush1.bf16.msra.mxu0 %v6727
        %6790 = vmatprep.subr.bf16.mxu0 %v6743
        %6791 = vmatpush1.bf16.msra.mxu0 %v6742
        %6792 = vmatprep.subr.bf16.mxu0 0
        %6793 = vmatpush1.bf16.msra.mxu0 0
        %6794 = vmatprep.subr.bf16.mxu0 0
        %6795 = vmatpush1.bf16.msra.mxu0 0
        %6796 = vmatprep.subr.bf16.mxu0 0
        %6797 = vmatpush1.bf16.msra.mxu0 0
        %6798 = vmatprep.subr.bf16.mxu0 0
        %6799 = vmatpush1.bf16.msra.mxu0 0
        %6800 = vmatprep.subr.bf16.mxu0 0
        %6801 = vmatpush1.bf16.msra.mxu0 0
        %6802 = vmatprep.subr.bf16.mxu0 0
        %6803 = vmatpush1.bf16.msra.mxu0 0
        %6804 = vmatprep.subr.bf16.mxu0 0
        %6805 = vmatpush1.bf16.msra.mxu0 0
        %6806 = vmatprep.mubr.bf16.mxu0 %v6772
        %6807 = vmatmul.mubr.bf16.gmra.mrb[0].mxu0 %v6768
        %v6808 = vpop.f32.mrb[0].mxu0
        %v6809 = vadd.f32 %v6755, %v6808
        %v6810 = vpop.f32.mrb[0].mxu0
        %v6811 = vadd.f32 %v6755, %v6810
        %v6812 = vpop.f32.mrb[0].mxu0
        %v6813 = vadd.f32 %v6760, %v6812
        %v6814 = vpop.f32.mrb[0].mxu0
        %v6815 = vadd.f32 %v6760, %v6814
        %6816 = vdwg.mxu0
        %6817 = vmatprep.subr.bf16.mxu0 0
        %6818 = vmatpush1.bf16.msra.mxu0 %v6639
        %6819 = vmatprep.subr.bf16.mxu0 0
        %6820 = vmatpush1.bf16.msra.mxu0 %v6649
        %6821 = vmatprep.subr.bf16.mxu0 0
        %6822 = vmatpush1.bf16.msra.mxu0 %v6660
        %6823 = vmatprep.subr.bf16.mxu0 0
        %6824 = vmatpush1.bf16.msra.mxu0 %v6671
        %6825 = vmatprep.subr.bf16.mxu0 0
        %6826 = vmatpush1.bf16.msra.mxu0 %v6683
        %6827 = vmatprep.subr.bf16.mxu0 0
        %6828 = vmatpush1.bf16.msra.mxu0 %v6695
        %6829 = vmatprep.subr.bf16.mxu0 0
        %6830 = vmatpush1.bf16.msra.mxu0 %v6714
        %6831 = vmatprep.subr.bf16.mxu0 0
        %6832 = vmatpush1.bf16.msra.mxu0 %v6729
        %6833 = vmatprep.subr.bf16.mxu0 0
        %6834 = vmatpush1.bf16.msra.mxu0 %v6744
        %6835 = vmatprep.subr.bf16.mxu0 0
        %6836 = vmatpush1.bf16.msra.mxu0 0
        %6837 = vmatprep.subr.bf16.mxu0 0
        %6838 = vmatpush1.bf16.msra.mxu0 0
        %6839 = vmatprep.subr.bf16.mxu0 0
        %6840 = vmatpush1.bf16.msra.mxu0 0
        %6841 = vmatprep.subr.bf16.mxu0 0
        %6842 = vmatpush1.bf16.msra.mxu0 0
        %6843 = vmatprep.subr.bf16.mxu0 0
        %6844 = vmatpush1.bf16.msra.mxu0 0
        %6845 = vmatprep.subr.bf16.mxu0 0
        %6846 = vmatpush1.bf16.msra.mxu0 0
        %6847 = vmatprep.subr.bf16.mxu0 0
        %6848 = vmatpush1.bf16.msra.mxu0 0
        %6849 = vmatprep.mubr.bf16.mxu0 %v6772
        %6850 = vmatmul.mubr.bf16.gmra.mrb[0].mxu0 %v6768
        %v6851 = vpop.f32.mrb[0].mxu0
        %v6852 = vadd.f32 %v6755, %v6851
        %v6853 = vpop.f32.mrb[0].mxu0
        %v6854 = vpop.f32.mrb[0].mxu0
        %v6855 = vadd.f32 %v6760, %v6854
        %v6856 = vpop.f32.mrb[0].mxu0
        %6857 = vdwg.mxu0
        %v6858 = vmax.f32 %v6809, 0.0
        %v6859 = vmax.f32 %v6811, 0.0
        %v6860 = vmax.f32 %v6852, 0.0
        %v6861 = vmax.f32 %v6813, 0.0
        %v6862 = vmax.f32 %v6815, 0.0
        %v6863 = vmax.f32 %v6855, 0.0
        %v6864 = vpack.c.bf16 %v6861, %v6858
        %v6865 = vpack.c.bf16 %v6862, %v6859
        %v6866 = vpack.c.bf16 %v6863, %v6860
        %6870 = vrot.lane.b32.xlu0 %v6864, 127
        %v6871 = vpop.permute.xlu0 %6870
        %6872 = vrot.lane.b32.xlu0 %v6865, 127
        %v6873 = vpop.permute.xlu0 %6872
        %6874 = vrot.lane.b32.xlu0 %v6866, 127
        %v6875 = vpop.permute.xlu0 %6874
        %v6876 = vsel %vm1395, %v6871, %v6873
        %v6877 = vsel %vm1395, %v6873, %v6875
        %6881 = vrot.lane.b32.xlu0 %v6864, 126
        %v6882 = vpop.permute.xlu0 %6881
        %6883 = vrot.lane.b32.xlu0 %v6865, 126
        %v6884 = vpop.permute.xlu0 %6883
        %6885 = vrot.lane.b32.xlu0 %v6866, 126
        %v6886 = vpop.permute.xlu0 %6885
        %v6887 = vsel %vm1455, %v6882, %v6884
        %v6888 = vsel %vm1455, %v6884, %v6886
        %6892 = vrot.lane.b32.xlu0 %v6864, 108
        %v6893 = vpop.permute.xlu0 %6892
        %6894 = vrot.lane.b32.xlu0 %v6865, 108
        %v6895 = vpop.permute.xlu0 %6894
        %6896 = vrot.lane.b32.xlu0 %v6866, 108
        %v6897 = vpop.permute.xlu0 %6896
        %v6898 = vsel %vm6672, %v6893, %v6895
        %v6899 = vsel %vm6672, %v6895, %v6897
        %6903 = vrot.lane.b32.xlu0 %v6864, 107
        %v6904 = vpop.permute.xlu0 %6903
        %6905 = vrot.lane.b32.xlu0 %v6865, 107
        %v6906 = vpop.permute.xlu0 %6905
        %6907 = vrot.lane.b32.xlu0 %v6866, 107
        %v6908 = vpop.permute.xlu0 %6907
        %v6909 = vsel %vm6684, %v6904, %v6906
        %v6910 = vsel %vm6684, %v6906, %v6908
        %6914 = vrot.lane.b32.xlu0 %v6864, 106
        %v6915 = vpop.permute.xlu0 %6914
        %6916 = vrot.lane.b32.xlu0 %v6865, 106
        %v6917 = vpop.permute.xlu0 %6916
        %6918 = vrot.lane.b32.xlu0 %v6866, 106
        %v6919 = vpop.permute.xlu0 %6918
        %v6920 = vsel %vm6696, %v6915, %v6917
        %v6921 = vsel %vm6696, %v6917, %v6919
        %6925 = vrot.lane.b32.xlu0 %v6864, 88
        %v6926 = vpop.permute.xlu0 %6925
        %6927 = vrot.lane.b32.xlu0 %v6865, 88
        %v6928 = vpop.permute.xlu0 %6927
        %6929 = vrot.lane.b32.xlu0 %v6866, 88
        %v6930 = vpop.permute.xlu0 %6929
        %v6931 = vsel %vm6711, %v6926, %v6928
        %v6932 = vsel %vm6711, %v6928, %v6930
        %6936 = vrot.lane.b32.xlu0 %v6864, 87
        %v6937 = vpop.permute.xlu0 %6936
        %6938 = vrot.lane.b32.xlu0 %v6865, 87
        %v6939 = vpop.permute.xlu0 %6938
        %6940 = vrot.lane.b32.xlu0 %v6866, 87
        %v6941 = vpop.permute.xlu0 %6940
        %v6942 = vsel %vm6726, %v6937, %v6939
        %v6943 = vsel %vm6726, %v6939, %v6941
        %6947 = vrot.lane.b32.xlu0 %v6864, 86
        %v6948 = vpop.permute.xlu0 %6947
        %6949 = vrot.lane.b32.xlu0 %v6865, 86
        %v6950 = vpop.permute.xlu0 %6949
        %6951 = vrot.lane.b32.xlu0 %v6866, 86
        %v6952 = vpop.permute.xlu0 %6951
        %v6953 = vsel %vm6741, %v6948, %v6950
        %v6954 = vsel %vm6741, %v6950, %v6952
        %v6958 = vld [vmem:[%s17] sm:$0xff]
        %v6959 = vld [vmem:[%s17 + $0x8] sm:$0xff]
        %v6960 = vld [vmem:[#allocation9] sm:$0xff]
        %v6961 = vld [vmem:[#allocation9 + $0x8] sm:$0xff]
        %6963 = vset.pattern.permute.xlu0 0
        %6964 = vperm.xlu0 %6963, %v6960
        %v6965 = vpop.permute.xlu0 %6964
        %6968 = vset.pattern.permute.xlu0 0
        %6969 = vperm.xlu0 %6968, %v6961
        %v6970 = vpop.permute.xlu0 %6969
        %v6974 = vunpack.c.l.b16 %v6958
        %v6975 = vunpack.c.h.b16 %v6958
        %v6976 = vunpack.c.l.b16 %v6959
        %v6977 = vunpack.c.h.b16 %v6959
        %v6978 = vpack.c.b16 %v6976, %v6974
        %v6979 = vpack.c.b16 %v6977, %v6975
        %v6982 = vsel %vm1880, %v6979, 0
        %6984 = vmatprep.subr.bf16.mxu0 %v6865
        %6985 = vmatpush1.bf16.msra.mxu0 %v6864
        %6986 = vmatprep.subr.bf16.mxu0 %v6877
        %6987 = vmatpush1.bf16.msra.mxu0 %v6876
        %6988 = vmatprep.subr.bf16.mxu0 %v6888
        %6989 = vmatpush1.bf16.msra.mxu0 %v6887
        %6990 = vmatprep.subr.bf16.mxu0 %v6899
        %6991 = vmatpush1.bf16.msra.mxu0 %v6898
        %6992 = vmatprep.subr.bf16.mxu0 %v6910
        %6993 = vmatpush1.bf16.msra.mxu0 %v6909
        %6994 = vmatprep.subr.bf16.mxu0 %v6921
        %6995 = vmatpush1.bf16.msra.mxu0 %v6920
        %6996 = vmatprep.subr.bf16.mxu0 %v6932
        %6997 = vmatpush1.bf16.msra.mxu0 %v6931
        %6998 = vmatprep.subr.bf16.mxu0 %v6943
        %6999 = vmatpush1.bf16.msra.mxu0 %v6942
        %7000 = vmatprep.subr.bf16.mxu0 %v6954
        %7001 = vmatpush1.bf16.msra.mxu0 %v6953
        %7002 = vmatprep.subr.bf16.mxu0 0
        %7003 = vmatpush1.bf16.msra.mxu0 0
        %7004 = vmatprep.subr.bf16.mxu0 0
        %7005 = vmatpush1.bf16.msra.mxu0 0
        %7006 = vmatprep.subr.bf16.mxu0 0
        %7007 = vmatpush1.bf16.msra.mxu0 0
        %7008 = vmatprep.subr.bf16.mxu0 0
        %7009 = vmatpush1.bf16.msra.mxu0 0
        %7010 = vmatprep.subr.bf16.mxu0 0
        %7011 = vmatpush1.bf16.msra.mxu0 0
        %7012 = vmatprep.subr.bf16.mxu0 0
        %7013 = vmatpush1.bf16.msra.mxu0 0
        %7014 = vmatprep.subr.bf16.mxu0 0
        %7015 = vmatpush1.bf16.msra.mxu0 0
        %7016 = vmatprep.mubr.bf16.mxu0 %v6982
        %7017 = vmatmul.mubr.bf16.gmra.mrb[0].mxu0 %v6978
        %v7018 = vpop.f32.mrb[0].mxu0
        %v7019 = vadd.f32 %v6965, %v7018
        %v7020 = vpop.f32.mrb[0].mxu0
        %v7021 = vadd.f32 %v6965, %v7020
        %v7022 = vpop.f32.mrb[0].mxu0
        %v7023 = vadd.f32 %v6970, %v7022
        %v7024 = vpop.f32.mrb[0].mxu0
        %v7025 = vadd.f32 %v6970, %v7024
        %7026 = vdwg.mxu0
        %7027 = vmatprep.subr.bf16.mxu0 0
        %7028 = vmatpush1.bf16.msra.mxu0 %v6866
        %7029 = vmatprep.subr.bf16.mxu0 0
        %7030 = vmatpush1.bf16.msra.mxu0 %v6875
        %7031 = vmatprep.subr.bf16.mxu0 0
        %7032 = vmatpush1.bf16.msra.mxu0 %v6886
        %7033 = vmatprep.subr.bf16.mxu0 0
        %7034 = vmatpush1.bf16.msra.mxu0 %v6897
        %7035 = vmatprep.subr.bf16.mxu0 0
        %7036 = vmatpush1.bf16.msra.mxu0 %v6908
        %7037 = vmatprep.subr.bf16.mxu0 0
        %7038 = vmatpush1.bf16.msra.mxu0 %v6919
        %7039 = vmatprep.subr.bf16.mxu0 0
        %7040 = vmatpush1.bf16.msra.mxu0 %v6930
        %7041 = vmatprep.subr.bf16.mxu0 0
        %7042 = vmatpush1.bf16.msra.mxu0 %v6941
        %7043 = vmatprep.subr.bf16.mxu0 0
        %7044 = vmatpush1.bf16.msra.mxu0 %v6952
        %7045 = vmatprep.subr.bf16.mxu0 0
        %7046 = vmatpush1.bf16.msra.mxu0 0
        %7047 = vmatprep.subr.bf16.mxu0 0
        %7048 = vmatpush1.bf16.msra.mxu0 0
        %7049 = vmatprep.subr.bf16.mxu0 0
        %7050 = vmatpush1.bf16.msra.mxu0 0
        %7051 = vmatprep.subr.bf16.mxu0 0
        %7052 = vmatpush1.bf16.msra.mxu0 0
        %7053 = vmatprep.subr.bf16.mxu0 0
        %7054 = vmatpush1.bf16.msra.mxu0 0
        %7055 = vmatprep.subr.bf16.mxu0 0
        %7056 = vmatpush1.bf16.msra.mxu0 0
        %7057 = vmatprep.subr.bf16.mxu0 0
        %7058 = vmatpush1.bf16.msra.mxu0 0
        %7059 = vmatprep.mubr.bf16.mxu0 %v6982
        %7060 = vmatmul.mubr.bf16.gmra.mrb[0].mxu0 %v6978
        %v7061 = vpop.f32.mrb[0].mxu0
        %v7062 = vadd.f32 %v6965, %v7061
        %v7063 = vpop.f32.mrb[0].mxu0
        %v7064 = vpop.f32.mrb[0].mxu0
        %v7065 = vadd.f32 %v6970, %v7064
        %v7066 = vpop.f32.mrb[0].mxu0
        %7067 = vdwg.mxu0
        %v7068 = vmax.f32 %v7019, 0.0
        %v7069 = vmax.f32 %v7021, 0.0
        %v7070 = vmax.f32 %v7062, 0.0
        %v7071 = vmax.f32 %v7023, 0.0
        %v7072 = vmax.f32 %v7025, 0.0
        %v7073 = vmax.f32 %v7065, 0.0
        %v7074 = vpack.c.bf16 %v7071, %v7068
        %v7075 = vpack.c.bf16 %v7072, %v7069
        %7082 = vrot.lane.b32.xlu0 %v7068, 108
        %v7083 = vpop.permute.xlu0 %7082
        %7084 = vrot.lane.b32.xlu0 %v7069, 108
        %v7085 = vpop.permute.xlu0 %7084
        %7086 = vrot.lane.b32.xlu0 %v7070, 108
        %v7087 = vpop.permute.xlu0 %7086
        %7088 = vrot.lane.b32.xlu0 %v7071, 108
        %v7089 = vpop.permute.xlu0 %7088
        %7090 = vrot.lane.b32.xlu0 %v7072, 108
        %v7091 = vpop.permute.xlu0 %7090
        %7092 = vrot.lane.b32.xlu0 %v7073, 108
        %v7093 = vpop.permute.xlu0 %7092
        %vm7094 = vcmask 883712
        %v7095 = vsel %vm7094, %v7083, %v7085
        %v7096 = vsel %vm7094, %v7085, %v7087
        %v7097 = vsel %vm7094, %v7089, %v7091
        %v7098 = vsel %vm7094, %v7091, %v7093
        %v7105 = vmax.f32 %v7068, %v7095
        %v7106 = vmax.f32 %v7069, %v7096
        %v7107 = vmax.f32 %v7070, %v7087
        %v7108 = vmax.f32 %v7071, %v7097
        %v7109 = vmax.f32 %v7072, %v7098
        %v7110 = vmax.f32 %v7073, %v7093
        %7117 = vrot.lane.b32.xlu0 %v7105, 127
        %v7118 = vpop.permute.xlu0 %7117
        %7119 = vrot.lane.b32.xlu0 %v7106, 127
        %v7120 = vpop.permute.xlu0 %7119
        %7121 = vrot.lane.b32.xlu0 %v7107, 127
        %v7122 = vpop.permute.xlu0 %7121
        %7123 = vrot.lane.b32.xlu0 %v7108, 127
        %v7124 = vpop.permute.xlu0 %7123
        %7125 = vrot.lane.b32.xlu0 %v7109, 127
        %v7126 = vpop.permute.xlu0 %7125
        %7127 = vrot.lane.b32.xlu0 %v7110, 127
        %v7128 = vpop.permute.xlu0 %7127
        %v7129 = vsel %vm3354, %v7118, %v7120
        %v7130 = vsel %vm3354, %v7120, %v7122
        %v7131 = vsel %vm3354, %v7124, %v7126
        %v7132 = vsel %vm3354, %v7126, %v7128
        %v7139 = vmax.f32 %v7105, %v7129
        %v7140 = vmax.f32 %v7106, %v7130
        %v7141 = vmax.f32 %v7107, %v7122
        %v7142 = vmax.f32 %v7108, %v7131
        %v7143 = vmax.f32 %v7109, %v7132
        %v7144 = vmax.f32 %v7110, %v7128
        %v7145 = vpack.c.bf16 %v7142, %v7139
        %v7146 = vpack.c.bf16 %v7143, %v7140
        %v7147 = vpack.c.bf16 %v7144, %v7141
        %v7148 = vld [vmem:[#allocation10] sm:$0xf]
        %v7149 = vld [vmem:[#allocation10 + $0x4] sm:$0xf]
        %v7150 = vld [vmem:[#allocation10 + $0x8] sm:$0xf]
        %v7151 = vld [vmem:[#allocation10 + $0xc] sm:$0xf]
        %v7152 = vld [vmem:[#allocation10 + $0x10] sm:$0xf]
        %v7153 = vld [vmem:[#allocation10 + $0x14] sm:$0xf]
        %v7154 = vld [vmem:[#allocation10 + $0x18] sm:$0xf]
        %v7155 = vld [vmem:[#allocation10 + $0x1c] sm:$0xf]
        %v7156 = vld [vmem:[#allocation10 + $0x20] sm:$0xf]
        %v7157 = vld [vmem:[#allocation10 + $0x24] sm:$0xf]
        %v7158 = vld [vmem:[#allocation10 + $0x28] sm:$0xf]
        %v7159 = vld [vmem:[#allocation10 + $0x2c] sm:$0xf]
        %v7160 = vld [vmem:[#allocation10 + $0x30] sm:$0xf]
        %v7161 = vld [vmem:[#allocation10 + $0x34] sm:$0xf]
        %v7162 = vld [vmem:[#allocation10 + $0x38] sm:$0xf]
        %v7163 = vld [vmem:[#allocation10 + $0x3c] sm:$0xf]
        %v7164 = vld [vmem:[#allocation10 + $0x40] sm:$0xf]
        %v7165 = vld [vmem:[#allocation10 + $0x44] sm:$0xf]
        %v7166 = vld [vmem:[#allocation10 + $0x48] sm:$0xf]
        %v7167 = vld [vmem:[#allocation10 + $0x4c] sm:$0xf]
        %v7168 = vld [vmem:[#allocation10 + $0x50] sm:$0xf]
        %v7169 = vld [vmem:[#allocation10 + $0x54] sm:$0xf]
        %v7170 = vld [vmem:[#allocation10 + $0x58] sm:$0xf]
        %v7171 = vld [vmem:[#allocation10 + $0x5c] sm:$0xf]
        %v7172 = vld [vmem:[#allocation10 + $0x60] sm:$0xf]
        %v7173 = vld [vmem:[#allocation10 + $0x64] sm:$0xf]
        %v7174 = vld [vmem:[#allocation10 + $0x68] sm:$0xf]
        %v7175 = vld [vmem:[#allocation10 + $0x6c] sm:$0xf]
        %v7176 = vld [vmem:[#allocation10 + $0x70] sm:$0xf]
        %v7177 = vld [vmem:[#allocation10 + $0x74] sm:$0xf]
        %v7178 = vld [vmem:[#allocation10 + $0x78] sm:$0xf]
        %v7179 = vld [vmem:[#allocation10 + $0x7c] sm:$0xf]
        %v7180 = vld [vmem:[#allocation10 + $0x80] sm:$0xf]
        %v7181 = vld [vmem:[#allocation10 + $0x84] sm:$0xf]
        %v7182 = vld [vmem:[#allocation10 + $0x88] sm:$0xf]
        %v7183 = vld [vmem:[#allocation10 + $0x8c] sm:$0xf]
        %v7184 = vld [vmem:[#allocation10 + $0x90] sm:$0xf]
        %v7222 = vunpack.c.l.b16 %v7148
        %v7223 = vunpack.c.l.b16 %v7149
        %v7224 = vunpack.c.l.b16 %v7150
        %v7225 = vunpack.c.l.b16 %v7151
        %v7226 = vunpack.c.l.b16 %v7152
        %v7227 = vunpack.c.l.b16 %v7153
        %v7228 = vunpack.c.l.b16 %v7154
        %v7229 = vunpack.c.l.b16 %v7155
        %v7230 = vunpack.c.l.b16 %v7156
        %v7231 = vunpack.c.l.b16 %v7157
        %v7232 = vunpack.c.l.b16 %v7158
        %v7233 = vunpack.c.l.b16 %v7159
        %v7234 = vunpack.c.l.b16 %v7160
        %v7235 = vunpack.c.l.b16 %v7161
        %v7236 = vunpack.c.l.b16 %v7162
        %v7237 = vunpack.c.l.b16 %v7163
        %v7238 = vunpack.c.l.b16 %v7164
        %v7239 = vunpack.c.l.b16 %v7165
        %v7240 = vunpack.c.l.b16 %v7166
        %v7241 = vunpack.c.l.b16 %v7167
        %v7242 = vunpack.c.l.b16 %v7168
        %v7243 = vunpack.c.l.b16 %v7169
        %v7244 = vunpack.c.l.b16 %v7170
        %v7245 = vunpack.c.l.b16 %v7171
        %v7246 = vunpack.c.l.b16 %v7172
        %v7247 = vunpack.c.l.b16 %v7173
        %v7248 = vunpack.c.l.b16 %v7174
        %v7249 = vunpack.c.l.b16 %v7175
        %v7250 = vunpack.c.l.b16 %v7176
        %v7251 = vunpack.c.l.b16 %v7177
        %v7252 = vunpack.c.l.b16 %v7178
        %v7253 = vunpack.c.l.b16 %v7179
        %v7254 = vunpack.c.l.b16 %v7180
        %v7255 = vunpack.c.l.b16 %v7181
        %v7256 = vunpack.c.l.b16 %v7182
        %v7257 = vunpack.c.l.b16 %v7183
        %v7258 = vunpack.c.l.b16 %v7184
        %v7259 = vpack.c.b16 %v7223, %v7222
        %v7260 = vpack.c.b16 %v7225, %v7224
        %v7261 = vpack.c.b16 %v7227, %v7226
        %v7262 = vpack.c.b16 %v7229, %v7228
        %v7263 = vpack.c.b16 %v7231, %v7230
        %v7264 = vpack.c.b16 %v7233, %v7232
        %v7265 = vpack.c.b16 %v7235, %v7234
        %v7266 = vpack.c.b16 %v7237, %v7236
        %v7267 = vpack.c.b16 %v7239, %v7238
        %v7268 = vpack.c.b16 %v7241, %v7240
        %v7269 = vpack.c.b16 %v7243, %v7242
        %v7270 = vpack.c.b16 %v7245, %v7244
        %v7271 = vpack.c.b16 %v7247, %v7246
        %v7272 = vpack.c.b16 %v7249, %v7248
        %v7273 = vpack.c.b16 %v7251, %v7250
        %v7274 = vpack.c.b16 %v7253, %v7252
        %v7275 = vpack.c.b16 %v7255, %v7254
        %v7276 = vpack.c.b16 %v7257, %v7256
        %v7277 = vpack.c.b16 %v7258, %v7258
        %vm7296 = vcmask 318464
        %v7298 = vsel %vm7296, %v7147, 0
        %vm7300 = vcmask 1042432
        %vm7301 = vcmask 1043456
        %v7302 = vsel %vm7300, 4294967295, 65535
        %v7303 = vsel %vm7301, %v7302, 0
        %v7305 = vand.u32 %v7277, %v7303
        %7307 = vmatprep.subr.bf16.mxu0 0
        %7308 = vmatpush1.bf16.msra.mxu0 %v7259
        %7309 = vmatprep.subr.bf16.mxu0 0
        %7310 = vmatpush1.bf16.msra.mxu0 %v7260
        %7311 = vmatprep.subr.bf16.mxu0 0
        %7312 = vmatpush1.bf16.msra.mxu0 %v7261
        %7313 = vmatprep.subr.bf16.mxu0 0
        %7314 = vmatpush1.bf16.msra.mxu0 %v7262
        %7315 = vmatprep.subr.bf16.mxu0 0
        %7316 = vmatpush1.bf16.msra.mxu0 %v7263
        %7317 = vmatprep.subr.bf16.mxu0 0
        %7318 = vmatpush1.bf16.msra.mxu0 %v7264
        %7319 = vmatprep.subr.bf16.mxu0 0
        %7320 = vmatpush1.bf16.msra.mxu0 %v7265
        %7321 = vmatprep.subr.bf16.mxu0 0
        %7322 = vmatpush1.bf16.msra.mxu0 %v7266
        %7323 = vmatprep.subr.bf16.mxu0 0
        %7324 = vmatpush1.bf16.msra.mxu0 %v7267
        %7325 = vmatprep.subr.bf16.mxu0 0
        %7326 = vmatpush1.bf16.msra.mxu0 %v7268
        %7327 = vmatprep.subr.bf16.mxu0 0
        %7328 = vmatpush1.bf16.msra.mxu0 %v7269
        %7329 = vmatprep.subr.bf16.mxu0 0
        %7330 = vmatpush1.bf16.msra.mxu0 %v7270
        %7331 = vmatprep.subr.bf16.mxu0 0
        %7332 = vmatpush1.bf16.msra.mxu0 %v7271
        %7333 = vmatprep.subr.bf16.mxu0 0
        %7334 = vmatpush1.bf16.msra.mxu0 %v7272
        %7335 = vmatprep.subr.bf16.mxu0 0
        %7336 = vmatpush1.bf16.msra.mxu0 %v7273
        %7337 = vmatprep.subr.bf16.mxu0 0
        %7338 = vmatpush1.bf16.msra.mxu0 %v7274
        %7339 = vmatprep.mubr.bf16.mxu0 %v7146
        %7340 = vmatmul.mubr.bf16.gmra.mrb[0].mxu0 %v7145
        %v7341 = vpop.f32.mrb[0].mxu0
        %v7342 = vadd.f32 0.0, %v7341
        %v7343 = vpop.f32.mrb[0].mxu0
        %v7344 = vpop.f32.mrb[0].mxu0
        %v7345 = vadd.f32 0.0, %v7344
        %v7346 = vpop.f32.mrb[0].mxu0
        %7347 = vdwg.mxu0
        %7348 = vmatprep.subr.bf16.mxu0 0
        %7349 = vmatpush1.bf16.msra.mxu0 %v7275
        %7350 = vmatprep.subr.bf16.mxu0 0
        %7351 = vmatpush1.bf16.msra.mxu0 %v7276
        %7352 = vmatprep.subr.bf16.mxu0 0
        %7353 = vmatpush1.bf16.msra.mxu0 %v7305
        %7354 = vmatprep.subr.bf16.mxu0 0
        %7355 = vmatpush1.bf16.msra.mxu0 0
        %7356 = vmatprep.subr.bf16.mxu0 0
        %7357 = vmatpush1.bf16.msra.mxu0 0
        %7358 = vmatprep.subr.bf16.mxu0 0
        %7359 = vmatpush1.bf16.msra.mxu0 0
        %7360 = vmatprep.subr.bf16.mxu0 0
        %7361 = vmatpush1.bf16.msra.mxu0 0
        %7362 = vmatprep.subr.bf16.mxu0 0
        %7363 = vmatpush1.bf16.msra.mxu0 0
        %7364 = vmatprep.subr.bf16.mxu0 0
        %7365 = vmatpush1.bf16.msra.mxu0 0
        %7366 = vmatprep.subr.bf16.mxu0 0
        %7367 = vmatpush1.bf16.msra.mxu0 0
        %7368 = vmatprep.subr.bf16.mxu0 0
        %7369 = vmatpush1.bf16.msra.mxu0 0
        %7370 = vmatprep.subr.bf16.mxu0 0
        %7371 = vmatpush1.bf16.msra.mxu0 0
        %7372 = vmatprep.subr.bf16.mxu0 0
        %7373 = vmatpush1.bf16.msra.mxu0 0
        %7374 = vmatprep.subr.bf16.mxu0 0
        %7375 = vmatpush1.bf16.msra.mxu0 0
        %7376 = vmatprep.subr.bf16.mxu0 0
        %7377 = vmatpush1.bf16.msra.mxu0 0
        %7378 = vmatprep.subr.bf16.mxu0 0
        %7379 = vmatpush1.bf16.msra.mxu0 0
        %7380 = vmatprep.mubr.bf16.mxu0 0
        %7381 = vmatmul.mubr.bf16.gmra.mrb[0].mxu0 %v7298
        %v7382 = vpop.f32.mrb[0].mxu0
        %v7383 = vadd.f32 %v7342, %v7382
        %v7384 = vpop.f32.mrb[0].mxu0
        %v7385 = vpop.f32.mrb[0].mxu0
        %v7386 = vadd.f32 %v7345, %v7385
        %v7387 = vpop.f32.mrb[0].mxu0
        %7388 = vdwg.mxu0
        %v7389 = vpack.c.bf16 %v7386, %v7383
        %7391 = vrot.lane.b32.xlu0 %v7389, 127
        %v7392 = vpop.permute.xlu0 %7391
        %7394 = vrot.lane.b32.xlu0 %v7389, 126
        %v7395 = vpop.permute.xlu0 %7394
        %7397 = vrot.lane.b32.xlu0 %v7389, 120
        %v7398 = vpop.permute.xlu0 %7397
        %7400 = vrot.lane.b32.xlu0 %v7389, 119
        %v7401 = vpop.permute.xlu0 %7400
        %7403 = vrot.lane.b32.xlu0 %v7389, 118
        %v7404 = vpop.permute.xlu0 %7403
        %7406 = vrot.lane.b32.xlu0 %v7389, 112
        %v7407 = vpop.permute.xlu0 %7406
        %7409 = vrot.lane.b32.xlu0 %v7389, 111
        %v7410 = vpop.permute.xlu0 %7409
        %7412 = vrot.lane.b32.xlu0 %v7389, 110
        %v7413 = vpop.permute.xlu0 %7412
        %v7415 = vld [vmem:[%s23] sm:$0xff]
        %v7416 = vld [vmem:[%s23 + $0x8] sm:$0xff]
        %v7417 = vld [vmem:[%s23 + $0x10] sm:$0xff]
        %v7418 = vld [vmem:[%s23 + $0x18] sm:$0xff]
        %v7419 = vld [vmem:[#allocation12] sm:$0xff]
        %v7420 = vld [vmem:[#allocation12 + $0x8] sm:$0xff]
        %v7421 = vld [vmem:[#allocation12 + $0x10] sm:$0xff]
        %v7422 = vld [vmem:[#allocation12 + $0x18] sm:$0xff]
        %7424 = vset.pattern.permute.xlu0 0
        %7425 = vperm.xlu0 %7424, %v7419
        %v7426 = vpop.permute.xlu0 %7425
        %7429 = vset.pattern.permute.xlu0 0
        %7430 = vperm.xlu0 %7429, %v7420
        %v7431 = vpop.permute.xlu0 %7430
        %7434 = vset.pattern.permute.xlu0 0
        %7435 = vperm.xlu0 %7434, %v7421
        %v7436 = vpop.permute.xlu0 %7435
        %7439 = vset.pattern.permute.xlu0 0
        %7440 = vperm.xlu0 %7439, %v7422
        %v7441 = vpop.permute.xlu0 %7440
        %v7447 = vunpack.c.l.b16 %v7415
        %v7448 = vunpack.c.h.b16 %v7415
        %v7449 = vunpack.c.l.b16 %v7416
        %v7450 = vunpack.c.h.b16 %v7416
        %v7451 = vunpack.c.l.b16 %v7417
        %v7452 = vunpack.c.h.b16 %v7417
        %v7453 = vunpack.c.l.b16 %v7418
        %v7454 = vunpack.c.h.b16 %v7418
        %v7455 = vpack.c.b16 %v7449, %v7447
        %v7456 = vpack.c.b16 %v7450, %v7448
        %v7457 = vpack.c.b16 %v7453, %v7451
        %v7458 = vpack.c.b16 %v7454, %v7452
        %v7462 = vsel %vm1880, %v7456, 0
        %v7465 = vsel %vm1880, %v7458, 0
        %7467 = vmatprep.subr.bf16.mxu0 0
        %7468 = vmatpush1.bf16.msra.mxu0 %v7389
        %7469 = vmatprep.subr.bf16.mxu0 0
        %7470 = vmatpush1.bf16.msra.mxu0 %v7392
        %7471 = vmatprep.subr.bf16.mxu0 0
        %7472 = vmatpush1.bf16.msra.mxu0 %v7395
        %7473 = vmatprep.subr.bf16.mxu0 0
        %7474 = vmatpush1.bf16.msra.mxu0 %v7398
        %7475 = vmatprep.subr.bf16.mxu0 0
        %7476 = vmatpush1.bf16.msra.mxu0 %v7401
        %7477 = vmatprep.subr.bf16.mxu0 0
        %7478 = vmatpush1.bf16.msra.mxu0 %v7404
        %7479 = vmatprep.subr.bf16.mxu0 0
        %7480 = vmatpush1.bf16.msra.mxu0 %v7407
        %7481 = vmatprep.subr.bf16.mxu0 0
        %7482 = vmatpush1.bf16.msra.mxu0 %v7410
        %7483 = vmatprep.subr.bf16.mxu0 0
        %7484 = vmatpush1.bf16.msra.mxu0 %v7413
        %7485 = vmatprep.subr.bf16.mxu0 0
        %7486 = vmatpush1.bf16.msra.mxu0 0
        %7487 = vmatprep.subr.bf16.mxu0 0
        %7488 = vmatpush1.bf16.msra.mxu0 0
        %7489 = vmatprep.subr.bf16.mxu0 0
        %7490 = vmatpush1.bf16.msra.mxu0 0
        %7491 = vmatprep.subr.bf16.mxu0 0
        %7492 = vmatpush1.bf16.msra.mxu0 0
        %7493 = vmatprep.subr.bf16.mxu0 0
        %7494 = vmatpush1.bf16.msra.mxu0 0
        %7495 = vmatprep.subr.bf16.mxu0 0
        %7496 = vmatpush1.bf16.msra.mxu0 0
        %7497 = vmatprep.subr.bf16.mxu0 0
        %7498 = vmatpush1.bf16.msra.mxu0 0
        %7499 = vmatprep.mubr.bf16.mxu0 %v7462
        %7500 = vmatmul.mubr.bf16.gmra.mrb[0].mxu0 %v7455
        %v7501 = vpop.f32.mrb[0].mxu0
        %v7502 = vadd.f32 %v7426, %v7501
        %v7503 = vpop.f32.mrb[0].mxu0
        %v7504 = vpop.f32.mrb[0].mxu0
        %v7505 = vadd.f32 %v7431, %v7504
        %v7506 = vpop.f32.mrb[0].mxu0
        %7507 = vmatprep.mubr.bf16.mxu0 %v7465
        %7508 = vmatmul.mubr.bf16.gmra.mrb[0].mxu0 %v7457
        %v7509 = vpop.f32.mrb[0].mxu0
        %v7510 = vadd.f32 %v7436, %v7509
        %v7511 = vpop.f32.mrb[0].mxu0
        %v7512 = vpop.f32.mrb[0].mxu0
        %v7513 = vadd.f32 %v7441, %v7512
        %v7514 = vpop.f32.mrb[0].mxu0
        %7515 = vdwg.mxu0
        %v7516 = vmax.f32 %v7502, 0.0
        %v7517 = vmax.f32 %v7505, 0.0
        %v7518 = vmax.f32 %v7510, 0.0
        %v7519 = vmax.f32 %v7513, 0.0
        %v7520 = vpack.c.bf16 %v7517, %v7516
        %v7521 = vpack.c.bf16 %v7519, %v7518
        %7524 = vrot.lane.b32.xlu0 %v7520, 127
        %v7525 = vpop.permute.xlu0 %7524
        %7526 = vrot.lane.b32.xlu0 %v7521, 127
        %v7527 = vpop.permute.xlu0 %7526
        %7530 = vrot.lane.b32.xlu0 %v7520, 126
        %v7531 = vpop.permute.xlu0 %7530
        %7532 = vrot.lane.b32.xlu0 %v7521, 126
        %v7533 = vpop.permute.xlu0 %7532
        %7536 = vrot.lane.b32.xlu0 %v7520, 120
        %v7537 = vpop.permute.xlu0 %7536
        %7538 = vrot.lane.b32.xlu0 %v7521, 120
        %v7539 = vpop.permute.xlu0 %7538
        %7542 = vrot.lane.b32.xlu0 %v7520, 119
        %v7543 = vpop.permute.xlu0 %7542
        %7544 = vrot.lane.b32.xlu0 %v7521, 119
        %v7545 = vpop.permute.xlu0 %7544
        %7548 = vrot.lane.b32.xlu0 %v7520, 118
        %v7549 = vpop.permute.xlu0 %7548
        %7550 = vrot.lane.b32.xlu0 %v7521, 118
        %v7551 = vpop.permute.xlu0 %7550
        %7554 = vrot.lane.b32.xlu0 %v7520, 112
        %v7555 = vpop.permute.xlu0 %7554
        %7556 = vrot.lane.b32.xlu0 %v7521, 112
        %v7557 = vpop.permute.xlu0 %7556
        %7560 = vrot.lane.b32.xlu0 %v7520, 111
        %v7561 = vpop.permute.xlu0 %7560
        %7562 = vrot.lane.b32.xlu0 %v7521, 111
        %v7563 = vpop.permute.xlu0 %7562
        %7566 = vrot.lane.b32.xlu0 %v7520, 110
        %v7567 = vpop.permute.xlu0 %7566
        %7568 = vrot.lane.b32.xlu0 %v7521, 110
        %v7569 = vpop.permute.xlu0 %7568
        %v7572 = vld [vmem:[%s27] sm:$0xff]
        %v7573 = vld [vmem:[%s27 + $0x8] sm:$0xf]
        %v7574 = vld [vmem:[%s27 + $0xc] sm:$0xff]
        %v7575 = vld [vmem:[%s27 + $0x14] sm:$0xf]
        %v7576 = vld [vmem:[%s27 + $0x18] sm:$0xff]
        %v7577 = vld [vmem:[%s27 + $0x20] sm:$0xf]
        %v7578 = vld [vmem:[%s27 + $0x24] sm:$0xff]
        %v7579 = vld [vmem:[%s27 + $0x2c] sm:$0xf]
        %v7580 = vld [vmem:[#allocation13] sm:$0xff]
        %v7581 = vld [vmem:[#allocation13 + $0x8] sm:$0xff]
        %v7582 = vld [vmem:[#allocation13 + $0x10] sm:$0xff]
        %v7583 = vld [vmem:[#allocation13 + $0x18] sm:$0xff]
        %7585 = vset.pattern.permute.xlu0 0
        %7586 = vperm.xlu0 %7585, %v7580
        %v7587 = vpop.permute.xlu0 %7586
        %7590 = vset.pattern.permute.xlu0 0
        %7591 = vperm.xlu0 %7590, %v7581
        %v7592 = vpop.permute.xlu0 %7591
        %7595 = vset.pattern.permute.xlu0 0
        %7596 = vperm.xlu0 %7595, %v7582
        %v7597 = vpop.permute.xlu0 %7596
        %7600 = vset.pattern.permute.xlu0 0
        %7601 = vperm.xlu0 %7600, %v7583
        %v7602 = vpop.permute.xlu0 %7601
        %v7612 = vunpack.c.l.b16 %v7572
        %v7613 = vunpack.c.h.b16 %v7572
        %v7614 = vunpack.c.l.b16 %v7573
        %v7615 = vunpack.c.l.b16 %v7574
        %v7616 = vunpack.c.h.b16 %v7574
        %v7617 = vunpack.c.l.b16 %v7575
        %v7618 = vunpack.c.l.b16 %v7576
        %v7619 = vunpack.c.h.b16 %v7576
        %v7620 = vunpack.c.l.b16 %v7577
        %v7621 = vunpack.c.l.b16 %v7578
        %v7622 = vunpack.c.h.b16 %v7578
        %v7623 = vunpack.c.l.b16 %v7579
        %v7624 = vpack.c.b16 %v7615, %v7612
        %v7625 = vpack.c.b16 %v7616, %v7613
        %v7626 = vpack.c.b16 %v7617, %v7614
        %v7627 = vpack.c.b16 %v7621, %v7618
        %v7628 = vpack.c.b16 %v7622, %v7619
        %v7629 = vpack.c.b16 %v7623, %v7620
        %vm7634 = vcmask 261120
        %v7636 = vsel %vm7634, %v7626, 0
        %v7639 = vsel %vm7634, %v7629, 0
        %7641 = vmatprep.subr.bf16.mxu0 0
        %7642 = vmatpush1.bf16.msra.mxu0 %v7520
        %7643 = vmatprep.subr.bf16.mxu0 0
        %7644 = vmatpush1.bf16.msra.mxu0 %v7521
        %7645 = vmatprep.subr.bf16.mxu0 0
        %7646 = vmatpush1.bf16.msra.mxu0 %v7525
        %7647 = vmatprep.subr.bf16.mxu0 0
        %7648 = vmatpush1.bf16.msra.mxu0 %v7527
        %7649 = vmatprep.subr.bf16.mxu0 0
        %7650 = vmatpush1.bf16.msra.mxu0 %v7531
        %7651 = vmatprep.subr.bf16.mxu0 0
        %7652 = vmatpush1.bf16.msra.mxu0 %v7533
        %7653 = vmatprep.subr.bf16.mxu0 0
        %7654 = vmatpush1.bf16.msra.mxu0 %v7537
        %7655 = vmatprep.subr.bf16.mxu0 0
        %7656 = vmatpush1.bf16.msra.mxu0 %v7539
        %7657 = vmatprep.subr.bf16.mxu0 0
        %7658 = vmatpush1.bf16.msra.mxu0 %v7543
        %7659 = vmatprep.subr.bf16.mxu0 0
        %7660 = vmatpush1.bf16.msra.mxu0 %v7545
        %7661 = vmatprep.subr.bf16.mxu0 0
        %7662 = vmatpush1.bf16.msra.mxu0 %v7549
        %7663 = vmatprep.subr.bf16.mxu0 0
        %7664 = vmatpush1.bf16.msra.mxu0 %v7551
        %7665 = vmatprep.subr.bf16.mxu0 0
        %7666 = vmatpush1.bf16.msra.mxu0 %v7555
        %7667 = vmatprep.subr.bf16.mxu0 0
        %7668 = vmatpush1.bf16.msra.mxu0 %v7557
        %7669 = vmatprep.subr.bf16.mxu0 0
        %7670 = vmatpush1.bf16.msra.mxu0 %v7561
        %7671 = vmatprep.subr.bf16.mxu0 0
        %7672 = vmatpush1.bf16.msra.mxu0 %v7563
        %7673 = vmatprep.mubr.bf16.mxu0 %v7625
        %7674 = vmatmul.mubr.bf16.gmra.mrb[0].mxu0 %v7624
        %v7675 = vpop.f32.mrb[0].mxu0
        %v7676 = vadd.f32 %v7587, %v7675
        %v7677 = vpop.f32.mrb[0].mxu0
        %v7678 = vpop.f32.mrb[0].mxu0
        %v7679 = vadd.f32 %v7592, %v7678
        %v7680 = vpop.f32.mrb[0].mxu0
        %7681 = vmatprep.mubr.bf16.mxu0 %v7628
        %7682 = vmatmul.mubr.bf16.gmra.mrb[0].mxu0 %v7627
        %v7683 = vpop.f32.mrb[0].mxu0
        %v7684 = vadd.f32 %v7597, %v7683
        %v7685 = vpop.f32.mrb[0].mxu0
        %v7686 = vpop.f32.mrb[0].mxu0
        %v7687 = vadd.f32 %v7602, %v7686
        %v7688 = vpop.f32.mrb[0].mxu0
        %7689 = vdwg.mxu0
        %7690 = vmatprep.subr.bf16.mxu0 0
        %7691 = vmatpush1.bf16.msra.mxu0 %v7567
        %7692 = vmatprep.subr.bf16.mxu0 0
        %7693 = vmatpush1.bf16.msra.mxu0 %v7569
        %7694 = vmatprep.subr.bf16.mxu0 0
        %7695 = vmatpush1.bf16.msra.mxu0 0
        %7696 = vmatprep.subr.bf16.mxu0 0
        %7697 = vmatpush1.bf16.msra.mxu0 0
        %7698 = vmatprep.subr.bf16.mxu0 0
        %7699 = vmatpush1.bf16.msra.mxu0 0
        %7700 = vmatprep.subr.bf16.mxu0 0
        %7701 = vmatpush1.bf16.msra.mxu0 0
        %7702 = vmatprep.subr.bf16.mxu0 0
        %7703 = vmatpush1.bf16.msra.mxu0 0
        %7704 = vmatprep.subr.bf16.mxu0 0
        %7705 = vmatpush1.bf16.msra.mxu0 0
        %7706 = vmatprep.subr.bf16.mxu0 0
        %7707 = vmatpush1.bf16.msra.mxu0 0
        %7708 = vmatprep.subr.bf16.mxu0 0
        %7709 = vmatpush1.bf16.msra.mxu0 0
        %7710 = vmatprep.subr.bf16.mxu0 0
        %7711 = vmatpush1.bf16.msra.mxu0 0
        %7712 = vmatprep.subr.bf16.mxu0 0
        %7713 = vmatpush1.bf16.msra.mxu0 0
        %7714 = vmatprep.subr.bf16.mxu0 0
        %7715 = vmatpush1.bf16.msra.mxu0 0
        %7716 = vmatprep.subr.bf16.mxu0 0
        %7717 = vmatpush1.bf16.msra.mxu0 0
        %7718 = vmatprep.subr.bf16.mxu0 0
        %7719 = vmatpush1.bf16.msra.mxu0 0
        %7720 = vmatprep.subr.bf16.mxu0 0
        %7721 = vmatpush1.bf16.msra.mxu0 0
        %7722 = vmatprep.mubr.bf16.mxu0 0
        %7723 = vmatmul.mubr.bf16.gmra.mrb[0].mxu0 %v7636
        %v7724 = vpop.f32.mrb[0].mxu0
        %v7725 = vadd.f32 %v7676, %v7724
        %v7726 = vpop.f32.mrb[0].mxu0
        %v7727 = vpop.f32.mrb[0].mxu0
        %v7728 = vadd.f32 %v7679, %v7727
        %v7729 = vpop.f32.mrb[0].mxu0
        %7730 = vmatprep.mubr.bf16.mxu0 0
        %7731 = vmatmul.mubr.bf16.gmra.mrb[0].mxu0 %v7639
        %v7732 = vpop.f32.mrb[0].mxu0
        %v7733 = vadd.f32 %v7684, %v7732
        %v7734 = vpop.f32.mrb[0].mxu0
        %v7735 = vpop.f32.mrb[0].mxu0
        %v7736 = vadd.f32 %v7687, %v7735
        %v7737 = vpop.f32.mrb[0].mxu0
        %7738 = vdwg.mxu0
        %v7739 = vmax.f32 %v7725, 0.0
        %v7740 = vmax.f32 %v7728, 0.0
        %v7741 = vmax.f32 %v7733, 0.0
        %v7742 = vmax.f32 %v7736, 0.0
        %v7743 = vpack.c.bf16 %v7740, %v7739
        %v7744 = vpack.c.bf16 %v7742, %v7741
        %v7745 = vld [vmem:[#allocation15] sm:$0xff]
        %v7746 = vld [vmem:[#allocation15 + $0x8] sm:$0xff]
        %v7747 = vld [vmem:[#allocation15 + $0x10] sm:$0xff]
        %v7748 = vld [vmem:[#allocation15 + $0x18] sm:$0x33]
        %v7753 = vunpack.c.l.b16 %v7745
        %v7754 = vunpack.c.h.b16 %v7745
        %v7755 = vunpack.c.l.b16 %v7746
        %v7756 = vunpack.c.h.b16 %v7746
        %v7757 = vunpack.c.l.b16 %v7747
        %v7758 = vunpack.c.h.b16 %v7747
        %v7759 = vunpack.c.l.b16 %v7748
        %v7760 = vunpack.c.h.b16 %v7748
        %v7761 = vpack.c.b16 %v7755, %v7753
        %v7762 = vpack.c.b16 %v7756, %v7754
        %v7763 = vpack.c.b16 %v7759, %v7757
        %v7764 = vpack.c.b16 %v7760, %v7758
        %vm7767 = vcmask 228352
        %v7769 = vsel %vm7767, %v7743, 0
        %v7772 = vsel %vm7767, %v7744, 0
        %vm7774 = vcmask 1045504
        %v7776 = vsel %vm7774, %v7763, 0
        %v7779 = vsel %vm7774, %v7764, 0
        %7781 = vmatprep.subr.bf16.mxu0 %v7762
        %7782 = vmatpush1.bf16.msra.mxu0 %v7761
        %7783 = vmatprep.subr.bf16.mxu0 %v7779
        %7784 = vmatpush1.bf16.msra.mxu0 %v7776
        %7785 = vmatprep.subr.bf16.mxu0 0
        %7786 = vmatpush1.bf16.msra.mxu0 0
        %7787 = vmatprep.subr.bf16.mxu0 0
        %7788 = vmatpush1.bf16.msra.mxu0 0
        %7789 = vmatprep.subr.bf16.mxu0 0
        %7790 = vmatpush1.bf16.msra.mxu0 0
        %7791 = vmatprep.subr.bf16.mxu0 0
        %7792 = vmatpush1.bf16.msra.mxu0 0
        %7793 = vmatprep.subr.bf16.mxu0 0
        %7794 = vmatpush1.bf16.msra.mxu0 0
        %7795 = vmatprep.subr.bf16.mxu0 0
        %7796 = vmatpush1.bf16.msra.mxu0 0
        %7797 = vmatprep.subr.bf16.mxu0 0
        %7798 = vmatpush1.bf16.msra.mxu0 0
        %7799 = vmatprep.subr.bf16.mxu0 0
        %7800 = vmatpush1.bf16.msra.mxu0 0
        %7801 = vmatprep.subr.bf16.mxu0 0
        %7802 = vmatpush1.bf16.msra.mxu0 0
        %7803 = vmatprep.subr.bf16.mxu0 0
        %7804 = vmatpush1.bf16.msra.mxu0 0
        %7805 = vmatprep.subr.bf16.mxu0 0
        %7806 = vmatpush1.bf16.msra.mxu0 0
        %7807 = vmatprep.subr.bf16.mxu0 0
        %7808 = vmatpush1.bf16.msra.mxu0 0
        %7809 = vmatprep.subr.bf16.mxu0 0
        %7810 = vmatpush1.bf16.msra.mxu0 0
        %7811 = vmatprep.subr.bf16.mxu0 0
        %7812 = vmatpush1.bf16.msra.mxu0 0
        %7813 = vmatprep.mubr.bf16.mxu0 0
        %7814 = vmatmul.mubr.bf16.gmra.mrb[0].mxu0 %v7769
        %v7815 = vpop.f32.mrb[0].mxu0
        %v7816 = vadd.f32 0.0, %v7815
        %v7817 = vpop.f32.mrb[0].mxu0
        %v7818 = vadd.f32 0.0, %v7817
        %v7819 = vpop.f32.mrb[0].mxu0
        %v7820 = vadd.f32 0.0, %v7819
        %v7821 = vpop.f32.mrb[0].mxu0
        %v7822 = vadd.f32 0.0, %v7821
        %7823 = vmatprep.mubr.bf16.mxu0 0
        %7824 = vmatmul.mubr.bf16.gmra.mrb[0].mxu0 %v7772
        %v7825 = vpop.f32.mrb[0].mxu0
        %v7826 = vadd.f32 0.0, %v7825
        %v7827 = vpop.f32.mrb[0].mxu0
        %v7828 = vadd.f32 0.0, %v7827
        %v7829 = vpop.f32.mrb[0].mxu0
        %v7830 = vadd.f32 0.0, %v7829
        %v7831 = vpop.f32.mrb[0].mxu0
        %v7832 = vadd.f32 0.0, %v7831
        %7833 = vdwg.mxu0
        %v7834 = vpack.c.bf16 %v7820, %v7816
        %v7835 = vpack.c.bf16 %v7822, %v7818
        %v7836 = vpack.c.bf16 %v7830, %v7826
        %v7837 = vpack.c.bf16 %v7832, %v7828
        %s7838 = scalar_lea.vmem [#allocation15], 32
        %v7839 = vld [vmem:[%s7838] sm:$0xff]
        %v7840 = vld [vmem:[%s7838 + $0x8] sm:$0xff]
        %v7841 = vld [vmem:[%s7838 + $0x10] sm:$0xff]
        %v7842 = vld [vmem:[%s7838 + $0x18] sm:$0x33]
        %v7847 = vunpack.c.l.b16 %v7839
        %v7848 = vunpack.c.h.b16 %v7839
        %v7849 = vunpack.c.l.b16 %v7840
        %v7850 = vunpack.c.h.b16 %v7840
        %v7851 = vunpack.c.l.b16 %v7841
        %v7852 = vunpack.c.h.b16 %v7841
        %v7853 = vunpack.c.l.b16 %v7842
        %v7854 = vunpack.c.h.b16 %v7842
        %v7855 = vpack.c.b16 %v7849, %v7847
        %v7856 = vpack.c.b16 %v7850, %v7848
        %v7857 = vpack.c.b16 %v7853, %v7851
        %v7858 = vpack.c.b16 %v7854, %v7852
        %v7862 = vsel %vm7774, %v7857, 0
        %v7865 = vsel %vm7774, %v7858, 0
        %7867 = vmatprep.subr.bf16.mxu0 %v7856
        %7868 = vmatpush1.bf16.msra.mxu0 %v7855
        %7869 = vmatprep.subr.bf16.mxu0 %v7865
        %7870 = vmatpush1.bf16.msra.mxu0 %v7862
        %7871 = vmatprep.subr.bf16.mxu0 0
        %7872 = vmatpush1.bf16.msra.mxu0 0
        %7873 = vmatprep.subr.bf16.mxu0 0
        %7874 = vmatpush1.bf16.msra.mxu0 0
        %7875 = vmatprep.subr.bf16.mxu0 0
        %7876 = vmatpush1.bf16.msra.mxu0 0
        %7877 = vmatprep.subr.bf16.mxu0 0
        %7878 = vmatpush1.bf16.msra.mxu0 0
        %7879 = vmatprep.subr.bf16.mxu0 0
        %7880 = vmatpush1.bf16.msra.mxu0 0
        %7881 = vmatprep.subr.bf16.mxu0 0
        %7882 = vmatpush1.bf16.msra.mxu0 0
        %7883 = vmatprep.subr.bf16.mxu0 0
        %7884 = vmatpush1.bf16.msra.mxu0 0
        %7885 = vmatprep.subr.bf16.mxu0 0
        %7886 = vmatpush1.bf16.msra.mxu0 0
        %7887 = vmatprep.subr.bf16.mxu0 0
        %7888 = vmatpush1.bf16.msra.mxu0 0
        %7889 = vmatprep.subr.bf16.mxu0 0
        %7890 = vmatpush1.bf16.msra.mxu0 0
        %7891 = vmatprep.subr.bf16.mxu0 0
        %7892 = vmatpush1.bf16.msra.mxu0 0
        %7893 = vmatprep.subr.bf16.mxu0 0
        %7894 = vmatpush1.bf16.msra.mxu0 0
        %7895 = vmatprep.subr.bf16.mxu0 0
        %7896 = vmatpush1.bf16.msra.mxu0 0
        %7897 = vmatprep.subr.bf16.mxu0 0
        %7898 = vmatpush1.bf16.msra.mxu0 0
        %7899 = vmatprep.mubr.bf16.mxu0 0
        %7900 = vmatmul.mubr.bf16.gmra.mrb[0].mxu0 %v7769
        %v7901 = vpop.f32.mrb[0].mxu0
        %v7902 = vadd.f32 0.0, %v7901
        %v7903 = vpop.f32.mrb[0].mxu0
        %v7904 = vadd.f32 0.0, %v7903
        %v7905 = vpop.f32.mrb[0].mxu0
        %v7906 = vadd.f32 0.0, %v7905
        %v7907 = vpop.f32.mrb[0].mxu0
        %v7908 = vadd.f32 0.0, %v7907
        %7909 = vmatprep.mubr.bf16.mxu0 0
        %7910 = vmatmul.mubr.bf16.gmra.mrb[0].mxu0 %v7772
        %v7911 = vpop.f32.mrb[0].mxu0
        %v7912 = vadd.f32 0.0, %v7911
        %v7913 = vpop.f32.mrb[0].mxu0
        %v7914 = vadd.f32 0.0, %v7913
        %v7915 = vpop.f32.mrb[0].mxu0
        %v7916 = vadd.f32 0.0, %v7915
        %v7917 = vpop.f32.mrb[0].mxu0
        %v7918 = vadd.f32 0.0, %v7917
        %7919 = vdwg.mxu0
        %v7920 = vpack.c.bf16 %v7906, %v7902
        %v7921 = vpack.c.bf16 %v7908, %v7904
        %v7922 = vpack.c.bf16 %v7916, %v7912
        %v7923 = vpack.c.bf16 %v7918, %v7914
        %s7924 = scalar_lea.vmem [#allocation15], 64
        %v7925 = vld [vmem:[%s7924] sm:$0xff]
        %v7926 = vld [vmem:[%s7924 + $0x8] sm:$0xff]
        %v7927 = vld [vmem:[%s7924 + $0x10] sm:$0xff]
        %v7928 = vld [vmem:[%s7924 + $0x18] sm:$0x33]
        %v7933 = vunpack.c.l.b16 %v7925
        %v7934 = vunpack.c.h.b16 %v7925
        %v7935 = vunpack.c.l.b16 %v7926
        %v7936 = vunpack.c.h.b16 %v7926
        %v7937 = vunpack.c.l.b16 %v7927
        %v7938 = vunpack.c.h.b16 %v7927
        %v7939 = vunpack.c.l.b16 %v7928
        %v7940 = vunpack.c.h.b16 %v7928
        %v7941 = vpack.c.b16 %v7935, %v7933
        %v7942 = vpack.c.b16 %v7936, %v7934
        %v7943 = vpack.c.b16 %v7939, %v7937
        %v7944 = vpack.c.b16 %v7940, %v7938
        %v7948 = vsel %vm7774, %v7943, 0
        %v7951 = vsel %vm7774, %v7944, 0
        %7953 = vmatprep.subr.bf16.mxu0 %v7942
        %7954 = vmatpush1.bf16.msra.mxu0 %v7941
        %7955 = vmatprep.subr.bf16.mxu0 %v7951
        %7956 = vmatpush1.bf16.msra.mxu0 %v7948
        %7957 = vmatprep.subr.bf16.mxu0 0
        %7958 = vmatpush1.bf16.msra.mxu0 0
        %7959 = vmatprep.subr.bf16.mxu0 0
        %7960 = vmatpush1.bf16.msra.mxu0 0
        %7961 = vmatprep.subr.bf16.mxu0 0
        %7962 = vmatpush1.bf16.msra.mxu0 0
        %7963 = vmatprep.subr.bf16.mxu0 0
        %7964 = vmatpush1.bf16.msra.mxu0 0
        %7965 = vmatprep.subr.bf16.mxu0 0
        %7966 = vmatpush1.bf16.msra.mxu0 0
        %7967 = vmatprep.subr.bf16.mxu0 0
        %7968 = vmatpush1.bf16.msra.mxu0 0
        %7969 = vmatprep.subr.bf16.mxu0 0
        %7970 = vmatpush1.bf16.msra.mxu0 0
        %7971 = vmatprep.subr.bf16.mxu0 0
        %7972 = vmatpush1.bf16.msra.mxu0 0
        %7973 = vmatprep.subr.bf16.mxu0 0
        %7974 = vmatpush1.bf16.msra.mxu0 0
        %7975 = vmatprep.subr.bf16.mxu0 0
        %7976 = vmatpush1.bf16.msra.mxu0 0
        %7977 = vmatprep.subr.bf16.mxu0 0
        %7978 = vmatpush1.bf16.msra.mxu0 0
        %7979 = vmatprep.subr.bf16.mxu0 0
        %7980 = vmatpush1.bf16.msra.mxu0 0
        %7981 = vmatprep.subr.bf16.mxu0 0
        %7982 = vmatpush1.bf16.msra.mxu0 0
        %7983 = vmatprep.subr.bf16.mxu0 0
        %7984 = vmatpush1.bf16.msra.mxu0 0
        %7985 = vmatprep.mubr.bf16.mxu0 0
        %7986 = vmatmul.mubr.bf16.gmra.mrb[0].mxu0 %v7769
        %v7987 = vpop.f32.mrb[0].mxu0
        %v7988 = vadd.f32 0.0, %v7987
        %v7989 = vpop.f32.mrb[0].mxu0
        %v7990 = vadd.f32 0.0, %v7989
        %v7991 = vpop.f32.mrb[0].mxu0
        %v7992 = vadd.f32 0.0, %v7991
        %v7993 = vpop.f32.mrb[0].mxu0
        %v7994 = vadd.f32 0.0, %v7993
        %7995 = vmatprep.mubr.bf16.mxu0 0
        %7996 = vmatmul.mubr.bf16.gmra.mrb[0].mxu0 %v7772
        %v7997 = vpop.f32.mrb[0].mxu0
        %v7998 = vadd.f32 0.0, %v7997
        %v7999 = vpop.f32.mrb[0].mxu0
        %v8000 = vadd.f32 0.0, %v7999
        %v8001 = vpop.f32.mrb[0].mxu0
        %v8002 = vadd.f32 0.0, %v8001
        %v8003 = vpop.f32.mrb[0].mxu0
        %v8004 = vadd.f32 0.0, %v8003
        %8005 = vdwg.mxu0
        %v8006 = vpack.c.bf16 %v7992, %v7988
        %v8007 = vpack.c.bf16 %v7994, %v7990
        %v8008 = vpack.c.bf16 %v8002, %v7998
        %v8009 = vpack.c.bf16 %v8004, %v8000
        %s8010 = scalar_lea.vmem [#allocation15], 96
        %v8011 = vld [vmem:[%s8010] sm:$0xff]
        %v8012 = vld [vmem:[%s8010 + $0x8] sm:$0xff]
        %v8013 = vld [vmem:[%s8010 + $0x10] sm:$0xff]
        %v8014 = vld [vmem:[%s8010 + $0x18] sm:$0x33]
        %v8019 = vunpack.c.l.b16 %v8011
        %v8020 = vunpack.c.h.b16 %v8011
        %v8021 = vunpack.c.l.b16 %v8012
        %v8022 = vunpack.c.h.b16 %v8012
        %v8023 = vunpack.c.l.b16 %v8013
        %v8024 = vunpack.c.h.b16 %v8013
        %v8025 = vunpack.c.l.b16 %v8014
        %v8026 = vunpack.c.h.b16 %v8014
        %v8027 = vpack.c.b16 %v8021, %v8019
        %v8028 = vpack.c.b16 %v8022, %v8020
        %v8029 = vpack.c.b16 %v8025, %v8023
        %v8030 = vpack.c.b16 %v8026, %v8024
        %v8034 = vsel %vm7774, %v8029, 0
        %v8037 = vsel %vm7774, %v8030, 0
        %8039 = vmatprep.subr.bf16.mxu0 %v8028
        %8040 = vmatpush1.bf16.msra.mxu0 %v8027
        %8041 = vmatprep.subr.bf16.mxu0 %v8037
        %8042 = vmatpush1.bf16.msra.mxu0 %v8034
        %8043 = vmatprep.subr.bf16.mxu0 0
        %8044 = vmatpush1.bf16.msra.mxu0 0
        %8045 = vmatprep.subr.bf16.mxu0 0
        %8046 = vmatpush1.bf16.msra.mxu0 0
        %8047 = vmatprep.subr.bf16.mxu0 0
        %8048 = vmatpush1.bf16.msra.mxu0 0
        %8049 = vmatprep.subr.bf16.mxu0 0
        %8050 = vmatpush1.bf16.msra.mxu0 0
        %8051 = vmatprep.subr.bf16.mxu0 0
        %8052 = vmatpush1.bf16.msra.mxu0 0
        %8053 = vmatprep.subr.bf16.mxu0 0
        %8054 = vmatpush1.bf16.msra.mxu0 0
        %8055 = vmatprep.subr.bf16.mxu0 0
        %8056 = vmatpush1.bf16.msra.mxu0 0
        %8057 = vmatprep.subr.bf16.mxu0 0
        %8058 = vmatpush1.bf16.msra.mxu0 0
        %8059 = vmatprep.subr.bf16.mxu0 0
        %8060 = vmatpush1.bf16.msra.mxu0 0
        %8061 = vmatprep.subr.bf16.mxu0 0
        %8062 = vmatpush1.bf16.msra.mxu0 0
        %8063 = vmatprep.subr.bf16.mxu0 0
        %8064 = vmatpush1.bf16.msra.mxu0 0
        %8065 = vmatprep.subr.bf16.mxu0 0
        %8066 = vmatpush1.bf16.msra.mxu0 0
        %8067 = vmatprep.subr.bf16.mxu0 0
        %8068 = vmatpush1.bf16.msra.mxu0 0
        %8069 = vmatprep.subr.bf16.mxu0 0
        %8070 = vmatpush1.bf16.msra.mxu0 0
        %8071 = vmatprep.mubr.bf16.mxu0 0
        %8072 = vmatmul.mubr.bf16.gmra.mrb[0].mxu0 %v7769
        %v8073 = vpop.f32.mrb[0].mxu0
        %v8074 = vadd.f32 0.0, %v8073
        %v8075 = vpop.f32.mrb[0].mxu0
        %v8076 = vadd.f32 0.0, %v8075
        %v8077 = vpop.f32.mrb[0].mxu0
        %v8078 = vadd.f32 0.0, %v8077
        %v8079 = vpop.f32.mrb[0].mxu0
        %v8080 = vadd.f32 0.0, %v8079
        %8081 = vmatprep.mubr.bf16.mxu0 0
        %8082 = vmatmul.mubr.bf16.gmra.mrb[0].mxu0 %v7772
        %v8083 = vpop.f32.mrb[0].mxu0
        %v8084 = vadd.f32 0.0, %v8083
        %v8085 = vpop.f32.mrb[0].mxu0
        %v8086 = vadd.f32 0.0, %v8085
        %v8087 = vpop.f32.mrb[0].mxu0
        %v8088 = vadd.f32 0.0, %v8087
        %v8089 = vpop.f32.mrb[0].mxu0
        %v8090 = vadd.f32 0.0, %v8089
        %8091 = vdwg.mxu0
        %v8092 = vpack.c.bf16 %v8078, %v8074
        %v8093 = vpack.c.bf16 %v8080, %v8076
        %v8094 = vpack.c.bf16 %v8088, %v8084
        %v8095 = vpack.c.bf16 %v8090, %v8086
        %v8096 = vld [vmem:[#allocation16] sm:$0xf]
        %v8097 = vld [vmem:[#allocation16 + $0x4] sm:$0xf]
        %v8098 = vld [vmem:[#allocation18] sm:$0xff]
        %v8099 = vld [vmem:[#allocation18 + $0x8] sm:$0xff]
        %8101 = vset.pattern.permute.xlu0 0
        %8102 = vperm.xlu0 %8101, %v8098
        %v8103 = vpop.permute.xlu0 %8102
        %8106 = vset.pattern.permute.xlu0 0
        %8107 = vperm.xlu0 %8106, %v8099
        %v8108 = vpop.permute.xlu0 %8107
        %v8112 = vunpack.c.l.b16 %v8096
        %v8113 = vunpack.c.l.b16 %v8097
        %v8114 = vpack.c.b16 %v8113, %v8112
        %8116 = vmatprep.subr.bf16.mxu0 %v7835
        %8117 = vmatpush1.bf16.msra.mxu0 %v7834
        %8118 = vmatprep.subr.bf16.mxu0 %v7837
        %8119 = vmatpush1.bf16.msra.mxu0 %v7836
        %8120 = vmatprep.subr.bf16.mxu0 %v7921
        %8121 = vmatpush1.bf16.msra.mxu0 %v7920
        %8122 = vmatprep.subr.bf16.mxu0 %v7923
        %8123 = vmatpush1.bf16.msra.mxu0 %v7922
        %8124 = vmatprep.subr.bf16.mxu0 %v8007
        %8125 = vmatpush1.bf16.msra.mxu0 %v8006
        %8126 = vmatprep.subr.bf16.mxu0 %v8009
        %8127 = vmatpush1.bf16.msra.mxu0 %v8008
        %8128 = vmatprep.subr.bf16.mxu0 %v8093
        %8129 = vmatpush1.bf16.msra.mxu0 %v8092
        %8130 = vmatprep.subr.bf16.mxu0 %v8095
        %8131 = vmatpush1.bf16.msra.mxu0 %v8094
        %8132 = vmatprep.subr.bf16.mxu0 0
        %8133 = vmatpush1.bf16.msra.mxu0 0
        %8134 = vmatprep.subr.bf16.mxu0 0
        %8135 = vmatpush1.bf16.msra.mxu0 0
        %8136 = vmatprep.subr.bf16.mxu0 0
        %8137 = vmatpush1.bf16.msra.mxu0 0
        %8138 = vmatprep.subr.bf16.mxu0 0
        %8139 = vmatpush1.bf16.msra.mxu0 0
        %8140 = vmatprep.subr.bf16.mxu0 0
        %8141 = vmatpush1.bf16.msra.mxu0 0
        %8142 = vmatprep.subr.bf16.mxu0 0
        %8143 = vmatpush1.bf16.msra.mxu0 0
        %8144 = vmatprep.subr.bf16.mxu0 0
        %8145 = vmatpush1.bf16.msra.mxu0 0
        %8146 = vmatprep.subr.bf16.mxu0 0
        %8147 = vmatpush1.bf16.msra.mxu0 0
        %8148 = vmatprep.mubr.bf16.mxu0 0
        %8149 = vmatmul.mubr.bf16.gmra.mrb[0].mxu0 %v8114
        %v8150 = vpop.f32.mrb[0].mxu0
        %v8151 = vadd.f32 %v8103, %v8150
        %v8152 = vpop.f32.mrb[0].mxu0
        %v8153 = vadd.f32 %v8103, %v8152
        %v8154 = vpop.f32.mrb[0].mxu0
        %v8155 = vadd.f32 %v8108, %v8154
        %v8156 = vpop.f32.mrb[0].mxu0
        %v8157 = vadd.f32 %v8108, %v8156
        %8158 = vdwg.mxu0
        %v8159 = vpack.c.bf16 %v8155, %v8151
        %v8160 = vpack.c.bf16 %v8157, %v8153
        %8162 = vrot.lane.b32.xlu0 %v8159, 84
        %v8163 = vpop.permute.xlu0 %8162
        %8166 = vrot.lane.b32.xlu0 %v7074, 127
        %v8167 = vpop.permute.xlu0 %8166
        %8168 = vrot.lane.b32.xlu0 %v7075, 127
        %v8169 = vpop.permute.xlu0 %8168
        %v8170 = vsel %vm1395, %v8167, %v8169
        %8171 = vrot.lane.b32.xlu0 %v8159, 83
        %v8172 = vpop.permute.xlu0 %8171
        %8173 = vrot.lane.b32.xlu0 %v7074, 126
        %v8174 = vpop.permute.xlu0 %8173
        %8175 = vrot.lane.b32.xlu0 %v7075, 126
        %v8176 = vpop.permute.xlu0 %8175
        %v8177 = vsel %vm1455, %v8174, %v8176
        %8178 = vrot.lane.b32.xlu0 %v8159, 82
        %v8179 = vpop.permute.xlu0 %8178
        %8180 = vrot.lane.b32.xlu0 %v7074, 108
        %v8181 = vpop.permute.xlu0 %8180
        %8182 = vrot.lane.b32.xlu0 %v7075, 108
        %v8183 = vpop.permute.xlu0 %8182
        %v8184 = vsel %vm6672, %v8181, %v8183
        %8185 = vrot.lane.b32.xlu0 %v8159, 64
        %v8186 = vpop.permute.xlu0 %8185
        %8187 = vrot.lane.b32.xlu0 %v7074, 107
        %v8188 = vpop.permute.xlu0 %8187
        %8189 = vrot.lane.b32.xlu0 %v7075, 107
        %v8190 = vpop.permute.xlu0 %8189
        %v8191 = vsel %vm6684, %v8188, %v8190
        %8192 = vrot.lane.b32.xlu0 %v8159, 63
        %v8193 = vpop.permute.xlu0 %8192
        %8194 = vrot.lane.b32.xlu0 %v7074, 106
        %v8195 = vpop.permute.xlu0 %8194
        %8196 = vrot.lane.b32.xlu0 %v7075, 106
        %v8197 = vpop.permute.xlu0 %8196
        %v8198 = vsel %vm6696, %v8195, %v8197
        %8199 = vrot.lane.b32.xlu0 %v8159, 62
        %v8200 = vpop.permute.xlu0 %8199
        %8201 = vrot.lane.b32.xlu0 %v7074, 88
        %v8202 = vpop.permute.xlu0 %8201
        %8203 = vrot.lane.b32.xlu0 %v7075, 88
        %v8204 = vpop.permute.xlu0 %8203
        %v8205 = vsel %vm6711, %v8202, %v8204
        %8207 = vrot.lane.b32.xlu0 %v8159, 44
        %v8208 = vpop.permute.xlu0 %8207
        %8209 = vrot.lane.b32.xlu0 %v8160, 44
        %v8210 = vpop.permute.xlu0 %8209
        %vm8211 = vcmask 359424
        %v8212 = vsel %vm8211, %v8208, %v8210
        %8213 = vrot.lane.b32.xlu0 %v7074, 87
        %v8214 = vpop.permute.xlu0 %8213
        %8215 = vrot.lane.b32.xlu0 %v7075, 87
        %v8216 = vpop.permute.xlu0 %8215
        %v8217 = vsel %vm6726, %v8214, %v8216
        %8218 = vrot.lane.b32.xlu0 %v8159, 43
        %v8219 = vpop.permute.xlu0 %8218
        %8220 = vrot.lane.b32.xlu0 %v8160, 43
        %v8221 = vpop.permute.xlu0 %8220
        %vm8222 = vcmask 351232
        %v8223 = vsel %vm8222, %v8219, %v8221
        %8224 = vrot.lane.b32.xlu0 %v8160, 84
        %v8225 = vpop.permute.xlu0 %8224
        %v8226 = vsel %vm1515, %v8163, %v8225
        %8227 = vrot.lane.b32.xlu0 %v7074, 86
        %v8228 = vpop.permute.xlu0 %8227
        %8229 = vrot.lane.b32.xlu0 %v7075, 86
        %v8230 = vpop.permute.xlu0 %8229
        %8231 = vrot.lane.b32.xlu0 %v8163, 86
        %v8232 = vpop.permute.xlu0 %8231
        %8233 = vrot.lane.b32.xlu0 %v8226, 86
        %v8234 = vpop.permute.xlu0 %8233
        %v8235 = vsel %vm6741, %v8228, %v8230
        %v8236 = vsel %vm6741, %v8232, %v8234
        %v8237 = vld [vmem:[%s37] sm:$0xff]
        %v8238 = vld [vmem:[%s37 + $0x8] sm:$0xf]
        %v8239 = vld [vmem:[%s37 + $0xc] sm:$0xff]
        %v8240 = vld [vmem:[%s37 + $0x14] sm:$0xf]
        %v8241 = vld [vmem:[#allocation19] sm:$0xff]
        %v8242 = vld [vmem:[#allocation19 + $0x8] sm:$0xff]
        %8244 = vset.pattern.permute.xlu0 0
        %8245 = vperm.xlu0 %8244, %v8241
        %v8246 = vpop.permute.xlu0 %8245
        %8249 = vset.pattern.permute.xlu0 0
        %8250 = vperm.xlu0 %8249, %v8242
        %v8251 = vpop.permute.xlu0 %8250
        %v8257 = vunpack.c.l.b16 %v8237
        %v8258 = vunpack.c.h.b16 %v8237
        %v8259 = vunpack.c.l.b16 %v8238
        %v8260 = vunpack.c.l.b16 %v8239
        %v8261 = vunpack.c.h.b16 %v8239
        %v8262 = vunpack.c.l.b16 %v8240
        %v8263 = vpack.c.b16 %v8260, %v8257
        %v8264 = vpack.c.b16 %v8261, %v8258
        %v8265 = vpack.c.b16 %v8262, %v8259
        %8268 = vrot.lane.b32.xlu0 %v7074, 44
        %v8269 = vpop.permute.xlu0 %8268
        %8270 = vrot.lane.b32.xlu0 %v7075, 44
        %v8271 = vpop.permute.xlu0 %8270
        %8272 = vrot.lane.b32.xlu0 %v8163, 44
        %v8273 = vpop.permute.xlu0 %8272
        %8274 = vrot.lane.b32.xlu0 %v8170, 44
        %v8275 = vpop.permute.xlu0 %8274
        %8276 = vrot.lane.b32.xlu0 %v8169, 44
        %v8277 = vpop.permute.xlu0 %8276
        %8278 = vrot.lane.b32.xlu0 %v8172, 44
        %v8279 = vpop.permute.xlu0 %8278
        %8280 = vrot.lane.b32.xlu0 %v8177, 44
        %v8281 = vpop.permute.xlu0 %8280
        %8282 = vrot.lane.b32.xlu0 %v8176, 44
        %v8283 = vpop.permute.xlu0 %8282
        %8284 = vrot.lane.b32.xlu0 %v8179, 44
        %v8285 = vpop.permute.xlu0 %8284
        %8286 = vrot.lane.b32.xlu0 %v8184, 44
        %v8287 = vpop.permute.xlu0 %8286
        %8288 = vrot.lane.b32.xlu0 %v8183, 44
        %v8289 = vpop.permute.xlu0 %8288
        %8290 = vrot.lane.b32.xlu0 %v8186, 44
        %v8291 = vpop.permute.xlu0 %8290
        %8292 = vrot.lane.b32.xlu0 %v8191, 44
        %v8293 = vpop.permute.xlu0 %8292
        %8294 = vrot.lane.b32.xlu0 %v8190, 44
        %v8295 = vpop.permute.xlu0 %8294
        %8296 = vrot.lane.b32.xlu0 %v8193, 44
        %v8297 = vpop.permute.xlu0 %8296
        %8298 = vrot.lane.b32.xlu0 %v8198, 44
        %v8299 = vpop.permute.xlu0 %8298
        %8300 = vrot.lane.b32.xlu0 %v8197, 44
        %v8301 = vpop.permute.xlu0 %8300
        %8302 = vrot.lane.b32.xlu0 %v8200, 44
        %v8303 = vpop.permute.xlu0 %8302
        %8304 = vrot.lane.b32.xlu0 %v8205, 44
        %v8305 = vpop.permute.xlu0 %8304
        %8306 = vrot.lane.b32.xlu0 %v8204, 44
        %v8307 = vpop.permute.xlu0 %8306
        %8308 = vrot.lane.b32.xlu0 %v8208, 44
        %v8309 = vpop.permute.xlu0 %8308
        %8310 = vrot.lane.b32.xlu0 %v8212, 44
        %v8311 = vpop.permute.xlu0 %8310
        %8312 = vrot.lane.b32.xlu0 %v8217, 44
        %v8313 = vpop.permute.xlu0 %8312
        %8314 = vrot.lane.b32.xlu0 %v8216, 44
        %v8315 = vpop.permute.xlu0 %8314
        %8316 = vrot.lane.b32.xlu0 %v8219, 44
        %v8317 = vpop.permute.xlu0 %8316
        %8318 = vrot.lane.b32.xlu0 %v8223, 44
        %v8319 = vpop.permute.xlu0 %8318
        %8320 = vrot.lane.b32.xlu0 %v8235, 44
        %v8321 = vpop.permute.xlu0 %8320
        %8322 = vrot.lane.b32.xlu0 %v8230, 44
        %v8323 = vpop.permute.xlu0 %8322
        %8324 = vrot.lane.b32.xlu0 %v8236, 44
        %v8325 = vpop.permute.xlu0 %8324
        %8326 = vrot.lane.b32.xlu0 %v8234, 44
        %v8327 = vpop.permute.xlu0 %8326
        %v8328 = vsel %vm8211, %v8269, %v8271
        %v8329 = vsel %vm8211, %v8275, %v8277
        %v8330 = vsel %vm8211, %v8281, %v8283
        %v8331 = vsel %vm8211, %v8287, %v8289
        %v8332 = vsel %vm8211, %v8293, %v8295
        %v8333 = vsel %vm8211, %v8299, %v8301
        %v8334 = vsel %vm8211, %v8305, %v8307
        %v8335 = vsel %vm8211, %v8309, %v8311
        %v8336 = vsel %vm8211, %v8313, %v8315
        %v8337 = vsel %vm8211, %v8317, %v8319
        %v8338 = vsel %vm8211, %v8321, %v8323
        %v8339 = vsel %vm8211, %v8325, %v8327
        %v8359 = vsel %vm7634, %v8265, 0
        %8361 = vmatprep.subr.bf16.mxu0 0
        %8362 = vmatpush1.bf16.msra.mxu0 %v8328
        %8363 = vmatprep.subr.bf16.mxu0 0
        %8364 = vmatpush1.bf16.msra.mxu0 %v8273
        %8365 = vmatprep.subr.bf16.mxu0 0
        %8366 = vmatpush1.bf16.msra.mxu0 %v8329
        %8367 = vmatprep.subr.bf16.mxu0 0
        %8368 = vmatpush1.bf16.msra.mxu0 %v8279
        %8369 = vmatprep.subr.bf16.mxu0 0
        %8370 = vmatpush1.bf16.msra.mxu0 %v8330
        %8371 = vmatprep.subr.bf16.mxu0 0
        %8372 = vmatpush1.bf16.msra.mxu0 %v8285
        %8373 = vmatprep.subr.bf16.mxu0 0
        %8374 = vmatpush1.bf16.msra.mxu0 %v8331
        %8375 = vmatprep.subr.bf16.mxu0 0
        %8376 = vmatpush1.bf16.msra.mxu0 %v8291
        %8377 = vmatprep.subr.bf16.mxu0 0
        %8378 = vmatpush1.bf16.msra.mxu0 %v8332
        %8379 = vmatprep.subr.bf16.mxu0 0
        %8380 = vmatpush1.bf16.msra.mxu0 %v8297
        %8381 = vmatprep.subr.bf16.mxu0 0
        %8382 = vmatpush1.bf16.msra.mxu0 %v8333
        %8383 = vmatprep.subr.bf16.mxu0 0
        %8384 = vmatpush1.bf16.msra.mxu0 %v8303
        %8385 = vmatprep.subr.bf16.mxu0 0
        %8386 = vmatpush1.bf16.msra.mxu0 %v8334
        %8387 = vmatprep.subr.bf16.mxu0 0
        %8388 = vmatpush1.bf16.msra.mxu0 %v8335
        %8389 = vmatprep.subr.bf16.mxu0 0
        %8390 = vmatpush1.bf16.msra.mxu0 %v8336
        %8391 = vmatprep.subr.bf16.mxu0 0
        %8392 = vmatpush1.bf16.msra.mxu0 %v8337
        %8393 = vmatprep.mubr.bf16.mxu0 %v8264
        %8394 = vmatmul.mubr.bf16.gmra.mrb[0].mxu0 %v8263
        %v8395 = vpop.f32.mrb[0].mxu0
        %v8396 = vadd.f32 %v8246, %v8395
        %v8397 = vpop.f32.mrb[0].mxu0
        %v8398 = vpop.f32.mrb[0].mxu0
        %v8399 = vadd.f32 %v8251, %v8398
        %v8400 = vpop.f32.mrb[0].mxu0
        %8401 = vdwg.mxu0
        %8402 = vmatprep.subr.bf16.mxu0 0
        %8403 = vmatpush1.bf16.msra.mxu0 %v8338
        %8404 = vmatprep.subr.bf16.mxu0 0
        %8405 = vmatpush1.bf16.msra.mxu0 %v8339
        %8406 = vmatprep.subr.bf16.mxu0 0
        %8407 = vmatpush1.bf16.msra.mxu0 0
        %8408 = vmatprep.subr.bf16.mxu0 0
        %8409 = vmatpush1.bf16.msra.mxu0 0
        %8410 = vmatprep.subr.bf16.mxu0 0
        %8411 = vmatpush1.bf16.msra.mxu0 0
        %8412 = vmatprep.subr.bf16.mxu0 0
        %8413 = vmatpush1.bf16.msra.mxu0 0
        %8414 = vmatprep.subr.bf16.mxu0 0
        %8415 = vmatpush1.bf16.msra.mxu0 0
        %8416 = vmatprep.subr.bf16.mxu0 0
        %8417 = vmatpush1.bf16.msra.mxu0 0
        %8418 = vmatprep.subr.bf16.mxu0 0
        %8419 = vmatpush1.bf16.msra.mxu0 0
        %8420 = vmatprep.subr.bf16.mxu0 0
        %8421 = vmatpush1.bf16.msra.mxu0 0
        %8422 = vmatprep.subr.bf16.mxu0 0
        %8423 = vmatpush1.bf16.msra.mxu0 0
        %8424 = vmatprep.subr.bf16.mxu0 0
        %8425 = vmatpush1.bf16.msra.mxu0 0
        %8426 = vmatprep.subr.bf16.mxu0 0
        %8427 = vmatpush1.bf16.msra.mxu0 0
        %8428 = vmatprep.subr.bf16.mxu0 0
        %8429 = vmatpush1.bf16.msra.mxu0 0
        %8430 = vmatprep.subr.bf16.mxu0 0
        %8431 = vmatpush1.bf16.msra.mxu0 0
        %8432 = vmatprep.subr.bf16.mxu0 0
        %8433 = vmatpush1.bf16.msra.mxu0 0
        %8434 = vmatprep.mubr.bf16.mxu0 0
        %8435 = vmatmul.mubr.bf16.gmra.mrb[0].mxu0 %v8359
        %v8436 = vpop.f32.mrb[0].mxu0
        %v8437 = vadd.f32 %v8396, %v8436
        %v8438 = vpop.f32.mrb[0].mxu0
        %v8439 = vpop.f32.mrb[0].mxu0
        %v8440 = vadd.f32 %v8399, %v8439
        %v8441 = vpop.f32.mrb[0].mxu0
        %8442 = vdwg.mxu0
        %v8443 = vmax.f32 %v8437, 0.0
        %v8444 = vmax.f32 %v8440, 0.0
        %v8445 = vpack.c.bf16 %v8444, %v8443
        %8447 = vrot.lane.b32.xlu0 %v8445, 127
        %v8448 = vpop.permute.xlu0 %8447
        %8450 = vrot.lane.b32.xlu0 %v8445, 126
        %v8451 = vpop.permute.xlu0 %8450
        %8453 = vrot.lane.b32.xlu0 %v8445, 108
        %v8454 = vpop.permute.xlu0 %8453
        %8456 = vrot.lane.b32.xlu0 %v8445, 107
        %v8457 = vpop.permute.xlu0 %8456
        %8459 = vrot.lane.b32.xlu0 %v8445, 106
        %v8460 = vpop.permute.xlu0 %8459
        %8462 = vrot.lane.b32.xlu0 %v8445, 88
        %v8463 = vpop.permute.xlu0 %8462
        %8465 = vrot.lane.b32.xlu0 %v8445, 87
        %v8466 = vpop.permute.xlu0 %8465
        %8468 = vrot.lane.b32.xlu0 %v8445, 86
        %v8469 = vpop.permute.xlu0 %8468
        %v8471 = vld [vmem:[%s41] sm:$0xff]
        %v8472 = vld [vmem:[%s41 + $0x8] sm:$0xff]
        %v8473 = vld [vmem:[#allocation21] sm:$0xff]
        %v8474 = vld [vmem:[#allocation21 + $0x8] sm:$0xff]
        %8476 = vset.pattern.permute.xlu0 0
        %8477 = vperm.xlu0 %8476, %v8473
        %v8478 = vpop.permute.xlu0 %8477
        %8481 = vset.pattern.permute.xlu0 0
        %8482 = vperm.xlu0 %8481, %v8474
        %v8483 = vpop.permute.xlu0 %8482
        %v8487 = vunpack.c.l.b16 %v8471
        %v8488 = vunpack.c.h.b16 %v8471
        %v8489 = vunpack.c.l.b16 %v8472
        %v8490 = vunpack.c.h.b16 %v8472
        %v8491 = vpack.c.b16 %v8489, %v8487
        %v8492 = vpack.c.b16 %v8490, %v8488
        %v8495 = vsel %vm1880, %v8492, 0
        %8497 = vmatprep.subr.bf16.mxu0 0
        %8498 = vmatpush1.bf16.msra.mxu0 %v8445
        %8499 = vmatprep.subr.bf16.mxu0 0
        %8500 = vmatpush1.bf16.msra.mxu0 %v8448
        %8501 = vmatprep.subr.bf16.mxu0 0
        %8502 = vmatpush1.bf16.msra.mxu0 %v8451
        %8503 = vmatprep.subr.bf16.mxu0 0
        %8504 = vmatpush1.bf16.msra.mxu0 %v8454
        %8505 = vmatprep.subr.bf16.mxu0 0
        %8506 = vmatpush1.bf16.msra.mxu0 %v8457
        %8507 = vmatprep.subr.bf16.mxu0 0
        %8508 = vmatpush1.bf16.msra.mxu0 %v8460
        %8509 = vmatprep.subr.bf16.mxu0 0
        %8510 = vmatpush1.bf16.msra.mxu0 %v8463
        %8511 = vmatprep.subr.bf16.mxu0 0
        %8512 = vmatpush1.bf16.msra.mxu0 %v8466
        %8513 = vmatprep.subr.bf16.mxu0 0
        %8514 = vmatpush1.bf16.msra.mxu0 %v8469
        %8515 = vmatprep.subr.bf16.mxu0 0
        %8516 = vmatpush1.bf16.msra.mxu0 0
        %8517 = vmatprep.subr.bf16.mxu0 0
        %8518 = vmatpush1.bf16.msra.mxu0 0
        %8519 = vmatprep.subr.bf16.mxu0 0
        %8520 = vmatpush1.bf16.msra.mxu0 0
        %8521 = vmatprep.subr.bf16.mxu0 0
        %8522 = vmatpush1.bf16.msra.mxu0 0
        %8523 = vmatprep.subr.bf16.mxu0 0
        %8524 = vmatpush1.bf16.msra.mxu0 0
        %8525 = vmatprep.subr.bf16.mxu0 0
        %8526 = vmatpush1.bf16.msra.mxu0 0
        %8527 = vmatprep.subr.bf16.mxu0 0
        %8528 = vmatpush1.bf16.msra.mxu0 0
        %8529 = vmatprep.mubr.bf16.mxu0 %v8495
        %8530 = vmatmul.mubr.bf16.gmra.mrb[0].mxu0 %v8491
        %v8531 = vpop.f32.mrb[0].mxu0
        %v8532 = vadd.f32 %v8478, %v8531
        %v8533 = vpop.f32.mrb[0].mxu0
        %v8534 = vpop.f32.mrb[0].mxu0
        %v8535 = vadd.f32 %v8483, %v8534
        %v8536 = vpop.f32.mrb[0].mxu0
        %8537 = vdwg.mxu0
        %v8538 = vmax.f32 %v8532, 0.0
        %v8539 = vmax.f32 %v8535, 0.0
        %v8540 = vpack.c.bf16 %v8539, %v8538
        %v8541 = vld [vmem:[%s45] sm:$0xff]
        %v8542 = vld [vmem:[%s45 + $0x8] sm:$0xf]
        %v8543 = vld [vmem:[%s45 + $0xc] sm:$0xff]
        %v8544 = vld [vmem:[%s45 + $0x14] sm:$0xf]
        %v8545 = vld [vmem:[%s45 + $0x18] sm:$0xff]
        %v8546 = vld [vmem:[%s45 + $0x20] sm:$0xf]
        %v8547 = vld [vmem:[%s45 + $0x24] sm:$0xff]
        %v8548 = vld [vmem:[%s45 + $0x2c] sm:$0xf]
        %v8549 = vld [vmem:[%s45 + $0x30] sm:$0xff]
        %v8550 = vld [vmem:[%s45 + $0x38] sm:$0xf]
        %v8551 = vld [vmem:[%s45 + $0x3c] sm:$0xff]
        %v8552 = vld [vmem:[%s45 + $0x44] sm:$0xf]
        %v8553 = vld [vmem:[%s45 + $0x48] sm:$0xff]
        %v8554 = vld [vmem:[%s45 + $0x50] sm:$0xf]
        %v8555 = vld [vmem:[%s45 + $0x54] sm:$0xff]
        %v8556 = vld [vmem:[%s45 + $0x5c] sm:$0xf]
        %v8573 = vunpack.c.l.b16 %v8541
        %v8574 = vunpack.c.h.b16 %v8541
        %v8575 = vunpack.c.l.b16 %v8542
        %v8576 = vunpack.c.l.b16 %v8543
        %v8577 = vunpack.c.h.b16 %v8543
        %v8578 = vunpack.c.l.b16 %v8544
        %v8579 = vunpack.c.l.b16 %v8545
        %v8580 = vunpack.c.h.b16 %v8545
        %v8581 = vunpack.c.l.b16 %v8546
        %v8582 = vunpack.c.l.b16 %v8547
        %v8583 = vunpack.c.h.b16 %v8547
        %v8584 = vunpack.c.l.b16 %v8548
        %v8585 = vunpack.c.l.b16 %v8549
        %v8586 = vunpack.c.h.b16 %v8549
        %v8587 = vunpack.c.l.b16 %v8550
        %v8588 = vunpack.c.l.b16 %v8551
        %v8589 = vunpack.c.h.b16 %v8551
        %v8590 = vunpack.c.l.b16 %v8552
        %v8591 = vunpack.c.l.b16 %v8553
        %v8592 = vunpack.c.h.b16 %v8553
        %v8593 = vunpack.c.l.b16 %v8554
        %v8594 = vunpack.c.l.b16 %v8555
        %v8595 = vunpack.c.h.b16 %v8555
        %v8596 = vunpack.c.l.b16 %v8556
        %v8597 = vpack.c.b16 %v8576, %v8573
        %v8598 = vpack.c.b16 %v8577, %v8574
        %v8599 = vpack.c.b16 %v8578, %v8575
        %v8600 = vpack.c.b16 %v8582, %v8579
        %v8601 = vpack.c.b16 %v8583, %v8580
        %v8602 = vpack.c.b16 %v8584, %v8581
        %v8603 = vpack.c.b16 %v8588, %v8585
        %v8604 = vpack.c.b16 %v8589, %v8586
        %v8605 = vpack.c.b16 %v8590, %v8587
        %v8606 = vpack.c.b16 %v8594, %v8591
        %v8607 = vpack.c.b16 %v8595, %v8592
        %v8608 = vpack.c.b16 %v8596, %v8593
        %vm8621 = vcmask 523264
        %v8623 = vsel %vm8621, %v8540, 0
        %8625 = vmatprep.subr.bf16.mxu0 %v8598
        %8626 = vmatpush1.bf16.msra.mxu0 %v8597
        %8627 = vmatprep.subr.bf16.mxu0 %v8601
        %8628 = vmatpush1.bf16.msra.mxu0 %v8600
        %8629 = vmatprep.subr.bf16.mxu0 %v8604
        %8630 = vmatpush1.bf16.msra.mxu0 %v8603
        %8631 = vmatprep.subr.bf16.mxu0 %v8607
        %8632 = vmatpush1.bf16.msra.mxu0 %v8606
        %8633 = vmatprep.subr.bf16.mxu0 0
        %8634 = vmatpush1.bf16.msra.mxu0 0
        %8635 = vmatprep.subr.bf16.mxu0 0
        %8636 = vmatpush1.bf16.msra.mxu0 0
        %8637 = vmatprep.subr.bf16.mxu0 0
        %8638 = vmatpush1.bf16.msra.mxu0 0
        %8639 = vmatprep.subr.bf16.mxu0 0
        %8640 = vmatpush1.bf16.msra.mxu0 0
        %8641 = vmatprep.subr.bf16.mxu0 0
        %8642 = vmatpush1.bf16.msra.mxu0 0
        %8643 = vmatprep.subr.bf16.mxu0 0
        %8644 = vmatpush1.bf16.msra.mxu0 0
        %8645 = vmatprep.subr.bf16.mxu0 0
        %8646 = vmatpush1.bf16.msra.mxu0 0
        %8647 = vmatprep.subr.bf16.mxu0 0
        %8648 = vmatpush1.bf16.msra.mxu0 0
        %8649 = vmatprep.subr.bf16.mxu0 0
        %8650 = vmatpush1.bf16.msra.mxu0 0
        %8651 = vmatprep.subr.bf16.mxu0 0
        %8652 = vmatpush1.bf16.msra.mxu0 0
        %8653 = vmatprep.subr.bf16.mxu0 0
        %8654 = vmatpush1.bf16.msra.mxu0 0
        %8655 = vmatprep.subr.bf16.mxu0 0
        %8656 = vmatpush1.bf16.msra.mxu0 0
        %8657 = vmatprep.mubr.bf16.mxu0 0
        %8658 = vmatmul.mubr.bf16.gmra.mrb[0].mxu0 %v8623
        %v8659 = vpop.f32.mrb[0].mxu0
        %v8660 = vadd.f32 0.0, %v8659
        %v8661 = vpop.f32.mrb[0].mxu0
        %v8662 = vadd.f32 0.0, %v8661
        %v8663 = vpop.f32.mrb[0].mxu0
        %v8664 = vadd.f32 0.0, %v8663
        %v8665 = vpop.f32.mrb[0].mxu0
        %v8666 = vadd.f32 0.0, %v8665
        %8667 = vdwg.mxu0
        %8668 = vmatprep.subr.bf16.mxu0 0
        %8669 = vmatpush1.bf16.msra.mxu0 %v8599
        %8670 = vmatprep.subr.bf16.mxu0 0
        %8671 = vmatpush1.bf16.msra.mxu0 %v8602
        %8672 = vmatprep.subr.bf16.mxu0 0
        %8673 = vmatpush1.bf16.msra.mxu0 %v8605
        %8674 = vmatprep.subr.bf16.mxu0 0
        %8675 = vmatpush1.bf16.msra.mxu0 %v8608
        %8676 = vmatprep.subr.bf16.mxu0 0
        %8677 = vmatpush1.bf16.msra.mxu0 0
        %8678 = vmatprep.subr.bf16.mxu0 0
        %8679 = vmatpush1.bf16.msra.mxu0 0
        %8680 = vmatprep.subr.bf16.mxu0 0
        %8681 = vmatpush1.bf16.msra.mxu0 0
        %8682 = vmatprep.subr.bf16.mxu0 0
        %8683 = vmatpush1.bf16.msra.mxu0 0
        %8684 = vmatprep.subr.bf16.mxu0 0
        %8685 = vmatpush1.bf16.msra.mxu0 0
        %8686 = vmatprep.subr.bf16.mxu0 0
        %8687 = vmatpush1.bf16.msra.mxu0 0
        %8688 = vmatprep.subr.bf16.mxu0 0
        %8689 = vmatpush1.bf16.msra.mxu0 0
        %8690 = vmatprep.subr.bf16.mxu0 0
        %8691 = vmatpush1.bf16.msra.mxu0 0
        %8692 = vmatprep.subr.bf16.mxu0 0
        %8693 = vmatpush1.bf16.msra.mxu0 0
        %8694 = vmatprep.subr.bf16.mxu0 0
        %8695 = vmatpush1.bf16.msra.mxu0 0
        %8696 = vmatprep.subr.bf16.mxu0 0
        %8697 = vmatpush1.bf16.msra.mxu0 0
        %8698 = vmatprep.subr.bf16.mxu0 0
        %8699 = vmatpush1.bf16.msra.mxu0 0
        %8700 = vmatprep.mubr.bf16.mxu0 0
        %8701 = vmatmul.mubr.bf16.gmra.mrb[0].mxu0 %v8623
        %v8702 = vpop.f32.mrb[0].mxu0
        %v8703 = vadd.f32 0.0, %v8702
        %v8704 = vpop.f32.mrb[0].mxu0
        %v8705 = vpop.f32.mrb[0].mxu0
        %v8706 = vadd.f32 0.0, %v8705
        %v8707 = vpop.f32.mrb[0].mxu0
        %8708 = vdwg.mxu0
        %v8709 = vpack.c.bf16 %v8664, %v8660
        %v8710 = vpack.c.bf16 %v8666, %v8662
        %v8711 = vpack.c.bf16 %v8706, %v8703
        %s8712 = scalar_lea.vmem %s45, 96
        %v8713 = vld [vmem:[%s8712] sm:$0xff]
        %v8714 = vld [vmem:[%s8712 + $0x8] sm:$0xf]
        %v8715 = vld [vmem:[%s8712 + $0xc] sm:$0xff]
        %v8716 = vld [vmem:[%s8712 + $0x14] sm:$0xf]
        %v8717 = vld [vmem:[%s8712 + $0x18] sm:$0xff]
        %v8718 = vld [vmem:[%s8712 + $0x20] sm:$0xf]
        %v8719 = vld [vmem:[%s8712 + $0x24] sm:$0xff]
        %v8720 = vld [vmem:[%s8712 + $0x2c] sm:$0xf]
        %v8721 = vld [vmem:[%s8712 + $0x30] sm:$0xff]
        %v8722 = vld [vmem:[%s8712 + $0x38] sm:$0xf]
        %v8723 = vld [vmem:[%s8712 + $0x3c] sm:$0xff]
        %v8724 = vld [vmem:[%s8712 + $0x44] sm:$0xf]
        %v8725 = vld [vmem:[%s8712 + $0x48] sm:$0xff]
        %v8726 = vld [vmem:[%s8712 + $0x50] sm:$0xf]
        %v8727 = vld [vmem:[%s8712 + $0x54] sm:$0xff]
        %v8728 = vld [vmem:[%s8712 + $0x5c] sm:$0xf]
        %v8745 = vunpack.c.l.b16 %v8713
        %v8746 = vunpack.c.h.b16 %v8713
        %v8747 = vunpack.c.l.b16 %v8714
        %v8748 = vunpack.c.l.b16 %v8715
        %v8749 = vunpack.c.h.b16 %v8715
        %v8750 = vunpack.c.l.b16 %v8716
        %v8751 = vunpack.c.l.b16 %v8717
        %v8752 = vunpack.c.h.b16 %v8717
        %v8753 = vunpack.c.l.b16 %v8718
        %v8754 = vunpack.c.l.b16 %v8719
        %v8755 = vunpack.c.h.b16 %v8719
        %v8756 = vunpack.c.l.b16 %v8720
        %v8757 = vunpack.c.l.b16 %v8721
        %v8758 = vunpack.c.h.b16 %v8721
        %v8759 = vunpack.c.l.b16 %v8722
        %v8760 = vunpack.c.l.b16 %v8723
        %v8761 = vunpack.c.h.b16 %v8723
        %v8762 = vunpack.c.l.b16 %v8724
        %v8763 = vunpack.c.l.b16 %v8725
        %v8764 = vunpack.c.h.b16 %v8725
        %v8765 = vunpack.c.l.b16 %v8726
        %v8766 = vunpack.c.l.b16 %v8727
        %v8767 = vunpack.c.h.b16 %v8727
        %v8768 = vunpack.c.l.b16 %v8728
        %v8769 = vpack.c.b16 %v8748, %v8745
        %v8770 = vpack.c.b16 %v8749, %v8746
        %v8771 = vpack.c.b16 %v8750, %v8747
        %v8772 = vpack.c.b16 %v8754, %v8751
        %v8773 = vpack.c.b16 %v8755, %v8752
        %v8774 = vpack.c.b16 %v8756, %v8753
        %v8775 = vpack.c.b16 %v8760, %v8757
        %v8776 = vpack.c.b16 %v8761, %v8758
        %v8777 = vpack.c.b16 %v8762, %v8759
        %v8778 = vpack.c.b16 %v8766, %v8763
        %v8779 = vpack.c.b16 %v8767, %v8764
        %v8780 = vpack.c.b16 %v8768, %v8765
        %8793 = vmatprep.subr.bf16.mxu0 %v8770
        %8794 = vmatpush1.bf16.msra.mxu0 %v8769
        %8795 = vmatprep.subr.bf16.mxu0 %v8773
        %8796 = vmatpush1.bf16.msra.mxu0 %v8772
        %8797 = vmatprep.subr.bf16.mxu0 %v8776
        %8798 = vmatpush1.bf16.msra.mxu0 %v8775
        %8799 = vmatprep.subr.bf16.mxu0 %v8779
        %8800 = vmatpush1.bf16.msra.mxu0 %v8778
        %8801 = vmatprep.subr.bf16.mxu0 0
        %8802 = vmatpush1.bf16.msra.mxu0 0
        %8803 = vmatprep.subr.bf16.mxu0 0
        %8804 = vmatpush1.bf16.msra.mxu0 0
        %8805 = vmatprep.subr.bf16.mxu0 0
        %8806 = vmatpush1.bf16.msra.mxu0 0
        %8807 = vmatprep.subr.bf16.mxu0 0
        %8808 = vmatpush1.bf16.msra.mxu0 0
        %8809 = vmatprep.subr.bf16.mxu0 0
        %8810 = vmatpush1.bf16.msra.mxu0 0
        %8811 = vmatprep.subr.bf16.mxu0 0
        %8812 = vmatpush1.bf16.msra.mxu0 0
        %8813 = vmatprep.subr.bf16.mxu0 0
        %8814 = vmatpush1.bf16.msra.mxu0 0
        %8815 = vmatprep.subr.bf16.mxu0 0
        %8816 = vmatpush1.bf16.msra.mxu0 0
        %8817 = vmatprep.subr.bf16.mxu0 0
        %8818 = vmatpush1.bf16.msra.mxu0 0
        %8819 = vmatprep.subr.bf16.mxu0 0
        %8820 = vmatpush1.bf16.msra.mxu0 0
        %8821 = vmatprep.subr.bf16.mxu0 0
        %8822 = vmatpush1.bf16.msra.mxu0 0
        %8823 = vmatprep.subr.bf16.mxu0 0
        %8824 = vmatpush1.bf16.msra.mxu0 0
        %8825 = vmatprep.mubr.bf16.mxu0 0
        %8826 = vmatmul.mubr.bf16.gmra.mrb[0].mxu0 %v8623
        %v8827 = vpop.f32.mrb[0].mxu0
        %v8828 = vadd.f32 0.0, %v8827
        %v8829 = vpop.f32.mrb[0].mxu0
        %v8830 = vadd.f32 0.0, %v8829
        %v8831 = vpop.f32.mrb[0].mxu0
        %v8832 = vadd.f32 0.0, %v8831
        %v8833 = vpop.f32.mrb[0].mxu0
        %v8834 = vadd.f32 0.0, %v8833
        %8835 = vdwg.mxu0
        %8836 = vmatprep.subr.bf16.mxu0 0
        %8837 = vmatpush1.bf16.msra.mxu0 %v8771
        %8838 = vmatprep.subr.bf16.mxu0 0
        %8839 = vmatpush1.bf16.msra.mxu0 %v8774
        %8840 = vmatprep.subr.bf16.mxu0 0
        %8841 = vmatpush1.bf16.msra.mxu0 %v8777
        %8842 = vmatprep.subr.bf16.mxu0 0
        %8843 = vmatpush1.bf16.msra.mxu0 %v8780
        %8844 = vmatprep.subr.bf16.mxu0 0
        %8845 = vmatpush1.bf16.msra.mxu0 0
        %8846 = vmatprep.subr.bf16.mxu0 0
        %8847 = vmatpush1.bf16.msra.mxu0 0
        %8848 = vmatprep.subr.bf16.mxu0 0
        %8849 = vmatpush1.bf16.msra.mxu0 0
        %8850 = vmatprep.subr.bf16.mxu0 0
        %8851 = vmatpush1.bf16.msra.mxu0 0
        %8852 = vmatprep.subr.bf16.mxu0 0
        %8853 = vmatpush1.bf16.msra.mxu0 0
        %8854 = vmatprep.subr.bf16.mxu0 0
        %8855 = vmatpush1.bf16.msra.mxu0 0
        %8856 = vmatprep.subr.bf16.mxu0 0
        %8857 = vmatpush1.bf16.msra.mxu0 0
        %8858 = vmatprep.subr.bf16.mxu0 0
        %8859 = vmatpush1.bf16.msra.mxu0 0
        %8860 = vmatprep.subr.bf16.mxu0 0
        %8861 = vmatpush1.bf16.msra.mxu0 0
        %8862 = vmatprep.subr.bf16.mxu0 0
        %8863 = vmatpush1.bf16.msra.mxu0 0
        %8864 = vmatprep.subr.bf16.mxu0 0
        %8865 = vmatpush1.bf16.msra.mxu0 0
        %8866 = vmatprep.subr.bf16.mxu0 0
        %8867 = vmatpush1.bf16.msra.mxu0 0
        %8868 = vmatprep.mubr.bf16.mxu0 0
        %8869 = vmatmul.mubr.bf16.gmra.mrb[0].mxu0 %v8623
        %v8870 = vpop.f32.mrb[0].mxu0
        %v8871 = vadd.f32 0.0, %v8870
        %v8872 = vpop.f32.mrb[0].mxu0
        %v8873 = vpop.f32.mrb[0].mxu0
        %v8874 = vadd.f32 0.0, %v8873
        %v8875 = vpop.f32.mrb[0].mxu0
        %8876 = vdwg.mxu0
        %v8877 = vpack.c.bf16 %v8832, %v8828
        %v8878 = vpack.c.bf16 %v8834, %v8830
        %v8879 = vpack.c.bf16 %v8874, %v8871
        %s8880 = scalar_lea.vmem %s45, 192
        %v8881 = vld [vmem:[%s8880] sm:$0xff]
        %v8882 = vld [vmem:[%s8880 + $0x8] sm:$0xf]
        %v8883 = vld [vmem:[%s8880 + $0xc] sm:$0xff]
        %v8884 = vld [vmem:[%s8880 + $0x14] sm:$0xf]
        %v8885 = vld [vmem:[%s8880 + $0x18] sm:$0xff]
        %v8886 = vld [vmem:[%s8880 + $0x20] sm:$0xf]
        %v8887 = vld [vmem:[%s8880 + $0x24] sm:$0xff]
        %v8888 = vld [vmem:[%s8880 + $0x2c] sm:$0xf]
        %v8889 = vld [vmem:[%s8880 + $0x30] sm:$0xff]
        %v8890 = vld [vmem:[%s8880 + $0x38] sm:$0xf]
        %v8891 = vld [vmem:[%s8880 + $0x3c] sm:$0xff]
        %v8892 = vld [vmem:[%s8880 + $0x44] sm:$0xf]
        %v8893 = vld [vmem:[%s8880 + $0x48] sm:$0xff]
        %v8894 = vld [vmem:[%s8880 + $0x50] sm:$0xf]
        %v8895 = vld [vmem:[%s8880 + $0x54] sm:$0xff]
        %v8896 = vld [vmem:[%s8880 + $0x5c] sm:$0xf]
        %v8913 = vunpack.c.l.b16 %v8881
        %v8914 = vunpack.c.h.b16 %v8881
        %v8915 = vunpack.c.l.b16 %v8882
        %v8916 = vunpack.c.l.b16 %v8883
        %v8917 = vunpack.c.h.b16 %v8883
        %v8918 = vunpack.c.l.b16 %v8884
        %v8919 = vunpack.c.l.b16 %v8885
        %v8920 = vunpack.c.h.b16 %v8885
        %v8921 = vunpack.c.l.b16 %v8886
        %v8922 = vunpack.c.l.b16 %v8887
        %v8923 = vunpack.c.h.b16 %v8887
        %v8924 = vunpack.c.l.b16 %v8888
        %v8925 = vunpack.c.l.b16 %v8889
        %v8926 = vunpack.c.h.b16 %v8889
        %v8927 = vunpack.c.l.b16 %v8890
        %v8928 = vunpack.c.l.b16 %v8891
        %v8929 = vunpack.c.h.b16 %v8891
        %v8930 = vunpack.c.l.b16 %v8892
        %v8931 = vunpack.c.l.b16 %v8893
        %v8932 = vunpack.c.h.b16 %v8893
        %v8933 = vunpack.c.l.b16 %v8894
        %v8934 = vunpack.c.l.b16 %v8895
        %v8935 = vunpack.c.h.b16 %v8895
        %v8936 = vunpack.c.l.b16 %v8896
        %v8937 = vpack.c.b16 %v8916, %v8913
        %v8938 = vpack.c.b16 %v8917, %v8914
        %v8939 = vpack.c.b16 %v8918, %v8915
        %v8940 = vpack.c.b16 %v8922, %v8919
        %v8941 = vpack.c.b16 %v8923, %v8920
        %v8942 = vpack.c.b16 %v8924, %v8921
        %v8943 = vpack.c.b16 %v8928, %v8925
        %v8944 = vpack.c.b16 %v8929, %v8926
        %v8945 = vpack.c.b16 %v8930, %v8927
        %v8946 = vpack.c.b16 %v8934, %v8931
        %v8947 = vpack.c.b16 %v8935, %v8932
        %v8948 = vpack.c.b16 %v8936, %v8933
        %8961 = vmatprep.subr.bf16.mxu0 %v8938
        %8962 = vmatpush1.bf16.msra.mxu0 %v8937
        %8963 = vmatprep.subr.bf16.mxu0 %v8941
        %8964 = vmatpush1.bf16.msra.mxu0 %v8940
        %8965 = vmatprep.subr.bf16.mxu0 %v8944
        %8966 = vmatpush1.bf16.msra.mxu0 %v8943
        %8967 = vmatprep.subr.bf16.mxu0 %v8947
        %8968 = vmatpush1.bf16.msra.mxu0 %v8946
        %8969 = vmatprep.subr.bf16.mxu0 0
        %8970 = vmatpush1.bf16.msra.mxu0 0
        %8971 = vmatprep.subr.bf16.mxu0 0
        %8972 = vmatpush1.bf16.msra.mxu0 0
        %8973 = vmatprep.subr.bf16.mxu0 0
        %8974 = vmatpush1.bf16.msra.mxu0 0
        %8975 = vmatprep.subr.bf16.mxu0 0
        %8976 = vmatpush1.bf16.msra.mxu0 0
        %8977 = vmatprep.subr.bf16.mxu0 0
        %8978 = vmatpush1.bf16.msra.mxu0 0
        %8979 = vmatprep.subr.bf16.mxu0 0
        %8980 = vmatpush1.bf16.msra.mxu0 0
        %8981 = vmatprep.subr.bf16.mxu0 0
        %8982 = vmatpush1.bf16.msra.mxu0 0
        %8983 = vmatprep.subr.bf16.mxu0 0
        %8984 = vmatpush1.bf16.msra.mxu0 0
        %8985 = vmatprep.subr.bf16.mxu0 0
        %8986 = vmatpush1.bf16.msra.mxu0 0
        %8987 = vmatprep.subr.bf16.mxu0 0
        %8988 = vmatpush1.bf16.msra.mxu0 0
        %8989 = vmatprep.subr.bf16.mxu0 0
        %8990 = vmatpush1.bf16.msra.mxu0 0
        %8991 = vmatprep.subr.bf16.mxu0 0
        %8992 = vmatpush1.bf16.msra.mxu0 0
        %8993 = vmatprep.mubr.bf16.mxu0 0
        %8994 = vmatmul.mubr.bf16.gmra.mrb[0].mxu0 %v8623
        %v8995 = vpop.f32.mrb[0].mxu0
        %v8996 = vadd.f32 0.0, %v8995
        %v8997 = vpop.f32.mrb[0].mxu0
        %v8998 = vadd.f32 0.0, %v8997
        %v8999 = vpop.f32.mrb[0].mxu0
        %v9000 = vadd.f32 0.0, %v8999
        %v9001 = vpop.f32.mrb[0].mxu0
        %v9002 = vadd.f32 0.0, %v9001
        %9003 = vdwg.mxu0
        %9004 = vmatprep.subr.bf16.mxu0 0
        %9005 = vmatpush1.bf16.msra.mxu0 %v8939
        %9006 = vmatprep.subr.bf16.mxu0 0
        %9007 = vmatpush1.bf16.msra.mxu0 %v8942
        %9008 = vmatprep.subr.bf16.mxu0 0
        %9009 = vmatpush1.bf16.msra.mxu0 %v8945
        %9010 = vmatprep.subr.bf16.mxu0 0
        %9011 = vmatpush1.bf16.msra.mxu0 %v8948
        %9012 = vmatprep.subr.bf16.mxu0 0
        %9013 = vmatpush1.bf16.msra.mxu0 0
        %9014 = vmatprep.subr.bf16.mxu0 0
        %9015 = vmatpush1.bf16.msra.mxu0 0
        %9016 = vmatprep.subr.bf16.mxu0 0
        %9017 = vmatpush1.bf16.msra.mxu0 0
        %9018 = vmatprep.subr.bf16.mxu0 0
        %9019 = vmatpush1.bf16.msra.mxu0 0
        %9020 = vmatprep.subr.bf16.mxu0 0
        %9021 = vmatpush1.bf16.msra.mxu0 0
        %9022 = vmatprep.subr.bf16.mxu0 0
        %9023 = vmatpush1.bf16.msra.mxu0 0
        %9024 = vmatprep.subr.bf16.mxu0 0
        %9025 = vmatpush1.bf16.msra.mxu0 0
        %9026 = vmatprep.subr.bf16.mxu0 0
        %9027 = vmatpush1.bf16.msra.mxu0 0
        %9028 = vmatprep.subr.bf16.mxu0 0
        %9029 = vmatpush1.bf16.msra.mxu0 0
        %9030 = vmatprep.subr.bf16.mxu0 0
        %9031 = vmatpush1.bf16.msra.mxu0 0
        %9032 = vmatprep.subr.bf16.mxu0 0
        %9033 = vmatpush1.bf16.msra.mxu0 0
        %9034 = vmatprep.subr.bf16.mxu0 0
        %9035 = vmatpush1.bf16.msra.mxu0 0
        %9036 = vmatprep.mubr.bf16.mxu0 0
        %9037 = vmatmul.mubr.bf16.gmra.mrb[0].mxu0 %v8623
        %v9038 = vpop.f32.mrb[0].mxu0
        %v9039 = vadd.f32 0.0, %v9038
        %v9040 = vpop.f32.mrb[0].mxu0
        %v9041 = vpop.f32.mrb[0].mxu0
        %v9042 = vadd.f32 0.0, %v9041
        %v9043 = vpop.f32.mrb[0].mxu0
        %9044 = vdwg.mxu0
        %v9045 = vpack.c.bf16 %v9000, %v8996
        %v9046 = vpack.c.bf16 %v9002, %v8998
        %v9047 = vpack.c.bf16 %v9042, %v9039
        %s9048 = scalar_lea.vmem %s45, 288
        %v9049 = vld [vmem:[%s9048] sm:$0xff]
        %v9050 = vld [vmem:[%s9048 + $0x8] sm:$0xf]
        %v9051 = vld [vmem:[%s9048 + $0xc] sm:$0xff]
        %v9052 = vld [vmem:[%s9048 + $0x14] sm:$0xf]
        %v9053 = vld [vmem:[%s9048 + $0x18] sm:$0xff]
        %v9054 = vld [vmem:[%s9048 + $0x20] sm:$0xf]
        %v9055 = vld [vmem:[%s9048 + $0x24] sm:$0xff]
        %v9056 = vld [vmem:[%s9048 + $0x2c] sm:$0xf]
        %v9057 = vld [vmem:[%s9048 + $0x30] sm:$0xff]
        %v9058 = vld [vmem:[%s9048 + $0x38] sm:$0xf]
        %v9059 = vld [vmem:[%s9048 + $0x3c] sm:$0xff]
        %v9060 = vld [vmem:[%s9048 + $0x44] sm:$0xf]
        %v9061 = vld [vmem:[%s9048 + $0x48] sm:$0xff]
        %v9062 = vld [vmem:[%s9048 + $0x50] sm:$0xf]
        %v9063 = vld [vmem:[%s9048 + $0x54] sm:$0xff]
        %v9064 = vld [vmem:[%s9048 + $0x5c] sm:$0xf]
        %v9081 = vunpack.c.l.b16 %v9049
        %v9082 = vunpack.c.h.b16 %v9049
        %v9083 = vunpack.c.l.b16 %v9050
        %v9084 = vunpack.c.l.b16 %v9051
        %v9085 = vunpack.c.h.b16 %v9051
        %v9086 = vunpack.c.l.b16 %v9052
        %v9087 = vunpack.c.l.b16 %v9053
        %v9088 = vunpack.c.h.b16 %v9053
        %v9089 = vunpack.c.l.b16 %v9054
        %v9090 = vunpack.c.l.b16 %v9055
        %v9091 = vunpack.c.h.b16 %v9055
        %v9092 = vunpack.c.l.b16 %v9056
        %v9093 = vunpack.c.l.b16 %v9057
        %v9094 = vunpack.c.h.b16 %v9057
        %v9095 = vunpack.c.l.b16 %v9058
        %v9096 = vunpack.c.l.b16 %v9059
        %v9097 = vunpack.c.h.b16 %v9059
        %v9098 = vunpack.c.l.b16 %v9060
        %v9099 = vunpack.c.l.b16 %v9061
        %v9100 = vunpack.c.h.b16 %v9061
        %v9101 = vunpack.c.l.b16 %v9062
        %v9102 = vunpack.c.l.b16 %v9063
        %v9103 = vunpack.c.h.b16 %v9063
        %v9104 = vunpack.c.l.b16 %v9064
        %v9105 = vpack.c.b16 %v9084, %v9081
        %v9106 = vpack.c.b16 %v9085, %v9082
        %v9107 = vpack.c.b16 %v9086, %v9083
        %v9108 = vpack.c.b16 %v9090, %v9087
        %v9109 = vpack.c.b16 %v9091, %v9088
        %v9110 = vpack.c.b16 %v9092, %v9089
        %v9111 = vpack.c.b16 %v9096, %v9093
        %v9112 = vpack.c.b16 %v9097, %v9094
        %v9113 = vpack.c.b16 %v9098, %v9095
        %v9114 = vpack.c.b16 %v9102, %v9099
        %v9115 = vpack.c.b16 %v9103, %v9100
        %v9116 = vpack.c.b16 %v9104, %v9101
        %9129 = vmatprep.subr.bf16.mxu0 %v9106
        %9130 = vmatpush1.bf16.msra.mxu0 %v9105
        %9131 = vmatprep.subr.bf16.mxu0 %v9109
        %9132 = vmatpush1.bf16.msra.mxu0 %v9108
        %9133 = vmatprep.subr.bf16.mxu0 %v9112
        %9134 = vmatpush1.bf16.msra.mxu0 %v9111
        %9135 = vmatprep.subr.bf16.mxu0 %v9115
        %9136 = vmatpush1.bf16.msra.mxu0 %v9114
        %9137 = vmatprep.subr.bf16.mxu0 0
        %9138 = vmatpush1.bf16.msra.mxu0 0
        %9139 = vmatprep.subr.bf16.mxu0 0
        %9140 = vmatpush1.bf16.msra.mxu0 0
        %9141 = vmatprep.subr.bf16.mxu0 0
        %9142 = vmatpush1.bf16.msra.mxu0 0
        %9143 = vmatprep.subr.bf16.mxu0 0
        %9144 = vmatpush1.bf16.msra.mxu0 0
        %9145 = vmatprep.subr.bf16.mxu0 0
        %9146 = vmatpush1.bf16.msra.mxu0 0
        %9147 = vmatprep.subr.bf16.mxu0 0
        %9148 = vmatpush1.bf16.msra.mxu0 0
        %9149 = vmatprep.subr.bf16.mxu0 0
        %9150 = vmatpush1.bf16.msra.mxu0 0
        %9151 = vmatprep.subr.bf16.mxu0 0
        %9152 = vmatpush1.bf16.msra.mxu0 0
        %9153 = vmatprep.subr.bf16.mxu0 0
        %9154 = vmatpush1.bf16.msra.mxu0 0
        %9155 = vmatprep.subr.bf16.mxu0 0
        %9156 = vmatpush1.bf16.msra.mxu0 0
        %9157 = vmatprep.subr.bf16.mxu0 0
        %9158 = vmatpush1.bf16.msra.mxu0 0
        %9159 = vmatprep.subr.bf16.mxu0 0
        %9160 = vmatpush1.bf16.msra.mxu0 0
        %9161 = vmatprep.mubr.bf16.mxu0 0
        %9162 = vmatmul.mubr.bf16.gmra.mrb[0].mxu0 %v8623
        %v9163 = vpop.f32.mrb[0].mxu0
        %v9164 = vadd.f32 0.0, %v9163
        %v9165 = vpop.f32.mrb[0].mxu0
        %v9166 = vadd.f32 0.0, %v9165
        %v9167 = vpop.f32.mrb[0].mxu0
        %v9168 = vadd.f32 0.0, %v9167
        %v9169 = vpop.f32.mrb[0].mxu0
        %v9170 = vadd.f32 0.0, %v9169
        %9171 = vdwg.mxu0
        %9172 = vmatprep.subr.bf16.mxu0 0
        %9173 = vmatpush1.bf16.msra.mxu0 %v9107
        %9174 = vmatprep.subr.bf16.mxu0 0
        %9175 = vmatpush1.bf16.msra.mxu0 %v9110
        %9176 = vmatprep.subr.bf16.mxu0 0
        %9177 = vmatpush1.bf16.msra.mxu0 %v9113
        %9178 = vmatprep.subr.bf16.mxu0 0
        %9179 = vmatpush1.bf16.msra.mxu0 %v9116
        %9180 = vmatprep.subr.bf16.mxu0 0
        %9181 = vmatpush1.bf16.msra.mxu0 0
        %9182 = vmatprep.subr.bf16.mxu0 0
        %9183 = vmatpush1.bf16.msra.mxu0 0
        %9184 = vmatprep.subr.bf16.mxu0 0
        %9185 = vmatpush1.bf16.msra.mxu0 0
        %9186 = vmatprep.subr.bf16.mxu0 0
        %9187 = vmatpush1.bf16.msra.mxu0 0
        %9188 = vmatprep.subr.bf16.mxu0 0
        %9189 = vmatpush1.bf16.msra.mxu0 0
        %9190 = vmatprep.subr.bf16.mxu0 0
        %9191 = vmatpush1.bf16.msra.mxu0 0
        %9192 = vmatprep.subr.bf16.mxu0 0
        %9193 = vmatpush1.bf16.msra.mxu0 0
        %9194 = vmatprep.subr.bf16.mxu0 0
        %9195 = vmatpush1.bf16.msra.mxu0 0
        %9196 = vmatprep.subr.bf16.mxu0 0
        %9197 = vmatpush1.bf16.msra.mxu0 0
        %9198 = vmatprep.subr.bf16.mxu0 0
        %9199 = vmatpush1.bf16.msra.mxu0 0
        %9200 = vmatprep.subr.bf16.mxu0 0
        %9201 = vmatpush1.bf16.msra.mxu0 0
        %9202 = vmatprep.subr.bf16.mxu0 0
        %9203 = vmatpush1.bf16.msra.mxu0 0
        %9204 = vmatprep.mubr.bf16.mxu0 0
        %9205 = vmatmul.mubr.bf16.gmra.mrb[0].mxu0 %v8623
        %v9206 = vpop.f32.mrb[0].mxu0
        %v9207 = vadd.f32 0.0, %v9206
        %v9208 = vpop.f32.mrb[0].mxu0
        %v9209 = vpop.f32.mrb[0].mxu0
        %v9210 = vadd.f32 0.0, %v9209
        %v9211 = vpop.f32.mrb[0].mxu0
        %9212 = vdwg.mxu0
        %v9213 = vpack.c.bf16 %v9168, %v9164
        %v9214 = vpack.c.bf16 %v9170, %v9166
        %v9215 = vpack.c.bf16 %v9210, %v9207
        %v9216 = vld [vmem:[#allocation22] sm:$0xf]
        %v9217 = vld [vmem:[#allocation22 + $0x4] sm:$0xf]
        %v9218 = vld [vmem:[#allocation24] sm:$0xff]
        %v9219 = vld [vmem:[#allocation24 + $0x8] sm:$0xff]
        %9221 = vset.pattern.permute.xlu0 0
        %9222 = vperm.xlu0 %9221, %v9218
        %v9223 = vpop.permute.xlu0 %9222
        %9226 = vset.pattern.permute.xlu0 0
        %9227 = vperm.xlu0 %9226, %v9219
        %v9228 = vpop.permute.xlu0 %9227
        %v9232 = vunpack.c.l.b16 %v9216
        %v9233 = vunpack.c.l.b16 %v9217
        %v9234 = vpack.c.b16 %v9233, %v9232
        %v9236 = vsel %vm8621, %v9234, 0
        %9238 = vmatprep.subr.bf16.mxu0 %v8710
        %9239 = vmatpush1.bf16.msra.mxu0 %v8709
        %9240 = vmatprep.subr.bf16.mxu0 %v8878
        %9241 = vmatpush1.bf16.msra.mxu0 %v8877
        %9242 = vmatprep.subr.bf16.mxu0 %v9046
        %9243 = vmatpush1.bf16.msra.mxu0 %v9045
        %9244 = vmatprep.subr.bf16.mxu0 %v9214
        %9245 = vmatpush1.bf16.msra.mxu0 %v9213
        %9246 = vmatprep.subr.bf16.mxu0 0
        %9247 = vmatpush1.bf16.msra.mxu0 0
        %9248 = vmatprep.subr.bf16.mxu0 0
        %9249 = vmatpush1.bf16.msra.mxu0 0
        %9250 = vmatprep.subr.bf16.mxu0 0
        %9251 = vmatpush1.bf16.msra.mxu0 0
        %9252 = vmatprep.subr.bf16.mxu0 0
        %9253 = vmatpush1.bf16.msra.mxu0 0
        %9254 = vmatprep.subr.bf16.mxu0 0
        %9255 = vmatpush1.bf16.msra.mxu0 0
        %9256 = vmatprep.subr.bf16.mxu0 0
        %9257 = vmatpush1.bf16.msra.mxu0 0
        %9258 = vmatprep.subr.bf16.mxu0 0
        %9259 = vmatpush1.bf16.msra.mxu0 0
        %9260 = vmatprep.subr.bf16.mxu0 0
        %9261 = vmatpush1.bf16.msra.mxu0 0
        %9262 = vmatprep.subr.bf16.mxu0 0
        %9263 = vmatpush1.bf16.msra.mxu0 0
        %9264 = vmatprep.subr.bf16.mxu0 0
        %9265 = vmatpush1.bf16.msra.mxu0 0
        %9266 = vmatprep.subr.bf16.mxu0 0
        %9267 = vmatpush1.bf16.msra.mxu0 0
        %9268 = vmatprep.subr.bf16.mxu0 0
        %9269 = vmatpush1.bf16.msra.mxu0 0
        %9270 = vmatprep.mubr.bf16.mxu0 0
        %9271 = vmatmul.mubr.bf16.gmra.mrb[0].mxu0 %v9236
        %v9272 = vpop.f32.mrb[0].mxu0
        %v9273 = vadd.f32 %v9223, %v9272
        %v9274 = vpop.f32.mrb[0].mxu0
        %v9275 = vadd.f32 %v9223, %v9274
        %v9276 = vpop.f32.mrb[0].mxu0
        %v9277 = vadd.f32 %v9228, %v9276
        %v9278 = vpop.f32.mrb[0].mxu0
        %v9279 = vadd.f32 %v9228, %v9278
        %9280 = vdwg.mxu0
        %9281 = vmatprep.subr.bf16.mxu0 0
        %9282 = vmatpush1.bf16.msra.mxu0 %v8711
        %9283 = vmatprep.subr.bf16.mxu0 0
        %9284 = vmatpush1.bf16.msra.mxu0 %v8879
        %9285 = vmatprep.subr.bf16.mxu0 0
        %9286 = vmatpush1.bf16.msra.mxu0 %v9047
        %9287 = vmatprep.subr.bf16.mxu0 0
        %9288 = vmatpush1.bf16.msra.mxu0 %v9215
        %9289 = vmatprep.subr.bf16.mxu0 0
        %9290 = vmatpush1.bf16.msra.mxu0 0
        %9291 = vmatprep.subr.bf16.mxu0 0
        %9292 = vmatpush1.bf16.msra.mxu0 0
        %9293 = vmatprep.subr.bf16.mxu0 0
        %9294 = vmatpush1.bf16.msra.mxu0 0
        %9295 = vmatprep.subr.bf16.mxu0 0
        %9296 = vmatpush1.bf16.msra.mxu0 0
        %9297 = vmatprep.subr.bf16.mxu0 0
        %9298 = vmatpush1.bf16.msra.mxu0 0
        %9299 = vmatprep.subr.bf16.mxu0 0
        %9300 = vmatpush1.bf16.msra.mxu0 0
        %9301 = vmatprep.subr.bf16.mxu0 0
        %9302 = vmatpush1.bf16.msra.mxu0 0
        %9303 = vmatprep.subr.bf16.mxu0 0
        %9304 = vmatpush1.bf16.msra.mxu0 0
        %9305 = vmatprep.subr.bf16.mxu0 0
        %9306 = vmatpush1.bf16.msra.mxu0 0
        %9307 = vmatprep.subr.bf16.mxu0 0
        %9308 = vmatpush1.bf16.msra.mxu0 0
        %9309 = vmatprep.subr.bf16.mxu0 0
        %9310 = vmatpush1.bf16.msra.mxu0 0
        %9311 = vmatprep.subr.bf16.mxu0 0
        %9312 = vmatpush1.bf16.msra.mxu0 0
        %9313 = vmatprep.mubr.bf16.mxu0 0
        %9314 = vmatmul.mubr.bf16.gmra.mrb[0].mxu0 %v9236
        %v9315 = vpop.f32.mrb[0].mxu0
        %v9316 = vadd.f32 %v9223, %v9315
        %v9317 = vpop.f32.mrb[0].mxu0
        %v9318 = vpop.f32.mrb[0].mxu0
        %v9319 = vadd.f32 %v9228, %v9318
        %v9320 = vpop.f32.mrb[0].mxu0
        %9321 = vdwg.mxu0
        %v9322 = vpack.c.bf16 %v9277, %v9273
        %v9323 = vpack.c.bf16 %v9279, %v9275
        %v9324 = vpack.c.bf16 %v9319, %v9316
        %9327 = vrot.lane.b32.xlu0 %v9322, 80
        %v9328 = vpop.permute.xlu0 %9327
        %9329 = vrot.lane.b32.xlu0 %v9323, 80
        %v9330 = vpop.permute.xlu0 %9329
        %vm9331 = vcmask 654336
        %v9332 = vsel %vm9331, %v9328, %v9330
        %9336 = vrot.lane.b32.xlu0 %v3099, 127
        %v9337 = vpop.permute.xlu0 %9336
        %9338 = vrot.lane.b32.xlu0 %v3100, 127
        %v9339 = vpop.permute.xlu0 %9338
        %9340 = vrot.lane.b32.xlu0 %v3101, 127
        %v9341 = vpop.permute.xlu0 %9340
        %v9342 = vsel %vm1395, %v9337, %v9339
        %v9343 = vsel %vm1395, %v9339, %v9341
        %9344 = vrot.lane.b32.xlu0 %v9322, 79
        %v9345 = vpop.permute.xlu0 %9344
        %9346 = vrot.lane.b32.xlu0 %v9323, 79
        %v9347 = vpop.permute.xlu0 %9346
        %vm9348 = vcmask 646144
        %v9349 = vsel %vm9348, %v9345, %v9347
        %9350 = vrot.lane.b32.xlu0 %v3099, 126
        %v9351 = vpop.permute.xlu0 %9350
        %9352 = vrot.lane.b32.xlu0 %v3100, 126
        %v9353 = vpop.permute.xlu0 %9352
        %9354 = vrot.lane.b32.xlu0 %v3101, 126
        %v9355 = vpop.permute.xlu0 %9354
        %v9356 = vsel %vm1455, %v9351, %v9353
        %v9357 = vsel %vm1455, %v9353, %v9355
        %9358 = vrot.lane.b32.xlu0 %v9322, 78
        %v9359 = vpop.permute.xlu0 %9358
        %9360 = vrot.lane.b32.xlu0 %v9323, 78
        %v9361 = vpop.permute.xlu0 %9360
        %vm9362 = vcmask 637952
        %v9363 = vsel %vm9362, %v9359, %v9361
        %9364 = vrot.lane.b32.xlu0 %v3099, 84
        %v9365 = vpop.permute.xlu0 %9364
        %9366 = vrot.lane.b32.xlu0 %v3100, 84
        %v9367 = vpop.permute.xlu0 %9366
        %9368 = vrot.lane.b32.xlu0 %v3101, 84
        %v9369 = vpop.permute.xlu0 %9368
        %v9370 = vsel %vm1515, %v9365, %v9367
        %v9371 = vsel %vm1515, %v9367, %v9369
        %9373 = vrot.lane.b32.xlu0 %v9322, 36
        %v9374 = vpop.permute.xlu0 %9373
        %9375 = vrot.lane.b32.xlu0 %v9323, 36
        %v9376 = vpop.permute.xlu0 %9375
        %9377 = vrot.lane.b32.xlu0 %v9324, 36
        %v9378 = vpop.permute.xlu0 %9377
        %vm9379 = vcmask 293888
        %v9380 = vsel %vm9379, %v9374, %v9376
        %v9381 = vsel %vm9379, %v9376, %v9378
        %9382 = vrot.lane.b32.xlu0 %v3099, 83
        %v9383 = vpop.permute.xlu0 %9382
        %9384 = vrot.lane.b32.xlu0 %v3100, 83
        %v9385 = vpop.permute.xlu0 %9384
        %9386 = vrot.lane.b32.xlu0 %v3101, 83
        %v9387 = vpop.permute.xlu0 %9386
        %v9388 = vsel %vm1575, %v9383, %v9385
        %v9389 = vsel %vm1575, %v9385, %v9387
        %9390 = vrot.lane.b32.xlu0 %v9322, 35
        %v9391 = vpop.permute.xlu0 %9390
        %9392 = vrot.lane.b32.xlu0 %v9323, 35
        %v9393 = vpop.permute.xlu0 %9392
        %9394 = vrot.lane.b32.xlu0 %v9324, 35
        %v9395 = vpop.permute.xlu0 %9394
        %vm9396 = vcmask 285696
        %v9397 = vsel %vm9396, %v9391, %v9393
        %v9398 = vsel %vm9396, %v9393, %v9395
        %9399 = vrot.lane.b32.xlu0 %v3099, 82
        %v9400 = vpop.permute.xlu0 %9399
        %9401 = vrot.lane.b32.xlu0 %v3100, 82
        %v9402 = vpop.permute.xlu0 %9401
        %9403 = vrot.lane.b32.xlu0 %v3101, 82
        %v9404 = vpop.permute.xlu0 %9403
        %v9405 = vsel %vm1635, %v9400, %v9402
        %v9406 = vsel %vm1635, %v9402, %v9404
        %9407 = vrot.lane.b32.xlu0 %v9322, 34
        %v9408 = vpop.permute.xlu0 %9407
        %9409 = vrot.lane.b32.xlu0 %v9323, 34
        %v9410 = vpop.permute.xlu0 %9409
        %9411 = vrot.lane.b32.xlu0 %v9324, 34
        %v9412 = vpop.permute.xlu0 %9411
        %vm9413 = vcmask 277504
        %v9414 = vsel %vm9413, %v9408, %v9410
        %v9415 = vsel %vm9413, %v9410, %v9412
        %9417 = vrot.lane.b32.xlu0 %v3100, 40
        %v9418 = vpop.permute.xlu0 %9417
        %9419 = vrot.lane.b32.xlu0 %v3101, 40
        %v9420 = vpop.permute.xlu0 %9419
        %9421 = vrot.lane.b32.xlu0 %v3102, 40
        %v9422 = vpop.permute.xlu0 %9421
        %v9423 = vsel %vm1700, %v9418, %v9420
        %v9424 = vsel %vm1700, %v9420, %v9422
        %9425 = vrot.lane.b32.xlu0 %v9322, 120
        %v9426 = vpop.permute.xlu0 %9425
        %9427 = vrot.lane.b32.xlu0 %v9323, 120
        %v9428 = vpop.permute.xlu0 %9427
        %9429 = vrot.lane.b32.xlu0 %v9324, 120
        %v9430 = vpop.permute.xlu0 %9429
        %vm9431 = vcmask 982016
        %v9432 = vsel %vm9431, %v9426, %v9428
        %v9433 = vsel %vm9431, %v9428, %v9430
        %9434 = vrot.lane.b32.xlu0 %v3100, 39
        %v9435 = vpop.permute.xlu0 %9434
        %9436 = vrot.lane.b32.xlu0 %v3101, 39
        %v9437 = vpop.permute.xlu0 %9436
        %9438 = vrot.lane.b32.xlu0 %v3102, 39
        %v9439 = vpop.permute.xlu0 %9438
        %v9440 = vsel %vm1763, %v9435, %v9437
        %v9441 = vsel %vm1763, %v9437, %v9439
        %9442 = vrot.lane.b32.xlu0 %v9322, 119
        %v9443 = vpop.permute.xlu0 %9442
        %9444 = vrot.lane.b32.xlu0 %v9323, 119
        %v9445 = vpop.permute.xlu0 %9444
        %9446 = vrot.lane.b32.xlu0 %v9324, 119
        %v9447 = vpop.permute.xlu0 %9446
        %vm9448 = vcmask 973824
        %v9449 = vsel %vm9448, %v9443, %v9445
        %v9450 = vsel %vm9448, %v9445, %v9447
        %9451 = vrot.lane.b32.xlu0 %v9324, 80
        %v9452 = vpop.permute.xlu0 %9451
        %v9453 = vsel %vm9331, %v9330, %v9452
        %9454 = vrot.lane.b32.xlu0 %v3100, 38
        %v9455 = vpop.permute.xlu0 %9454
        %9456 = vrot.lane.b32.xlu0 %v3101, 38
        %v9457 = vpop.permute.xlu0 %9456
        %9458 = vrot.lane.b32.xlu0 %v3102, 38
        %v9459 = vpop.permute.xlu0 %9458
        %9460 = vrot.lane.b32.xlu0 %v9332, 38
        %v9461 = vpop.permute.xlu0 %9460
        %9462 = vrot.lane.b32.xlu0 %v9453, 38
        %v9463 = vpop.permute.xlu0 %9462
        %9464 = vrot.lane.b32.xlu0 %v9452, 38
        %v9465 = vpop.permute.xlu0 %9464
        %v9466 = vsel %vm1826, %v9455, %v9457
        %v9467 = vsel %vm1826, %v9457, %v9459
        %v9468 = vsel %vm1826, %v9461, %v9463
        %v9469 = vsel %vm1826, %v9463, %v9465
        %v9470 = vld [vmem:[%s51] sm:$0xff]
        %v9471 = vld [vmem:[%s51 + $0x8] sm:$0xf]
        %v9472 = vld [vmem:[%s51 + $0xc] sm:$0xff]
        %v9473 = vld [vmem:[%s51 + $0x14] sm:$0xf]
        %v9474 = vld [vmem:[#allocation25] sm:$0xff]
        %v9475 = vld [vmem:[#allocation25 + $0x8] sm:$0xff]
        %9477 = vset.pattern.permute.xlu0 0
        %9478 = vperm.xlu0 %9477, %v9474
        %v9479 = vpop.permute.xlu0 %9478
        %9482 = vset.pattern.permute.xlu0 0
        %9483 = vperm.xlu0 %9482, %v9475
        %v9484 = vpop.permute.xlu0 %9483
        %v9490 = vunpack.c.l.b16 %v9470
        %v9491 = vunpack.c.h.b16 %v9470
        %v9492 = vunpack.c.l.b16 %v9471
        %v9493 = vunpack.c.l.b16 %v9472
        %v9494 = vunpack.c.h.b16 %v9472
        %v9495 = vunpack.c.l.b16 %v9473
        %v9496 = vpack.c.b16 %v9493, %v9490
        %v9497 = vpack.c.b16 %v9494, %v9491
        %v9498 = vpack.c.b16 %v9495, %v9492
        %9501 = vrot.lane.b32.xlu0 %v3099, 48
        %v9502 = vpop.permute.xlu0 %9501
        %9503 = vrot.lane.b32.xlu0 %v3100, 48
        %v9504 = vpop.permute.xlu0 %9503
        %9505 = vrot.lane.b32.xlu0 %v3101, 48
        %v9506 = vpop.permute.xlu0 %9505
        %9507 = vrot.lane.b32.xlu0 %v9328, 48
        %v9508 = vpop.permute.xlu0 %9507
        %9509 = vrot.lane.b32.xlu0 %v9332, 48
        %v9510 = vpop.permute.xlu0 %9509
        %9511 = vrot.lane.b32.xlu0 %v9330, 48
        %v9512 = vpop.permute.xlu0 %9511
        %9513 = vrot.lane.b32.xlu0 %v9342, 48
        %v9514 = vpop.permute.xlu0 %9513
        %9515 = vrot.lane.b32.xlu0 %v9343, 48
        %v9516 = vpop.permute.xlu0 %9515
        %9517 = vrot.lane.b32.xlu0 %v9341, 48
        %v9518 = vpop.permute.xlu0 %9517
        %9519 = vrot.lane.b32.xlu0 %v9345, 48
        %v9520 = vpop.permute.xlu0 %9519
        %9521 = vrot.lane.b32.xlu0 %v9349, 48
        %v9522 = vpop.permute.xlu0 %9521
        %9523 = vrot.lane.b32.xlu0 %v9347, 48
        %v9524 = vpop.permute.xlu0 %9523
        %9525 = vrot.lane.b32.xlu0 %v9356, 48
        %v9526 = vpop.permute.xlu0 %9525
        %9527 = vrot.lane.b32.xlu0 %v9357, 48
        %v9528 = vpop.permute.xlu0 %9527
        %9529 = vrot.lane.b32.xlu0 %v9355, 48
        %v9530 = vpop.permute.xlu0 %9529
        %9531 = vrot.lane.b32.xlu0 %v9359, 48
        %v9532 = vpop.permute.xlu0 %9531
        %9533 = vrot.lane.b32.xlu0 %v9363, 48
        %v9534 = vpop.permute.xlu0 %9533
        %9535 = vrot.lane.b32.xlu0 %v9361, 48
        %v9536 = vpop.permute.xlu0 %9535
        %9537 = vrot.lane.b32.xlu0 %v9370, 48
        %v9538 = vpop.permute.xlu0 %9537
        %9539 = vrot.lane.b32.xlu0 %v9371, 48
        %v9540 = vpop.permute.xlu0 %9539
        %9541 = vrot.lane.b32.xlu0 %v9369, 48
        %v9542 = vpop.permute.xlu0 %9541
        %9543 = vrot.lane.b32.xlu0 %v9374, 48
        %v9544 = vpop.permute.xlu0 %9543
        %9545 = vrot.lane.b32.xlu0 %v9380, 48
        %v9546 = vpop.permute.xlu0 %9545
        %9547 = vrot.lane.b32.xlu0 %v9381, 48
        %v9548 = vpop.permute.xlu0 %9547
        %9549 = vrot.lane.b32.xlu0 %v9388, 48
        %v9550 = vpop.permute.xlu0 %9549
        %9551 = vrot.lane.b32.xlu0 %v9389, 48
        %v9552 = vpop.permute.xlu0 %9551
        %9553 = vrot.lane.b32.xlu0 %v9387, 48
        %v9554 = vpop.permute.xlu0 %9553
        %9555 = vrot.lane.b32.xlu0 %v9391, 48
        %v9556 = vpop.permute.xlu0 %9555
        %9557 = vrot.lane.b32.xlu0 %v9397, 48
        %v9558 = vpop.permute.xlu0 %9557
        %9559 = vrot.lane.b32.xlu0 %v9398, 48
        %v9560 = vpop.permute.xlu0 %9559
        %9561 = vrot.lane.b32.xlu0 %v9405, 48
        %v9562 = vpop.permute.xlu0 %9561
        %9563 = vrot.lane.b32.xlu0 %v9406, 48
        %v9564 = vpop.permute.xlu0 %9563
        %9565 = vrot.lane.b32.xlu0 %v9404, 48
        %v9566 = vpop.permute.xlu0 %9565
        %9567 = vrot.lane.b32.xlu0 %v9408, 48
        %v9568 = vpop.permute.xlu0 %9567
        %9569 = vrot.lane.b32.xlu0 %v9414, 48
        %v9570 = vpop.permute.xlu0 %9569
        %9571 = vrot.lane.b32.xlu0 %v9415, 48
        %v9572 = vpop.permute.xlu0 %9571
        %9573 = vrot.lane.b32.xlu0 %v9418, 48
        %v9574 = vpop.permute.xlu0 %9573
        %9575 = vrot.lane.b32.xlu0 %v9423, 48
        %v9576 = vpop.permute.xlu0 %9575
        %9577 = vrot.lane.b32.xlu0 %v9424, 48
        %v9578 = vpop.permute.xlu0 %9577
        %9579 = vrot.lane.b32.xlu0 %v9432, 48
        %v9580 = vpop.permute.xlu0 %9579
        %9581 = vrot.lane.b32.xlu0 %v9433, 48
        %v9582 = vpop.permute.xlu0 %9581
        %9583 = vrot.lane.b32.xlu0 %v9430, 48
        %v9584 = vpop.permute.xlu0 %9583
        %9585 = vrot.lane.b32.xlu0 %v9435, 48
        %v9586 = vpop.permute.xlu0 %9585
        %9587 = vrot.lane.b32.xlu0 %v9440, 48
        %v9588 = vpop.permute.xlu0 %9587
        %9589 = vrot.lane.b32.xlu0 %v9441, 48
        %v9590 = vpop.permute.xlu0 %9589
        %9591 = vrot.lane.b32.xlu0 %v9449, 48
        %v9592 = vpop.permute.xlu0 %9591
        %9593 = vrot.lane.b32.xlu0 %v9450, 48
        %v9594 = vpop.permute.xlu0 %9593
        %9595 = vrot.lane.b32.xlu0 %v9447, 48
        %v9596 = vpop.permute.xlu0 %9595
        %9597 = vrot.lane.b32.xlu0 %v9455, 48
        %v9598 = vpop.permute.xlu0 %9597
        %9599 = vrot.lane.b32.xlu0 %v9466, 48
        %v9600 = vpop.permute.xlu0 %9599
        %9601 = vrot.lane.b32.xlu0 %v9467, 48
        %v9602 = vpop.permute.xlu0 %9601
        %9603 = vrot.lane.b32.xlu0 %v9461, 48
        %v9604 = vpop.permute.xlu0 %9603
        %9605 = vrot.lane.b32.xlu0 %v9468, 48
        %v9606 = vpop.permute.xlu0 %9605
        %9607 = vrot.lane.b32.xlu0 %v9469, 48
        %v9608 = vpop.permute.xlu0 %9607
        %vm9609 = vcmask 392192
        %v9610 = vsel %vm9609, %v9502, %v9504
        %v9611 = vsel %vm9609, %v9504, %v9506
        %v9612 = vsel %vm9609, %v9508, %v9510
        %v9613 = vsel %vm9609, %v9510, %v9512
        %v9614 = vsel %vm9609, %v9514, %v9516
        %v9615 = vsel %vm9609, %v9516, %v9518
        %v9616 = vsel %vm9609, %v9520, %v9522
        %v9617 = vsel %vm9609, %v9522, %v9524
        %v9618 = vsel %vm9609, %v9526, %v9528
        %v9619 = vsel %vm9609, %v9528, %v9530
        %v9620 = vsel %vm9609, %v9532, %v9534
        %v9621 = vsel %vm9609, %v9534, %v9536
        %v9622 = vsel %vm9609, %v9538, %v9540
        %v9623 = vsel %vm9609, %v9540, %v9542
        %v9624 = vsel %vm9609, %v9544, %v9546
        %v9625 = vsel %vm9609, %v9546, %v9548
        %v9626 = vsel %vm9609, %v9550, %v9552
        %v9627 = vsel %vm9609, %v9552, %v9554
        %v9628 = vsel %vm9609, %v9556, %v9558
        %v9629 = vsel %vm9609, %v9558, %v9560
        %v9630 = vsel %vm9609, %v9562, %v9564
        %v9631 = vsel %vm9609, %v9564, %v9566
        %v9632 = vsel %vm9609, %v9568, %v9570
        %v9633 = vsel %vm9609, %v9570, %v9572
        %v9634 = vsel %vm9609, %v9574, %v9576
        %v9635 = vsel %vm9609, %v9576, %v9578
        %v9636 = vsel %vm9609, %v9580, %v9582
        %v9637 = vsel %vm9609, %v9582, %v9584
        %v9638 = vsel %vm9609, %v9586, %v9588
        %v9639 = vsel %vm9609, %v9588, %v9590
        %v9640 = vsel %vm9609, %v9592, %v9594
        %v9641 = vsel %vm9609, %v9594, %v9596
        %v9642 = vsel %vm9609, %v9598, %v9600
        %v9643 = vsel %vm9609, %v9600, %v9602
        %v9644 = vsel %vm9609, %v9604, %v9606
        %v9645 = vsel %vm9609, %v9606, %v9608
        %v9683 = vsel %vm7634, %v9498, 0
        %9685 = vmatprep.subr.bf16.mxu0 %v9611
        %9686 = vmatpush1.bf16.msra.mxu0 %v9610
        %9687 = vmatprep.subr.bf16.mxu0 %v9613
        %9688 = vmatpush1.bf16.msra.mxu0 %v9612
        %9689 = vmatprep.subr.bf16.mxu0 %v9615
        %9690 = vmatpush1.bf16.msra.mxu0 %v9614
        %9691 = vmatprep.subr.bf16.mxu0 %v9617
        %9692 = vmatpush1.bf16.msra.mxu0 %v9616
        %9693 = vmatprep.subr.bf16.mxu0 %v9619
        %9694 = vmatpush1.bf16.msra.mxu0 %v9618
        %9695 = vmatprep.subr.bf16.mxu0 %v9621
        %9696 = vmatpush1.bf16.msra.mxu0 %v9620
        %9697 = vmatprep.subr.bf16.mxu0 %v9623
        %9698 = vmatpush1.bf16.msra.mxu0 %v9622
        %9699 = vmatprep.subr.bf16.mxu0 %v9625
        %9700 = vmatpush1.bf16.msra.mxu0 %v9624
        %9701 = vmatprep.subr.bf16.mxu0 %v9627
        %9702 = vmatpush1.bf16.msra.mxu0 %v9626
        %9703 = vmatprep.subr.bf16.mxu0 %v9629
        %9704 = vmatpush1.bf16.msra.mxu0 %v9628
        %9705 = vmatprep.subr.bf16.mxu0 %v9631
        %9706 = vmatpush1.bf16.msra.mxu0 %v9630
        %9707 = vmatprep.subr.bf16.mxu0 %v9633
        %9708 = vmatpush1.bf16.msra.mxu0 %v9632
        %9709 = vmatprep.subr.bf16.mxu0 %v9635
        %9710 = vmatpush1.bf16.msra.mxu0 %v9634
        %9711 = vmatprep.subr.bf16.mxu0 %v9637
        %9712 = vmatpush1.bf16.msra.mxu0 %v9636
        %9713 = vmatprep.subr.bf16.mxu0 %v9639
        %9714 = vmatpush1.bf16.msra.mxu0 %v9638
        %9715 = vmatprep.subr.bf16.mxu0 %v9641
        %9716 = vmatpush1.bf16.msra.mxu0 %v9640
        %9717 = vmatprep.mubr.bf16.mxu0 %v9497
        %9718 = vmatmul.mubr.bf16.gmra.mrb[0].mxu0 %v9496
        %v9719 = vpop.f32.mrb[0].mxu0
        %v9720 = vadd.f32 %v9479, %v9719
        %v9721 = vpop.f32.mrb[0].mxu0
        %v9722 = vadd.f32 %v9479, %v9721
        %v9723 = vpop.f32.mrb[0].mxu0
        %v9724 = vadd.f32 %v9484, %v9723
        %v9725 = vpop.f32.mrb[0].mxu0
        %v9726 = vadd.f32 %v9484, %v9725
        %9727 = vdwg.mxu0
        %9728 = vmatprep.subr.bf16.mxu0 %v9643
        %9729 = vmatpush1.bf16.msra.mxu0 %v9642
        %9730 = vmatprep.subr.bf16.mxu0 %v9645
        %9731 = vmatpush1.bf16.msra.mxu0 %v9644
        %9732 = vmatprep.subr.bf16.mxu0 0
        %9733 = vmatpush1.bf16.msra.mxu0 0
        %9734 = vmatprep.subr.bf16.mxu0 0
        %9735 = vmatpush1.bf16.msra.mxu0 0
        %9736 = vmatprep.subr.bf16.mxu0 0
        %9737 = vmatpush1.bf16.msra.mxu0 0
        %9738 = vmatprep.subr.bf16.mxu0 0
        %9739 = vmatpush1.bf16.msra.mxu0 0
        %9740 = vmatprep.subr.bf16.mxu0 0
        %9741 = vmatpush1.bf16.msra.mxu0 0
        %9742 = vmatprep.subr.bf16.mxu0 0
        %9743 = vmatpush1.bf16.msra.mxu0 0
        %9744 = vmatprep.subr.bf16.mxu0 0
        %9745 = vmatpush1.bf16.msra.mxu0 0
        %9746 = vmatprep.subr.bf16.mxu0 0
        %9747 = vmatpush1.bf16.msra.mxu0 0
        %9748 = vmatprep.subr.bf16.mxu0 0
        %9749 = vmatpush1.bf16.msra.mxu0 0
        %9750 = vmatprep.subr.bf16.mxu0 0
        %9751 = vmatpush1.bf16.msra.mxu0 0
        %9752 = vmatprep.subr.bf16.mxu0 0
        %9753 = vmatpush1.bf16.msra.mxu0 0
        %9754 = vmatprep.subr.bf16.mxu0 0
        %9755 = vmatpush1.bf16.msra.mxu0 0
        %9756 = vmatprep.subr.bf16.mxu0 0
        %9757 = vmatpush1.bf16.msra.mxu0 0
        %9758 = vmatprep.subr.bf16.mxu0 0
        %9759 = vmatpush1.bf16.msra.mxu0 0
        %9760 = vmatprep.mubr.bf16.mxu0 0
        %9761 = vmatmul.mubr.bf16.gmra.mrb[0].mxu0 %v9683
        %v9762 = vpop.f32.mrb[0].mxu0
        %v9763 = vadd.f32 %v9720, %v9762
        %v9764 = vpop.f32.mrb[0].mxu0
        %v9765 = vadd.f32 %v9722, %v9764
        %v9766 = vpop.f32.mrb[0].mxu0
        %v9767 = vadd.f32 %v9724, %v9766
        %v9768 = vpop.f32.mrb[0].mxu0
        %v9769 = vadd.f32 %v9726, %v9768
        %9770 = vdwg.mxu0
        %v9771 = vmax.f32 %v9763, 0.0
        %v9772 = vmax.f32 %v9765, 0.0
        %v9773 = vmax.f32 %v9767, 0.0
        %v9774 = vmax.f32 %v9769, 0.0
        %v9775 = vpack.c.bf16 %v9773, %v9771
        %v9776 = vpack.c.bf16 %v9774, %v9772
        %9779 = vrot.lane.b32.xlu0 %v9775, 127
        %v9780 = vpop.permute.xlu0 %9779
        %9781 = vrot.lane.b32.xlu0 %v9776, 127
        %v9782 = vpop.permute.xlu0 %9781
        %v9783 = vsel %vm1395, %v9780, %v9782
        %9786 = vrot.lane.b32.xlu0 %v9775, 126
        %v9787 = vpop.permute.xlu0 %9786
        %9788 = vrot.lane.b32.xlu0 %v9776, 126
        %v9789 = vpop.permute.xlu0 %9788
        %v9790 = vsel %vm1455, %v9787, %v9789
        %9793 = vrot.lane.b32.xlu0 %v9775, 84
        %v9794 = vpop.permute.xlu0 %9793
        %9795 = vrot.lane.b32.xlu0 %v9776, 84
        %v9796 = vpop.permute.xlu0 %9795
        %v9797 = vsel %vm1515, %v9794, %v9796
        %9800 = vrot.lane.b32.xlu0 %v9775, 83
        %v9801 = vpop.permute.xlu0 %9800
        %9802 = vrot.lane.b32.xlu0 %v9776, 83
        %v9803 = vpop.permute.xlu0 %9802
        %v9804 = vsel %vm1575, %v9801, %v9803
        %9807 = vrot.lane.b32.xlu0 %v9775, 82
        %v9808 = vpop.permute.xlu0 %9807
        %9809 = vrot.lane.b32.xlu0 %v9776, 82
        %v9810 = vpop.permute.xlu0 %9809
        %v9811 = vsel %vm1635, %v9808, %v9810
        %9814 = vrot.lane.b32.xlu0 %v9775, 40
        %v9815 = vpop.permute.xlu0 %9814
        %9816 = vrot.lane.b32.xlu0 %v9776, 40
        %v9817 = vpop.permute.xlu0 %9816
        %v9818 = vsel %vm1700, %v9815, %v9817
        %9821 = vrot.lane.b32.xlu0 %v9775, 39
        %v9822 = vpop.permute.xlu0 %9821
        %9823 = vrot.lane.b32.xlu0 %v9776, 39
        %v9824 = vpop.permute.xlu0 %9823
        %v9825 = vsel %vm1763, %v9822, %v9824
        %9828 = vrot.lane.b32.xlu0 %v9775, 38
        %v9829 = vpop.permute.xlu0 %9828
        %9830 = vrot.lane.b32.xlu0 %v9776, 38
        %v9831 = vpop.permute.xlu0 %9830
        %v9832 = vsel %vm1826, %v9829, %v9831
        %v9835 = vld [vmem:[%s55] sm:$0xff]
        %v9836 = vld [vmem:[%s55 + $0x8] sm:$0xff]
        %v9837 = vld [vmem:[#allocation27] sm:$0xff]
        %v9838 = vld [vmem:[#allocation27 + $0x8] sm:$0xff]
        %9840 = vset.pattern.permute.xlu0 0
        %9841 = vperm.xlu0 %9840, %v9837
        %v9842 = vpop.permute.xlu0 %9841
        %9845 = vset.pattern.permute.xlu0 0
        %9846 = vperm.xlu0 %9845, %v9838
        %v9847 = vpop.permute.xlu0 %9846
        %v9851 = vunpack.c.l.b16 %v9835
        %v9852 = vunpack.c.h.b16 %v9835
        %v9853 = vunpack.c.l.b16 %v9836
        %v9854 = vunpack.c.h.b16 %v9836
        %v9855 = vpack.c.b16 %v9853, %v9851
        %v9856 = vpack.c.b16 %v9854, %v9852
        %v9859 = vsel %vm1880, %v9856, 0
        %9861 = vmatprep.subr.bf16.mxu0 %v9776
        %9862 = vmatpush1.bf16.msra.mxu0 %v9775
        %9863 = vmatprep.subr.bf16.mxu0 %v9782
        %9864 = vmatpush1.bf16.msra.mxu0 %v9783
        %9865 = vmatprep.subr.bf16.mxu0 %v9789
        %9866 = vmatpush1.bf16.msra.mxu0 %v9790
        %9867 = vmatprep.subr.bf16.mxu0 %v9796
        %9868 = vmatpush1.bf16.msra.mxu0 %v9797
        %9869 = vmatprep.subr.bf16.mxu0 %v9803
        %9870 = vmatpush1.bf16.msra.mxu0 %v9804
        %9871 = vmatprep.subr.bf16.mxu0 %v9810
        %9872 = vmatpush1.bf16.msra.mxu0 %v9811
        %9873 = vmatprep.subr.bf16.mxu0 %v9817
        %9874 = vmatpush1.bf16.msra.mxu0 %v9818
        %9875 = vmatprep.subr.bf16.mxu0 %v9824
        %9876 = vmatpush1.bf16.msra.mxu0 %v9825
        %9877 = vmatprep.subr.bf16.mxu0 %v9831
        %9878 = vmatpush1.bf16.msra.mxu0 %v9832
        %9879 = vmatprep.subr.bf16.mxu0 0
        %9880 = vmatpush1.bf16.msra.mxu0 0
        %9881 = vmatprep.subr.bf16.mxu0 0
        %9882 = vmatpush1.bf16.msra.mxu0 0
        %9883 = vmatprep.subr.bf16.mxu0 0
        %9884 = vmatpush1.bf16.msra.mxu0 0
        %9885 = vmatprep.subr.bf16.mxu0 0
        %9886 = vmatpush1.bf16.msra.mxu0 0
        %9887 = vmatprep.subr.bf16.mxu0 0
        %9888 = vmatpush1.bf16.msra.mxu0 0
        %9889 = vmatprep.subr.bf16.mxu0 0
        %9890 = vmatpush1.bf16.msra.mxu0 0
        %9891 = vmatprep.subr.bf16.mxu0 0
        %9892 = vmatpush1.bf16.msra.mxu0 0
        %9893 = vmatprep.mubr.bf16.mxu0 %v9859
        %9894 = vmatmul.mubr.bf16.gmra.mrb[0].mxu0 %v9855
        %v9895 = vpop.f32.mrb[0].mxu0
        %v9896 = vadd.f32 %v9842, %v9895
        %v9897 = vpop.f32.mrb[0].mxu0
        %v9898 = vadd.f32 %v9842, %v9897
        %v9899 = vpop.f32.mrb[0].mxu0
        %v9900 = vadd.f32 %v9847, %v9899
        %v9901 = vpop.f32.mrb[0].mxu0
        %v9902 = vadd.f32 %v9847, %v9901
        %9903 = vdwg.mxu0
        %v9904 = vmax.f32 %v9896, 0.0
        %v9905 = vmax.f32 %v9898, 0.0
        %v9906 = vmax.f32 %v9900, 0.0
        %v9907 = vmax.f32 %v9902, 0.0
        %v9908 = vpack.c.bf16 %v9906, %v9904
        %v9909 = vpack.c.bf16 %v9907, %v9905
        %v9910 = vld [vmem:[#allocation31] sm:$0xf]
        %v9911 = vld [vmem:[#allocation31 + $0x4] sm:$0xf]
        %v9912 = vld [vmem:[#allocation31 + $0x8] sm:$0xf]
        %v9913 = vld [vmem:[#allocation31 + $0xc] sm:$0xf]
        %v9914 = vld [vmem:[#allocation31 + $0x10] sm:$0xf]
        %v9915 = vld [vmem:[#allocation31 + $0x14] sm:$0xf]
        %v9916 = vld [vmem:[#allocation31 + $0x18] sm:$0xf]
        %v9917 = vld [vmem:[#allocation31 + $0x1c] sm:$0xf]
        %v9918 = vld [vmem:[#allocation31 + $0x20] sm:$0xf]
        %v9919 = vld [vmem:[#allocation31 + $0x24] sm:$0xf]
        %v9920 = vld [vmem:[#allocation31 + $0x28] sm:$0xf]
        %v9921 = vld [vmem:[#allocation31 + $0x2c] sm:$0xf]
        %v9922 = vld [vmem:[#allocation31 + $0x30] sm:$0xf]
        %v9923 = vld [vmem:[#allocation31 + $0x34] sm:$0xf]
        %v9924 = vld [vmem:[#allocation31 + $0x38] sm:$0xf]
        %v9925 = vld [vmem:[#allocation31 + $0x3c] sm:$0xf]
        %v9926 = vld [vmem:[#allocation31 + $0x40] sm:$0xf]
        %v9944 = vunpack.c.l.b16 %v9910
        %v9945 = vunpack.c.l.b16 %v9911
        %v9946 = vunpack.c.l.b16 %v9912
        %v9947 = vunpack.c.l.b16 %v9913
        %v9948 = vunpack.c.l.b16 %v9914
        %v9949 = vunpack.c.l.b16 %v9915
        %v9950 = vunpack.c.l.b16 %v9916
        %v9951 = vunpack.c.l.b16 %v9917
        %v9952 = vunpack.c.l.b16 %v9918
        %v9953 = vunpack.c.l.b16 %v9919
        %v9954 = vunpack.c.l.b16 %v9920
        %v9955 = vunpack.c.l.b16 %v9921
        %v9956 = vunpack.c.l.b16 %v9922
        %v9957 = vunpack.c.l.b16 %v9923
        %v9958 = vunpack.c.l.b16 %v9924
        %v9959 = vunpack.c.l.b16 %v9925
        %v9960 = vunpack.c.l.b16 %v9926
        %v9961 = vpack.c.b16 %v9945, %v9944
        %v9962 = vpack.c.b16 %v9947, %v9946
        %v9963 = vpack.c.b16 %v9949, %v9948
        %v9964 = vpack.c.b16 %v9951, %v9950
        %v9965 = vpack.c.b16 %v9953, %v9952
        %v9966 = vpack.c.b16 %v9955, %v9954
        %v9967 = vpack.c.b16 %v9957, %v9956
        %v9968 = vpack.c.b16 %v9959, %v9958
        %v9969 = vpack.c.b16 %v9960, %v9960
        %vm9978 = vcmask 64512
        %v9980 = vsel %vm9978, %v9909, 0
        %v9983 = vsel %vm7301, %v9969, 0
        %9985 = vmatprep.subr.bf16.mxu0 0
        %9986 = vmatpush1.bf16.msra.mxu0 %v9961
        %9987 = vmatprep.subr.bf16.mxu0 0
        %9988 = vmatpush1.bf16.msra.mxu0 %v9962
        %9989 = vmatprep.subr.bf16.mxu0 0
        %9990 = vmatpush1.bf16.msra.mxu0 %v9963
        %9991 = vmatprep.subr.bf16.mxu0 0
        %9992 = vmatpush1.bf16.msra.mxu0 %v9964
        %9993 = vmatprep.subr.bf16.mxu0 0
        %9994 = vmatpush1.bf16.msra.mxu0 %v9965
        %9995 = vmatprep.subr.bf16.mxu0 0
        %9996 = vmatpush1.bf16.msra.mxu0 %v9966
        %9997 = vmatprep.subr.bf16.mxu0 0
        %9998 = vmatpush1.bf16.msra.mxu0 %v9967
        %9999 = vmatprep.subr.bf16.mxu0 0
        %10000 = vmatpush1.bf16.msra.mxu0 %v9968
        %10001 = vmatprep.subr.bf16.mxu0 0
        %10002 = vmatpush1.bf16.msra.mxu0 %v9983
        %10003 = vmatprep.subr.bf16.mxu0 0
        %10004 = vmatpush1.bf16.msra.mxu0 0
        %10005 = vmatprep.subr.bf16.mxu0 0
        %10006 = vmatpush1.bf16.msra.mxu0 0
        %10007 = vmatprep.subr.bf16.mxu0 0
        %10008 = vmatpush1.bf16.msra.mxu0 0
        %10009 = vmatprep.subr.bf16.mxu0 0
        %10010 = vmatpush1.bf16.msra.mxu0 0
        %10011 = vmatprep.subr.bf16.mxu0 0
        %10012 = vmatpush1.bf16.msra.mxu0 0
        %10013 = vmatprep.subr.bf16.mxu0 0
        %10014 = vmatpush1.bf16.msra.mxu0 0
        %10015 = vmatprep.subr.bf16.mxu0 0
        %10016 = vmatpush1.bf16.msra.mxu0 0
        %10017 = vmatprep.mubr.bf16.mxu0 %v9980
        %10018 = vmatmul.mubr.bf16.gmra.mrb[0].mxu0 %v9908
        %v10019 = vpop.f32.mrb[0].mxu0
        %v10020 = vadd.f32 0.0, %v10019
        %v10021 = vpop.f32.mrb[0].mxu0
        %v10022 = vpop.f32.mrb[0].mxu0
        %v10023 = vadd.f32 0.0, %v10022
        %v10024 = vpop.f32.mrb[0].mxu0
        %10025 = vdwg.mxu0
        %v10026 = vpack.c.bf16 %v10023, %v10020
        %v10027 = vld [vmem:[#allocation28] sm:$0xf]
        %v10028 = vld [vmem:[#allocation30] sm:$0xff]
        %10030 = vset.pattern.permute.xlu0 0
        %10031 = vperm.xlu0 %10030, %v10028
        %v10032 = vpop.permute.xlu0 %10031
        %v10035 = vsel %vm1880, %v10027, 0
        %10037 = vmatprep.subr.bf16.mxu0 0
        %10038 = vmatpush1.bf16.msra.mxu0 %v10026
        %10039 = vmatprep.subr.bf16.mxu0 0
        %10040 = vmatpush1.bf16.msra.mxu0 0
        %10041 = vmatprep.subr.bf16.mxu0 0
        %10042 = vmatpush1.bf16.msra.mxu0 0
        %10043 = vmatprep.subr.bf16.mxu0 0
        %10044 = vmatpush1.bf16.msra.mxu0 0
        %10045 = vmatprep.subr.bf16.mxu0 0
        %10046 = vmatpush1.bf16.msra.mxu0 0
        %10047 = vmatprep.subr.bf16.mxu0 0
        %10048 = vmatpush1.bf16.msra.mxu0 0
        %10049 = vmatprep.subr.bf16.mxu0 0
        %10050 = vmatpush1.bf16.msra.mxu0 0
        %10051 = vmatprep.subr.bf16.mxu0 0
        %10052 = vmatpush1.bf16.msra.mxu0 0
        %10053 = vmatprep.subr.bf16.mxu0 0
        %10054 = vmatpush1.bf16.msra.mxu0 0
        %10055 = vmatprep.subr.bf16.mxu0 0
        %10056 = vmatpush1.bf16.msra.mxu0 0
        %10057 = vmatprep.subr.bf16.mxu0 0
        %10058 = vmatpush1.bf16.msra.mxu0 0
        %10059 = vmatprep.subr.bf16.mxu0 0
        %10060 = vmatpush1.bf16.msra.mxu0 0
        %10061 = vmatprep.subr.bf16.mxu0 0
        %10062 = vmatpush1.bf16.msra.mxu0 0
        %10063 = vmatprep.subr.bf16.mxu0 0
        %10064 = vmatpush1.bf16.msra.mxu0 0
        %10065 = vmatprep.subr.bf16.mxu0 0
        %10066 = vmatpush1.bf16.msra.mxu0 0
        %10067 = vmatprep.subr.bf16.mxu0 0
        %10068 = vmatpush1.bf16.msra.mxu0 0
        %10069 = vmatprep.mubr.bf16.mxu0 0
        %10070 = vmatmul.mubr.bf16.gmra.mrb[0].mxu0 %v10035
        %v10071 = vpop.f32.mrb[0].mxu0
        %v10072 = vadd.f32 %v10032, %v10071
        %v10073 = vpop.f32.mrb[0].mxu0
        %v10074 = vpop.f32.mrb[0].mxu0
        %v10075 = vpop.f32.mrb[0].mxu0
        %10076 = vdwg.mxu0
        %10077 = vst.msk [vmem:[%s1271] sm:$0xff] %vm1880, %v10072
        %p10078 = scmp.lt.s32.totalorder %s87, 1
        %s10079 = scalar_select %p10078, %s87, 1
        %s10080 = smul.addr %s10079, 8
        %s10081 = scalar_lea.vmem %s65, %s10080
        // Predicated region
        $region229: #{forward.1} parent=147 // pred_check
          %p10082 = pneg %p782
        $region230: #{forward.1} parent=147 // pred_check_branch
          %10084 = sbr.rel (%p10082) target = $region232
        $region231: #{forward.1} parent=147 // pred_region
          _
        $region232: #{forward.1} parent=147 // pred_fallthru
          _
      $region148: #{forward.1} parent=5 // pred_fallthru
        _
      %p10085 = scmp.le.s32.totalorder 2, %s82
      // Predicated region
      $region233: #{forward.1} parent=5 // pred_check
        %p10086 = pneg %p10085
      $region234: #{forward.1} parent=5 // pred_check_branch
        %10088 = sbr.rel (%p10086) target = $region236
      $region235: #{forward.1} parent=5 // pred_region
        %s10089 = ssub.s32 %s82, 2
        // Predicated region
        $region237: #{forward.1} parent=235 // pred_check
          %p10090 = pneg %p788
        $region238: #{forward.1} parent=235 // pred_check_branch
          %10092 = sbr.rel (%p10090) target = $region240
        $region239: #{forward.1} parent=235 // pred_region
          %p10093 = scmp.lt.s32.totalorder %s88, 1
          %s10094 = scalar_select %p10093, %s88, 1
          %s10095 = smul.addr %s10094, 8
          %s10096 = scalar_lea.vmem %s65, %s10095
        $region240: #{forward.1} parent=235 // pred_fallthru
          _
      $region236: #{forward.1} parent=5 // pred_fallthru
        _
    $region6: #{forward.1} parent=1 // loop_footer
      %s86 = sadd.s32 1, %s82
    $region7: #{forward.1} parent=1 // loop_footer_branch
      %81 = sbr.rel target = $region3
    $region8: #{forward.1} parent=1 // loop_exit
      _
    %10097 = vsyncpa [#allocation3], 1
    %s10098 = scalar_lea.sflag [#allocation3], 1
    %10099 = vsyncpa %s10098, 1
    %10100 = vsyncpa [#allocation5], 1
    %10101 = vsyncpa [#allocation8], 1
    %10102 = vsyncpa [#allocation11], 1
    %10103 = vsyncpa [#allocation14], 1
    %10104 = vsyncpa [#allocation17], 1
    %10105 = vsyncpa [#allocation20], 1
    %10106 = vsyncpa [#allocation23], 1
    %10107 = vsyncpa [#allocation26], 1
    %10108 = vsyncpa [#allocation29], 1
    %10109 = vsyncpa [#allocation32], 1

</llo_original>
